<compile_context>
chip_gen: v5e
topology: v5e:2x2
jax: 0.10.0
libtpu: 0.0.40
codegen_flags: <defaults>
</compile_context>

<pallas_src>
import math

import jax
import jax.numpy as jnp
from jax.experimental import pallas as pl
from jax.experimental.pallas import tpu as pltpu

# ----------------------------- config ---------------------------------------
IMAGE_SIZE = 8
IN_DIM = IMAGE_SIZE * IMAGE_SIZE          # 64
H_DIM = 128
EMBED_DIM = 128                           # == H_DIM (required by Dense(h, h)(embed))
N_HIDDEN = 2
OUT_PAD = 8                               # final_fc output padded 1 -> 8 lanes
BATCH = 256

_HALF = EMBED_DIM // 2
_PE_SCALE = math.log(10000.0) / (_HALF - 1)


def _swish(x):
    return x * jax.nn.sigmoid(x)


def _round_up(n, m):
    return ((n + m - 1) // m) * m


def sinusoidal_pos_emb(t, embed_dim):
    """DDPM sinusoidal positional embedding (reference path). t: (B,) -> (B, embed_dim)."""
    half = embed_dim // 2
    scale = math.log(10000.0) / (half - 1)
    freqs = jnp.exp(-scale * jnp.arange(half, dtype=jnp.float32))
    args = t[:, None] * freqs[None, :]
    return jnp.concatenate([jnp.sin(args), jnp.cos(args)], axis=-1)


# ----------------------------- kernel ---------------------------------------
def ncsn_mlpv2_kernel(
    t_ref,        # (TILE_B, 1)          f32   diffusion time (already squeezed)
    x_ref,        # (TILE_B, IN_DIM)     f32   pre-encoded data
    we_ref,       # (EMBED_DIM, EMBED_DIM)           bf16  embed Linear weight
    w0_ref,       # (IN_DIM, H_DIM)                  bf16  net[0] weight
    wh_ref,       # (N_HIDDEN, H_DIM, H_DIM)         bf16  net[1..] weights
    dwp_ref,      # (H_DIM, (N_HIDDEN+1)*H_DIM)      bf16  packed Dense weights
    wfp_ref,      # (H_DIM, OUT_PAD)                 f32   final_fc weight, zero-padded cols
    bias_ref,     # (N_HIDDEN+3, H_DIM)              f32   packed biases (row -1 = final bias)
    out_ref,      # (TILE_B, OUT_PAD)    f32   column 0 = final_fc output
):
    f32, bf16 = jnp.float32, jnp.bfloat16
    tile_b = x_ref.shape[0]

    # ---- SinusoidalPosEmb(t), in-kernel (exp/sin/cos on the idle EUP slot, f32) ----
    lane = jax.lax.broadcasted_iota(jnp.int32, (tile_b, EMBED_DIM), 1)
    is_sin = lane < _HALF
    freq_idx = jnp.where(is_sin, lane, lane - _HALF).astype(f32)
    freqs = jnp.exp(-_PE_SCALE * freq_idx)
    args = t_ref[...] * freqs                               # (tile_b,1) * (tile_b,128)
    pe = jnp.where(is_sin, jnp.sin(args), jnp.cos(args))    # [sin | cos] lane layout

    # embed = temb_act(Linear(pe)) -- bf16 MXU, f32 accumulate, bias/swish in f32.
    emb = jnp.dot(pe.astype(bf16), we_ref[...], preferred_element_type=f32) + bias_ref[0]
    emb = _swish(emb)
    emb_bf = emb.astype(bf16)

    # All Dense(embed) contributions in one wide matmul: (tile_b, 3*H_DIM).
    # (Dense biases are already folded into the per-layer biases.)
    emb_dense = jnp.dot(emb_bf, dwp_ref[...], preferred_element_type=f32)

    # Layer 0: Linear(in_dim, h_dim) + Dense_0(embed), then swish.
    h = jnp.dot(x_ref[...].astype(bf16), w0_ref[...], preferred_element_type=f32)
    h = _swish(h + emb_dense[:, 0:H_DIM] + bias_ref[1])

    # Hidden layers (N_HIDDEN is small and fixed -> static unroll).
    for i in range(N_HIDDEN):
        h = jnp.dot(h.astype(bf16), wh_ref[i], preferred_element_type=f32)
        h = _swish(h + emb_dense[:, (i + 1) * H_DIM:(i + 2) * H_DIM] + bias_ref[2 + i])

    # final_fc: tiny 128x8 contraction kept in f32; only column 0 is real.
    out = jnp.dot(h, wfp_ref[...], preferred_element_type=f32)
    out_ref[...] = out + bias_ref[N_HIDDEN + 2][0:OUT_PAD]


# ----------------------------- param packing --------------------------------
def pack_params(params):
    """Fuse/pack raw f32 params into the kernel layout (bf16 weights, f32 biases)."""
    bf16 = jnp.bfloat16
    # All Dense(embed) weights side by side: (H_DIM, (N_HIDDEN+1)*H_DIM).
    dw_packed = jnp.concatenate([params["dw"][i] for i in range(N_HIDDEN + 1)], axis=1)
    # final_fc padded to OUT_PAD output lanes (zeros beyond column 0), kept f32.
    wf_pad = jnp.pad(params["wf"], ((0, 0), (0, OUT_PAD - 1))).astype(jnp.float32)
    # Fold Dense biases into the matching layer biases; pack as a 2-D (rows, H_DIM) tile.
    bias_rows = [params["be"].reshape(-1),
                 (params["b0"] + params["db"][0]).reshape(-1)]
    for i in range(N_HIDDEN):
        bias_rows.append((params["bh"][i] + params["db"][i + 1]).reshape(-1))
    bias_rows.append(jnp.pad(params["bf"].reshape(-1), (0, H_DIM - 1)))
    bias_pack = jnp.stack(bias_rows, axis=0).astype(jnp.float32)   # (N_HIDDEN+3, H_DIM)
    return {
        "we": params["we"].astype(bf16),
        "w0": params["w0"].astype(bf16),
        "wh": params["wh"].astype(bf16),
        "dwp": dw_packed.astype(bf16),
        "wfp": wf_pad,
        "bias": bias_pack,
    }


# ----------------------------- tiling / cost ---------------------------------
def _choose_tiling(batch):
    # Target two batch tiles (one per v7x TensorCore); >=128 rows/tile so the resident
    # weight DMA is amortized; <=1024 rows so per-tile VMEM stays tiny.
    tile_b = min(1024, max(128, _round_up(-(-batch // 2), 8)))
    n_tiles = -(-batch // tile_b)
    if n_tiles > 1 and n_tiles % 2:
        n_tiles += 1            # keep tile count a multiple of 2 for v7x megacore
    return tile_b, n_tiles


def _cost_estimate(bp):
    flops_per_row = 2 * (EMBED_DIM * EMBED_DIM                      # embed Linear
                         + EMBED_DIM * (N_HIDDEN + 1) * H_DIM       # packed Dense
                         + IN_DIM * H_DIM                           # net[0]
                         + N_HIDDEN * H_DIM * H_DIM                 # hidden layers
                         + H_DIM * OUT_PAD)                         # final_fc (padded)
    trans_per_row = 2 * EMBED_DIM + (N_HIDDEN + 2) * H_DIM          # exp+sin/cos+sigmoids
    weight_bytes = 2 * (EMBED_DIM * EMBED_DIM + IN_DIM * H_DIM
                        + N_HIDDEN * H_DIM * H_DIM
                        + EMBED_DIM * (N_HIDDEN + 1) * H_DIM) \
        + 4 * (H_DIM * OUT_PAD + (N_HIDDEN + 3) * H_DIM)
    stream_bytes = bp * (IN_DIM * 4 + 4 + OUT_PAD * 4)
    return pl.CostEstimate(flops=bp * flops_per_row,
                           transcendentals=bp * trans_per_row,
                           bytes_accessed=weight_bytes + stream_bytes)


# ----------------------------- wrapper ---------------------------------------
@jax.jit
def ncsn_mlpv2_forward(x, t, packed):
    B = x.shape[0]
    # t.squeeze() equivalent, shaped (B, 1) for the streamed block.
    t_col = jnp.reshape(t, (-1, 1)).astype(jnp.float32)

    tile_b, n_tiles = _choose_tiling(B)
    bp = tile_b * n_tiles
    if bp != B:
        x = jnp.pad(x, ((0, bp - B), (0, 0)))
        t_col = jnp.pad(t_col, ((0, bp - B), (0, 0)))

    in_specs = [
        # Streaming per-tile inputs.
        pl.BlockSpec((tile_b, 1), lambda b: (b, 0)),                      # t
        pl.BlockSpec((tile_b, IN_DIM), lambda b: (b, 0)),                 # x
        # Weights/biases: constant block -> fetched once, resident in VMEM.
        pl.BlockSpec((EMBED_DIM, EMBED_DIM), lambda b: (0, 0)),           # we
        pl.BlockSpec((IN_DIM, H_DIM), lambda b: (0, 0)),                  # w0
        pl.BlockSpec((N_HIDDEN, H_DIM, H_DIM), lambda b: (0, 0, 0)),      # wh
        pl.BlockSpec((H_DIM, (N_HIDDEN + 1) * H_DIM), lambda b: (0, 0)),  # dw packed
        pl.BlockSpec((H_DIM, OUT_PAD), lambda b: (0, 0)),                 # wf padded (f32)
        pl.BlockSpec((N_HIDDEN + 3, H_DIM), lambda b: (0, 0)),            # biases packed
    ]
    out_spec = pl.BlockSpec((tile_b, OUT_PAD), lambda b: (b, 0))

    out_full = pl.pallas_call(
        ncsn_mlpv2_kernel,
        out_shape=jax.ShapeDtypeStruct((bp, OUT_PAD), jnp.float32),
        grid=(n_tiles,),
        in_specs=in_specs,
        out_specs=out_spec,
        compiler_params=pltpu.CompilerParams(
            dimension_semantics=("parallel",)),   # v7x: both TCs split batch tiles
        cost_estimate=_cost_estimate(bp),
    )(t_col, x, packed["we"], packed["w0"], packed["wh"],
      packed["dwp"], packed["wfp"], packed["bias"])

    # Column 0 of the 8-lane-padded output is the (B, 1) result.
    return out_full[:B, 0:1]


# ----------------------------- reference (pure JAX, f32) ---------------------
def ncsn_mlpv2_reference(x, t, params):
    t_flat = jnp.reshape(t, (-1,))
    pe = sinusoidal_pos_emb(t_flat, EMBED_DIM)
    emb = _swish(pe @ params["we"] + params["be"])
    h = x @ params["w0"] + params["b0"] + emb @ params["dw"][0] + params["db"][0]
    h = _swish(h)
    for i in range(N_HIDDEN):
        h = h @ params["wh"][i] + params["bh"][i] \
            + emb @ params["dw"][i + 1] + params["db"][i + 1]
        h = _swish(h)
    return h @ params["wf"] + params["bf"]


# ----------------------------- param init ------------------------------------
def init_params(key):
    ks = jax.random.split(key, 12)
    s = 0.05
    return {
        "we": jax.random.normal(ks[0], (EMBED_DIM, EMBED_DIM), jnp.float32) * s,
        "be": jax.random.normal(ks[1], (1, EMBED_DIM), jnp.float32) * s,
        "w0": jax.random.normal(ks[2], (IN_DIM, H_DIM), jnp.float32) * s,
        "b0": jax.random.normal(ks[3], (1, H_DIM), jnp.float32) * s,
        "wh": jax.random.normal(ks[4], (N_HIDDEN, H_DIM, H_DIM), jnp.float32) * s,
        "bh": jax.random.normal(ks[5], (N_HIDDEN, 1, H_DIM), jnp.float32) * s,
        "dw": jax.random.normal(ks[6], (N_HIDDEN + 1, H_DIM, H_DIM), jnp.float32) * s,
        "db": jax.random.normal(ks[7], (N_HIDDEN + 1, 1, H_DIM), jnp.float32) * s,
        "wf": jax.random.normal(ks[8], (H_DIM, 1), jnp.float32) * s,
        "bf": jax.random.normal(ks[9], (1, 1), jnp.float32) * s,
    }


# ----------------------------- main -------------------------------------------
if __name__ == "__main__":
    key = jax.random.PRNGKey(0)
    kx, kt, kp = jax.random.split(key, 3)

    x = jax.random.normal(kx, (BATCH, IN_DIM), jnp.float32)        # pre-encoded data
    t = jax.random.uniform(kt, (BATCH, 1), jnp.float32) * 999.0    # diffusion time
    params = init_params(kp)
    packed = pack_params(params)

    out = ncsn_mlpv2_forward(x, t, packed)
    out = jax.block_until_ready(out)

    ref = ncsn_mlpv2_reference(x, t, params)
    assert out.shape == (BATCH, 1)
    max_err = float(jnp.max(jnp.abs(out - ref)))
    # bf16 weights + f32 accumulation vs pure-f32 reference -> loose tolerance.
    assert jnp.allclose(out, ref, atol=2e-2, rtol=2e-2), \
        f"mismatch vs reference (max abs err {max_err})"

    print("KERNEL_OK")
</pallas_src>

<mosaic_0001>
module attributes {stable_mosaic.version = 11 : i64} {
  func.func @ncsn_mlpv2_kernel(%arg0: i32, %arg1: memref<128x1xf32, #tpu.memory_space<vmem>>, %arg2: memref<128x64xf32, #tpu.memory_space<vmem>>, %arg3: memref<128x128xbf16, #tpu.memory_space<vmem>>, %arg4: memref<64x128xbf16, #tpu.memory_space<vmem>>, %arg5: memref<2x128x128xbf16, #tpu.memory_space<vmem>>, %arg6: memref<128x384xbf16, #tpu.memory_space<vmem>>, %arg7: memref<128x8xf32, #tpu.memory_space<vmem>>, %arg8: memref<5x128xf32, #tpu.memory_space<vmem>>, %arg9: memref<128x8xf32, #tpu.memory_space<vmem>>) attributes {dimension_semantics = [#tpu.dimension_semantics<parallel>], iteration_bounds = array<i64: 2>, scalar_prefetch = 0 : i64, scratch_operands = 0 : i64, tpu.core_type = #tpu.core_type<tc>, window_params = [{transform_indices = @transform_0, window_bounds = array<i64: 128, 1>}, {transform_indices = @transform_1, window_bounds = array<i64: 128, 64>}, {pipeline_mode = #tpu.pipeline_mode<synchronous>, transform_indices = @transform_2, window_bounds = array<i64: 128, 128>}, {pipeline_mode = #tpu.pipeline_mode<synchronous>, transform_indices = @transform_3, window_bounds = array<i64: 64, 128>}, {pipeline_mode = #tpu.pipeline_mode<synchronous>, transform_indices = @transform_4, window_bounds = array<i64: 2, 128, 128>}, {pipeline_mode = #tpu.pipeline_mode<synchronous>, transform_indices = @transform_5, window_bounds = array<i64: 128, 384>}, {pipeline_mode = #tpu.pipeline_mode<synchronous>, transform_indices = @transform_6, window_bounds = array<i64: 128, 8>}, {pipeline_mode = #tpu.pipeline_mode<synchronous>, transform_indices = @transform_7, window_bounds = array<i64: 5, 128>}, {transform_indices = @transform_8, window_bounds = array<i64: 128, 8>}]} {
    %0 = tpu.iota {dimensions = array<i32: 1>} : vector<128x128xi32>
    %c64_i32 = arith.constant 64 : i32
    %1 = vector.broadcast %c64_i32 : i32 to vector<128x128xi32>
    %2 = arith.cmpi slt, %0, %1 : vector<128x128xi32>
    %c64_i32_0 = arith.constant 64 : i32
    %3 = vector.broadcast %c64_i32_0 : i32 to vector<128x128xi32>
    %4 = arith.subi %0, %3 : vector<128x128xi32>
    %5 = arith.select %2, %0, %4 : vector<128x128xi1>, vector<128x128xi32>
    %6 = arith.sitofp %5 : vector<128x128xi32> to vector<128x128xf32>
    %cst = arith.constant -0.146195874 : f32
    %7 = vector.broadcast %cst : f32 to vector<128x128xf32>
    %8 = arith.mulf %7, %6 : vector<128x128xf32>
    %9 = math.exp %8 : vector<128x128xf32>
    %c0 = arith.constant 0 : index
    %c0_1 = arith.constant 0 : index
    %10 = vector.load %arg1[%c0, %c0_1] : memref<128x1xf32, #tpu.memory_space<vmem>>, vector<128x1xf32>
    %11 = vector.broadcast %10 : vector<128x1xf32> to vector<128x128xf32>
    %12 = arith.mulf %11, %9 : vector<128x128xf32>
    %13 = math.sin %12 : vector<128x128xf32>
    %14 = math.cos %12 : vector<128x128xf32>
    %15 = arith.select %2, %13, %14 : vector<128x128xi1>, vector<128x128xf32>
    %16 = arith.truncf %15 : vector<128x128xf32> to vector<128x128xbf16>
    %c0_2 = arith.constant 0 : index
    %c0_3 = arith.constant 0 : index
    %17 = vector.load %arg3[%c0_2, %c0_3] : memref<128x128xbf16, #tpu.memory_space<vmem>>, vector<128x128xbf16>
    %cst_4 = arith.constant dense<0.000000e+00> : vector<128x128xf32>
    %18 = tpu.matmul %16, %17, %cst_4 {dimension_numbers = #tpu.dot_dimension_numbers<[1], [0], [0], [1], [0, 0, 1, 1], [], []>} : vector<128x128xbf16>, vector<128x128xbf16>, vector<128x128xf32> -> vector<128x128xf32>
    %c0_5 = arith.constant 0 : index
    %c0_6 = arith.constant 0 : index
    %19 = vector.load %arg8[%c0_5, %c0_6] : memref<5x128xf32, #tpu.memory_space<vmem>>, vector<1x128xf32>
    %20 = vector.shape_cast %19 : vector<1x128xf32> to vector<128xf32>
    %21 = vector.shape_cast %20 : vector<128xf32> to vector<1x128xf32>
    %22 = vector.broadcast %21 : vector<1x128xf32> to vector<128x128xf32>
    %23 = arith.addf %18, %22 : vector<128x128xf32>
    %24 = arith.negf %23 : vector<128x128xf32>
    %25 = math.exp %24 : vector<128x128xf32>
    %cst_7 = arith.constant 1.000000e+00 : f32
    %26 = vector.broadcast %cst_7 : f32 to vector<128x128xf32>
    %27 = arith.addf %26, %25 : vector<128x128xf32>
    %28 = arith.divf %26, %27 : vector<128x128xf32>
    %29 = arith.mulf %23, %28 : vector<128x128xf32>
    %30 = arith.truncf %29 : vector<128x128xf32> to vector<128x128xbf16>
    %c0_8 = arith.constant 0 : index
    %c0_9 = arith.constant 0 : index
    %31 = vector.load %arg6[%c0_8, %c0_9] : memref<128x384xbf16, #tpu.memory_space<vmem>>, vector<128x384xbf16>
    %cst_10 = arith.constant dense<0.000000e+00> : vector<128x384xf32>
    %32 = tpu.matmul %30, %31, %cst_10 {dimension_numbers = #tpu.dot_dimension_numbers<[1], [0], [0], [1], [0, 0, 1, 1], [], []>} : vector<128x128xbf16>, vector<128x384xbf16>, vector<128x384xf32> -> vector<128x384xf32>
    %c0_11 = arith.constant 0 : index
    %c0_12 = arith.constant 0 : index
    %33 = vector.load %arg2[%c0_11, %c0_12] : memref<128x64xf32, #tpu.memory_space<vmem>>, vector<128x64xf32>
    %34 = arith.truncf %33 : vector<128x64xf32> to vector<128x64xbf16>
    %c0_13 = arith.constant 0 : index
    %c0_14 = arith.constant 0 : index
    %35 = vector.load %arg4[%c0_13, %c0_14] : memref<64x128xbf16, #tpu.memory_space<vmem>>, vector<64x128xbf16>
    %cst_15 = arith.constant dense<0.000000e+00> : vector<128x128xf32>
    %36 = tpu.matmul %34, %35, %cst_15 {dimension_numbers = #tpu.dot_dimension_numbers<[1], [0], [0], [1], [0, 0, 1, 1], [], []>} : vector<128x64xbf16>, vector<64x128xbf16>, vector<128x128xf32> -> vector<128x128xf32>
    %37 = vector.extract_strided_slice %32 {offsets = [0, 0], sizes = [128, 128], strides = [1, 1]} : vector<128x384xf32> to vector<128x128xf32>
    %38 = arith.addf %36, %37 : vector<128x128xf32>
    %c1 = arith.constant 1 : index
    %c0_16 = arith.constant 0 : index
    %39 = vector.load %arg8[%c1, %c0_16] : memref<5x128xf32, #tpu.memory_space<vmem>>, vector<1x128xf32>
    %40 = vector.shape_cast %39 : vector<1x128xf32> to vector<128xf32>
    %41 = vector.shape_cast %40 : vector<128xf32> to vector<1x128xf32>
    %42 = vector.broadcast %41 : vector<1x128xf32> to vector<128x128xf32>
    %43 = arith.addf %38, %42 : vector<128x128xf32>
    %44 = arith.negf %43 : vector<128x128xf32>
    %45 = math.exp %44 : vector<128x128xf32>
    %cst_17 = arith.constant 1.000000e+00 : f32
    %46 = vector.broadcast %cst_17 : f32 to vector<128x128xf32>
    %47 = arith.addf %46, %45 : vector<128x128xf32>
    %48 = arith.divf %46, %47 : vector<128x128xf32>
    %49 = arith.mulf %43, %48 : vector<128x128xf32>
    %50 = arith.truncf %49 : vector<128x128xf32> to vector<128x128xbf16>
    %c0_18 = arith.constant 0 : index
    %c0_19 = arith.constant 0 : index
    %c0_20 = arith.constant 0 : index
    %51 = vector.load %arg5[%c0_18, %c0_19, %c0_20] : memref<2x128x128xbf16, #tpu.memory_space<vmem>>, vector<1x128x128xbf16>
    %52 = vector.shape_cast %51 : vector<1x128x128xbf16> to vector<128x128xbf16>
    %cst_21 = arith.constant dense<0.000000e+00> : vector<128x128xf32>
    %53 = tpu.matmul %50, %52, %cst_21 {dimension_numbers = #tpu.dot_dimension_numbers<[1], [0], [0], [1], [0, 0, 1, 1], [], []>} : vector<128x128xbf16>, vector<128x128xbf16>, vector<128x128xf32> -> vector<128x128xf32>
    %54 = vector.extract_strided_slice %32 {offsets = [0, 128], sizes = [128, 128], strides = [1, 1]} : vector<128x384xf32> to vector<128x128xf32>
    %55 = arith.addf %53, %54 : vector<128x128xf32>
    %c2 = arith.constant 2 : index
    %c0_22 = arith.constant 0 : index
    %56 = vector.load %arg8[%c2, %c0_22] : memref<5x128xf32, #tpu.memory_space<vmem>>, vector<1x128xf32>
    %57 = vector.shape_cast %56 : vector<1x128xf32> to vector<128xf32>
    %58 = vector.shape_cast %57 : vector<128xf32> to vector<1x128xf32>
    %59 = vector.broadcast %58 : vector<1x128xf32> to vector<128x128xf32>
    %60 = arith.addf %55, %59 : vector<128x128xf32>
    %61 = arith.negf %60 : vector<128x128xf32>
    %62 = math.exp %61 : vector<128x128xf32>
    %cst_23 = arith.constant 1.000000e+00 : f32
    %63 = vector.broadcast %cst_23 : f32 to vector<128x128xf32>
    %64 = arith.addf %63, %62 : vector<128x128xf32>
    %65 = arith.divf %63, %64 : vector<128x128xf32>
    %66 = arith.mulf %60, %65 : vector<128x128xf32>
    %67 = arith.truncf %66 : vector<128x128xf32> to vector<128x128xbf16>
    %c1_24 = arith.constant 1 : index
    %c0_25 = arith.constant 0 : index
    %c0_26 = arith.constant 0 : index
    %68 = vector.load %arg5[%c1_24, %c0_25, %c0_26] : memref<2x128x128xbf16, #tpu.memory_space<vmem>>, vector<1x128x128xbf16>
    %69 = vector.shape_cast %68 : vector<1x128x128xbf16> to vector<128x128xbf16>
    %cst_27 = arith.constant dense<0.000000e+00> : vector<128x128xf32>
    %70 = tpu.matmul %67, %69, %cst_27 {dimension_numbers = #tpu.dot_dimension_numbers<[1], [0], [0], [1], [0, 0, 1, 1], [], []>} : vector<128x128xbf16>, vector<128x128xbf16>, vector<128x128xf32> -> vector<128x128xf32>
    %71 = vector.extract_strided_slice %32 {offsets = [0, 256], sizes = [128, 128], strides = [1, 1]} : vector<128x384xf32> to vector<128x128xf32>
    %72 = arith.addf %70, %71 : vector<128x128xf32>
    %c3 = arith.constant 3 : index
    %c0_28 = arith.constant 0 : index
    %73 = vector.load %arg8[%c3, %c0_28] : memref<5x128xf32, #tpu.memory_space<vmem>>, vector<1x128xf32>
    %74 = vector.shape_cast %73 : vector<1x128xf32> to vector<128xf32>
    %75 = vector.shape_cast %74 : vector<128xf32> to vector<1x128xf32>
    %76 = vector.broadcast %75 : vector<1x128xf32> to vector<128x128xf32>
    %77 = arith.addf %72, %76 : vector<128x128xf32>
    %78 = arith.negf %77 : vector<128x128xf32>
    %79 = math.exp %78 : vector<128x128xf32>
    %cst_29 = arith.constant 1.000000e+00 : f32
    %80 = vector.broadcast %cst_29 : f32 to vector<128x128xf32>
    %81 = arith.addf %80, %79 : vector<128x128xf32>
    %82 = arith.divf %80, %81 : vector<128x128xf32>
    %83 = arith.mulf %77, %82 : vector<128x128xf32>
    %c0_30 = arith.constant 0 : index
    %c0_31 = arith.constant 0 : index
    %84 = vector.load %arg7[%c0_30, %c0_31] : memref<128x8xf32, #tpu.memory_space<vmem>>, vector<128x8xf32>
    %cst_32 = arith.constant dense<0.000000e+00> : vector<128x8xf32>
    %85 = tpu.matmul %83, %84, %cst_32 {dimension_numbers = #tpu.dot_dimension_numbers<[1], [0], [0], [1], [0, 0, 1, 1], [], []>} : vector<128x128xf32>, vector<128x8xf32>, vector<128x8xf32> -> vector<128x8xf32>
    %c4 = arith.constant 4 : index
    %c0_33 = arith.constant 0 : index
    %86 = vector.load %arg8[%c4, %c0_33] : memref<5x128xf32, #tpu.memory_space<vmem>>, vector<1x128xf32>
    %87 = vector.shape_cast %86 : vector<1x128xf32> to vector<128xf32>
    %88 = vector.extract_strided_slice %87 {offsets = [0], sizes = [8], strides = [1]} : vector<128xf32> to vector<8xf32>
    %89 = vector.shape_cast %88 : vector<8xf32> to vector<1x8xf32>
    %90 = vector.broadcast %89 : vector<1x8xf32> to vector<128x8xf32>
    %91 = arith.addf %85, %90 : vector<128x8xf32>
    %c0_34 = arith.constant 0 : index
    %c0_35 = arith.constant 0 : index
    %92 = vector.load %arg9[%c0_34, %c0_35] : memref<128x8xf32, #tpu.memory_space<vmem>>, vector<128x8xf32>
    tpu.vector_store %arg9[%c0_34, %c0_35], %91 {strides = array<i32>} : memref<128x8xf32, #tpu.memory_space<vmem>>, vector<128x8xf32>,
    return
  }
  func.func @transform_0(%arg0: i32) -> (i32, i32) {
    %c0_i32 = arith.constant 0 : i32
    %c0_i32_0 = arith.constant 0 : i32
    return %arg0, %c0_i32 : i32, i32
  }
  func.func @transform_1(%arg0: i32) -> (i32, i32) {
    %c0_i32 = arith.constant 0 : i32
    %c0_i32_0 = arith.constant 0 : i32
    return %arg0, %c0_i32 : i32, i32
  }
  func.func @transform_2(%arg0: i32) -> (i32, i32) {
    %c0_i32 = arith.constant 0 : i32
    %c0_i32_0 = arith.constant 0 : i32
    %c0_i32_1 = arith.constant 0 : i32
    return %c0_i32, %c0_i32_0 : i32, i32
  }
  func.func @transform_3(%arg0: i32) -> (i32, i32) {
    %c0_i32 = arith.constant 0 : i32
    %c0_i32_0 = arith.constant 0 : i32
    %c0_i32_1 = arith.constant 0 : i32
    return %c0_i32, %c0_i32_0 : i32, i32
  }
  func.func @transform_4(%arg0: i32) -> (i32, i32, i32) {
    %c0_i32 = arith.constant 0 : i32
    %c0_i32_0 = arith.constant 0 : i32
    %c0_i32_1 = arith.constant 0 : i32
    %c0_i32_2 = arith.constant 0 : i32
    return %c0_i32, %c0_i32_0, %c0_i32_1 : i32, i32, i32
  }
  func.func @transform_5(%arg0: i32) -> (i32, i32) {
    %c0_i32 = arith.constant 0 : i32
    %c0_i32_0 = arith.constant 0 : i32
    %c0_i32_1 = arith.constant 0 : i32
    return %c0_i32, %c0_i32_0 : i32, i32
  }
  func.func @transform_6(%arg0: i32) -> (i32, i32) {
    %c0_i32 = arith.constant 0 : i32
    %c0_i32_0 = arith.constant 0 : i32
    %c0_i32_1 = arith.constant 0 : i32
    return %c0_i32, %c0_i32_0 : i32, i32
  }
  func.func @transform_7(%arg0: i32) -> (i32, i32) {
    %c0_i32 = arith.constant 0 : i32
    %c0_i32_0 = arith.constant 0 : i32
    %c0_i32_1 = arith.constant 0 : i32
    return %c0_i32, %c0_i32_0 : i32, i32
  }
  func.func @transform_8(%arg0: i32) -> (i32, i32) {
    %c0_i32 = arith.constant 0 : i32
    %c0_i32_0 = arith.constant 0 : i32
    return %arg0, %c0_i32 : i32, i32
  }
}

</mosaic_0001>

<llo_original>
// kernel: ncsn_mlpv2_forward.1
$region0: #{ncsn_mlpv2_forward.1}
  #allocation0 [shape = 'u32[]', space=smem, size = 0x4, offset = 0x4, fixed_abs, tag = 'smem constant byte address 0x4 - core index']
  #allocation1 [shape = 'u32[72,128]{1,0:T(1,128)}', space=vmem, size = 0x9000, scoped, tag = 'internal scratch']
  %s0 = inlined_call_operand.vmem [shape: f32[256,1], index: 0, kind: input, shape index: {}]
  %s1 = inlined_call_operand.vmem [shape: f32[256,64], index: 1, kind: input, shape index: {}]
  %s2 = inlined_call_operand.vmem [shape: bf16[128,128], index: 2, kind: input, shape index: {}]
  %s3 = inlined_call_operand.vmem [shape: bf16[64,128], index: 3, kind: input, shape index: {}]
  %s4 = inlined_call_operand.vmem [shape: bf16[2,128,128], index: 4, kind: input, shape index: {}]
  %s5 = inlined_call_operand.vmem [shape: bf16[128,384], index: 5, kind: input, shape index: {}]
  %s6 = inlined_call_operand.vmem [shape: f32[128,8], index: 6, kind: input, shape index: {}]
  %s7 = inlined_call_operand.vmem [shape: f32[5,128], index: 7, kind: input, shape index: {}]
  %s8 = inlined_call_operand.vmem [shape: f32[256,8], index: 8, kind: output, shape index: {}]
  %s9 = sld [smem:[#allocation0]]
  $region65: #{ncsn_mlpv2_forward.1} parent=0
    _
  %s11 = ssub.s32 1, %s9
  %s12 = scalar_select 0, %s11, %s9
  loop: start=0, step=1, limit=4
  $region2: #{ncsn_mlpv2_forward.1} parent=0 // loop_pre_header
    _
  $region3: #{ncsn_mlpv2_forward.1} parent=0 // loop_header
    %s14 = sphi 0, %s18
    %p15 = scmp.ge.s32.totalorder %s14, 4
    %s24 = sphi 0, %s26
    %s27 = sphi 0, %s24
    %s28 = sphi 0, %s27
    %s44 = sphi 0, %s28
    %s50 = sphi 0, %s52
    %s53 = sphi 0, %s50
    %s54 = sphi 0, %s53
    %s70 = sphi 0, %s54
    %s74 = sphi 0, %s74
    %s76 = sphi 0, %s74
    %s77 = sphi 0, %s76
    %s91 = sphi 0, %s77
    %s95 = sphi 0, %s95
    %s97 = sphi 0, %s95
    %s98 = sphi 0, %s97
    %s112 = sphi 0, %s98
    %s116 = sphi 0, %s116
    %s118 = sphi 0, %s116
    %s119 = sphi 0, %s118
    %s133 = sphi 0, %s119
    %s137 = sphi 0, %s137
    %s139 = sphi 0, %s137
    %s140 = sphi 0, %s139
    %s154 = sphi 0, %s140
    %s158 = sphi 0, %s158
    %s160 = sphi 0, %s158
    %s161 = sphi 0, %s160
    %s175 = sphi 0, %s161
    %s179 = sphi 0, %s179
    %s181 = sphi 0, %s179
    %s182 = sphi 0, %s181
    %s196 = sphi 0, %s182
    %s202 = sphi 0, %s204
    %s205 = sphi 0, %s202
    %s206 = sphi 0, %s205
    %s222 = sphi 0, %s206
  $region4: #{ncsn_mlpv2_forward.1} parent=0 // loop_header_branch
    %17 = sbr.rel (%p15) target = $region8
  $region5: #{ncsn_mlpv2_forward.1} parent=0 // loop_body
    %s19 = ssub.s32 %s14, 1
    %s20 = ssub.s32 %s14, 2
    %s21 = sadd.s32 %s14, 1
    %s22 = ssub.s32 %s14, %s21
    %p23 = scmp.eq.s32.totalorder %s22, 0
    %s25 = sadd.s32 %s24, 1
    %s26 = scalar_select %p23, %s24, %s25
    %p29 = pneg %p23
    %p30 = scmp.eq.s32.totalorder %s14, 1
    %p31 = por %p29, %p30
    %p32 = scmp.ne.s32.totalorder %s24, %s27
    %p33 = scmp.eq.s32.totalorder %s14, 0
    %p34 = por %p32, %p33
    %p35 = scmp.ne.s32.totalorder %s24, %s27
    %p36 = scmp.eq.s32.totalorder %s19, 1
    %p37 = por %p35, %p36
    %p38 = scmp.ne.s32.totalorder %s27, %s28
    %p39 = scmp.eq.s32.totalorder %s19, 0
    %p40 = por %p38, %p39
    %p41 = scmp.ne.s32.totalorder %s27, %s28
    %p42 = scmp.eq.s32.totalorder %s20, 1
    %p43 = por %p41, %p42
    %p45 = scmp.ne.s32.totalorder %s28, %s44
    %p46 = scmp.eq.s32.totalorder %s20, 0
    %p47 = por %p45, %p46
    %s48 = ssub.s32 %s14, %s21
    %p49 = scmp.eq.s32.totalorder %s48, 0
    %s51 = sadd.s32 %s50, 1
    %s52 = scalar_select %p49, %s50, %s51
    %p55 = pneg %p49
    %p56 = scmp.eq.s32.totalorder %s14, 1
    %p57 = por %p55, %p56
    %p58 = scmp.ne.s32.totalorder %s50, %s53
    %p59 = scmp.eq.s32.totalorder %s14, 0
    %p60 = por %p58, %p59
    %p61 = scmp.ne.s32.totalorder %s50, %s53
    %p62 = scmp.eq.s32.totalorder %s19, 1
    %p63 = por %p61, %p62
    %p64 = scmp.ne.s32.totalorder %s53, %s54
    %p65 = scmp.eq.s32.totalorder %s19, 0
    %p66 = por %p64, %p65
    %p67 = scmp.ne.s32.totalorder %s53, %s54
    %p68 = scmp.eq.s32.totalorder %s20, 1
    %p69 = por %p67, %p68
    %p71 = scmp.ne.s32.totalorder %s54, %s70
    %p72 = scmp.eq.s32.totalorder %s20, 0
    %p73 = por %p71, %p72
    %s75 = sadd.s32 %s74, 1
    %p78 = scmp.eq.s32.totalorder %s14, 1
    %p79 = scmp.ne.s32.totalorder %s74, %s76
    %p80 = scmp.eq.s32.totalorder %s14, 0
    %p81 = por %p79, %p80
    %p82 = scmp.ne.s32.totalorder %s74, %s76
    %p83 = scmp.eq.s32.totalorder %s19, 1
    %p84 = por %p82, %p83
    %p85 = scmp.ne.s32.totalorder %s76, %s77
    %p86 = scmp.eq.s32.totalorder %s19, 0
    %p87 = por %p85, %p86
    %p88 = scmp.ne.s32.totalorder %s76, %s77
    %p89 = scmp.eq.s32.totalorder %s20, 1
    %p90 = por %p88, %p89
    %p92 = scmp.ne.s32.totalorder %s77, %s91
    %p93 = scmp.eq.s32.totalorder %s20, 0
    %p94 = por %p92, %p93
    %s96 = sadd.s32 %s95, 1
    %p99 = scmp.eq.s32.totalorder %s14, 1
    %p100 = scmp.ne.s32.totalorder %s95, %s97
    %p101 = scmp.eq.s32.totalorder %s14, 0
    %p102 = por %p100, %p101
    %p103 = scmp.ne.s32.totalorder %s95, %s97
    %p104 = scmp.eq.s32.totalorder %s19, 1
    %p105 = por %p103, %p104
    %p106 = scmp.ne.s32.totalorder %s97, %s98
    %p107 = scmp.eq.s32.totalorder %s19, 0
    %p108 = por %p106, %p107
    %p109 = scmp.ne.s32.totalorder %s97, %s98
    %p110 = scmp.eq.s32.totalorder %s20, 1
    %p111 = por %p109, %p110
    %p113 = scmp.ne.s32.totalorder %s98, %s112
    %p114 = scmp.eq.s32.totalorder %s20, 0
    %p115 = por %p113, %p114
    %s117 = sadd.s32 %s116, 1
    %p120 = scmp.eq.s32.totalorder %s14, 1
    %p121 = scmp.ne.s32.totalorder %s116, %s118
    %p122 = scmp.eq.s32.totalorder %s14, 0
    %p123 = por %p121, %p122
    %p124 = scmp.ne.s32.totalorder %s116, %s118
    %p125 = scmp.eq.s32.totalorder %s19, 1
    %p126 = por %p124, %p125
    %p127 = scmp.ne.s32.totalorder %s118, %s119
    %p128 = scmp.eq.s32.totalorder %s19, 0
    %p129 = por %p127, %p128
    %p130 = scmp.ne.s32.totalorder %s118, %s119
    %p131 = scmp.eq.s32.totalorder %s20, 1
    %p132 = por %p130, %p131
    %p134 = scmp.ne.s32.totalorder %s119, %s133
    %p135 = scmp.eq.s32.totalorder %s20, 0
    %p136 = por %p134, %p135
    %s138 = sadd.s32 %s137, 1
    %p141 = scmp.eq.s32.totalorder %s14, 1
    %p142 = scmp.ne.s32.totalorder %s137, %s139
    %p143 = scmp.eq.s32.totalorder %s14, 0
    %p144 = por %p142, %p143
    %p145 = scmp.ne.s32.totalorder %s137, %s139
    %p146 = scmp.eq.s32.totalorder %s19, 1
    %p147 = por %p145, %p146
    %p148 = scmp.ne.s32.totalorder %s139, %s140
    %p149 = scmp.eq.s32.totalorder %s19, 0
    %p150 = por %p148, %p149
    %p151 = scmp.ne.s32.totalorder %s139, %s140
    %p152 = scmp.eq.s32.totalorder %s20, 1
    %p153 = por %p151, %p152
    %p155 = scmp.ne.s32.totalorder %s140, %s154
    %p156 = scmp.eq.s32.totalorder %s20, 0
    %p157 = por %p155, %p156
    %s159 = sadd.s32 %s158, 1
    %p162 = scmp.eq.s32.totalorder %s14, 1
    %p163 = scmp.ne.s32.totalorder %s158, %s160
    %p164 = scmp.eq.s32.totalorder %s14, 0
    %p165 = por %p163, %p164
    %p166 = scmp.ne.s32.totalorder %s158, %s160
    %p167 = scmp.eq.s32.totalorder %s19, 1
    %p168 = por %p166, %p167
    %p169 = scmp.ne.s32.totalorder %s160, %s161
    %p170 = scmp.eq.s32.totalorder %s19, 0
    %p171 = por %p169, %p170
    %p172 = scmp.ne.s32.totalorder %s160, %s161
    %p173 = scmp.eq.s32.totalorder %s20, 1
    %p174 = por %p172, %p173
    %p176 = scmp.ne.s32.totalorder %s161, %s175
    %p177 = scmp.eq.s32.totalorder %s20, 0
    %p178 = por %p176, %p177
    %s180 = sadd.s32 %s179, 1
    %p183 = scmp.eq.s32.totalorder %s14, 1
    %p184 = scmp.ne.s32.totalorder %s179, %s181
    %p185 = scmp.eq.s32.totalorder %s14, 0
    %p186 = por %p184, %p185
    %p187 = scmp.ne.s32.totalorder %s179, %s181
    %p188 = scmp.eq.s32.totalorder %s19, 1
    %p189 = por %p187, %p188
    %p190 = scmp.ne.s32.totalorder %s181, %s182
    %p191 = scmp.eq.s32.totalorder %s19, 0
    %p192 = por %p190, %p191
    %p193 = scmp.ne.s32.totalorder %s181, %s182
    %p194 = scmp.eq.s32.totalorder %s20, 1
    %p195 = por %p193, %p194
    %p197 = scmp.ne.s32.totalorder %s182, %s196
    %p198 = scmp.eq.s32.totalorder %s20, 0
    %p199 = por %p197, %p198
    %s200 = ssub.s32 %s14, %s21
    %p201 = scmp.eq.s32.totalorder %s200, 0
    %s203 = sadd.s32 %s202, 1
    %s204 = scalar_select %p201, %s202, %s203
    %p207 = pneg %p201
    %p208 = scmp.eq.s32.totalorder %s14, 1
    %p209 = por %p207, %p208
    %p210 = scmp.ne.s32.totalorder %s202, %s205
    %p211 = scmp.eq.s32.totalorder %s14, 0
    %p212 = por %p210, %p211
    %p213 = scmp.ne.s32.totalorder %s202, %s205
    %p214 = scmp.eq.s32.totalorder %s19, 1
    %p215 = por %p213, %p214
    %p216 = scmp.ne.s32.totalorder %s205, %s206
    %p217 = scmp.eq.s32.totalorder %s19, 0
    %p218 = por %p216, %p217
    %p219 = scmp.ne.s32.totalorder %s205, %s206
    %p220 = scmp.eq.s32.totalorder %s20, 1
    %p221 = por %p219, %p220
    %p223 = scmp.ne.s32.totalorder %s206, %s222
    %p224 = scmp.eq.s32.totalorder %s20, 0
    %p225 = por %p223, %p224
    %p226 = scmp.le.s32.totalorder 1, %s14
    %p227 = scmp.lt.s32.totalorder %s14, 3
    %p228 = pnand %p226, %p227
    %p229 = pneg %p228
    // Predicated region
    $region9: #{ncsn_mlpv2_forward.1} parent=5 // pred_check
      _
    $region10: #{ncsn_mlpv2_forward.1} parent=5 // pred_check_branch
      %231 = sbr.rel (%p228) target = $region12
    $region11: #{ncsn_mlpv2_forward.1} parent=5 // pred_region
      %s232 = ssub.s32 %s14, 1
      // Predicated region
      $region13: #{ncsn_mlpv2_forward.1} parent=11 // pred_check
        %p233 = pneg %p87
      $region14: #{ncsn_mlpv2_forward.1} parent=11 // pred_check_branch
        %235 = sbr.rel (%p233) target = $region16
      $region15: #{ncsn_mlpv2_forward.1} parent=11 // pred_region
        _
      $region16: #{ncsn_mlpv2_forward.1} parent=11 // pred_fallthru
        _
      // Predicated region
      $region17: #{ncsn_mlpv2_forward.1} parent=11 // pred_check
        %p236 = pneg %p108
      $region18: #{ncsn_mlpv2_forward.1} parent=11 // pred_check_branch
        %238 = sbr.rel (%p236) target = $region20
      $region19: #{ncsn_mlpv2_forward.1} parent=11 // pred_region
        _
      $region20: #{ncsn_mlpv2_forward.1} parent=11 // pred_fallthru
        _
      // Predicated region
      $region21: #{ncsn_mlpv2_forward.1} parent=11 // pred_check
        %p239 = pneg %p129
      $region22: #{ncsn_mlpv2_forward.1} parent=11 // pred_check_branch
        %241 = sbr.rel (%p239) target = $region24
      $region23: #{ncsn_mlpv2_forward.1} parent=11 // pred_region
        _
      $region24: #{ncsn_mlpv2_forward.1} parent=11 // pred_fallthru
        _
      // Predicated region
      $region25: #{ncsn_mlpv2_forward.1} parent=11 // pred_check
        %p242 = pneg %p150
      $region26: #{ncsn_mlpv2_forward.1} parent=11 // pred_check_branch
        %244 = sbr.rel (%p242) target = $region28
      $region27: #{ncsn_mlpv2_forward.1} parent=11 // pred_region
        _
      $region28: #{ncsn_mlpv2_forward.1} parent=11 // pred_fallthru
        _
      // Predicated region
      $region29: #{ncsn_mlpv2_forward.1} parent=11 // pred_check
        %p245 = pneg %p171
      $region30: #{ncsn_mlpv2_forward.1} parent=11 // pred_check_branch
        %247 = sbr.rel (%p245) target = $region32
      $region31: #{ncsn_mlpv2_forward.1} parent=11 // pred_region
        _
      $region32: #{ncsn_mlpv2_forward.1} parent=11 // pred_fallthru
        _
      // Predicated region
      $region33: #{ncsn_mlpv2_forward.1} parent=11 // pred_check
        %p248 = pneg %p192
      $region34: #{ncsn_mlpv2_forward.1} parent=11 // pred_check_branch
        %250 = sbr.rel (%p248) target = $region36
      $region35: #{ncsn_mlpv2_forward.1} parent=11 // pred_region
        _
      $region36: #{ncsn_mlpv2_forward.1} parent=11 // pred_fallthru
        _
    $region12: #{ncsn_mlpv2_forward.1} parent=5 // pred_fallthru
      _
    %p251 = scmp.lt.s32.totalorder %s14, 2
    // Predicated region
    $region37: #{ncsn_mlpv2_forward.1} parent=5 // pred_check
      %p252 = pneg %p251
    $region38: #{ncsn_mlpv2_forward.1} parent=5 // pred_check_branch
      %254 = sbr.rel (%p252) target = $region40
    $region39: #{ncsn_mlpv2_forward.1} parent=5 // pred_region
      // Predicated region
      $region41: #{ncsn_mlpv2_forward.1} parent=39 // pred_check
        %p255 = pneg %p34
      $region42: #{ncsn_mlpv2_forward.1} parent=39 // pred_check_branch
        %257 = sbr.rel (%p255) target = $region44
      $region43: #{ncsn_mlpv2_forward.1} parent=39 // pred_region
        %s258 = smul.u32 16, %s14
        %p259 = scmp.lt.s32.totalorder %s258, 31
        %s260 = scalar_select %p259, %s258, 31
        %s261 = smul.addr %s260, 8
        %s262 = scalar_lea.vmem %s0, %s261
        %s263 = smul.u32 16, %s14
      $region44: #{ncsn_mlpv2_forward.1} parent=39 // pred_fallthru
        _
      // Predicated region
      $region45: #{ncsn_mlpv2_forward.1} parent=39 // pred_check
        %p264 = pneg %p60
      $region46: #{ncsn_mlpv2_forward.1} parent=39 // pred_check_branch
        %266 = sbr.rel (%p264) target = $region48
      $region47: #{ncsn_mlpv2_forward.1} parent=39 // pred_region
        %s267 = smul.u32 16, %s14
        %p268 = scmp.lt.s32.totalorder %s267, 31
        %s269 = scalar_select %p268, %s267, 31
        %s270 = smul.addr %s269, 8
        %s271 = scalar_lea.vmem %s1, %s270
        %s272 = smul.u32 16, %s14
      $region48: #{ncsn_mlpv2_forward.1} parent=39 // pred_fallthru
        _
    $region40: #{ncsn_mlpv2_forward.1} parent=5 // pred_fallthru
      _
    %p273 = scmp.le.s32.totalorder 1, %s14
    %p274 = scmp.lt.s32.totalorder %s14, 3
    %p275 = pnand %p273, %p274
    %p276 = pneg %p275
    // Predicated region
    $region49: #{ncsn_mlpv2_forward.1} parent=5 // pred_check
      _
    $region50: #{ncsn_mlpv2_forward.1} parent=5 // pred_check_branch
      %278 = sbr.rel (%p275) target = $region52
    $region51: #{ncsn_mlpv2_forward.1} parent=5 // pred_region
      %s279 = ssub.s32 %s14, 1
      %s280 = smul.u32 16, %s19
      %p281 = scmp.lt.s32.totalorder %s280, 31
      %s282 = scalar_select %p281, %s280, 31
      %s283 = smul.addr %s282, 8
      %s284 = scalar_lea.vmem %s0, %s283
      %p285 = pneg %p40
      %p286 = pneg %p37
      %s287 = smul.u32 16, %s19
      %p288 = scmp.lt.s32.totalorder %s287, 31
      %s289 = scalar_select %p288, %s287, 31
      %s290 = smul.addr %s289, 8
      %s291 = scalar_lea.vmem %s1, %s290
      %p292 = pneg %p66
      %p293 = pneg %p63
      %p294 = pneg %p87
      %p295 = pneg %p84
      %p296 = pneg %p108
      %p297 = pneg %p105
      %p298 = pneg %p129
      %p299 = pneg %p126
      %p300 = pneg %p150
      %p301 = pneg %p147
      %p302 = pneg %p171
      %p303 = pneg %p168
      %p304 = pneg %p192
      %p305 = pneg %p189
      %p306 = pneg %p218
      %p307 = pneg %p215
      %s308 = smul.u32 16, %s19
      %p309 = scmp.lt.s32.totalorder %s308, 31
      %s310 = scalar_select %p309, %s308, 31
      %s311 = smul.addr %s310, 8
      %s312 = scalar_lea.vmem %s8, %s311
      %s313 = smul.u32 16, %s19
      %p314 = scmp.lt.s32.totalorder %s313, 31
      %s315 = scalar_select %p314, %s313, 31
      %s316 = smul.addr %s315, 8
      %s317 = scalar_lea.vmem %s0, %s316
      %s318 = smul.u32 16, %s19
      %s319 = smul.u32 16, %s19
      %p320 = scmp.lt.s32.totalorder %s319, 31
      %s321 = scalar_select %p320, %s319, 31
      %s322 = smul.addr %s321, 8
      %s323 = scalar_lea.vmem %s1, %s322
      %s324 = smul.u32 16, %s19
      %s325 = smul.u32 16, %s19
      %p326 = scmp.lt.s32.totalorder %s325, 31
      %s327 = scalar_select %p326, %s325, 31
      %s328 = smul.addr %s327, 8
      %s329 = scalar_lea.vmem %s8, %s328
      %s330 = smul.u32 16, %s19
      %v332 = vlaneseq
      %v333 = vand.u32 %v332, 127
      %vm334 = vcmp.lt.s32.totalorder %v333, 64
      %v335 = vsub.s32 %v333, 64
      %v336 = vsel %vm334, %v333, %v335
      %v337 = vcvt.s32.f32 %v336
      %v338 = vmul.f32 %v337, -0.14619587
      %v339 = vmul.f32 %v338, 1.442695
      %v340 = vpow.pop %v339
      %v341 = vld [vmem:[%s317] sm:$0xff]
      %v342 = vld [vmem:[%s317 + $0x8] sm:$0xff]
      %v343 = vld [vmem:[%s317 + $0x10] sm:$0xff]
      %v344 = vld [vmem:[%s317 + $0x18] sm:$0xff]
      %v345 = vld [vmem:[%s317 + $0x20] sm:$0xff]
      %v346 = vld [vmem:[%s317 + $0x28] sm:$0xff]
      %v347 = vld [vmem:[%s317 + $0x30] sm:$0xff]
      %v348 = vld [vmem:[%s317 + $0x38] sm:$0xff]
      %v349 = vld [vmem:[%s317 + $0x40] sm:$0xff]
      %v350 = vld [vmem:[%s317 + $0x48] sm:$0xff]
      %v351 = vld [vmem:[%s317 + $0x50] sm:$0xff]
      %v352 = vld [vmem:[%s317 + $0x58] sm:$0xff]
      %v353 = vld [vmem:[%s317 + $0x60] sm:$0xff]
      %v354 = vld [vmem:[%s317 + $0x68] sm:$0xff]
      %v355 = vld [vmem:[%s317 + $0x70] sm:$0xff]
      %v356 = vld [vmem:[%s317 + $0x78] sm:$0xff]
      %358 = vset.pattern.permute.xlu0 0
      %359 = vperm.xlu0 %358, %v341
      %v360 = vpop.permute.xlu0 %359
      %363 = vset.pattern.permute.xlu0 0
      %364 = vperm.xlu0 %363, %v342
      %v365 = vpop.permute.xlu0 %364
      %368 = vset.pattern.permute.xlu0 0
      %369 = vperm.xlu0 %368, %v343
      %v370 = vpop.permute.xlu0 %369
      %373 = vset.pattern.permute.xlu0 0
      %374 = vperm.xlu0 %373, %v344
      %v375 = vpop.permute.xlu0 %374
      %378 = vset.pattern.permute.xlu0 0
      %379 = vperm.xlu0 %378, %v345
      %v380 = vpop.permute.xlu0 %379
      %383 = vset.pattern.permute.xlu0 0
      %384 = vperm.xlu0 %383, %v346
      %v385 = vpop.permute.xlu0 %384
      %388 = vset.pattern.permute.xlu0 0
      %389 = vperm.xlu0 %388, %v347
      %v390 = vpop.permute.xlu0 %389
      %393 = vset.pattern.permute.xlu0 0
      %394 = vperm.xlu0 %393, %v348
      %v395 = vpop.permute.xlu0 %394
      %398 = vset.pattern.permute.xlu0 0
      %399 = vperm.xlu0 %398, %v349
      %v400 = vpop.permute.xlu0 %399
      %403 = vset.pattern.permute.xlu0 0
      %404 = vperm.xlu0 %403, %v350
      %v405 = vpop.permute.xlu0 %404
      %408 = vset.pattern.permute.xlu0 0
      %409 = vperm.xlu0 %408, %v351
      %v410 = vpop.permute.xlu0 %409
      %413 = vset.pattern.permute.xlu0 0
      %414 = vperm.xlu0 %413, %v352
      %v415 = vpop.permute.xlu0 %414
      %418 = vset.pattern.permute.xlu0 0
      %419 = vperm.xlu0 %418, %v353
      %v420 = vpop.permute.xlu0 %419
      %423 = vset.pattern.permute.xlu0 0
      %424 = vperm.xlu0 %423, %v354
      %v425 = vpop.permute.xlu0 %424
      %428 = vset.pattern.permute.xlu0 0
      %429 = vperm.xlu0 %428, %v355
      %v430 = vpop.permute.xlu0 %429
      %433 = vset.pattern.permute.xlu0 0
      %434 = vperm.xlu0 %433, %v356
      %v435 = vpop.permute.xlu0 %434
      %v437 = vmul.f32 %v360, %v340
      %v438 = vmul.f32 %v365, %v340
      %v439 = vmul.f32 %v370, %v340
      %v440 = vmul.f32 %v375, %v340
      %v441 = vmul.f32 %v380, %v340
      %v442 = vmul.f32 %v385, %v340
      %v443 = vmul.f32 %v390, %v340
      %v444 = vmul.f32 %v395, %v340
      %v445 = vmul.f32 %v400, %v340
      %v446 = vmul.f32 %v405, %v340
      %v447 = vmul.f32 %v410, %v340
      %v448 = vmul.f32 %v415, %v340
      %v449 = vmul.f32 %v420, %v340
      %v450 = vmul.f32 %v425, %v340
      %v451 = vmul.f32 %v430, %v340
      %v452 = vmul.f32 %v435, %v340
      %v453 = vand.u32 2147483647, %v437
      %vm454 = vcmp.le.f32.partialorder %v453, 0.7853982
      %vm455 = vcmp.lt.s32.totalorder %v437, 0
      %v456 = vand.u32 %v437, 2139095040
      %v457 = vshrl.u32 %v456, 23
      %v458 = vsub.s32 %v457, 127
      %v459 = vand.u32 2147483647, %v437
      %v460 = vand.u32 %v459, 8388607
      %v461 = vor.u32 %v460, 8388608
      %v462 = vsub.s32 0, %v461
      %v463 = vadd.s32 %v458, 1
      %vm464 = vcmp.gt.s32.totalorder %v463, 0
      %v465 = vsel %vm464, %v463, 0
      %v466 = vshrl.u32 %v465, 5
      %v467 = vand.u32 %v465, 31
      %v468 = vsub.s32 32, %v467
      %v469 = vshrl.u32 683565275, %v468
      %v470 = vshll.u32 683565275, %v467
      %v471 = vshrl.u32 2475754826, %v468
      %v472 = vor.u32 %v470, %v471
      %v473 = vshll.u32 2475754826, %v467
      %v474 = vshrl.u32 2131351028, %v468
      %v475 = vor.u32 %v473, %v474
      %v476 = vshll.u32 2131351028, %v467
      %v477 = vshrl.u32 2102212464, %v468
      %v478 = vor.u32 %v476, %v477
      %v479 = vshll.u32 2102212464, %v467
      %v480 = vshrl.u32 920167782, %v468
      %v481 = vor.u32 %v479, %v480
      %v482 = vshll.u32 920167782, %v467
      %v483 = vshrl.u32 1326507024, %v468
      %v484 = vor.u32 %v482, %v483
      %vm485 = vcmp.lt.s32.totalorder %v466, 1
      %vm486 = vcmp.lt.s32.totalorder %v466, 2
      %vm487 = vcmp.lt.s32.totalorder %v466, 3
      %vm488 = vcmp.lt.s32.totalorder %v466, 4
      %v489 = vsel %vm485, %v469, %v472
      %v490 = vsel %vm488, %v478, 2102212464
      %v491 = vsel %vm487, %v475, %v490
      %v492 = vsel %vm486, %v489, %v491
      %v493 = vsel %vm485, %v472, %v475
      %v494 = vsel %vm488, %v481, 920167782
      %v495 = vsel %vm487, %v478, %v494
      %v496 = vsel %vm486, %v493, %v495
      %v497 = vsel %vm485, %v475, %v478
      %v498 = vsel %vm488, %v484, 1326507024
      %v499 = vsel %vm487, %v481, %v498
      %v500 = vsel %vm486, %v497, %v499
      %v501 = vshll.u32 %v461, 8
      %v502 = vand.u32 %v501, 65535
      %v503 = vshrl.u32 %v501, 16
      %v504 = vand.u32 %v500, 65535
      %v505 = vshrl.u32 %v500, 16
      %v506 = vmul.u32 %v502, %v504
      %v507 = vmul.u32 %v502, %v505
      %v508 = vmul.u32 %v503, %v504
      %v509 = vmul.u32 %v503, %v505
      %v510 = vshll.u32 %v507, 16
      %v511 = vshrl.u32 %v507, 16
      %v512 = vshll.u32 %v508, 16
      %v513 = vshrl.u32 %v508, 16
      %vm514 = vc.u32 %v506, %v510
      %v515 = vsel %vm514, 1, 0
      %v516 = vadd.s32 %v506, %v510
      %v517 = vadd.s32 %v509, %v515
      %vm518 = vc.u32 %v516, %v512
      %v519 = vsel %vm518, 1, 0
      %v520 = vadd.s32 %v516, %v512
      %v521 = vadd.s32 %v517, %v519
      %v522 = vadd.s32 %v521, %v511
      %v523 = vadd.s32 %v522, %v513
      %v524 = vand.u32 %v501, 65535
      %v525 = vshrl.u32 %v501, 16
      %v526 = vand.u32 %v496, 65535
      %v527 = vshrl.u32 %v496, 16
      %v528 = vmul.u32 %v524, %v526
      %v529 = vmul.u32 %v524, %v527
      %v530 = vmul.u32 %v525, %v526
      %v531 = vmul.u32 %v525, %v527
      %v532 = vshll.u32 %v529, 16
      %v533 = vshrl.u32 %v529, 16
      %v534 = vshll.u32 %v530, 16
      %v535 = vshrl.u32 %v530, 16
      %vm536 = vc.u32 %v528, %v532
      %v537 = vsel %vm536, 1, 0
      %v538 = vadd.s32 %v528, %v532
      %v539 = vadd.s32 %v531, %v537
      %vm540 = vc.u32 %v538, %v534
      %v541 = vsel %vm540, 1, 0
      %v542 = vadd.s32 %v538, %v534
      %v543 = vadd.s32 %v539, %v541
      %v544 = vadd.s32 %v543, %v533
      %v545 = vadd.s32 %v544, %v535
      %v546 = vmul.u32 %v501, %v492
      %v547 = vadd.s32 %v523, %v542
      %vm548 = vc.u32 %v523, %v542
      %v549 = vadd.s32 %v545, 1
      %v550 = vsel %vm548, %v549, %v545
      %v551 = vadd.s32 %v546, %v550
      %v552 = vadd.s32 %v551, 536870912
      %v553 = vshrl.u32 %v552, 30
      %v554 = vshll.u32 %v553, 30
      %v555 = vsub.s32 %v551, %v554
      %vm556 = vcmp.lt.s32.totalorder %v555, 0
      %v557 = vsub.s32 0, %v555
      %v558 = vsel %vm556, %v557, %v555
      %v559 = vclz %v558
      %v560 = vsub.s32 %v559, 2
      %vm561 = vcmp.gt.s32.totalorder 0, %v560
      %v562 = vsel %vm561, 0, %v560
      %v563 = vsub.s32 32, %v562
      %v564 = vshll.u32 %v555, %v562
      %v565 = vshrl.u32 %v547, %v563
      %v566 = vor.u32 %v564, %v565
      %v567 = vsub.s32 4294967266, %v562
      %v568 = vadd.s32 %v567, 127
      %v569 = vshll.u32 %v568, 23
      %v570 = vor.u32 4788187, %v569
      %v571 = vand.u32 2147483647, %v570
      %v573 = vcvt.s32.f32 %v566
      %v574 = vmul.f32 %v573, %v571
      %v575 = vxor.u32 %v574, 2147483648
      %v576 = vsel %vm455, %v575, %v574
      %v577 = vsub.s32 4, %v553
      %v578 = vsel %vm455, %v577, %v553
      %v579 = vsel %vm454, %v437, %v576
      %v580 = vsel %vm454, 0, %v578
      %v581 = vmul.f32 %v579, %v579
      %v582 = vmul.f32 %v581, -0.001358992
      %v583 = vadd.f32 %v582, 0.041655596
      %v584 = vmul.f32 %v581, %v583
      %v585 = vadd.f32 %v584, -0.4999988
      %v586 = vmul.f32 %v581, %v585
      %v587 = vadd.f32 1.0, %v586
      %v588 = vmul.f32 %v579, %v579
      %v589 = vmul.f32 %v588, -0.00019511016
      %v590 = vadd.f32 %v589, 0.008332121
      %v591 = vmul.f32 %v588, %v590
      %v592 = vadd.f32 %v591, -0.16666654
      %v593 = vmul.f32 %v588, %v592
      %v594 = vadd.f32 %v593, 1.0
      %v595 = vmul.f32 %v594, %v579
      %vm596 = vweird.f32 %v437
      %v597 = vadd.s32 %v580, 3
      %v598 = vand.u32 %v597, 3
      %vm599 = vcmp.lt.s32.totalorder %v598, 2
      %vm600 = vcmp.eq.s32.totalorder %v598, 0
      %v601 = vxor.u32 %v595, 2147483648
      %v602 = vsel %vm600, %v587, %v601
      %vm603 = vcmp.eq.s32.totalorder %v598, 2
      %v604 = vxor.u32 %v587, 2147483648
      %v605 = vsel %vm603, %v604, %v595
      %v606 = vsel %vm599, %v602, %v605
      %v607 = vsel %vm596, nan, %v606
      %v608 = vand.u32 2147483647, %v438
      %vm609 = vcmp.le.f32.partialorder %v608, 0.7853982
      %vm610 = vcmp.lt.s32.totalorder %v438, 0
      %v611 = vand.u32 %v438, 2139095040
      %v612 = vshrl.u32 %v611, 23
      %v613 = vsub.s32 %v612, 127
      %v614 = vand.u32 2147483647, %v438
      %v615 = vand.u32 %v614, 8388607
      %v616 = vor.u32 %v615, 8388608
      %v617 = vsub.s32 0, %v616
      %v618 = vadd.s32 %v613, 1
      %vm619 = vcmp.gt.s32.totalorder %v618, 0
      %v620 = vsel %vm619, %v618, 0
      %v621 = vshrl.u32 %v620, 5
      %v622 = vand.u32 %v620, 31
      %v623 = vsub.s32 32, %v622
      %v624 = vshrl.u32 683565275, %v623
      %v625 = vshll.u32 683565275, %v622
      %v626 = vshrl.u32 2475754826, %v623
      %v627 = vor.u32 %v625, %v626
      %v628 = vshll.u32 2475754826, %v622
      %v629 = vshrl.u32 2131351028, %v623
      %v630 = vor.u32 %v628, %v629
      %v631 = vshll.u32 2131351028, %v622
      %v632 = vshrl.u32 2102212464, %v623
      %v633 = vor.u32 %v631, %v632
      %v634 = vshll.u32 2102212464, %v622
      %v635 = vshrl.u32 920167782, %v623
      %v636 = vor.u32 %v634, %v635
      %v637 = vshll.u32 920167782, %v622
      %v638 = vshrl.u32 1326507024, %v623
      %v639 = vor.u32 %v637, %v638
      %vm640 = vcmp.lt.s32.totalorder %v621, 1
      %vm641 = vcmp.lt.s32.totalorder %v621, 2
      %vm642 = vcmp.lt.s32.totalorder %v621, 3
      %vm643 = vcmp.lt.s32.totalorder %v621, 4
      %v644 = vsel %vm640, %v624, %v627
      %v645 = vsel %vm643, %v633, 2102212464
      %v646 = vsel %vm642, %v630, %v645
      %v647 = vsel %vm641, %v644, %v646
      %v648 = vsel %vm640, %v627, %v630
      %v649 = vsel %vm643, %v636, 920167782
      %v650 = vsel %vm642, %v633, %v649
      %v651 = vsel %vm641, %v648, %v650
      %v652 = vsel %vm640, %v630, %v633
      %v653 = vsel %vm643, %v639, 1326507024
      %v654 = vsel %vm642, %v636, %v653
      %v655 = vsel %vm641, %v652, %v654
      %v656 = vshll.u32 %v616, 8
      %v657 = vand.u32 %v656, 65535
      %v658 = vshrl.u32 %v656, 16
      %v659 = vand.u32 %v655, 65535
      %v660 = vshrl.u32 %v655, 16
      %v661 = vmul.u32 %v657, %v659
      %v662 = vmul.u32 %v657, %v660
      %v663 = vmul.u32 %v658, %v659
      %v664 = vmul.u32 %v658, %v660
      %v665 = vshll.u32 %v662, 16
      %v666 = vshrl.u32 %v662, 16
      %v667 = vshll.u32 %v663, 16
      %v668 = vshrl.u32 %v663, 16
      %vm669 = vc.u32 %v661, %v665
      %v670 = vsel %vm669, 1, 0
      %v671 = vadd.s32 %v661, %v665
      %v672 = vadd.s32 %v664, %v670
      %vm673 = vc.u32 %v671, %v667
      %v674 = vsel %vm673, 1, 0
      %v675 = vadd.s32 %v671, %v667
      %v676 = vadd.s32 %v672, %v674
      %v677 = vadd.s32 %v676, %v666
      %v678 = vadd.s32 %v677, %v668
      %v679 = vand.u32 %v656, 65535
      %v680 = vshrl.u32 %v656, 16
      %v681 = vand.u32 %v651, 65535
      %v682 = vshrl.u32 %v651, 16
      %v683 = vmul.u32 %v679, %v681
      %v684 = vmul.u32 %v679, %v682
      %v685 = vmul.u32 %v680, %v681
      %v686 = vmul.u32 %v680, %v682
      %v687 = vshll.u32 %v684, 16
      %v688 = vshrl.u32 %v684, 16
      %v689 = vshll.u32 %v685, 16
      %v690 = vshrl.u32 %v685, 16
      %vm691 = vc.u32 %v683, %v687
      %v692 = vsel %vm691, 1, 0
      %v693 = vadd.s32 %v683, %v687
      %v694 = vadd.s32 %v686, %v692
      %vm695 = vc.u32 %v693, %v689
      %v696 = vsel %vm695, 1, 0
      %v697 = vadd.s32 %v693, %v689
      %v698 = vadd.s32 %v694, %v696
      %v699 = vadd.s32 %v698, %v688
      %v700 = vadd.s32 %v699, %v690
      %v701 = vmul.u32 %v656, %v647
      %v702 = vadd.s32 %v678, %v697
      %vm703 = vc.u32 %v678, %v697
      %v704 = vadd.s32 %v700, 1
      %v705 = vsel %vm703, %v704, %v700
      %v706 = vadd.s32 %v701, %v705
      %v707 = vadd.s32 %v706, 536870912
      %v708 = vshrl.u32 %v707, 30
      %v709 = vshll.u32 %v708, 30
      %v710 = vsub.s32 %v706, %v709
      %vm711 = vcmp.lt.s32.totalorder %v710, 0
      %v712 = vsub.s32 0, %v710
      %v713 = vsel %vm711, %v712, %v710
      %v714 = vclz %v713
      %v715 = vsub.s32 %v714, 2
      %vm716 = vcmp.gt.s32.totalorder 0, %v715
      %v717 = vsel %vm716, 0, %v715
      %v718 = vsub.s32 32, %v717
      %v719 = vshll.u32 %v710, %v717
      %v720 = vshrl.u32 %v702, %v718
      %v721 = vor.u32 %v719, %v720
      %v722 = vsub.s32 4294967266, %v717
      %v723 = vadd.s32 %v722, 127
      %v724 = vshll.u32 %v723, 23
      %v725 = vor.u32 4788187, %v724
      %v726 = vand.u32 2147483647, %v725
      %v728 = vcvt.s32.f32 %v721
      %v729 = vmul.f32 %v728, %v726
      %v730 = vxor.u32 %v729, 2147483648
      %v731 = vsel %vm610, %v730, %v729
      %v732 = vsub.s32 4, %v708
      %v733 = vsel %vm610, %v732, %v708
      %v734 = vsel %vm609, %v438, %v731
      %v735 = vsel %vm609, 0, %v733
      %v736 = vmul.f32 %v734, %v734
      %v737 = vmul.f32 %v736, -0.001358992
      %v738 = vadd.f32 %v737, 0.041655596
      %v739 = vmul.f32 %v736, %v738
      %v740 = vadd.f32 %v739, -0.4999988
      %v741 = vmul.f32 %v736, %v740
      %v742 = vadd.f32 1.0, %v741
      %v743 = vmul.f32 %v734, %v734
      %v744 = vmul.f32 %v743, -0.00019511016
      %v745 = vadd.f32 %v744, 0.008332121
      %v746 = vmul.f32 %v743, %v745
      %v747 = vadd.f32 %v746, -0.16666654
      %v748 = vmul.f32 %v743, %v747
      %v749 = vadd.f32 %v748, 1.0
      %v750 = vmul.f32 %v749, %v734
      %vm751 = vweird.f32 %v438
      %v752 = vadd.s32 %v735, 3
      %v753 = vand.u32 %v752, 3
      %vm754 = vcmp.lt.s32.totalorder %v753, 2
      %vm755 = vcmp.eq.s32.totalorder %v753, 0
      %v756 = vxor.u32 %v750, 2147483648
      %v757 = vsel %vm755, %v742, %v756
      %vm758 = vcmp.eq.s32.totalorder %v753, 2
      %v759 = vxor.u32 %v742, 2147483648
      %v760 = vsel %vm758, %v759, %v750
      %v761 = vsel %vm754, %v757, %v760
      %v762 = vsel %vm751, nan, %v761
      %v763 = vand.u32 2147483647, %v439
      %vm764 = vcmp.le.f32.partialorder %v763, 0.7853982
      %vm765 = vcmp.lt.s32.totalorder %v439, 0
      %v766 = vand.u32 %v439, 2139095040
      %v767 = vshrl.u32 %v766, 23
      %v768 = vsub.s32 %v767, 127
      %v769 = vand.u32 2147483647, %v439
      %v770 = vand.u32 %v769, 8388607
      %v771 = vor.u32 %v770, 8388608
      %v772 = vsub.s32 0, %v771
      %v773 = vadd.s32 %v768, 1
      %vm774 = vcmp.gt.s32.totalorder %v773, 0
      %v775 = vsel %vm774, %v773, 0
      %v776 = vshrl.u32 %v775, 5
      %v777 = vand.u32 %v775, 31
      %v778 = vsub.s32 32, %v777
      %v779 = vshrl.u32 683565275, %v778
      %v780 = vshll.u32 683565275, %v777
      %v781 = vshrl.u32 2475754826, %v778
      %v782 = vor.u32 %v780, %v781
      %v783 = vshll.u32 2475754826, %v777
      %v784 = vshrl.u32 2131351028, %v778
      %v785 = vor.u32 %v783, %v784
      %v786 = vshll.u32 2131351028, %v777
      %v787 = vshrl.u32 2102212464, %v778
      %v788 = vor.u32 %v786, %v787
      %v789 = vshll.u32 2102212464, %v777
      %v790 = vshrl.u32 920167782, %v778
      %v791 = vor.u32 %v789, %v790
      %v792 = vshll.u32 920167782, %v777
      %v793 = vshrl.u32 1326507024, %v778
      %v794 = vor.u32 %v792, %v793
      %vm795 = vcmp.lt.s32.totalorder %v776, 1
      %vm796 = vcmp.lt.s32.totalorder %v776, 2
      %vm797 = vcmp.lt.s32.totalorder %v776, 3
      %vm798 = vcmp.lt.s32.totalorder %v776, 4
      %v799 = vsel %vm795, %v779, %v782
      %v800 = vsel %vm798, %v788, 2102212464
      %v801 = vsel %vm797, %v785, %v800
      %v802 = vsel %vm796, %v799, %v801
      %v803 = vsel %vm795, %v782, %v785
      %v804 = vsel %vm798, %v791, 920167782
      %v805 = vsel %vm797, %v788, %v804
      %v806 = vsel %vm796, %v803, %v805
      %v807 = vsel %vm795, %v785, %v788
      %v808 = vsel %vm798, %v794, 1326507024
      %v809 = vsel %vm797, %v791, %v808
      %v810 = vsel %vm796, %v807, %v809
      %v811 = vshll.u32 %v771, 8
      %v812 = vand.u32 %v811, 65535
      %v813 = vshrl.u32 %v811, 16
      %v814 = vand.u32 %v810, 65535
      %v815 = vshrl.u32 %v810, 16
      %v816 = vmul.u32 %v812, %v814
      %v817 = vmul.u32 %v812, %v815
      %v818 = vmul.u32 %v813, %v814
      %v819 = vmul.u32 %v813, %v815
      %v820 = vshll.u32 %v817, 16
      %v821 = vshrl.u32 %v817, 16
      %v822 = vshll.u32 %v818, 16
      %v823 = vshrl.u32 %v818, 16
      %vm824 = vc.u32 %v816, %v820
      %v825 = vsel %vm824, 1, 0
      %v826 = vadd.s32 %v816, %v820
      %v827 = vadd.s32 %v819, %v825
      %vm828 = vc.u32 %v826, %v822
      %v829 = vsel %vm828, 1, 0
      %v830 = vadd.s32 %v826, %v822
      %v831 = vadd.s32 %v827, %v829
      %v832 = vadd.s32 %v831, %v821
      %v833 = vadd.s32 %v832, %v823
      %v834 = vand.u32 %v811, 65535
      %v835 = vshrl.u32 %v811, 16
      %v836 = vand.u32 %v806, 65535
      %v837 = vshrl.u32 %v806, 16
      %v838 = vmul.u32 %v834, %v836
      %v839 = vmul.u32 %v834, %v837
      %v840 = vmul.u32 %v835, %v836
      %v841 = vmul.u32 %v835, %v837
      %v842 = vshll.u32 %v839, 16
      %v843 = vshrl.u32 %v839, 16
      %v844 = vshll.u32 %v840, 16
      %v845 = vshrl.u32 %v840, 16
      %vm846 = vc.u32 %v838, %v842
      %v847 = vsel %vm846, 1, 0
      %v848 = vadd.s32 %v838, %v842
      %v849 = vadd.s32 %v841, %v847
      %vm850 = vc.u32 %v848, %v844
      %v851 = vsel %vm850, 1, 0
      %v852 = vadd.s32 %v848, %v844
      %v853 = vadd.s32 %v849, %v851
      %v854 = vadd.s32 %v853, %v843
      %v855 = vadd.s32 %v854, %v845
      %v856 = vmul.u32 %v811, %v802
      %v857 = vadd.s32 %v833, %v852
      %vm858 = vc.u32 %v833, %v852
      %v859 = vadd.s32 %v855, 1
      %v860 = vsel %vm858, %v859, %v855
      %v861 = vadd.s32 %v856, %v860
      %v862 = vadd.s32 %v861, 536870912
      %v863 = vshrl.u32 %v862, 30
      %v864 = vshll.u32 %v863, 30
      %v865 = vsub.s32 %v861, %v864
      %vm866 = vcmp.lt.s32.totalorder %v865, 0
      %v867 = vsub.s32 0, %v865
      %v868 = vsel %vm866, %v867, %v865
      %v869 = vclz %v868
      %v870 = vsub.s32 %v869, 2
      %vm871 = vcmp.gt.s32.totalorder 0, %v870
      %v872 = vsel %vm871, 0, %v870
      %v873 = vsub.s32 32, %v872
      %v874 = vshll.u32 %v865, %v872
      %v875 = vshrl.u32 %v857, %v873
      %v876 = vor.u32 %v874, %v875
      %v877 = vsub.s32 4294967266, %v872
      %v878 = vadd.s32 %v877, 127
      %v879 = vshll.u32 %v878, 23
      %v880 = vor.u32 4788187, %v879
      %v881 = vand.u32 2147483647, %v880
      %v883 = vcvt.s32.f32 %v876
      %v884 = vmul.f32 %v883, %v881
      %v885 = vxor.u32 %v884, 2147483648
      %v886 = vsel %vm765, %v885, %v884
      %v887 = vsub.s32 4, %v863
      %v888 = vsel %vm765, %v887, %v863
      %v889 = vsel %vm764, %v439, %v886
      %v890 = vsel %vm764, 0, %v888
      %v891 = vmul.f32 %v889, %v889
      %v892 = vmul.f32 %v891, -0.001358992
      %v893 = vadd.f32 %v892, 0.041655596
      %v894 = vmul.f32 %v891, %v893
      %v895 = vadd.f32 %v894, -0.4999988
      %v896 = vmul.f32 %v891, %v895
      %v897 = vadd.f32 1.0, %v896
      %v898 = vmul.f32 %v889, %v889
      %v899 = vmul.f32 %v898, -0.00019511016
      %v900 = vadd.f32 %v899, 0.008332121
      %v901 = vmul.f32 %v898, %v900
      %v902 = vadd.f32 %v901, -0.16666654
      %v903 = vmul.f32 %v898, %v902
      %v904 = vadd.f32 %v903, 1.0
      %v905 = vmul.f32 %v904, %v889
      %vm906 = vweird.f32 %v439
      %v907 = vadd.s32 %v890, 3
      %v908 = vand.u32 %v907, 3
      %vm909 = vcmp.lt.s32.totalorder %v908, 2
      %vm910 = vcmp.eq.s32.totalorder %v908, 0
      %v911 = vxor.u32 %v905, 2147483648
      %v912 = vsel %vm910, %v897, %v911
      %vm913 = vcmp.eq.s32.totalorder %v908, 2
      %v914 = vxor.u32 %v897, 2147483648
      %v915 = vsel %vm913, %v914, %v905
      %v916 = vsel %vm909, %v912, %v915
      %v917 = vsel %vm906, nan, %v916
      %v918 = vand.u32 2147483647, %v440
      %vm919 = vcmp.le.f32.partialorder %v918, 0.7853982
      %vm920 = vcmp.lt.s32.totalorder %v440, 0
      %v921 = vand.u32 %v440, 2139095040
      %v922 = vshrl.u32 %v921, 23
      %v923 = vsub.s32 %v922, 127
      %v924 = vand.u32 2147483647, %v440
      %v925 = vand.u32 %v924, 8388607
      %v926 = vor.u32 %v925, 8388608
      %v927 = vsub.s32 0, %v926
      %v928 = vadd.s32 %v923, 1
      %vm929 = vcmp.gt.s32.totalorder %v928, 0
      %v930 = vsel %vm929, %v928, 0
      %v931 = vshrl.u32 %v930, 5
      %v932 = vand.u32 %v930, 31
      %v933 = vsub.s32 32, %v932
      %v934 = vshrl.u32 683565275, %v933
      %v935 = vshll.u32 683565275, %v932
      %v936 = vshrl.u32 2475754826, %v933
      %v937 = vor.u32 %v935, %v936
      %v938 = vshll.u32 2475754826, %v932
      %v939 = vshrl.u32 2131351028, %v933
      %v940 = vor.u32 %v938, %v939
      %v941 = vshll.u32 2131351028, %v932
      %v942 = vshrl.u32 2102212464, %v933
      %v943 = vor.u32 %v941, %v942
      %v944 = vshll.u32 2102212464, %v932
      %v945 = vshrl.u32 920167782, %v933
      %v946 = vor.u32 %v944, %v945
      %v947 = vshll.u32 920167782, %v932
      %v948 = vshrl.u32 1326507024, %v933
      %v949 = vor.u32 %v947, %v948
      %vm950 = vcmp.lt.s32.totalorder %v931, 1
      %vm951 = vcmp.lt.s32.totalorder %v931, 2
      %vm952 = vcmp.lt.s32.totalorder %v931, 3
      %vm953 = vcmp.lt.s32.totalorder %v931, 4
      %v954 = vsel %vm950, %v934, %v937
      %v955 = vsel %vm953, %v943, 2102212464
      %v956 = vsel %vm952, %v940, %v955
      %v957 = vsel %vm951, %v954, %v956
      %v958 = vsel %vm950, %v937, %v940
      %v959 = vsel %vm953, %v946, 920167782
      %v960 = vsel %vm952, %v943, %v959
      %v961 = vsel %vm951, %v958, %v960
      %v962 = vsel %vm950, %v940, %v943
      %v963 = vsel %vm953, %v949, 1326507024
      %v964 = vsel %vm952, %v946, %v963
      %v965 = vsel %vm951, %v962, %v964
      %v966 = vshll.u32 %v926, 8
      %v967 = vand.u32 %v966, 65535
      %v968 = vshrl.u32 %v966, 16
      %v969 = vand.u32 %v965, 65535
      %v970 = vshrl.u32 %v965, 16
      %v971 = vmul.u32 %v967, %v969
      %v972 = vmul.u32 %v967, %v970
      %v973 = vmul.u32 %v968, %v969
      %v974 = vmul.u32 %v968, %v970
      %v975 = vshll.u32 %v972, 16
      %v976 = vshrl.u32 %v972, 16
      %v977 = vshll.u32 %v973, 16
      %v978 = vshrl.u32 %v973, 16
      %vm979 = vc.u32 %v971, %v975
      %v980 = vsel %vm979, 1, 0
      %v981 = vadd.s32 %v971, %v975
      %v982 = vadd.s32 %v974, %v980
      %vm983 = vc.u32 %v981, %v977
      %v984 = vsel %vm983, 1, 0
      %v985 = vadd.s32 %v981, %v977
      %v986 = vadd.s32 %v982, %v984
      %v987 = vadd.s32 %v986, %v976
      %v988 = vadd.s32 %v987, %v978
      %v989 = vand.u32 %v966, 65535
      %v990 = vshrl.u32 %v966, 16
      %v991 = vand.u32 %v961, 65535
      %v992 = vshrl.u32 %v961, 16
      %v993 = vmul.u32 %v989, %v991
      %v994 = vmul.u32 %v989, %v992
      %v995 = vmul.u32 %v990, %v991
      %v996 = vmul.u32 %v990, %v992
      %v997 = vshll.u32 %v994, 16
      %v998 = vshrl.u32 %v994, 16
      %v999 = vshll.u32 %v995, 16
      %v1000 = vshrl.u32 %v995, 16
      %vm1001 = vc.u32 %v993, %v997
      %v1002 = vsel %vm1001, 1, 0
      %v1003 = vadd.s32 %v993, %v997
      %v1004 = vadd.s32 %v996, %v1002
      %vm1005 = vc.u32 %v1003, %v999
      %v1006 = vsel %vm1005, 1, 0
      %v1007 = vadd.s32 %v1003, %v999
      %v1008 = vadd.s32 %v1004, %v1006
      %v1009 = vadd.s32 %v1008, %v998
      %v1010 = vadd.s32 %v1009, %v1000
      %v1011 = vmul.u32 %v966, %v957
      %v1012 = vadd.s32 %v988, %v1007
      %vm1013 = vc.u32 %v988, %v1007
      %v1014 = vadd.s32 %v1010, 1
      %v1015 = vsel %vm1013, %v1014, %v1010
      %v1016 = vadd.s32 %v1011, %v1015
      %v1017 = vadd.s32 %v1016, 536870912
      %v1018 = vshrl.u32 %v1017, 30
      %v1019 = vshll.u32 %v1018, 30
      %v1020 = vsub.s32 %v1016, %v1019
      %vm1021 = vcmp.lt.s32.totalorder %v1020, 0
      %v1022 = vsub.s32 0, %v1020
      %v1023 = vsel %vm1021, %v1022, %v1020
      %v1024 = vclz %v1023
      %v1025 = vsub.s32 %v1024, 2
      %vm1026 = vcmp.gt.s32.totalorder 0, %v1025
      %v1027 = vsel %vm1026, 0, %v1025
      %v1028 = vsub.s32 32, %v1027
      %v1029 = vshll.u32 %v1020, %v1027
      %v1030 = vshrl.u32 %v1012, %v1028
      %v1031 = vor.u32 %v1029, %v1030
      %v1032 = vsub.s32 4294967266, %v1027
      %v1033 = vadd.s32 %v1032, 127
      %v1034 = vshll.u32 %v1033, 23
      %v1035 = vor.u32 4788187, %v1034
      %v1036 = vand.u32 2147483647, %v1035
      %v1038 = vcvt.s32.f32 %v1031
      %v1039 = vmul.f32 %v1038, %v1036
      %v1040 = vxor.u32 %v1039, 2147483648
      %v1041 = vsel %vm920, %v1040, %v1039
      %v1042 = vsub.s32 4, %v1018
      %v1043 = vsel %vm920, %v1042, %v1018
      %v1044 = vsel %vm919, %v440, %v1041
      %v1045 = vsel %vm919, 0, %v1043
      %v1046 = vmul.f32 %v1044, %v1044
      %v1047 = vmul.f32 %v1046, -0.001358992
      %v1048 = vadd.f32 %v1047, 0.041655596
      %v1049 = vmul.f32 %v1046, %v1048
      %v1050 = vadd.f32 %v1049, -0.4999988
      %v1051 = vmul.f32 %v1046, %v1050
      %v1052 = vadd.f32 1.0, %v1051
      %v1053 = vmul.f32 %v1044, %v1044
      %v1054 = vmul.f32 %v1053, -0.00019511016
      %v1055 = vadd.f32 %v1054, 0.008332121
      %v1056 = vmul.f32 %v1053, %v1055
      %v1057 = vadd.f32 %v1056, -0.16666654
      %v1058 = vmul.f32 %v1053, %v1057
      %v1059 = vadd.f32 %v1058, 1.0
      %v1060 = vmul.f32 %v1059, %v1044
      %vm1061 = vweird.f32 %v440
      %v1062 = vadd.s32 %v1045, 3
      %v1063 = vand.u32 %v1062, 3
      %vm1064 = vcmp.lt.s32.totalorder %v1063, 2
      %vm1065 = vcmp.eq.s32.totalorder %v1063, 0
      %v1066 = vxor.u32 %v1060, 2147483648
      %v1067 = vsel %vm1065, %v1052, %v1066
      %vm1068 = vcmp.eq.s32.totalorder %v1063, 2
      %v1069 = vxor.u32 %v1052, 2147483648
      %v1070 = vsel %vm1068, %v1069, %v1060
      %v1071 = vsel %vm1064, %v1067, %v1070
      %v1072 = vsel %vm1061, nan, %v1071
      %v1073 = vand.u32 2147483647, %v441
      %vm1074 = vcmp.le.f32.partialorder %v1073, 0.7853982
      %vm1075 = vcmp.lt.s32.totalorder %v441, 0
      %v1076 = vand.u32 %v441, 2139095040
      %v1077 = vshrl.u32 %v1076, 23
      %v1078 = vsub.s32 %v1077, 127
      %v1079 = vand.u32 2147483647, %v441
      %v1080 = vand.u32 %v1079, 8388607
      %v1081 = vor.u32 %v1080, 8388608
      %v1082 = vsub.s32 0, %v1081
      %v1083 = vadd.s32 %v1078, 1
      %vm1084 = vcmp.gt.s32.totalorder %v1083, 0
      %v1085 = vsel %vm1084, %v1083, 0
      %v1086 = vshrl.u32 %v1085, 5
      %v1087 = vand.u32 %v1085, 31
      %v1088 = vsub.s32 32, %v1087
      %v1089 = vshrl.u32 683565275, %v1088
      %v1090 = vshll.u32 683565275, %v1087
      %v1091 = vshrl.u32 2475754826, %v1088
      %v1092 = vor.u32 %v1090, %v1091
      %v1093 = vshll.u32 2475754826, %v1087
      %v1094 = vshrl.u32 2131351028, %v1088
      %v1095 = vor.u32 %v1093, %v1094
      %v1096 = vshll.u32 2131351028, %v1087
      %v1097 = vshrl.u32 2102212464, %v1088
      %v1098 = vor.u32 %v1096, %v1097
      %v1099 = vshll.u32 2102212464, %v1087
      %v1100 = vshrl.u32 920167782, %v1088
      %v1101 = vor.u32 %v1099, %v1100
      %v1102 = vshll.u32 920167782, %v1087
      %v1103 = vshrl.u32 1326507024, %v1088
      %v1104 = vor.u32 %v1102, %v1103
      %vm1105 = vcmp.lt.s32.totalorder %v1086, 1
      %vm1106 = vcmp.lt.s32.totalorder %v1086, 2
      %vm1107 = vcmp.lt.s32.totalorder %v1086, 3
      %vm1108 = vcmp.lt.s32.totalorder %v1086, 4
      %v1109 = vsel %vm1105, %v1089, %v1092
      %v1110 = vsel %vm1108, %v1098, 2102212464
      %v1111 = vsel %vm1107, %v1095, %v1110
      %v1112 = vsel %vm1106, %v1109, %v1111
      %v1113 = vsel %vm1105, %v1092, %v1095
      %v1114 = vsel %vm1108, %v1101, 920167782
      %v1115 = vsel %vm1107, %v1098, %v1114
      %v1116 = vsel %vm1106, %v1113, %v1115
      %v1117 = vsel %vm1105, %v1095, %v1098
      %v1118 = vsel %vm1108, %v1104, 1326507024
      %v1119 = vsel %vm1107, %v1101, %v1118
      %v1120 = vsel %vm1106, %v1117, %v1119
      %v1121 = vshll.u32 %v1081, 8
      %v1122 = vand.u32 %v1121, 65535
      %v1123 = vshrl.u32 %v1121, 16
      %v1124 = vand.u32 %v1120, 65535
      %v1125 = vshrl.u32 %v1120, 16
      %v1126 = vmul.u32 %v1122, %v1124
      %v1127 = vmul.u32 %v1122, %v1125
      %v1128 = vmul.u32 %v1123, %v1124
      %v1129 = vmul.u32 %v1123, %v1125
      %v1130 = vshll.u32 %v1127, 16
      %v1131 = vshrl.u32 %v1127, 16
      %v1132 = vshll.u32 %v1128, 16
      %v1133 = vshrl.u32 %v1128, 16
      %vm1134 = vc.u32 %v1126, %v1130
      %v1135 = vsel %vm1134, 1, 0
      %v1136 = vadd.s32 %v1126, %v1130
      %v1137 = vadd.s32 %v1129, %v1135
      %vm1138 = vc.u32 %v1136, %v1132
      %v1139 = vsel %vm1138, 1, 0
      %v1140 = vadd.s32 %v1136, %v1132
      %v1141 = vadd.s32 %v1137, %v1139
      %v1142 = vadd.s32 %v1141, %v1131
      %v1143 = vadd.s32 %v1142, %v1133
      %v1144 = vand.u32 %v1121, 65535
      %v1145 = vshrl.u32 %v1121, 16
      %v1146 = vand.u32 %v1116, 65535
      %v1147 = vshrl.u32 %v1116, 16
      %v1148 = vmul.u32 %v1144, %v1146
      %v1149 = vmul.u32 %v1144, %v1147
      %v1150 = vmul.u32 %v1145, %v1146
      %v1151 = vmul.u32 %v1145, %v1147
      %v1152 = vshll.u32 %v1149, 16
      %v1153 = vshrl.u32 %v1149, 16
      %v1154 = vshll.u32 %v1150, 16
      %v1155 = vshrl.u32 %v1150, 16
      %vm1156 = vc.u32 %v1148, %v1152
      %v1157 = vsel %vm1156, 1, 0
      %v1158 = vadd.s32 %v1148, %v1152
      %v1159 = vadd.s32 %v1151, %v1157
      %vm1160 = vc.u32 %v1158, %v1154
      %v1161 = vsel %vm1160, 1, 0
      %v1162 = vadd.s32 %v1158, %v1154
      %v1163 = vadd.s32 %v1159, %v1161
      %v1164 = vadd.s32 %v1163, %v1153
      %v1165 = vadd.s32 %v1164, %v1155
      %v1166 = vmul.u32 %v1121, %v1112
      %v1167 = vadd.s32 %v1143, %v1162
      %vm1168 = vc.u32 %v1143, %v1162
      %v1169 = vadd.s32 %v1165, 1
      %v1170 = vsel %vm1168, %v1169, %v1165
      %v1171 = vadd.s32 %v1166, %v1170
      %v1172 = vadd.s32 %v1171, 536870912
      %v1173 = vshrl.u32 %v1172, 30
      %v1174 = vshll.u32 %v1173, 30
      %v1175 = vsub.s32 %v1171, %v1174
      %vm1176 = vcmp.lt.s32.totalorder %v1175, 0
      %v1177 = vsub.s32 0, %v1175
      %v1178 = vsel %vm1176, %v1177, %v1175
      %v1179 = vclz %v1178
      %v1180 = vsub.s32 %v1179, 2
      %vm1181 = vcmp.gt.s32.totalorder 0, %v1180
      %v1182 = vsel %vm1181, 0, %v1180
      %v1183 = vsub.s32 32, %v1182
      %v1184 = vshll.u32 %v1175, %v1182
      %v1185 = vshrl.u32 %v1167, %v1183
      %v1186 = vor.u32 %v1184, %v1185
      %v1187 = vsub.s32 4294967266, %v1182
      %v1188 = vadd.s32 %v1187, 127
      %v1189 = vshll.u32 %v1188, 23
      %v1190 = vor.u32 4788187, %v1189
      %v1191 = vand.u32 2147483647, %v1190
      %v1193 = vcvt.s32.f32 %v1186
      %v1194 = vmul.f32 %v1193, %v1191
      %v1195 = vxor.u32 %v1194, 2147483648
      %v1196 = vsel %vm1075, %v1195, %v1194
      %v1197 = vsub.s32 4, %v1173
      %v1198 = vsel %vm1075, %v1197, %v1173
      %v1199 = vsel %vm1074, %v441, %v1196
      %v1200 = vsel %vm1074, 0, %v1198
      %v1201 = vmul.f32 %v1199, %v1199
      %v1202 = vmul.f32 %v1201, -0.001358992
      %v1203 = vadd.f32 %v1202, 0.041655596
      %v1204 = vmul.f32 %v1201, %v1203
      %v1205 = vadd.f32 %v1204, -0.4999988
      %v1206 = vmul.f32 %v1201, %v1205
      %v1207 = vadd.f32 1.0, %v1206
      %v1208 = vmul.f32 %v1199, %v1199
      %v1209 = vmul.f32 %v1208, -0.00019511016
      %v1210 = vadd.f32 %v1209, 0.008332121
      %v1211 = vmul.f32 %v1208, %v1210
      %v1212 = vadd.f32 %v1211, -0.16666654
      %v1213 = vmul.f32 %v1208, %v1212
      %v1214 = vadd.f32 %v1213, 1.0
      %v1215 = vmul.f32 %v1214, %v1199
      %vm1216 = vweird.f32 %v441
      %v1217 = vadd.s32 %v1200, 3
      %v1218 = vand.u32 %v1217, 3
      %vm1219 = vcmp.lt.s32.totalorder %v1218, 2
      %vm1220 = vcmp.eq.s32.totalorder %v1218, 0
      %v1221 = vxor.u32 %v1215, 2147483648
      %v1222 = vsel %vm1220, %v1207, %v1221
      %vm1223 = vcmp.eq.s32.totalorder %v1218, 2
      %v1224 = vxor.u32 %v1207, 2147483648
      %v1225 = vsel %vm1223, %v1224, %v1215
      %v1226 = vsel %vm1219, %v1222, %v1225
      %v1227 = vsel %vm1216, nan, %v1226
      %v1228 = vand.u32 2147483647, %v442
      %vm1229 = vcmp.le.f32.partialorder %v1228, 0.7853982
      %vm1230 = vcmp.lt.s32.totalorder %v442, 0
      %v1231 = vand.u32 %v442, 2139095040
      %v1232 = vshrl.u32 %v1231, 23
      %v1233 = vsub.s32 %v1232, 127
      %v1234 = vand.u32 2147483647, %v442
      %v1235 = vand.u32 %v1234, 8388607
      %v1236 = vor.u32 %v1235, 8388608
      %v1237 = vsub.s32 0, %v1236
      %v1238 = vadd.s32 %v1233, 1
      %vm1239 = vcmp.gt.s32.totalorder %v1238, 0
      %v1240 = vsel %vm1239, %v1238, 0
      %v1241 = vshrl.u32 %v1240, 5
      %v1242 = vand.u32 %v1240, 31
      %v1243 = vsub.s32 32, %v1242
      %v1244 = vshrl.u32 683565275, %v1243
      %v1245 = vshll.u32 683565275, %v1242
      %v1246 = vshrl.u32 2475754826, %v1243
      %v1247 = vor.u32 %v1245, %v1246
      %v1248 = vshll.u32 2475754826, %v1242
      %v1249 = vshrl.u32 2131351028, %v1243
      %v1250 = vor.u32 %v1248, %v1249
      %v1251 = vshll.u32 2131351028, %v1242
      %v1252 = vshrl.u32 2102212464, %v1243
      %v1253 = vor.u32 %v1251, %v1252
      %v1254 = vshll.u32 2102212464, %v1242
      %v1255 = vshrl.u32 920167782, %v1243
      %v1256 = vor.u32 %v1254, %v1255
      %v1257 = vshll.u32 920167782, %v1242
      %v1258 = vshrl.u32 1326507024, %v1243
      %v1259 = vor.u32 %v1257, %v1258
      %vm1260 = vcmp.lt.s32.totalorder %v1241, 1
      %vm1261 = vcmp.lt.s32.totalorder %v1241, 2
      %vm1262 = vcmp.lt.s32.totalorder %v1241, 3
      %vm1263 = vcmp.lt.s32.totalorder %v1241, 4
      %v1264 = vsel %vm1260, %v1244, %v1247
      %v1265 = vsel %vm1263, %v1253, 2102212464
      %v1266 = vsel %vm1262, %v1250, %v1265
      %v1267 = vsel %vm1261, %v1264, %v1266
      %v1268 = vsel %vm1260, %v1247, %v1250
      %v1269 = vsel %vm1263, %v1256, 920167782
      %v1270 = vsel %vm1262, %v1253, %v1269
      %v1271 = vsel %vm1261, %v1268, %v1270
      %v1272 = vsel %vm1260, %v1250, %v1253
      %v1273 = vsel %vm1263, %v1259, 1326507024
      %v1274 = vsel %vm1262, %v1256, %v1273
      %v1275 = vsel %vm1261, %v1272, %v1274
      %v1276 = vshll.u32 %v1236, 8
      %v1277 = vand.u32 %v1276, 65535
      %v1278 = vshrl.u32 %v1276, 16
      %v1279 = vand.u32 %v1275, 65535
      %v1280 = vshrl.u32 %v1275, 16
      %v1281 = vmul.u32 %v1277, %v1279
      %v1282 = vmul.u32 %v1277, %v1280
      %v1283 = vmul.u32 %v1278, %v1279
      %v1284 = vmul.u32 %v1278, %v1280
      %v1285 = vshll.u32 %v1282, 16
      %v1286 = vshrl.u32 %v1282, 16
      %v1287 = vshll.u32 %v1283, 16
      %v1288 = vshrl.u32 %v1283, 16
      %vm1289 = vc.u32 %v1281, %v1285
      %v1290 = vsel %vm1289, 1, 0
      %v1291 = vadd.s32 %v1281, %v1285
      %v1292 = vadd.s32 %v1284, %v1290
      %vm1293 = vc.u32 %v1291, %v1287
      %v1294 = vsel %vm1293, 1, 0
      %v1295 = vadd.s32 %v1291, %v1287
      %v1296 = vadd.s32 %v1292, %v1294
      %v1297 = vadd.s32 %v1296, %v1286
      %v1298 = vadd.s32 %v1297, %v1288
      %v1299 = vand.u32 %v1276, 65535
      %v1300 = vshrl.u32 %v1276, 16
      %v1301 = vand.u32 %v1271, 65535
      %v1302 = vshrl.u32 %v1271, 16
      %v1303 = vmul.u32 %v1299, %v1301
      %v1304 = vmul.u32 %v1299, %v1302
      %v1305 = vmul.u32 %v1300, %v1301
      %v1306 = vmul.u32 %v1300, %v1302
      %v1307 = vshll.u32 %v1304, 16
      %v1308 = vshrl.u32 %v1304, 16
      %v1309 = vshll.u32 %v1305, 16
      %v1310 = vshrl.u32 %v1305, 16
      %vm1311 = vc.u32 %v1303, %v1307
      %v1312 = vsel %vm1311, 1, 0
      %v1313 = vadd.s32 %v1303, %v1307
      %v1314 = vadd.s32 %v1306, %v1312
      %vm1315 = vc.u32 %v1313, %v1309
      %v1316 = vsel %vm1315, 1, 0
      %v1317 = vadd.s32 %v1313, %v1309
      %v1318 = vadd.s32 %v1314, %v1316
      %v1319 = vadd.s32 %v1318, %v1308
      %v1320 = vadd.s32 %v1319, %v1310
      %v1321 = vmul.u32 %v1276, %v1267
      %v1322 = vadd.s32 %v1298, %v1317
      %vm1323 = vc.u32 %v1298, %v1317
      %v1324 = vadd.s32 %v1320, 1
      %v1325 = vsel %vm1323, %v1324, %v1320
      %v1326 = vadd.s32 %v1321, %v1325
      %v1327 = vadd.s32 %v1326, 536870912
      %v1328 = vshrl.u32 %v1327, 30
      %v1329 = vshll.u32 %v1328, 30
      %v1330 = vsub.s32 %v1326, %v1329
      %vm1331 = vcmp.lt.s32.totalorder %v1330, 0
      %v1332 = vsub.s32 0, %v1330
      %v1333 = vsel %vm1331, %v1332, %v1330
      %v1334 = vclz %v1333
      %v1335 = vsub.s32 %v1334, 2
      %vm1336 = vcmp.gt.s32.totalorder 0, %v1335
      %v1337 = vsel %vm1336, 0, %v1335
      %v1338 = vsub.s32 32, %v1337
      %v1339 = vshll.u32 %v1330, %v1337
      %v1340 = vshrl.u32 %v1322, %v1338
      %v1341 = vor.u32 %v1339, %v1340
      %v1342 = vsub.s32 4294967266, %v1337
      %v1343 = vadd.s32 %v1342, 127
      %v1344 = vshll.u32 %v1343, 23
      %v1345 = vor.u32 4788187, %v1344
      %v1346 = vand.u32 2147483647, %v1345
      %v1348 = vcvt.s32.f32 %v1341
      %v1349 = vmul.f32 %v1348, %v1346
      %v1350 = vxor.u32 %v1349, 2147483648
      %v1351 = vsel %vm1230, %v1350, %v1349
      %v1352 = vsub.s32 4, %v1328
      %v1353 = vsel %vm1230, %v1352, %v1328
      %v1354 = vsel %vm1229, %v442, %v1351
      %v1355 = vsel %vm1229, 0, %v1353
      %v1356 = vmul.f32 %v1354, %v1354
      %v1357 = vmul.f32 %v1356, -0.001358992
      %v1358 = vadd.f32 %v1357, 0.041655596
      %v1359 = vmul.f32 %v1356, %v1358
      %v1360 = vadd.f32 %v1359, -0.4999988
      %v1361 = vmul.f32 %v1356, %v1360
      %v1362 = vadd.f32 1.0, %v1361
      %v1363 = vmul.f32 %v1354, %v1354
      %v1364 = vmul.f32 %v1363, -0.00019511016
      %v1365 = vadd.f32 %v1364, 0.008332121
      %v1366 = vmul.f32 %v1363, %v1365
      %v1367 = vadd.f32 %v1366, -0.16666654
      %v1368 = vmul.f32 %v1363, %v1367
      %v1369 = vadd.f32 %v1368, 1.0
      %v1370 = vmul.f32 %v1369, %v1354
      %vm1371 = vweird.f32 %v442
      %v1372 = vadd.s32 %v1355, 3
      %v1373 = vand.u32 %v1372, 3
      %vm1374 = vcmp.lt.s32.totalorder %v1373, 2
      %vm1375 = vcmp.eq.s32.totalorder %v1373, 0
      %v1376 = vxor.u32 %v1370, 2147483648
      %v1377 = vsel %vm1375, %v1362, %v1376
      %vm1378 = vcmp.eq.s32.totalorder %v1373, 2
      %v1379 = vxor.u32 %v1362, 2147483648
      %v1380 = vsel %vm1378, %v1379, %v1370
      %v1381 = vsel %vm1374, %v1377, %v1380
      %v1382 = vsel %vm1371, nan, %v1381
      %v1383 = vand.u32 2147483647, %v443
      %vm1384 = vcmp.le.f32.partialorder %v1383, 0.7853982
      %vm1385 = vcmp.lt.s32.totalorder %v443, 0
      %v1386 = vand.u32 %v443, 2139095040
      %v1387 = vshrl.u32 %v1386, 23
      %v1388 = vsub.s32 %v1387, 127
      %v1389 = vand.u32 2147483647, %v443
      %v1390 = vand.u32 %v1389, 8388607
      %v1391 = vor.u32 %v1390, 8388608
      %v1392 = vsub.s32 0, %v1391
      %v1393 = vadd.s32 %v1388, 1
      %vm1394 = vcmp.gt.s32.totalorder %v1393, 0
      %v1395 = vsel %vm1394, %v1393, 0
      %v1396 = vshrl.u32 %v1395, 5
      %v1397 = vand.u32 %v1395, 31
      %v1398 = vsub.s32 32, %v1397
      %v1399 = vshrl.u32 683565275, %v1398
      %v1400 = vshll.u32 683565275, %v1397
      %v1401 = vshrl.u32 2475754826, %v1398
      %v1402 = vor.u32 %v1400, %v1401
      %v1403 = vshll.u32 2475754826, %v1397
      %v1404 = vshrl.u32 2131351028, %v1398
      %v1405 = vor.u32 %v1403, %v1404
      %v1406 = vshll.u32 2131351028, %v1397
      %v1407 = vshrl.u32 2102212464, %v1398
      %v1408 = vor.u32 %v1406, %v1407
      %v1409 = vshll.u32 2102212464, %v1397
      %v1410 = vshrl.u32 920167782, %v1398
      %v1411 = vor.u32 %v1409, %v1410
      %v1412 = vshll.u32 920167782, %v1397
      %v1413 = vshrl.u32 1326507024, %v1398
      %v1414 = vor.u32 %v1412, %v1413
      %vm1415 = vcmp.lt.s32.totalorder %v1396, 1
      %vm1416 = vcmp.lt.s32.totalorder %v1396, 2
      %vm1417 = vcmp.lt.s32.totalorder %v1396, 3
      %vm1418 = vcmp.lt.s32.totalorder %v1396, 4
      %v1419 = vsel %vm1415, %v1399, %v1402
      %v1420 = vsel %vm1418, %v1408, 2102212464
      %v1421 = vsel %vm1417, %v1405, %v1420
      %v1422 = vsel %vm1416, %v1419, %v1421
      %v1423 = vsel %vm1415, %v1402, %v1405
      %v1424 = vsel %vm1418, %v1411, 920167782
      %v1425 = vsel %vm1417, %v1408, %v1424
      %v1426 = vsel %vm1416, %v1423, %v1425
      %v1427 = vsel %vm1415, %v1405, %v1408
      %v1428 = vsel %vm1418, %v1414, 1326507024
      %v1429 = vsel %vm1417, %v1411, %v1428
      %v1430 = vsel %vm1416, %v1427, %v1429
      %v1431 = vshll.u32 %v1391, 8
      %v1432 = vand.u32 %v1431, 65535
      %v1433 = vshrl.u32 %v1431, 16
      %v1434 = vand.u32 %v1430, 65535
      %v1435 = vshrl.u32 %v1430, 16
      %v1436 = vmul.u32 %v1432, %v1434
      %v1437 = vmul.u32 %v1432, %v1435
      %v1438 = vmul.u32 %v1433, %v1434
      %v1439 = vmul.u32 %v1433, %v1435
      %v1440 = vshll.u32 %v1437, 16
      %v1441 = vshrl.u32 %v1437, 16
      %v1442 = vshll.u32 %v1438, 16
      %v1443 = vshrl.u32 %v1438, 16
      %vm1444 = vc.u32 %v1436, %v1440
      %v1445 = vsel %vm1444, 1, 0
      %v1446 = vadd.s32 %v1436, %v1440
      %v1447 = vadd.s32 %v1439, %v1445
      %vm1448 = vc.u32 %v1446, %v1442
      %v1449 = vsel %vm1448, 1, 0
      %v1450 = vadd.s32 %v1446, %v1442
      %v1451 = vadd.s32 %v1447, %v1449
      %v1452 = vadd.s32 %v1451, %v1441
      %v1453 = vadd.s32 %v1452, %v1443
      %v1454 = vand.u32 %v1431, 65535
      %v1455 = vshrl.u32 %v1431, 16
      %v1456 = vand.u32 %v1426, 65535
      %v1457 = vshrl.u32 %v1426, 16
      %v1458 = vmul.u32 %v1454, %v1456
      %v1459 = vmul.u32 %v1454, %v1457
      %v1460 = vmul.u32 %v1455, %v1456
      %v1461 = vmul.u32 %v1455, %v1457
      %v1462 = vshll.u32 %v1459, 16
      %v1463 = vshrl.u32 %v1459, 16
      %v1464 = vshll.u32 %v1460, 16
      %v1465 = vshrl.u32 %v1460, 16
      %vm1466 = vc.u32 %v1458, %v1462
      %v1467 = vsel %vm1466, 1, 0
      %v1468 = vadd.s32 %v1458, %v1462
      %v1469 = vadd.s32 %v1461, %v1467
      %vm1470 = vc.u32 %v1468, %v1464
      %v1471 = vsel %vm1470, 1, 0
      %v1472 = vadd.s32 %v1468, %v1464
      %v1473 = vadd.s32 %v1469, %v1471
      %v1474 = vadd.s32 %v1473, %v1463
      %v1475 = vadd.s32 %v1474, %v1465
      %v1476 = vmul.u32 %v1431, %v1422
      %v1477 = vadd.s32 %v1453, %v1472
      %vm1478 = vc.u32 %v1453, %v1472
      %v1479 = vadd.s32 %v1475, 1
      %v1480 = vsel %vm1478, %v1479, %v1475
      %v1481 = vadd.s32 %v1476, %v1480
      %v1482 = vadd.s32 %v1481, 536870912
      %v1483 = vshrl.u32 %v1482, 30
      %v1484 = vshll.u32 %v1483, 30
      %v1485 = vsub.s32 %v1481, %v1484
      %vm1486 = vcmp.lt.s32.totalorder %v1485, 0
      %v1487 = vsub.s32 0, %v1485
      %v1488 = vsel %vm1486, %v1487, %v1485
      %v1489 = vclz %v1488
      %v1490 = vsub.s32 %v1489, 2
      %vm1491 = vcmp.gt.s32.totalorder 0, %v1490
      %v1492 = vsel %vm1491, 0, %v1490
      %v1493 = vsub.s32 32, %v1492
      %v1494 = vshll.u32 %v1485, %v1492
      %v1495 = vshrl.u32 %v1477, %v1493
      %v1496 = vor.u32 %v1494, %v1495
      %v1497 = vsub.s32 4294967266, %v1492
      %v1498 = vadd.s32 %v1497, 127
      %v1499 = vshll.u32 %v1498, 23
      %v1500 = vor.u32 4788187, %v1499
      %v1501 = vand.u32 2147483647, %v1500
      %v1503 = vcvt.s32.f32 %v1496
      %v1504 = vmul.f32 %v1503, %v1501
      %v1505 = vxor.u32 %v1504, 2147483648
      %v1506 = vsel %vm1385, %v1505, %v1504
      %v1507 = vsub.s32 4, %v1483
      %v1508 = vsel %vm1385, %v1507, %v1483
      %v1509 = vsel %vm1384, %v443, %v1506
      %v1510 = vsel %vm1384, 0, %v1508
      %v1511 = vmul.f32 %v1509, %v1509
      %v1512 = vmul.f32 %v1511, -0.001358992
      %v1513 = vadd.f32 %v1512, 0.041655596
      %v1514 = vmul.f32 %v1511, %v1513
      %v1515 = vadd.f32 %v1514, -0.4999988
      %v1516 = vmul.f32 %v1511, %v1515
      %v1517 = vadd.f32 1.0, %v1516
      %v1518 = vmul.f32 %v1509, %v1509
      %v1519 = vmul.f32 %v1518, -0.00019511016
      %v1520 = vadd.f32 %v1519, 0.008332121
      %v1521 = vmul.f32 %v1518, %v1520
      %v1522 = vadd.f32 %v1521, -0.16666654
      %v1523 = vmul.f32 %v1518, %v1522
      %v1524 = vadd.f32 %v1523, 1.0
      %v1525 = vmul.f32 %v1524, %v1509
      %vm1526 = vweird.f32 %v443
      %v1527 = vadd.s32 %v1510, 3
      %v1528 = vand.u32 %v1527, 3
      %vm1529 = vcmp.lt.s32.totalorder %v1528, 2
      %vm1530 = vcmp.eq.s32.totalorder %v1528, 0
      %v1531 = vxor.u32 %v1525, 2147483648
      %v1532 = vsel %vm1530, %v1517, %v1531
      %vm1533 = vcmp.eq.s32.totalorder %v1528, 2
      %v1534 = vxor.u32 %v1517, 2147483648
      %v1535 = vsel %vm1533, %v1534, %v1525
      %v1536 = vsel %vm1529, %v1532, %v1535
      %v1537 = vsel %vm1526, nan, %v1536
      %v1538 = vand.u32 2147483647, %v444
      %vm1539 = vcmp.le.f32.partialorder %v1538, 0.7853982
      %vm1540 = vcmp.lt.s32.totalorder %v444, 0
      %v1541 = vand.u32 %v444, 2139095040
      %v1542 = vshrl.u32 %v1541, 23
      %v1543 = vsub.s32 %v1542, 127
      %v1544 = vand.u32 2147483647, %v444
      %v1545 = vand.u32 %v1544, 8388607
      %v1546 = vor.u32 %v1545, 8388608
      %v1547 = vsub.s32 0, %v1546
      %v1548 = vadd.s32 %v1543, 1
      %vm1549 = vcmp.gt.s32.totalorder %v1548, 0
      %v1550 = vsel %vm1549, %v1548, 0
      %v1551 = vshrl.u32 %v1550, 5
      %v1552 = vand.u32 %v1550, 31
      %v1553 = vsub.s32 32, %v1552
      %v1554 = vshrl.u32 683565275, %v1553
      %v1555 = vshll.u32 683565275, %v1552
      %v1556 = vshrl.u32 2475754826, %v1553
      %v1557 = vor.u32 %v1555, %v1556
      %v1558 = vshll.u32 2475754826, %v1552
      %v1559 = vshrl.u32 2131351028, %v1553
      %v1560 = vor.u32 %v1558, %v1559
      %v1561 = vshll.u32 2131351028, %v1552
      %v1562 = vshrl.u32 2102212464, %v1553
      %v1563 = vor.u32 %v1561, %v1562
      %v1564 = vshll.u32 2102212464, %v1552
      %v1565 = vshrl.u32 920167782, %v1553
      %v1566 = vor.u32 %v1564, %v1565
      %v1567 = vshll.u32 920167782, %v1552
      %v1568 = vshrl.u32 1326507024, %v1553
      %v1569 = vor.u32 %v1567, %v1568
      %vm1570 = vcmp.lt.s32.totalorder %v1551, 1
      %vm1571 = vcmp.lt.s32.totalorder %v1551, 2
      %vm1572 = vcmp.lt.s32.totalorder %v1551, 3
      %vm1573 = vcmp.lt.s32.totalorder %v1551, 4
      %v1574 = vsel %vm1570, %v1554, %v1557
      %v1575 = vsel %vm1573, %v1563, 2102212464
      %v1576 = vsel %vm1572, %v1560, %v1575
      %v1577 = vsel %vm1571, %v1574, %v1576
      %v1578 = vsel %vm1570, %v1557, %v1560
      %v1579 = vsel %vm1573, %v1566, 920167782
      %v1580 = vsel %vm1572, %v1563, %v1579
      %v1581 = vsel %vm1571, %v1578, %v1580
      %v1582 = vsel %vm1570, %v1560, %v1563
      %v1583 = vsel %vm1573, %v1569, 1326507024
      %v1584 = vsel %vm1572, %v1566, %v1583
      %v1585 = vsel %vm1571, %v1582, %v1584
      %v1586 = vshll.u32 %v1546, 8
      %v1587 = vand.u32 %v1586, 65535
      %v1588 = vshrl.u32 %v1586, 16
      %v1589 = vand.u32 %v1585, 65535
      %v1590 = vshrl.u32 %v1585, 16
      %v1591 = vmul.u32 %v1587, %v1589
      %v1592 = vmul.u32 %v1587, %v1590
      %v1593 = vmul.u32 %v1588, %v1589
      %v1594 = vmul.u32 %v1588, %v1590
      %v1595 = vshll.u32 %v1592, 16
      %v1596 = vshrl.u32 %v1592, 16
      %v1597 = vshll.u32 %v1593, 16
      %v1598 = vshrl.u32 %v1593, 16
      %vm1599 = vc.u32 %v1591, %v1595
      %v1600 = vsel %vm1599, 1, 0
      %v1601 = vadd.s32 %v1591, %v1595
      %v1602 = vadd.s32 %v1594, %v1600
      %vm1603 = vc.u32 %v1601, %v1597
      %v1604 = vsel %vm1603, 1, 0
      %v1605 = vadd.s32 %v1601, %v1597
      %v1606 = vadd.s32 %v1602, %v1604
      %v1607 = vadd.s32 %v1606, %v1596
      %v1608 = vadd.s32 %v1607, %v1598
      %v1609 = vand.u32 %v1586, 65535
      %v1610 = vshrl.u32 %v1586, 16
      %v1611 = vand.u32 %v1581, 65535
      %v1612 = vshrl.u32 %v1581, 16
      %v1613 = vmul.u32 %v1609, %v1611
      %v1614 = vmul.u32 %v1609, %v1612
      %v1615 = vmul.u32 %v1610, %v1611
      %v1616 = vmul.u32 %v1610, %v1612
      %v1617 = vshll.u32 %v1614, 16
      %v1618 = vshrl.u32 %v1614, 16
      %v1619 = vshll.u32 %v1615, 16
      %v1620 = vshrl.u32 %v1615, 16
      %vm1621 = vc.u32 %v1613, %v1617
      %v1622 = vsel %vm1621, 1, 0
      %v1623 = vadd.s32 %v1613, %v1617
      %v1624 = vadd.s32 %v1616, %v1622
      %vm1625 = vc.u32 %v1623, %v1619
      %v1626 = vsel %vm1625, 1, 0
      %v1627 = vadd.s32 %v1623, %v1619
      %v1628 = vadd.s32 %v1624, %v1626
      %v1629 = vadd.s32 %v1628, %v1618
      %v1630 = vadd.s32 %v1629, %v1620
      %v1631 = vmul.u32 %v1586, %v1577
      %v1632 = vadd.s32 %v1608, %v1627
      %vm1633 = vc.u32 %v1608, %v1627
      %v1634 = vadd.s32 %v1630, 1
      %v1635 = vsel %vm1633, %v1634, %v1630
      %v1636 = vadd.s32 %v1631, %v1635
      %v1637 = vadd.s32 %v1636, 536870912
      %v1638 = vshrl.u32 %v1637, 30
      %v1639 = vshll.u32 %v1638, 30
      %v1640 = vsub.s32 %v1636, %v1639
      %vm1641 = vcmp.lt.s32.totalorder %v1640, 0
      %v1642 = vsub.s32 0, %v1640
      %v1643 = vsel %vm1641, %v1642, %v1640
      %v1644 = vclz %v1643
      %v1645 = vsub.s32 %v1644, 2
      %vm1646 = vcmp.gt.s32.totalorder 0, %v1645
      %v1647 = vsel %vm1646, 0, %v1645
      %v1648 = vsub.s32 32, %v1647
      %v1649 = vshll.u32 %v1640, %v1647
      %v1650 = vshrl.u32 %v1632, %v1648
      %v1651 = vor.u32 %v1649, %v1650
      %v1652 = vsub.s32 4294967266, %v1647
      %v1653 = vadd.s32 %v1652, 127
      %v1654 = vshll.u32 %v1653, 23
      %v1655 = vor.u32 4788187, %v1654
      %v1656 = vand.u32 2147483647, %v1655
      %v1658 = vcvt.s32.f32 %v1651
      %v1659 = vmul.f32 %v1658, %v1656
      %v1660 = vxor.u32 %v1659, 2147483648
      %v1661 = vsel %vm1540, %v1660, %v1659
      %v1662 = vsub.s32 4, %v1638
      %v1663 = vsel %vm1540, %v1662, %v1638
      %v1664 = vsel %vm1539, %v444, %v1661
      %v1665 = vsel %vm1539, 0, %v1663
      %v1666 = vmul.f32 %v1664, %v1664
      %v1667 = vmul.f32 %v1666, -0.001358992
      %v1668 = vadd.f32 %v1667, 0.041655596
      %v1669 = vmul.f32 %v1666, %v1668
      %v1670 = vadd.f32 %v1669, -0.4999988
      %v1671 = vmul.f32 %v1666, %v1670
      %v1672 = vadd.f32 1.0, %v1671
      %v1673 = vmul.f32 %v1664, %v1664
      %v1674 = vmul.f32 %v1673, -0.00019511016
      %v1675 = vadd.f32 %v1674, 0.008332121
      %v1676 = vmul.f32 %v1673, %v1675
      %v1677 = vadd.f32 %v1676, -0.16666654
      %v1678 = vmul.f32 %v1673, %v1677
      %v1679 = vadd.f32 %v1678, 1.0
      %v1680 = vmul.f32 %v1679, %v1664
      %vm1681 = vweird.f32 %v444
      %v1682 = vadd.s32 %v1665, 3
      %v1683 = vand.u32 %v1682, 3
      %vm1684 = vcmp.lt.s32.totalorder %v1683, 2
      %vm1685 = vcmp.eq.s32.totalorder %v1683, 0
      %v1686 = vxor.u32 %v1680, 2147483648
      %v1687 = vsel %vm1685, %v1672, %v1686
      %vm1688 = vcmp.eq.s32.totalorder %v1683, 2
      %v1689 = vxor.u32 %v1672, 2147483648
      %v1690 = vsel %vm1688, %v1689, %v1680
      %v1691 = vsel %vm1684, %v1687, %v1690
      %v1692 = vsel %vm1681, nan, %v1691
      %v1693 = vand.u32 2147483647, %v445
      %vm1694 = vcmp.le.f32.partialorder %v1693, 0.7853982
      %vm1695 = vcmp.lt.s32.totalorder %v445, 0
      %v1696 = vand.u32 %v445, 2139095040
      %v1697 = vshrl.u32 %v1696, 23
      %v1698 = vsub.s32 %v1697, 127
      %v1699 = vand.u32 2147483647, %v445
      %v1700 = vand.u32 %v1699, 8388607
      %v1701 = vor.u32 %v1700, 8388608
      %v1702 = vsub.s32 0, %v1701
      %v1703 = vadd.s32 %v1698, 1
      %vm1704 = vcmp.gt.s32.totalorder %v1703, 0
      %v1705 = vsel %vm1704, %v1703, 0
      %v1706 = vshrl.u32 %v1705, 5
      %v1707 = vand.u32 %v1705, 31
      %v1708 = vsub.s32 32, %v1707
      %v1709 = vshrl.u32 683565275, %v1708
      %v1710 = vshll.u32 683565275, %v1707
      %v1711 = vshrl.u32 2475754826, %v1708
      %v1712 = vor.u32 %v1710, %v1711
      %v1713 = vshll.u32 2475754826, %v1707
      %v1714 = vshrl.u32 2131351028, %v1708
      %v1715 = vor.u32 %v1713, %v1714
      %v1716 = vshll.u32 2131351028, %v1707
      %v1717 = vshrl.u32 2102212464, %v1708
      %v1718 = vor.u32 %v1716, %v1717
      %v1719 = vshll.u32 2102212464, %v1707
      %v1720 = vshrl.u32 920167782, %v1708
      %v1721 = vor.u32 %v1719, %v1720
      %v1722 = vshll.u32 920167782, %v1707
      %v1723 = vshrl.u32 1326507024, %v1708
      %v1724 = vor.u32 %v1722, %v1723
      %vm1725 = vcmp.lt.s32.totalorder %v1706, 1
      %vm1726 = vcmp.lt.s32.totalorder %v1706, 2
      %vm1727 = vcmp.lt.s32.totalorder %v1706, 3
      %vm1728 = vcmp.lt.s32.totalorder %v1706, 4
      %v1729 = vsel %vm1725, %v1709, %v1712
      %v1730 = vsel %vm1728, %v1718, 2102212464
      %v1731 = vsel %vm1727, %v1715, %v1730
      %v1732 = vsel %vm1726, %v1729, %v1731
      %v1733 = vsel %vm1725, %v1712, %v1715
      %v1734 = vsel %vm1728, %v1721, 920167782
      %v1735 = vsel %vm1727, %v1718, %v1734
      %v1736 = vsel %vm1726, %v1733, %v1735
      %v1737 = vsel %vm1725, %v1715, %v1718
      %v1738 = vsel %vm1728, %v1724, 1326507024
      %v1739 = vsel %vm1727, %v1721, %v1738
      %v1740 = vsel %vm1726, %v1737, %v1739
      %v1741 = vshll.u32 %v1701, 8
      %v1742 = vand.u32 %v1741, 65535
      %v1743 = vshrl.u32 %v1741, 16
      %v1744 = vand.u32 %v1740, 65535
      %v1745 = vshrl.u32 %v1740, 16
      %v1746 = vmul.u32 %v1742, %v1744
      %v1747 = vmul.u32 %v1742, %v1745
      %v1748 = vmul.u32 %v1743, %v1744
      %v1749 = vmul.u32 %v1743, %v1745
      %v1750 = vshll.u32 %v1747, 16
      %v1751 = vshrl.u32 %v1747, 16
      %v1752 = vshll.u32 %v1748, 16
      %v1753 = vshrl.u32 %v1748, 16
      %vm1754 = vc.u32 %v1746, %v1750
      %v1755 = vsel %vm1754, 1, 0
      %v1756 = vadd.s32 %v1746, %v1750
      %v1757 = vadd.s32 %v1749, %v1755
      %vm1758 = vc.u32 %v1756, %v1752
      %v1759 = vsel %vm1758, 1, 0
      %v1760 = vadd.s32 %v1756, %v1752
      %v1761 = vadd.s32 %v1757, %v1759
      %v1762 = vadd.s32 %v1761, %v1751
      %v1763 = vadd.s32 %v1762, %v1753
      %v1764 = vand.u32 %v1741, 65535
      %v1765 = vshrl.u32 %v1741, 16
      %v1766 = vand.u32 %v1736, 65535
      %v1767 = vshrl.u32 %v1736, 16
      %v1768 = vmul.u32 %v1764, %v1766
      %v1769 = vmul.u32 %v1764, %v1767
      %v1770 = vmul.u32 %v1765, %v1766
      %v1771 = vmul.u32 %v1765, %v1767
      %v1772 = vshll.u32 %v1769, 16
      %v1773 = vshrl.u32 %v1769, 16
      %v1774 = vshll.u32 %v1770, 16
      %v1775 = vshrl.u32 %v1770, 16
      %vm1776 = vc.u32 %v1768, %v1772
      %v1777 = vsel %vm1776, 1, 0
      %v1778 = vadd.s32 %v1768, %v1772
      %v1779 = vadd.s32 %v1771, %v1777
      %vm1780 = vc.u32 %v1778, %v1774
      %v1781 = vsel %vm1780, 1, 0
      %v1782 = vadd.s32 %v1778, %v1774
      %v1783 = vadd.s32 %v1779, %v1781
      %v1784 = vadd.s32 %v1783, %v1773
      %v1785 = vadd.s32 %v1784, %v1775
      %v1786 = vmul.u32 %v1741, %v1732
      %v1787 = vadd.s32 %v1763, %v1782
      %vm1788 = vc.u32 %v1763, %v1782
      %v1789 = vadd.s32 %v1785, 1
      %v1790 = vsel %vm1788, %v1789, %v1785
      %v1791 = vadd.s32 %v1786, %v1790
      %v1792 = vadd.s32 %v1791, 536870912
      %v1793 = vshrl.u32 %v1792, 30
      %v1794 = vshll.u32 %v1793, 30
      %v1795 = vsub.s32 %v1791, %v1794
      %vm1796 = vcmp.lt.s32.totalorder %v1795, 0
      %v1797 = vsub.s32 0, %v1795
      %v1798 = vsel %vm1796, %v1797, %v1795
      %v1799 = vclz %v1798
      %v1800 = vsub.s32 %v1799, 2
      %vm1801 = vcmp.gt.s32.totalorder 0, %v1800
      %v1802 = vsel %vm1801, 0, %v1800
      %v1803 = vsub.s32 32, %v1802
      %v1804 = vshll.u32 %v1795, %v1802
      %v1805 = vshrl.u32 %v1787, %v1803
      %v1806 = vor.u32 %v1804, %v1805
      %v1807 = vsub.s32 4294967266, %v1802
      %v1808 = vadd.s32 %v1807, 127
      %v1809 = vshll.u32 %v1808, 23
      %v1810 = vor.u32 4788187, %v1809
      %v1811 = vand.u32 2147483647, %v1810
      %v1813 = vcvt.s32.f32 %v1806
      %v1814 = vmul.f32 %v1813, %v1811
      %v1815 = vxor.u32 %v1814, 2147483648
      %v1816 = vsel %vm1695, %v1815, %v1814
      %v1817 = vsub.s32 4, %v1793
      %v1818 = vsel %vm1695, %v1817, %v1793
      %v1819 = vsel %vm1694, %v445, %v1816
      %v1820 = vsel %vm1694, 0, %v1818
      %v1821 = vmul.f32 %v1819, %v1819
      %v1822 = vmul.f32 %v1821, -0.001358992
      %v1823 = vadd.f32 %v1822, 0.041655596
      %v1824 = vmul.f32 %v1821, %v1823
      %v1825 = vadd.f32 %v1824, -0.4999988
      %v1826 = vmul.f32 %v1821, %v1825
      %v1827 = vadd.f32 1.0, %v1826
      %v1828 = vmul.f32 %v1819, %v1819
      %v1829 = vmul.f32 %v1828, -0.00019511016
      %v1830 = vadd.f32 %v1829, 0.008332121
      %v1831 = vmul.f32 %v1828, %v1830
      %v1832 = vadd.f32 %v1831, -0.16666654
      %v1833 = vmul.f32 %v1828, %v1832
      %v1834 = vadd.f32 %v1833, 1.0
      %v1835 = vmul.f32 %v1834, %v1819
      %vm1836 = vweird.f32 %v445
      %v1837 = vadd.s32 %v1820, 3
      %v1838 = vand.u32 %v1837, 3
      %vm1839 = vcmp.lt.s32.totalorder %v1838, 2
      %vm1840 = vcmp.eq.s32.totalorder %v1838, 0
      %v1841 = vxor.u32 %v1835, 2147483648
      %v1842 = vsel %vm1840, %v1827, %v1841
      %vm1843 = vcmp.eq.s32.totalorder %v1838, 2
      %v1844 = vxor.u32 %v1827, 2147483648
      %v1845 = vsel %vm1843, %v1844, %v1835
      %v1846 = vsel %vm1839, %v1842, %v1845
      %v1847 = vsel %vm1836, nan, %v1846
      %v1848 = vand.u32 2147483647, %v446
      %vm1849 = vcmp.le.f32.partialorder %v1848, 0.7853982
      %vm1850 = vcmp.lt.s32.totalorder %v446, 0
      %v1851 = vand.u32 %v446, 2139095040
      %v1852 = vshrl.u32 %v1851, 23
      %v1853 = vsub.s32 %v1852, 127
      %v1854 = vand.u32 2147483647, %v446
      %v1855 = vand.u32 %v1854, 8388607
      %v1856 = vor.u32 %v1855, 8388608
      %v1857 = vsub.s32 0, %v1856
      %v1858 = vadd.s32 %v1853, 1
      %vm1859 = vcmp.gt.s32.totalorder %v1858, 0
      %v1860 = vsel %vm1859, %v1858, 0
      %v1861 = vshrl.u32 %v1860, 5
      %v1862 = vand.u32 %v1860, 31
      %v1863 = vsub.s32 32, %v1862
      %v1864 = vshrl.u32 683565275, %v1863
      %v1865 = vshll.u32 683565275, %v1862
      %v1866 = vshrl.u32 2475754826, %v1863
      %v1867 = vor.u32 %v1865, %v1866
      %v1868 = vshll.u32 2475754826, %v1862
      %v1869 = vshrl.u32 2131351028, %v1863
      %v1870 = vor.u32 %v1868, %v1869
      %v1871 = vshll.u32 2131351028, %v1862
      %v1872 = vshrl.u32 2102212464, %v1863
      %v1873 = vor.u32 %v1871, %v1872
      %v1874 = vshll.u32 2102212464, %v1862
      %v1875 = vshrl.u32 920167782, %v1863
      %v1876 = vor.u32 %v1874, %v1875
      %v1877 = vshll.u32 920167782, %v1862
      %v1878 = vshrl.u32 1326507024, %v1863
      %v1879 = vor.u32 %v1877, %v1878
      %vm1880 = vcmp.lt.s32.totalorder %v1861, 1
      %vm1881 = vcmp.lt.s32.totalorder %v1861, 2
      %vm1882 = vcmp.lt.s32.totalorder %v1861, 3
      %vm1883 = vcmp.lt.s32.totalorder %v1861, 4
      %v1884 = vsel %vm1880, %v1864, %v1867
      %v1885 = vsel %vm1883, %v1873, 2102212464
      %v1886 = vsel %vm1882, %v1870, %v1885
      %v1887 = vsel %vm1881, %v1884, %v1886
      %v1888 = vsel %vm1880, %v1867, %v1870
      %v1889 = vsel %vm1883, %v1876, 920167782
      %v1890 = vsel %vm1882, %v1873, %v1889
      %v1891 = vsel %vm1881, %v1888, %v1890
      %v1892 = vsel %vm1880, %v1870, %v1873
      %v1893 = vsel %vm1883, %v1879, 1326507024
      %v1894 = vsel %vm1882, %v1876, %v1893
      %v1895 = vsel %vm1881, %v1892, %v1894
      %v1896 = vshll.u32 %v1856, 8
      %v1897 = vand.u32 %v1896, 65535
      %v1898 = vshrl.u32 %v1896, 16
      %v1899 = vand.u32 %v1895, 65535
      %v1900 = vshrl.u32 %v1895, 16
      %v1901 = vmul.u32 %v1897, %v1899
      %v1902 = vmul.u32 %v1897, %v1900
      %v1903 = vmul.u32 %v1898, %v1899
      %v1904 = vmul.u32 %v1898, %v1900
      %v1905 = vshll.u32 %v1902, 16
      %v1906 = vshrl.u32 %v1902, 16
      %v1907 = vshll.u32 %v1903, 16
      %v1908 = vshrl.u32 %v1903, 16
      %vm1909 = vc.u32 %v1901, %v1905
      %v1910 = vsel %vm1909, 1, 0
      %v1911 = vadd.s32 %v1901, %v1905
      %v1912 = vadd.s32 %v1904, %v1910
      %vm1913 = vc.u32 %v1911, %v1907
      %v1914 = vsel %vm1913, 1, 0
      %v1915 = vadd.s32 %v1911, %v1907
      %v1916 = vadd.s32 %v1912, %v1914
      %v1917 = vadd.s32 %v1916, %v1906
      %v1918 = vadd.s32 %v1917, %v1908
      %v1919 = vand.u32 %v1896, 65535
      %v1920 = vshrl.u32 %v1896, 16
      %v1921 = vand.u32 %v1891, 65535
      %v1922 = vshrl.u32 %v1891, 16
      %v1923 = vmul.u32 %v1919, %v1921
      %v1924 = vmul.u32 %v1919, %v1922
      %v1925 = vmul.u32 %v1920, %v1921
      %v1926 = vmul.u32 %v1920, %v1922
      %v1927 = vshll.u32 %v1924, 16
      %v1928 = vshrl.u32 %v1924, 16
      %v1929 = vshll.u32 %v1925, 16
      %v1930 = vshrl.u32 %v1925, 16
      %vm1931 = vc.u32 %v1923, %v1927
      %v1932 = vsel %vm1931, 1, 0
      %v1933 = vadd.s32 %v1923, %v1927
      %v1934 = vadd.s32 %v1926, %v1932
      %vm1935 = vc.u32 %v1933, %v1929
      %v1936 = vsel %vm1935, 1, 0
      %v1937 = vadd.s32 %v1933, %v1929
      %v1938 = vadd.s32 %v1934, %v1936
      %v1939 = vadd.s32 %v1938, %v1928
      %v1940 = vadd.s32 %v1939, %v1930
      %v1941 = vmul.u32 %v1896, %v1887
      %v1942 = vadd.s32 %v1918, %v1937
      %vm1943 = vc.u32 %v1918, %v1937
      %v1944 = vadd.s32 %v1940, 1
      %v1945 = vsel %vm1943, %v1944, %v1940
      %v1946 = vadd.s32 %v1941, %v1945
      %v1947 = vadd.s32 %v1946, 536870912
      %v1948 = vshrl.u32 %v1947, 30
      %v1949 = vshll.u32 %v1948, 30
      %v1950 = vsub.s32 %v1946, %v1949
      %vm1951 = vcmp.lt.s32.totalorder %v1950, 0
      %v1952 = vsub.s32 0, %v1950
      %v1953 = vsel %vm1951, %v1952, %v1950
      %v1954 = vclz %v1953
      %v1955 = vsub.s32 %v1954, 2
      %vm1956 = vcmp.gt.s32.totalorder 0, %v1955
      %v1957 = vsel %vm1956, 0, %v1955
      %v1958 = vsub.s32 32, %v1957
      %v1959 = vshll.u32 %v1950, %v1957
      %v1960 = vshrl.u32 %v1942, %v1958
      %v1961 = vor.u32 %v1959, %v1960
      %v1962 = vsub.s32 4294967266, %v1957
      %v1963 = vadd.s32 %v1962, 127
      %v1964 = vshll.u32 %v1963, 23
      %v1965 = vor.u32 4788187, %v1964
      %v1966 = vand.u32 2147483647, %v1965
      %v1968 = vcvt.s32.f32 %v1961
      %v1969 = vmul.f32 %v1968, %v1966
      %v1970 = vxor.u32 %v1969, 2147483648
      %v1971 = vsel %vm1850, %v1970, %v1969
      %v1972 = vsub.s32 4, %v1948
      %v1973 = vsel %vm1850, %v1972, %v1948
      %v1974 = vsel %vm1849, %v446, %v1971
      %v1975 = vsel %vm1849, 0, %v1973
      %v1976 = vmul.f32 %v1974, %v1974
      %v1977 = vmul.f32 %v1976, -0.001358992
      %v1978 = vadd.f32 %v1977, 0.041655596
      %v1979 = vmul.f32 %v1976, %v1978
      %v1980 = vadd.f32 %v1979, -0.4999988
      %v1981 = vmul.f32 %v1976, %v1980
      %v1982 = vadd.f32 1.0, %v1981
      %v1983 = vmul.f32 %v1974, %v1974
      %v1984 = vmul.f32 %v1983, -0.00019511016
      %v1985 = vadd.f32 %v1984, 0.008332121
      %v1986 = vmul.f32 %v1983, %v1985
      %v1987 = vadd.f32 %v1986, -0.16666654
      %v1988 = vmul.f32 %v1983, %v1987
      %v1989 = vadd.f32 %v1988, 1.0
      %v1990 = vmul.f32 %v1989, %v1974
      %vm1991 = vweird.f32 %v446
      %v1992 = vadd.s32 %v1975, 3
      %v1993 = vand.u32 %v1992, 3
      %vm1994 = vcmp.lt.s32.totalorder %v1993, 2
      %vm1995 = vcmp.eq.s32.totalorder %v1993, 0
      %v1996 = vxor.u32 %v1990, 2147483648
      %v1997 = vsel %vm1995, %v1982, %v1996
      %vm1998 = vcmp.eq.s32.totalorder %v1993, 2
      %v1999 = vxor.u32 %v1982, 2147483648
      %v2000 = vsel %vm1998, %v1999, %v1990
      %v2001 = vsel %vm1994, %v1997, %v2000
      %v2002 = vsel %vm1991, nan, %v2001
      %v2003 = vand.u32 2147483647, %v447
      %vm2004 = vcmp.le.f32.partialorder %v2003, 0.7853982
      %vm2005 = vcmp.lt.s32.totalorder %v447, 0
      %v2006 = vand.u32 %v447, 2139095040
      %v2007 = vshrl.u32 %v2006, 23
      %v2008 = vsub.s32 %v2007, 127
      %v2009 = vand.u32 2147483647, %v447
      %v2010 = vand.u32 %v2009, 8388607
      %v2011 = vor.u32 %v2010, 8388608
      %v2012 = vsub.s32 0, %v2011
      %v2013 = vadd.s32 %v2008, 1
      %vm2014 = vcmp.gt.s32.totalorder %v2013, 0
      %v2015 = vsel %vm2014, %v2013, 0
      %v2016 = vshrl.u32 %v2015, 5
      %v2017 = vand.u32 %v2015, 31
      %v2018 = vsub.s32 32, %v2017
      %v2019 = vshrl.u32 683565275, %v2018
      %v2020 = vshll.u32 683565275, %v2017
      %v2021 = vshrl.u32 2475754826, %v2018
      %v2022 = vor.u32 %v2020, %v2021
      %v2023 = vshll.u32 2475754826, %v2017
      %v2024 = vshrl.u32 2131351028, %v2018
      %v2025 = vor.u32 %v2023, %v2024
      %v2026 = vshll.u32 2131351028, %v2017
      %v2027 = vshrl.u32 2102212464, %v2018
      %v2028 = vor.u32 %v2026, %v2027
      %v2029 = vshll.u32 2102212464, %v2017
      %v2030 = vshrl.u32 920167782, %v2018
      %v2031 = vor.u32 %v2029, %v2030
      %v2032 = vshll.u32 920167782, %v2017
      %v2033 = vshrl.u32 1326507024, %v2018
      %v2034 = vor.u32 %v2032, %v2033
      %vm2035 = vcmp.lt.s32.totalorder %v2016, 1
      %vm2036 = vcmp.lt.s32.totalorder %v2016, 2
      %vm2037 = vcmp.lt.s32.totalorder %v2016, 3
      %vm2038 = vcmp.lt.s32.totalorder %v2016, 4
      %v2039 = vsel %vm2035, %v2019, %v2022
      %v2040 = vsel %vm2038, %v2028, 2102212464
      %v2041 = vsel %vm2037, %v2025, %v2040
      %v2042 = vsel %vm2036, %v2039, %v2041
      %v2043 = vsel %vm2035, %v2022, %v2025
      %v2044 = vsel %vm2038, %v2031, 920167782
      %v2045 = vsel %vm2037, %v2028, %v2044
      %v2046 = vsel %vm2036, %v2043, %v2045
      %v2047 = vsel %vm2035, %v2025, %v2028
      %v2048 = vsel %vm2038, %v2034, 1326507024
      %v2049 = vsel %vm2037, %v2031, %v2048
      %v2050 = vsel %vm2036, %v2047, %v2049
      %v2051 = vshll.u32 %v2011, 8
      %v2052 = vand.u32 %v2051, 65535
      %v2053 = vshrl.u32 %v2051, 16
      %v2054 = vand.u32 %v2050, 65535
      %v2055 = vshrl.u32 %v2050, 16
      %v2056 = vmul.u32 %v2052, %v2054
      %v2057 = vmul.u32 %v2052, %v2055
      %v2058 = vmul.u32 %v2053, %v2054
      %v2059 = vmul.u32 %v2053, %v2055
      %v2060 = vshll.u32 %v2057, 16
      %v2061 = vshrl.u32 %v2057, 16
      %v2062 = vshll.u32 %v2058, 16
      %v2063 = vshrl.u32 %v2058, 16
      %vm2064 = vc.u32 %v2056, %v2060
      %v2065 = vsel %vm2064, 1, 0
      %v2066 = vadd.s32 %v2056, %v2060
      %v2067 = vadd.s32 %v2059, %v2065
      %vm2068 = vc.u32 %v2066, %v2062
      %v2069 = vsel %vm2068, 1, 0
      %v2070 = vadd.s32 %v2066, %v2062
      %v2071 = vadd.s32 %v2067, %v2069
      %v2072 = vadd.s32 %v2071, %v2061
      %v2073 = vadd.s32 %v2072, %v2063
      %v2074 = vand.u32 %v2051, 65535
      %v2075 = vshrl.u32 %v2051, 16
      %v2076 = vand.u32 %v2046, 65535
      %v2077 = vshrl.u32 %v2046, 16
      %v2078 = vmul.u32 %v2074, %v2076
      %v2079 = vmul.u32 %v2074, %v2077
      %v2080 = vmul.u32 %v2075, %v2076
      %v2081 = vmul.u32 %v2075, %v2077
      %v2082 = vshll.u32 %v2079, 16
      %v2083 = vshrl.u32 %v2079, 16
      %v2084 = vshll.u32 %v2080, 16
      %v2085 = vshrl.u32 %v2080, 16
      %vm2086 = vc.u32 %v2078, %v2082
      %v2087 = vsel %vm2086, 1, 0
      %v2088 = vadd.s32 %v2078, %v2082
      %v2089 = vadd.s32 %v2081, %v2087
      %vm2090 = vc.u32 %v2088, %v2084
      %v2091 = vsel %vm2090, 1, 0
      %v2092 = vadd.s32 %v2088, %v2084
      %v2093 = vadd.s32 %v2089, %v2091
      %v2094 = vadd.s32 %v2093, %v2083
      %v2095 = vadd.s32 %v2094, %v2085
      %v2096 = vmul.u32 %v2051, %v2042
      %v2097 = vadd.s32 %v2073, %v2092
      %vm2098 = vc.u32 %v2073, %v2092
      %v2099 = vadd.s32 %v2095, 1
      %v2100 = vsel %vm2098, %v2099, %v2095
      %v2101 = vadd.s32 %v2096, %v2100
      %v2102 = vadd.s32 %v2101, 536870912
      %v2103 = vshrl.u32 %v2102, 30
      %v2104 = vshll.u32 %v2103, 30
      %v2105 = vsub.s32 %v2101, %v2104
      %vm2106 = vcmp.lt.s32.totalorder %v2105, 0
      %v2107 = vsub.s32 0, %v2105
      %v2108 = vsel %vm2106, %v2107, %v2105
      %v2109 = vclz %v2108
      %v2110 = vsub.s32 %v2109, 2
      %vm2111 = vcmp.gt.s32.totalorder 0, %v2110
      %v2112 = vsel %vm2111, 0, %v2110
      %v2113 = vsub.s32 32, %v2112
      %v2114 = vshll.u32 %v2105, %v2112
      %v2115 = vshrl.u32 %v2097, %v2113
      %v2116 = vor.u32 %v2114, %v2115
      %v2117 = vsub.s32 4294967266, %v2112
      %v2118 = vadd.s32 %v2117, 127
      %v2119 = vshll.u32 %v2118, 23
      %v2120 = vor.u32 4788187, %v2119
      %v2121 = vand.u32 2147483647, %v2120
      %v2123 = vcvt.s32.f32 %v2116
      %v2124 = vmul.f32 %v2123, %v2121
      %v2125 = vxor.u32 %v2124, 2147483648
      %v2126 = vsel %vm2005, %v2125, %v2124
      %v2127 = vsub.s32 4, %v2103
      %v2128 = vsel %vm2005, %v2127, %v2103
      %v2129 = vsel %vm2004, %v447, %v2126
      %v2130 = vsel %vm2004, 0, %v2128
      %v2131 = vmul.f32 %v2129, %v2129
      %v2132 = vmul.f32 %v2131, -0.001358992
      %v2133 = vadd.f32 %v2132, 0.041655596
      %v2134 = vmul.f32 %v2131, %v2133
      %v2135 = vadd.f32 %v2134, -0.4999988
      %v2136 = vmul.f32 %v2131, %v2135
      %v2137 = vadd.f32 1.0, %v2136
      %v2138 = vmul.f32 %v2129, %v2129
      %v2139 = vmul.f32 %v2138, -0.00019511016
      %v2140 = vadd.f32 %v2139, 0.008332121
      %v2141 = vmul.f32 %v2138, %v2140
      %v2142 = vadd.f32 %v2141, -0.16666654
      %v2143 = vmul.f32 %v2138, %v2142
      %v2144 = vadd.f32 %v2143, 1.0
      %v2145 = vmul.f32 %v2144, %v2129
      %vm2146 = vweird.f32 %v447
      %v2147 = vadd.s32 %v2130, 3
      %v2148 = vand.u32 %v2147, 3
      %vm2149 = vcmp.lt.s32.totalorder %v2148, 2
      %vm2150 = vcmp.eq.s32.totalorder %v2148, 0
      %v2151 = vxor.u32 %v2145, 2147483648
      %v2152 = vsel %vm2150, %v2137, %v2151
      %vm2153 = vcmp.eq.s32.totalorder %v2148, 2
      %v2154 = vxor.u32 %v2137, 2147483648
      %v2155 = vsel %vm2153, %v2154, %v2145
      %v2156 = vsel %vm2149, %v2152, %v2155
      %v2157 = vsel %vm2146, nan, %v2156
      %v2158 = vand.u32 2147483647, %v448
      %vm2159 = vcmp.le.f32.partialorder %v2158, 0.7853982
      %vm2160 = vcmp.lt.s32.totalorder %v448, 0
      %v2161 = vand.u32 %v448, 2139095040
      %v2162 = vshrl.u32 %v2161, 23
      %v2163 = vsub.s32 %v2162, 127
      %v2164 = vand.u32 2147483647, %v448
      %v2165 = vand.u32 %v2164, 8388607
      %v2166 = vor.u32 %v2165, 8388608
      %v2167 = vsub.s32 0, %v2166
      %v2168 = vadd.s32 %v2163, 1
      %vm2169 = vcmp.gt.s32.totalorder %v2168, 0
      %v2170 = vsel %vm2169, %v2168, 0
      %v2171 = vshrl.u32 %v2170, 5
      %v2172 = vand.u32 %v2170, 31
      %v2173 = vsub.s32 32, %v2172
      %v2174 = vshrl.u32 683565275, %v2173
      %v2175 = vshll.u32 683565275, %v2172
      %v2176 = vshrl.u32 2475754826, %v2173
      %v2177 = vor.u32 %v2175, %v2176
      %v2178 = vshll.u32 2475754826, %v2172
      %v2179 = vshrl.u32 2131351028, %v2173
      %v2180 = vor.u32 %v2178, %v2179
      %v2181 = vshll.u32 2131351028, %v2172
      %v2182 = vshrl.u32 2102212464, %v2173
      %v2183 = vor.u32 %v2181, %v2182
      %v2184 = vshll.u32 2102212464, %v2172
      %v2185 = vshrl.u32 920167782, %v2173
      %v2186 = vor.u32 %v2184, %v2185
      %v2187 = vshll.u32 920167782, %v2172
      %v2188 = vshrl.u32 1326507024, %v2173
      %v2189 = vor.u32 %v2187, %v2188
      %vm2190 = vcmp.lt.s32.totalorder %v2171, 1
      %vm2191 = vcmp.lt.s32.totalorder %v2171, 2
      %vm2192 = vcmp.lt.s32.totalorder %v2171, 3
      %vm2193 = vcmp.lt.s32.totalorder %v2171, 4
      %v2194 = vsel %vm2190, %v2174, %v2177
      %v2195 = vsel %vm2193, %v2183, 2102212464
      %v2196 = vsel %vm2192, %v2180, %v2195
      %v2197 = vsel %vm2191, %v2194, %v2196
      %v2198 = vsel %vm2190, %v2177, %v2180
      %v2199 = vsel %vm2193, %v2186, 920167782
      %v2200 = vsel %vm2192, %v2183, %v2199
      %v2201 = vsel %vm2191, %v2198, %v2200
      %v2202 = vsel %vm2190, %v2180, %v2183
      %v2203 = vsel %vm2193, %v2189, 1326507024
      %v2204 = vsel %vm2192, %v2186, %v2203
      %v2205 = vsel %vm2191, %v2202, %v2204
      %v2206 = vshll.u32 %v2166, 8
      %v2207 = vand.u32 %v2206, 65535
      %v2208 = vshrl.u32 %v2206, 16
      %v2209 = vand.u32 %v2205, 65535
      %v2210 = vshrl.u32 %v2205, 16
      %v2211 = vmul.u32 %v2207, %v2209
      %v2212 = vmul.u32 %v2207, %v2210
      %v2213 = vmul.u32 %v2208, %v2209
      %v2214 = vmul.u32 %v2208, %v2210
      %v2215 = vshll.u32 %v2212, 16
      %v2216 = vshrl.u32 %v2212, 16
      %v2217 = vshll.u32 %v2213, 16
      %v2218 = vshrl.u32 %v2213, 16
      %vm2219 = vc.u32 %v2211, %v2215
      %v2220 = vsel %vm2219, 1, 0
      %v2221 = vadd.s32 %v2211, %v2215
      %v2222 = vadd.s32 %v2214, %v2220
      %vm2223 = vc.u32 %v2221, %v2217
      %v2224 = vsel %vm2223, 1, 0
      %v2225 = vadd.s32 %v2221, %v2217
      %v2226 = vadd.s32 %v2222, %v2224
      %v2227 = vadd.s32 %v2226, %v2216
      %v2228 = vadd.s32 %v2227, %v2218
      %v2229 = vand.u32 %v2206, 65535
      %v2230 = vshrl.u32 %v2206, 16
      %v2231 = vand.u32 %v2201, 65535
      %v2232 = vshrl.u32 %v2201, 16
      %v2233 = vmul.u32 %v2229, %v2231
      %v2234 = vmul.u32 %v2229, %v2232
      %v2235 = vmul.u32 %v2230, %v2231
      %v2236 = vmul.u32 %v2230, %v2232
      %v2237 = vshll.u32 %v2234, 16
      %v2238 = vshrl.u32 %v2234, 16
      %v2239 = vshll.u32 %v2235, 16
      %v2240 = vshrl.u32 %v2235, 16
      %vm2241 = vc.u32 %v2233, %v2237
      %v2242 = vsel %vm2241, 1, 0
      %v2243 = vadd.s32 %v2233, %v2237
      %v2244 = vadd.s32 %v2236, %v2242
      %vm2245 = vc.u32 %v2243, %v2239
      %v2246 = vsel %vm2245, 1, 0
      %v2247 = vadd.s32 %v2243, %v2239
      %v2248 = vadd.s32 %v2244, %v2246
      %v2249 = vadd.s32 %v2248, %v2238
      %v2250 = vadd.s32 %v2249, %v2240
      %v2251 = vmul.u32 %v2206, %v2197
      %v2252 = vadd.s32 %v2228, %v2247
      %vm2253 = vc.u32 %v2228, %v2247
      %v2254 = vadd.s32 %v2250, 1
      %v2255 = vsel %vm2253, %v2254, %v2250
      %v2256 = vadd.s32 %v2251, %v2255
      %v2257 = vadd.s32 %v2256, 536870912
      %v2258 = vshrl.u32 %v2257, 30
      %v2259 = vshll.u32 %v2258, 30
      %v2260 = vsub.s32 %v2256, %v2259
      %vm2261 = vcmp.lt.s32.totalorder %v2260, 0
      %v2262 = vsub.s32 0, %v2260
      %v2263 = vsel %vm2261, %v2262, %v2260
      %v2264 = vclz %v2263
      %v2265 = vsub.s32 %v2264, 2
      %vm2266 = vcmp.gt.s32.totalorder 0, %v2265
      %v2267 = vsel %vm2266, 0, %v2265
      %v2268 = vsub.s32 32, %v2267
      %v2269 = vshll.u32 %v2260, %v2267
      %v2270 = vshrl.u32 %v2252, %v2268
      %v2271 = vor.u32 %v2269, %v2270
      %v2272 = vsub.s32 4294967266, %v2267
      %v2273 = vadd.s32 %v2272, 127
      %v2274 = vshll.u32 %v2273, 23
      %v2275 = vor.u32 4788187, %v2274
      %v2276 = vand.u32 2147483647, %v2275
      %v2278 = vcvt.s32.f32 %v2271
      %v2279 = vmul.f32 %v2278, %v2276
      %v2280 = vxor.u32 %v2279, 2147483648
      %v2281 = vsel %vm2160, %v2280, %v2279
      %v2282 = vsub.s32 4, %v2258
      %v2283 = vsel %vm2160, %v2282, %v2258
      %v2284 = vsel %vm2159, %v448, %v2281
      %v2285 = vsel %vm2159, 0, %v2283
      %v2286 = vmul.f32 %v2284, %v2284
      %v2287 = vmul.f32 %v2286, -0.001358992
      %v2288 = vadd.f32 %v2287, 0.041655596
      %v2289 = vmul.f32 %v2286, %v2288
      %v2290 = vadd.f32 %v2289, -0.4999988
      %v2291 = vmul.f32 %v2286, %v2290
      %v2292 = vadd.f32 1.0, %v2291
      %v2293 = vmul.f32 %v2284, %v2284
      %v2294 = vmul.f32 %v2293, -0.00019511016
      %v2295 = vadd.f32 %v2294, 0.008332121
      %v2296 = vmul.f32 %v2293, %v2295
      %v2297 = vadd.f32 %v2296, -0.16666654
      %v2298 = vmul.f32 %v2293, %v2297
      %v2299 = vadd.f32 %v2298, 1.0
      %v2300 = vmul.f32 %v2299, %v2284
      %vm2301 = vweird.f32 %v448
      %v2302 = vadd.s32 %v2285, 3
      %v2303 = vand.u32 %v2302, 3
      %vm2304 = vcmp.lt.s32.totalorder %v2303, 2
      %vm2305 = vcmp.eq.s32.totalorder %v2303, 0
      %v2306 = vxor.u32 %v2300, 2147483648
      %v2307 = vsel %vm2305, %v2292, %v2306
      %vm2308 = vcmp.eq.s32.totalorder %v2303, 2
      %v2309 = vxor.u32 %v2292, 2147483648
      %v2310 = vsel %vm2308, %v2309, %v2300
      %v2311 = vsel %vm2304, %v2307, %v2310
      %v2312 = vsel %vm2301, nan, %v2311
      %v2313 = vand.u32 2147483647, %v449
      %vm2314 = vcmp.le.f32.partialorder %v2313, 0.7853982
      %vm2315 = vcmp.lt.s32.totalorder %v449, 0
      %v2316 = vand.u32 %v449, 2139095040
      %v2317 = vshrl.u32 %v2316, 23
      %v2318 = vsub.s32 %v2317, 127
      %v2319 = vand.u32 2147483647, %v449
      %v2320 = vand.u32 %v2319, 8388607
      %v2321 = vor.u32 %v2320, 8388608
      %v2322 = vsub.s32 0, %v2321
      %v2323 = vadd.s32 %v2318, 1
      %vm2324 = vcmp.gt.s32.totalorder %v2323, 0
      %v2325 = vsel %vm2324, %v2323, 0
      %v2326 = vshrl.u32 %v2325, 5
      %v2327 = vand.u32 %v2325, 31
      %v2328 = vsub.s32 32, %v2327
      %v2329 = vshrl.u32 683565275, %v2328
      %v2330 = vshll.u32 683565275, %v2327
      %v2331 = vshrl.u32 2475754826, %v2328
      %v2332 = vor.u32 %v2330, %v2331
      %v2333 = vshll.u32 2475754826, %v2327
      %v2334 = vshrl.u32 2131351028, %v2328
      %v2335 = vor.u32 %v2333, %v2334
      %v2336 = vshll.u32 2131351028, %v2327
      %v2337 = vshrl.u32 2102212464, %v2328
      %v2338 = vor.u32 %v2336, %v2337
      %v2339 = vshll.u32 2102212464, %v2327
      %v2340 = vshrl.u32 920167782, %v2328
      %v2341 = vor.u32 %v2339, %v2340
      %v2342 = vshll.u32 920167782, %v2327
      %v2343 = vshrl.u32 1326507024, %v2328
      %v2344 = vor.u32 %v2342, %v2343
      %vm2345 = vcmp.lt.s32.totalorder %v2326, 1
      %vm2346 = vcmp.lt.s32.totalorder %v2326, 2
      %vm2347 = vcmp.lt.s32.totalorder %v2326, 3
      %vm2348 = vcmp.lt.s32.totalorder %v2326, 4
      %v2349 = vsel %vm2345, %v2329, %v2332
      %v2350 = vsel %vm2348, %v2338, 2102212464
      %v2351 = vsel %vm2347, %v2335, %v2350
      %v2352 = vsel %vm2346, %v2349, %v2351
      %v2353 = vsel %vm2345, %v2332, %v2335
      %v2354 = vsel %vm2348, %v2341, 920167782
      %v2355 = vsel %vm2347, %v2338, %v2354
      %v2356 = vsel %vm2346, %v2353, %v2355
      %v2357 = vsel %vm2345, %v2335, %v2338
      %v2358 = vsel %vm2348, %v2344, 1326507024
      %v2359 = vsel %vm2347, %v2341, %v2358
      %v2360 = vsel %vm2346, %v2357, %v2359
      %v2361 = vshll.u32 %v2321, 8
      %v2362 = vand.u32 %v2361, 65535
      %v2363 = vshrl.u32 %v2361, 16
      %v2364 = vand.u32 %v2360, 65535
      %v2365 = vshrl.u32 %v2360, 16
      %v2366 = vmul.u32 %v2362, %v2364
      %v2367 = vmul.u32 %v2362, %v2365
      %v2368 = vmul.u32 %v2363, %v2364
      %v2369 = vmul.u32 %v2363, %v2365
      %v2370 = vshll.u32 %v2367, 16
      %v2371 = vshrl.u32 %v2367, 16
      %v2372 = vshll.u32 %v2368, 16
      %v2373 = vshrl.u32 %v2368, 16
      %vm2374 = vc.u32 %v2366, %v2370
      %v2375 = vsel %vm2374, 1, 0
      %v2376 = vadd.s32 %v2366, %v2370
      %v2377 = vadd.s32 %v2369, %v2375
      %vm2378 = vc.u32 %v2376, %v2372
      %v2379 = vsel %vm2378, 1, 0
      %v2380 = vadd.s32 %v2376, %v2372
      %v2381 = vadd.s32 %v2377, %v2379
      %v2382 = vadd.s32 %v2381, %v2371
      %v2383 = vadd.s32 %v2382, %v2373
      %v2384 = vand.u32 %v2361, 65535
      %v2385 = vshrl.u32 %v2361, 16
      %v2386 = vand.u32 %v2356, 65535
      %v2387 = vshrl.u32 %v2356, 16
      %v2388 = vmul.u32 %v2384, %v2386
      %v2389 = vmul.u32 %v2384, %v2387
      %v2390 = vmul.u32 %v2385, %v2386
      %v2391 = vmul.u32 %v2385, %v2387
      %v2392 = vshll.u32 %v2389, 16
      %v2393 = vshrl.u32 %v2389, 16
      %v2394 = vshll.u32 %v2390, 16
      %v2395 = vshrl.u32 %v2390, 16
      %vm2396 = vc.u32 %v2388, %v2392
      %v2397 = vsel %vm2396, 1, 0
      %v2398 = vadd.s32 %v2388, %v2392
      %v2399 = vadd.s32 %v2391, %v2397
      %vm2400 = vc.u32 %v2398, %v2394
      %v2401 = vsel %vm2400, 1, 0
      %v2402 = vadd.s32 %v2398, %v2394
      %v2403 = vadd.s32 %v2399, %v2401
      %v2404 = vadd.s32 %v2403, %v2393
      %v2405 = vadd.s32 %v2404, %v2395
      %v2406 = vmul.u32 %v2361, %v2352
      %v2407 = vadd.s32 %v2383, %v2402
      %vm2408 = vc.u32 %v2383, %v2402
      %v2409 = vadd.s32 %v2405, 1
      %v2410 = vsel %vm2408, %v2409, %v2405
      %v2411 = vadd.s32 %v2406, %v2410
      %v2412 = vadd.s32 %v2411, 536870912
      %v2413 = vshrl.u32 %v2412, 30
      %v2414 = vshll.u32 %v2413, 30
      %v2415 = vsub.s32 %v2411, %v2414
      %vm2416 = vcmp.lt.s32.totalorder %v2415, 0
      %v2417 = vsub.s32 0, %v2415
      %v2418 = vsel %vm2416, %v2417, %v2415
      %v2419 = vclz %v2418
      %v2420 = vsub.s32 %v2419, 2
      %vm2421 = vcmp.gt.s32.totalorder 0, %v2420
      %v2422 = vsel %vm2421, 0, %v2420
      %v2423 = vsub.s32 32, %v2422
      %v2424 = vshll.u32 %v2415, %v2422
      %v2425 = vshrl.u32 %v2407, %v2423
      %v2426 = vor.u32 %v2424, %v2425
      %v2427 = vsub.s32 4294967266, %v2422
      %v2428 = vadd.s32 %v2427, 127
      %v2429 = vshll.u32 %v2428, 23
      %v2430 = vor.u32 4788187, %v2429
      %v2431 = vand.u32 2147483647, %v2430
      %v2433 = vcvt.s32.f32 %v2426
      %v2434 = vmul.f32 %v2433, %v2431
      %v2435 = vxor.u32 %v2434, 2147483648
      %v2436 = vsel %vm2315, %v2435, %v2434
      %v2437 = vsub.s32 4, %v2413
      %v2438 = vsel %vm2315, %v2437, %v2413
      %v2439 = vsel %vm2314, %v449, %v2436
      %v2440 = vsel %vm2314, 0, %v2438
      %v2441 = vmul.f32 %v2439, %v2439
      %v2442 = vmul.f32 %v2441, -0.001358992
      %v2443 = vadd.f32 %v2442, 0.041655596
      %v2444 = vmul.f32 %v2441, %v2443
      %v2445 = vadd.f32 %v2444, -0.4999988
      %v2446 = vmul.f32 %v2441, %v2445
      %v2447 = vadd.f32 1.0, %v2446
      %v2448 = vmul.f32 %v2439, %v2439
      %v2449 = vmul.f32 %v2448, -0.00019511016
      %v2450 = vadd.f32 %v2449, 0.008332121
      %v2451 = vmul.f32 %v2448, %v2450
      %v2452 = vadd.f32 %v2451, -0.16666654
      %v2453 = vmul.f32 %v2448, %v2452
      %v2454 = vadd.f32 %v2453, 1.0
      %v2455 = vmul.f32 %v2454, %v2439
      %vm2456 = vweird.f32 %v449
      %v2457 = vadd.s32 %v2440, 3
      %v2458 = vand.u32 %v2457, 3
      %vm2459 = vcmp.lt.s32.totalorder %v2458, 2
      %vm2460 = vcmp.eq.s32.totalorder %v2458, 0
      %v2461 = vxor.u32 %v2455, 2147483648
      %v2462 = vsel %vm2460, %v2447, %v2461
      %vm2463 = vcmp.eq.s32.totalorder %v2458, 2
      %v2464 = vxor.u32 %v2447, 2147483648
      %v2465 = vsel %vm2463, %v2464, %v2455
      %v2466 = vsel %vm2459, %v2462, %v2465
      %v2467 = vsel %vm2456, nan, %v2466
      %v2468 = vand.u32 2147483647, %v450
      %vm2469 = vcmp.le.f32.partialorder %v2468, 0.7853982
      %vm2470 = vcmp.lt.s32.totalorder %v450, 0
      %v2471 = vand.u32 %v450, 2139095040
      %v2472 = vshrl.u32 %v2471, 23
      %v2473 = vsub.s32 %v2472, 127
      %v2474 = vand.u32 2147483647, %v450
      %v2475 = vand.u32 %v2474, 8388607
      %v2476 = vor.u32 %v2475, 8388608
      %v2477 = vsub.s32 0, %v2476
      %v2478 = vadd.s32 %v2473, 1
      %vm2479 = vcmp.gt.s32.totalorder %v2478, 0
      %v2480 = vsel %vm2479, %v2478, 0
      %v2481 = vshrl.u32 %v2480, 5
      %v2482 = vand.u32 %v2480, 31
      %v2483 = vsub.s32 32, %v2482
      %v2484 = vshrl.u32 683565275, %v2483
      %v2485 = vshll.u32 683565275, %v2482
      %v2486 = vshrl.u32 2475754826, %v2483
      %v2487 = vor.u32 %v2485, %v2486
      %v2488 = vshll.u32 2475754826, %v2482
      %v2489 = vshrl.u32 2131351028, %v2483
      %v2490 = vor.u32 %v2488, %v2489
      %v2491 = vshll.u32 2131351028, %v2482
      %v2492 = vshrl.u32 2102212464, %v2483
      %v2493 = vor.u32 %v2491, %v2492
      %v2494 = vshll.u32 2102212464, %v2482
      %v2495 = vshrl.u32 920167782, %v2483
      %v2496 = vor.u32 %v2494, %v2495
      %v2497 = vshll.u32 920167782, %v2482
      %v2498 = vshrl.u32 1326507024, %v2483
      %v2499 = vor.u32 %v2497, %v2498
      %vm2500 = vcmp.lt.s32.totalorder %v2481, 1
      %vm2501 = vcmp.lt.s32.totalorder %v2481, 2
      %vm2502 = vcmp.lt.s32.totalorder %v2481, 3
      %vm2503 = vcmp.lt.s32.totalorder %v2481, 4
      %v2504 = vsel %vm2500, %v2484, %v2487
      %v2505 = vsel %vm2503, %v2493, 2102212464
      %v2506 = vsel %vm2502, %v2490, %v2505
      %v2507 = vsel %vm2501, %v2504, %v2506
      %v2508 = vsel %vm2500, %v2487, %v2490
      %v2509 = vsel %vm2503, %v2496, 920167782
      %v2510 = vsel %vm2502, %v2493, %v2509
      %v2511 = vsel %vm2501, %v2508, %v2510
      %v2512 = vsel %vm2500, %v2490, %v2493
      %v2513 = vsel %vm2503, %v2499, 1326507024
      %v2514 = vsel %vm2502, %v2496, %v2513
      %v2515 = vsel %vm2501, %v2512, %v2514
      %v2516 = vshll.u32 %v2476, 8
      %v2517 = vand.u32 %v2516, 65535
      %v2518 = vshrl.u32 %v2516, 16
      %v2519 = vand.u32 %v2515, 65535
      %v2520 = vshrl.u32 %v2515, 16
      %v2521 = vmul.u32 %v2517, %v2519
      %v2522 = vmul.u32 %v2517, %v2520
      %v2523 = vmul.u32 %v2518, %v2519
      %v2524 = vmul.u32 %v2518, %v2520
      %v2525 = vshll.u32 %v2522, 16
      %v2526 = vshrl.u32 %v2522, 16
      %v2527 = vshll.u32 %v2523, 16
      %v2528 = vshrl.u32 %v2523, 16
      %vm2529 = vc.u32 %v2521, %v2525
      %v2530 = vsel %vm2529, 1, 0
      %v2531 = vadd.s32 %v2521, %v2525
      %v2532 = vadd.s32 %v2524, %v2530
      %vm2533 = vc.u32 %v2531, %v2527
      %v2534 = vsel %vm2533, 1, 0
      %v2535 = vadd.s32 %v2531, %v2527
      %v2536 = vadd.s32 %v2532, %v2534
      %v2537 = vadd.s32 %v2536, %v2526
      %v2538 = vadd.s32 %v2537, %v2528
      %v2539 = vand.u32 %v2516, 65535
      %v2540 = vshrl.u32 %v2516, 16
      %v2541 = vand.u32 %v2511, 65535
      %v2542 = vshrl.u32 %v2511, 16
      %v2543 = vmul.u32 %v2539, %v2541
      %v2544 = vmul.u32 %v2539, %v2542
      %v2545 = vmul.u32 %v2540, %v2541
      %v2546 = vmul.u32 %v2540, %v2542
      %v2547 = vshll.u32 %v2544, 16
      %v2548 = vshrl.u32 %v2544, 16
      %v2549 = vshll.u32 %v2545, 16
      %v2550 = vshrl.u32 %v2545, 16
      %vm2551 = vc.u32 %v2543, %v2547
      %v2552 = vsel %vm2551, 1, 0
      %v2553 = vadd.s32 %v2543, %v2547
      %v2554 = vadd.s32 %v2546, %v2552
      %vm2555 = vc.u32 %v2553, %v2549
      %v2556 = vsel %vm2555, 1, 0
      %v2557 = vadd.s32 %v2553, %v2549
      %v2558 = vadd.s32 %v2554, %v2556
      %v2559 = vadd.s32 %v2558, %v2548
      %v2560 = vadd.s32 %v2559, %v2550
      %v2561 = vmul.u32 %v2516, %v2507
      %v2562 = vadd.s32 %v2538, %v2557
      %vm2563 = vc.u32 %v2538, %v2557
      %v2564 = vadd.s32 %v2560, 1
      %v2565 = vsel %vm2563, %v2564, %v2560
      %v2566 = vadd.s32 %v2561, %v2565
      %v2567 = vadd.s32 %v2566, 536870912
      %v2568 = vshrl.u32 %v2567, 30
      %v2569 = vshll.u32 %v2568, 30
      %v2570 = vsub.s32 %v2566, %v2569
      %vm2571 = vcmp.lt.s32.totalorder %v2570, 0
      %v2572 = vsub.s32 0, %v2570
      %v2573 = vsel %vm2571, %v2572, %v2570
      %v2574 = vclz %v2573
      %v2575 = vsub.s32 %v2574, 2
      %vm2576 = vcmp.gt.s32.totalorder 0, %v2575
      %v2577 = vsel %vm2576, 0, %v2575
      %v2578 = vsub.s32 32, %v2577
      %v2579 = vshll.u32 %v2570, %v2577
      %v2580 = vshrl.u32 %v2562, %v2578
      %v2581 = vor.u32 %v2579, %v2580
      %v2582 = vsub.s32 4294967266, %v2577
      %v2583 = vadd.s32 %v2582, 127
      %v2584 = vshll.u32 %v2583, 23
      %v2585 = vor.u32 4788187, %v2584
      %v2586 = vand.u32 2147483647, %v2585
      %v2588 = vcvt.s32.f32 %v2581
      %v2589 = vmul.f32 %v2588, %v2586
      %v2590 = vxor.u32 %v2589, 2147483648
      %v2591 = vsel %vm2470, %v2590, %v2589
      %v2592 = vsub.s32 4, %v2568
      %v2593 = vsel %vm2470, %v2592, %v2568
      %v2594 = vsel %vm2469, %v450, %v2591
      %v2595 = vsel %vm2469, 0, %v2593
      %v2596 = vmul.f32 %v2594, %v2594
      %v2597 = vmul.f32 %v2596, -0.001358992
      %v2598 = vadd.f32 %v2597, 0.041655596
      %v2599 = vmul.f32 %v2596, %v2598
      %v2600 = vadd.f32 %v2599, -0.4999988
      %v2601 = vmul.f32 %v2596, %v2600
      %v2602 = vadd.f32 1.0, %v2601
      %v2603 = vmul.f32 %v2594, %v2594
      %v2604 = vmul.f32 %v2603, -0.00019511016
      %v2605 = vadd.f32 %v2604, 0.008332121
      %v2606 = vmul.f32 %v2603, %v2605
      %v2607 = vadd.f32 %v2606, -0.16666654
      %v2608 = vmul.f32 %v2603, %v2607
      %v2609 = vadd.f32 %v2608, 1.0
      %v2610 = vmul.f32 %v2609, %v2594
      %vm2611 = vweird.f32 %v450
      %v2612 = vadd.s32 %v2595, 3
      %v2613 = vand.u32 %v2612, 3
      %vm2614 = vcmp.lt.s32.totalorder %v2613, 2
      %vm2615 = vcmp.eq.s32.totalorder %v2613, 0
      %v2616 = vxor.u32 %v2610, 2147483648
      %v2617 = vsel %vm2615, %v2602, %v2616
      %vm2618 = vcmp.eq.s32.totalorder %v2613, 2
      %v2619 = vxor.u32 %v2602, 2147483648
      %v2620 = vsel %vm2618, %v2619, %v2610
      %v2621 = vsel %vm2614, %v2617, %v2620
      %v2622 = vsel %vm2611, nan, %v2621
      %v2623 = vand.u32 2147483647, %v451
      %vm2624 = vcmp.le.f32.partialorder %v2623, 0.7853982
      %vm2625 = vcmp.lt.s32.totalorder %v451, 0
      %v2626 = vand.u32 %v451, 2139095040
      %v2627 = vshrl.u32 %v2626, 23
      %v2628 = vsub.s32 %v2627, 127
      %v2629 = vand.u32 2147483647, %v451
      %v2630 = vand.u32 %v2629, 8388607
      %v2631 = vor.u32 %v2630, 8388608
      %v2632 = vsub.s32 0, %v2631
      %v2633 = vadd.s32 %v2628, 1
      %vm2634 = vcmp.gt.s32.totalorder %v2633, 0
      %v2635 = vsel %vm2634, %v2633, 0
      %v2636 = vshrl.u32 %v2635, 5
      %v2637 = vand.u32 %v2635, 31
      %v2638 = vsub.s32 32, %v2637
      %v2639 = vshrl.u32 683565275, %v2638
      %v2640 = vshll.u32 683565275, %v2637
      %v2641 = vshrl.u32 2475754826, %v2638
      %v2642 = vor.u32 %v2640, %v2641
      %v2643 = vshll.u32 2475754826, %v2637
      %v2644 = vshrl.u32 2131351028, %v2638
      %v2645 = vor.u32 %v2643, %v2644
      %v2646 = vshll.u32 2131351028, %v2637
      %v2647 = vshrl.u32 2102212464, %v2638
      %v2648 = vor.u32 %v2646, %v2647
      %v2649 = vshll.u32 2102212464, %v2637
      %v2650 = vshrl.u32 920167782, %v2638
      %v2651 = vor.u32 %v2649, %v2650
      %v2652 = vshll.u32 920167782, %v2637
      %v2653 = vshrl.u32 1326507024, %v2638
      %v2654 = vor.u32 %v2652, %v2653
      %vm2655 = vcmp.lt.s32.totalorder %v2636, 1
      %vm2656 = vcmp.lt.s32.totalorder %v2636, 2
      %vm2657 = vcmp.lt.s32.totalorder %v2636, 3
      %vm2658 = vcmp.lt.s32.totalorder %v2636, 4
      %v2659 = vsel %vm2655, %v2639, %v2642
      %v2660 = vsel %vm2658, %v2648, 2102212464
      %v2661 = vsel %vm2657, %v2645, %v2660
      %v2662 = vsel %vm2656, %v2659, %v2661
      %v2663 = vsel %vm2655, %v2642, %v2645
      %v2664 = vsel %vm2658, %v2651, 920167782
      %v2665 = vsel %vm2657, %v2648, %v2664
      %v2666 = vsel %vm2656, %v2663, %v2665
      %v2667 = vsel %vm2655, %v2645, %v2648
      %v2668 = vsel %vm2658, %v2654, 1326507024
      %v2669 = vsel %vm2657, %v2651, %v2668
      %v2670 = vsel %vm2656, %v2667, %v2669
      %v2671 = vshll.u32 %v2631, 8
      %v2672 = vand.u32 %v2671, 65535
      %v2673 = vshrl.u32 %v2671, 16
      %v2674 = vand.u32 %v2670, 65535
      %v2675 = vshrl.u32 %v2670, 16
      %v2676 = vmul.u32 %v2672, %v2674
      %v2677 = vmul.u32 %v2672, %v2675
      %v2678 = vmul.u32 %v2673, %v2674
      %v2679 = vmul.u32 %v2673, %v2675
      %v2680 = vshll.u32 %v2677, 16
      %v2681 = vshrl.u32 %v2677, 16
      %v2682 = vshll.u32 %v2678, 16
      %v2683 = vshrl.u32 %v2678, 16
      %vm2684 = vc.u32 %v2676, %v2680
      %v2685 = vsel %vm2684, 1, 0
      %v2686 = vadd.s32 %v2676, %v2680
      %v2687 = vadd.s32 %v2679, %v2685
      %vm2688 = vc.u32 %v2686, %v2682
      %v2689 = vsel %vm2688, 1, 0
      %v2690 = vadd.s32 %v2686, %v2682
      %v2691 = vadd.s32 %v2687, %v2689
      %v2692 = vadd.s32 %v2691, %v2681
      %v2693 = vadd.s32 %v2692, %v2683
      %v2694 = vand.u32 %v2671, 65535
      %v2695 = vshrl.u32 %v2671, 16
      %v2696 = vand.u32 %v2666, 65535
      %v2697 = vshrl.u32 %v2666, 16
      %v2698 = vmul.u32 %v2694, %v2696
      %v2699 = vmul.u32 %v2694, %v2697
      %v2700 = vmul.u32 %v2695, %v2696
      %v2701 = vmul.u32 %v2695, %v2697
      %v2702 = vshll.u32 %v2699, 16
      %v2703 = vshrl.u32 %v2699, 16
      %v2704 = vshll.u32 %v2700, 16
      %v2705 = vshrl.u32 %v2700, 16
      %vm2706 = vc.u32 %v2698, %v2702
      %v2707 = vsel %vm2706, 1, 0
      %v2708 = vadd.s32 %v2698, %v2702
      %v2709 = vadd.s32 %v2701, %v2707
      %vm2710 = vc.u32 %v2708, %v2704
      %v2711 = vsel %vm2710, 1, 0
      %v2712 = vadd.s32 %v2708, %v2704
      %v2713 = vadd.s32 %v2709, %v2711
      %v2714 = vadd.s32 %v2713, %v2703
      %v2715 = vadd.s32 %v2714, %v2705
      %v2716 = vmul.u32 %v2671, %v2662
      %v2717 = vadd.s32 %v2693, %v2712
      %vm2718 = vc.u32 %v2693, %v2712
      %v2719 = vadd.s32 %v2715, 1
      %v2720 = vsel %vm2718, %v2719, %v2715
      %v2721 = vadd.s32 %v2716, %v2720
      %v2722 = vadd.s32 %v2721, 536870912
      %v2723 = vshrl.u32 %v2722, 30
      %v2724 = vshll.u32 %v2723, 30
      %v2725 = vsub.s32 %v2721, %v2724
      %vm2726 = vcmp.lt.s32.totalorder %v2725, 0
      %v2727 = vsub.s32 0, %v2725
      %v2728 = vsel %vm2726, %v2727, %v2725
      %v2729 = vclz %v2728
      %v2730 = vsub.s32 %v2729, 2
      %vm2731 = vcmp.gt.s32.totalorder 0, %v2730
      %v2732 = vsel %vm2731, 0, %v2730
      %v2733 = vsub.s32 32, %v2732
      %v2734 = vshll.u32 %v2725, %v2732
      %v2735 = vshrl.u32 %v2717, %v2733
      %v2736 = vor.u32 %v2734, %v2735
      %v2737 = vsub.s32 4294967266, %v2732
      %v2738 = vadd.s32 %v2737, 127
      %v2739 = vshll.u32 %v2738, 23
      %v2740 = vor.u32 4788187, %v2739
      %v2741 = vand.u32 2147483647, %v2740
      %v2743 = vcvt.s32.f32 %v2736
      %v2744 = vmul.f32 %v2743, %v2741
      %v2745 = vxor.u32 %v2744, 2147483648
      %v2746 = vsel %vm2625, %v2745, %v2744
      %v2747 = vsub.s32 4, %v2723
      %v2748 = vsel %vm2625, %v2747, %v2723
      %v2749 = vsel %vm2624, %v451, %v2746
      %v2750 = vsel %vm2624, 0, %v2748
      %v2751 = vmul.f32 %v2749, %v2749
      %v2752 = vmul.f32 %v2751, -0.001358992
      %v2753 = vadd.f32 %v2752, 0.041655596
      %v2754 = vmul.f32 %v2751, %v2753
      %v2755 = vadd.f32 %v2754, -0.4999988
      %v2756 = vmul.f32 %v2751, %v2755
      %v2757 = vadd.f32 1.0, %v2756
      %v2758 = vmul.f32 %v2749, %v2749
      %v2759 = vmul.f32 %v2758, -0.00019511016
      %v2760 = vadd.f32 %v2759, 0.008332121
      %v2761 = vmul.f32 %v2758, %v2760
      %v2762 = vadd.f32 %v2761, -0.16666654
      %v2763 = vmul.f32 %v2758, %v2762
      %v2764 = vadd.f32 %v2763, 1.0
      %v2765 = vmul.f32 %v2764, %v2749
      %vm2766 = vweird.f32 %v451
      %v2767 = vadd.s32 %v2750, 3
      %v2768 = vand.u32 %v2767, 3
      %vm2769 = vcmp.lt.s32.totalorder %v2768, 2
      %vm2770 = vcmp.eq.s32.totalorder %v2768, 0
      %v2771 = vxor.u32 %v2765, 2147483648
      %v2772 = vsel %vm2770, %v2757, %v2771
      %vm2773 = vcmp.eq.s32.totalorder %v2768, 2
      %v2774 = vxor.u32 %v2757, 2147483648
      %v2775 = vsel %vm2773, %v2774, %v2765
      %v2776 = vsel %vm2769, %v2772, %v2775
      %v2777 = vsel %vm2766, nan, %v2776
      %v2778 = vand.u32 2147483647, %v452
      %vm2779 = vcmp.le.f32.partialorder %v2778, 0.7853982
      %vm2780 = vcmp.lt.s32.totalorder %v452, 0
      %v2781 = vand.u32 %v452, 2139095040
      %v2782 = vshrl.u32 %v2781, 23
      %v2783 = vsub.s32 %v2782, 127
      %v2784 = vand.u32 2147483647, %v452
      %v2785 = vand.u32 %v2784, 8388607
      %v2786 = vor.u32 %v2785, 8388608
      %v2787 = vsub.s32 0, %v2786
      %v2788 = vadd.s32 %v2783, 1
      %vm2789 = vcmp.gt.s32.totalorder %v2788, 0
      %v2790 = vsel %vm2789, %v2788, 0
      %v2791 = vshrl.u32 %v2790, 5
      %v2792 = vand.u32 %v2790, 31
      %v2793 = vsub.s32 32, %v2792
      %v2794 = vshrl.u32 683565275, %v2793
      %v2795 = vshll.u32 683565275, %v2792
      %v2796 = vshrl.u32 2475754826, %v2793
      %v2797 = vor.u32 %v2795, %v2796
      %v2798 = vshll.u32 2475754826, %v2792
      %v2799 = vshrl.u32 2131351028, %v2793
      %v2800 = vor.u32 %v2798, %v2799
      %v2801 = vshll.u32 2131351028, %v2792
      %v2802 = vshrl.u32 2102212464, %v2793
      %v2803 = vor.u32 %v2801, %v2802
      %v2804 = vshll.u32 2102212464, %v2792
      %v2805 = vshrl.u32 920167782, %v2793
      %v2806 = vor.u32 %v2804, %v2805
      %v2807 = vshll.u32 920167782, %v2792
      %v2808 = vshrl.u32 1326507024, %v2793
      %v2809 = vor.u32 %v2807, %v2808
      %vm2810 = vcmp.lt.s32.totalorder %v2791, 1
      %vm2811 = vcmp.lt.s32.totalorder %v2791, 2
      %vm2812 = vcmp.lt.s32.totalorder %v2791, 3
      %vm2813 = vcmp.lt.s32.totalorder %v2791, 4
      %v2814 = vsel %vm2810, %v2794, %v2797
      %v2815 = vsel %vm2813, %v2803, 2102212464
      %v2816 = vsel %vm2812, %v2800, %v2815
      %v2817 = vsel %vm2811, %v2814, %v2816
      %v2818 = vsel %vm2810, %v2797, %v2800
      %v2819 = vsel %vm2813, %v2806, 920167782
      %v2820 = vsel %vm2812, %v2803, %v2819
      %v2821 = vsel %vm2811, %v2818, %v2820
      %v2822 = vsel %vm2810, %v2800, %v2803
      %v2823 = vsel %vm2813, %v2809, 1326507024
      %v2824 = vsel %vm2812, %v2806, %v2823
      %v2825 = vsel %vm2811, %v2822, %v2824
      %v2826 = vshll.u32 %v2786, 8
      %v2827 = vand.u32 %v2826, 65535
      %v2828 = vshrl.u32 %v2826, 16
      %v2829 = vand.u32 %v2825, 65535
      %v2830 = vshrl.u32 %v2825, 16
      %v2831 = vmul.u32 %v2827, %v2829
      %v2832 = vmul.u32 %v2827, %v2830
      %v2833 = vmul.u32 %v2828, %v2829
      %v2834 = vmul.u32 %v2828, %v2830
      %v2835 = vshll.u32 %v2832, 16
      %v2836 = vshrl.u32 %v2832, 16
      %v2837 = vshll.u32 %v2833, 16
      %v2838 = vshrl.u32 %v2833, 16
      %vm2839 = vc.u32 %v2831, %v2835
      %v2840 = vsel %vm2839, 1, 0
      %v2841 = vadd.s32 %v2831, %v2835
      %v2842 = vadd.s32 %v2834, %v2840
      %vm2843 = vc.u32 %v2841, %v2837
      %v2844 = vsel %vm2843, 1, 0
      %v2845 = vadd.s32 %v2841, %v2837
      %v2846 = vadd.s32 %v2842, %v2844
      %v2847 = vadd.s32 %v2846, %v2836
      %v2848 = vadd.s32 %v2847, %v2838
      %v2849 = vand.u32 %v2826, 65535
      %v2850 = vshrl.u32 %v2826, 16
      %v2851 = vand.u32 %v2821, 65535
      %v2852 = vshrl.u32 %v2821, 16
      %v2853 = vmul.u32 %v2849, %v2851
      %v2854 = vmul.u32 %v2849, %v2852
      %v2855 = vmul.u32 %v2850, %v2851
      %v2856 = vmul.u32 %v2850, %v2852
      %v2857 = vshll.u32 %v2854, 16
      %v2858 = vshrl.u32 %v2854, 16
      %v2859 = vshll.u32 %v2855, 16
      %v2860 = vshrl.u32 %v2855, 16
      %vm2861 = vc.u32 %v2853, %v2857
      %v2862 = vsel %vm2861, 1, 0
      %v2863 = vadd.s32 %v2853, %v2857
      %v2864 = vadd.s32 %v2856, %v2862
      %vm2865 = vc.u32 %v2863, %v2859
      %v2866 = vsel %vm2865, 1, 0
      %v2867 = vadd.s32 %v2863, %v2859
      %v2868 = vadd.s32 %v2864, %v2866
      %v2869 = vadd.s32 %v2868, %v2858
      %v2870 = vadd.s32 %v2869, %v2860
      %v2871 = vmul.u32 %v2826, %v2817
      %v2872 = vadd.s32 %v2848, %v2867
      %vm2873 = vc.u32 %v2848, %v2867
      %v2874 = vadd.s32 %v2870, 1
      %v2875 = vsel %vm2873, %v2874, %v2870
      %v2876 = vadd.s32 %v2871, %v2875
      %v2877 = vadd.s32 %v2876, 536870912
      %v2878 = vshrl.u32 %v2877, 30
      %v2879 = vshll.u32 %v2878, 30
      %v2880 = vsub.s32 %v2876, %v2879
      %vm2881 = vcmp.lt.s32.totalorder %v2880, 0
      %v2882 = vsub.s32 0, %v2880
      %v2883 = vsel %vm2881, %v2882, %v2880
      %v2884 = vclz %v2883
      %v2885 = vsub.s32 %v2884, 2
      %vm2886 = vcmp.gt.s32.totalorder 0, %v2885
      %v2887 = vsel %vm2886, 0, %v2885
      %v2888 = vsub.s32 32, %v2887
      %v2889 = vshll.u32 %v2880, %v2887
      %v2890 = vshrl.u32 %v2872, %v2888
      %v2891 = vor.u32 %v2889, %v2890
      %v2892 = vsub.s32 4294967266, %v2887
      %v2893 = vadd.s32 %v2892, 127
      %v2894 = vshll.u32 %v2893, 23
      %v2895 = vor.u32 4788187, %v2894
      %v2896 = vand.u32 2147483647, %v2895
      %v2898 = vcvt.s32.f32 %v2891
      %v2899 = vmul.f32 %v2898, %v2896
      %v2900 = vxor.u32 %v2899, 2147483648
      %v2901 = vsel %vm2780, %v2900, %v2899
      %v2902 = vsub.s32 4, %v2878
      %v2903 = vsel %vm2780, %v2902, %v2878
      %v2904 = vsel %vm2779, %v452, %v2901
      %v2905 = vsel %vm2779, 0, %v2903
      %v2906 = vmul.f32 %v2904, %v2904
      %v2907 = vmul.f32 %v2906, -0.001358992
      %v2908 = vadd.f32 %v2907, 0.041655596
      %v2909 = vmul.f32 %v2906, %v2908
      %v2910 = vadd.f32 %v2909, -0.4999988
      %v2911 = vmul.f32 %v2906, %v2910
      %v2912 = vadd.f32 1.0, %v2911
      %v2913 = vmul.f32 %v2904, %v2904
      %v2914 = vmul.f32 %v2913, -0.00019511016
      %v2915 = vadd.f32 %v2914, 0.008332121
      %v2916 = vmul.f32 %v2913, %v2915
      %v2917 = vadd.f32 %v2916, -0.16666654
      %v2918 = vmul.f32 %v2913, %v2917
      %v2919 = vadd.f32 %v2918, 1.0
      %v2920 = vmul.f32 %v2919, %v2904
      %vm2921 = vweird.f32 %v452
      %v2922 = vadd.s32 %v2905, 3
      %v2923 = vand.u32 %v2922, 3
      %vm2924 = vcmp.lt.s32.totalorder %v2923, 2
      %vm2925 = vcmp.eq.s32.totalorder %v2923, 0
      %v2926 = vxor.u32 %v2920, 2147483648
      %v2927 = vsel %vm2925, %v2912, %v2926
      %vm2928 = vcmp.eq.s32.totalorder %v2923, 2
      %v2929 = vxor.u32 %v2912, 2147483648
      %v2930 = vsel %vm2928, %v2929, %v2920
      %v2931 = vsel %vm2924, %v2927, %v2930
      %v2932 = vsel %vm2921, nan, %v2931
      %v2933 = vand.u32 2147483647, %v437
      %vm2934 = vcmp.le.f32.partialorder %v2933, 0.7853982
      %vm2935 = vcmp.lt.s32.totalorder %v437, 0
      %v2936 = vand.u32 %v437, 2139095040
      %v2937 = vshrl.u32 %v2936, 23
      %v2938 = vsub.s32 %v2937, 127
      %v2939 = vand.u32 2147483647, %v437
      %v2940 = vand.u32 %v2939, 8388607
      %v2941 = vor.u32 %v2940, 8388608
      %v2942 = vsub.s32 0, %v2941
      %v2943 = vadd.s32 %v2938, 1
      %vm2944 = vcmp.gt.s32.totalorder %v2943, 0
      %v2945 = vsel %vm2944, %v2943, 0
      %v2946 = vshrl.u32 %v2945, 5
      %v2947 = vand.u32 %v2945, 31
      %v2948 = vsub.s32 32, %v2947
      %v2949 = vshrl.u32 683565275, %v2948
      %v2950 = vshll.u32 683565275, %v2947
      %v2951 = vshrl.u32 2475754826, %v2948
      %v2952 = vor.u32 %v2950, %v2951
      %v2953 = vshll.u32 2475754826, %v2947
      %v2954 = vshrl.u32 2131351028, %v2948
      %v2955 = vor.u32 %v2953, %v2954
      %v2956 = vshll.u32 2131351028, %v2947
      %v2957 = vshrl.u32 2102212464, %v2948
      %v2958 = vor.u32 %v2956, %v2957
      %v2959 = vshll.u32 2102212464, %v2947
      %v2960 = vshrl.u32 920167782, %v2948
      %v2961 = vor.u32 %v2959, %v2960
      %v2962 = vshll.u32 920167782, %v2947
      %v2963 = vshrl.u32 1326507024, %v2948
      %v2964 = vor.u32 %v2962, %v2963
      %vm2965 = vcmp.lt.s32.totalorder %v2946, 1
      %vm2966 = vcmp.lt.s32.totalorder %v2946, 2
      %vm2967 = vcmp.lt.s32.totalorder %v2946, 3
      %vm2968 = vcmp.lt.s32.totalorder %v2946, 4
      %v2969 = vsel %vm2965, %v2949, %v2952
      %v2970 = vsel %vm2968, %v2958, 2102212464
      %v2971 = vsel %vm2967, %v2955, %v2970
      %v2972 = vsel %vm2966, %v2969, %v2971
      %v2973 = vsel %vm2965, %v2952, %v2955
      %v2974 = vsel %vm2968, %v2961, 920167782
      %v2975 = vsel %vm2967, %v2958, %v2974
      %v2976 = vsel %vm2966, %v2973, %v2975
      %v2977 = vsel %vm2965, %v2955, %v2958
      %v2978 = vsel %vm2968, %v2964, 1326507024
      %v2979 = vsel %vm2967, %v2961, %v2978
      %v2980 = vsel %vm2966, %v2977, %v2979
      %v2981 = vshll.u32 %v2941, 8
      %v2982 = vand.u32 %v2981, 65535
      %v2983 = vshrl.u32 %v2981, 16
      %v2984 = vand.u32 %v2980, 65535
      %v2985 = vshrl.u32 %v2980, 16
      %v2986 = vmul.u32 %v2982, %v2984
      %v2987 = vmul.u32 %v2982, %v2985
      %v2988 = vmul.u32 %v2983, %v2984
      %v2989 = vmul.u32 %v2983, %v2985
      %v2990 = vshll.u32 %v2987, 16
      %v2991 = vshrl.u32 %v2987, 16
      %v2992 = vshll.u32 %v2988, 16
      %v2993 = vshrl.u32 %v2988, 16
      %vm2994 = vc.u32 %v2986, %v2990
      %v2995 = vsel %vm2994, 1, 0
      %v2996 = vadd.s32 %v2986, %v2990
      %v2997 = vadd.s32 %v2989, %v2995
      %vm2998 = vc.u32 %v2996, %v2992
      %v2999 = vsel %vm2998, 1, 0
      %v3000 = vadd.s32 %v2996, %v2992
      %v3001 = vadd.s32 %v2997, %v2999
      %v3002 = vadd.s32 %v3001, %v2991
      %v3003 = vadd.s32 %v3002, %v2993
      %v3004 = vand.u32 %v2981, 65535
      %v3005 = vshrl.u32 %v2981, 16
      %v3006 = vand.u32 %v2976, 65535
      %v3007 = vshrl.u32 %v2976, 16
      %v3008 = vmul.u32 %v3004, %v3006
      %v3009 = vmul.u32 %v3004, %v3007
      %v3010 = vmul.u32 %v3005, %v3006
      %v3011 = vmul.u32 %v3005, %v3007
      %v3012 = vshll.u32 %v3009, 16
      %v3013 = vshrl.u32 %v3009, 16
      %v3014 = vshll.u32 %v3010, 16
      %v3015 = vshrl.u32 %v3010, 16
      %vm3016 = vc.u32 %v3008, %v3012
      %v3017 = vsel %vm3016, 1, 0
      %v3018 = vadd.s32 %v3008, %v3012
      %v3019 = vadd.s32 %v3011, %v3017
      %vm3020 = vc.u32 %v3018, %v3014
      %v3021 = vsel %vm3020, 1, 0
      %v3022 = vadd.s32 %v3018, %v3014
      %v3023 = vadd.s32 %v3019, %v3021
      %v3024 = vadd.s32 %v3023, %v3013
      %v3025 = vadd.s32 %v3024, %v3015
      %v3026 = vmul.u32 %v2981, %v2972
      %v3027 = vadd.s32 %v3003, %v3022
      %vm3028 = vc.u32 %v3003, %v3022
      %v3029 = vadd.s32 %v3025, 1
      %v3030 = vsel %vm3028, %v3029, %v3025
      %v3031 = vadd.s32 %v3026, %v3030
      %v3032 = vadd.s32 %v3031, 536870912
      %v3033 = vshrl.u32 %v3032, 30
      %v3034 = vshll.u32 %v3033, 30
      %v3035 = vsub.s32 %v3031, %v3034
      %vm3036 = vcmp.lt.s32.totalorder %v3035, 0
      %v3037 = vsub.s32 0, %v3035
      %v3038 = vsel %vm3036, %v3037, %v3035
      %v3039 = vclz %v3038
      %v3040 = vsub.s32 %v3039, 2
      %vm3041 = vcmp.gt.s32.totalorder 0, %v3040
      %v3042 = vsel %vm3041, 0, %v3040
      %v3043 = vsub.s32 32, %v3042
      %v3044 = vshll.u32 %v3035, %v3042
      %v3045 = vshrl.u32 %v3027, %v3043
      %v3046 = vor.u32 %v3044, %v3045
      %v3047 = vsub.s32 4294967266, %v3042
      %v3048 = vadd.s32 %v3047, 127
      %v3049 = vshll.u32 %v3048, 23
      %v3050 = vor.u32 4788187, %v3049
      %v3051 = vand.u32 2147483647, %v3050
      %v3053 = vcvt.s32.f32 %v3046
      %v3054 = vmul.f32 %v3053, %v3051
      %v3055 = vxor.u32 %v3054, 2147483648
      %v3056 = vsel %vm2935, %v3055, %v3054
      %v3057 = vsub.s32 4, %v3033
      %v3058 = vsel %vm2935, %v3057, %v3033
      %v3059 = vsel %vm2934, %v437, %v3056
      %v3060 = vsel %vm2934, 0, %v3058
      %v3061 = vmul.f32 %v3059, %v3059
      %v3062 = vmul.f32 %v3061, -0.001358992
      %v3063 = vadd.f32 %v3062, 0.041655596
      %v3064 = vmul.f32 %v3061, %v3063
      %v3065 = vadd.f32 %v3064, -0.4999988
      %v3066 = vmul.f32 %v3061, %v3065
      %v3067 = vadd.f32 1.0, %v3066
      %v3068 = vmul.f32 %v3059, %v3059
      %v3069 = vmul.f32 %v3068, -0.00019511016
      %v3070 = vadd.f32 %v3069, 0.008332121
      %v3071 = vmul.f32 %v3068, %v3070
      %v3072 = vadd.f32 %v3071, -0.16666654
      %v3073 = vmul.f32 %v3068, %v3072
      %v3074 = vadd.f32 %v3073, 1.0
      %v3075 = vmul.f32 %v3074, %v3059
      %vm3076 = vweird.f32 %v437
      %v3077 = vand.u32 %v3060, 3
      %vm3078 = vcmp.lt.s32.totalorder %v3077, 2
      %vm3079 = vcmp.eq.s32.totalorder %v3077, 0
      %v3080 = vxor.u32 %v3075, 2147483648
      %v3081 = vsel %vm3079, %v3067, %v3080
      %vm3082 = vcmp.eq.s32.totalorder %v3077, 2
      %v3083 = vxor.u32 %v3067, 2147483648
      %v3084 = vsel %vm3082, %v3083, %v3075
      %v3085 = vsel %vm3078, %v3081, %v3084
      %v3086 = vsel %vm3076, nan, %v3085
      %v3087 = vand.u32 2147483647, %v438
      %vm3088 = vcmp.le.f32.partialorder %v3087, 0.7853982
      %vm3089 = vcmp.lt.s32.totalorder %v438, 0
      %v3090 = vand.u32 %v438, 2139095040
      %v3091 = vshrl.u32 %v3090, 23
      %v3092 = vsub.s32 %v3091, 127
      %v3093 = vand.u32 2147483647, %v438
      %v3094 = vand.u32 %v3093, 8388607
      %v3095 = vor.u32 %v3094, 8388608
      %v3096 = vsub.s32 0, %v3095
      %v3097 = vadd.s32 %v3092, 1
      %vm3098 = vcmp.gt.s32.totalorder %v3097, 0
      %v3099 = vsel %vm3098, %v3097, 0
      %v3100 = vshrl.u32 %v3099, 5
      %v3101 = vand.u32 %v3099, 31
      %v3102 = vsub.s32 32, %v3101
      %v3103 = vshrl.u32 683565275, %v3102
      %v3104 = vshll.u32 683565275, %v3101
      %v3105 = vshrl.u32 2475754826, %v3102
      %v3106 = vor.u32 %v3104, %v3105
      %v3107 = vshll.u32 2475754826, %v3101
      %v3108 = vshrl.u32 2131351028, %v3102
      %v3109 = vor.u32 %v3107, %v3108
      %v3110 = vshll.u32 2131351028, %v3101
      %v3111 = vshrl.u32 2102212464, %v3102
      %v3112 = vor.u32 %v3110, %v3111
      %v3113 = vshll.u32 2102212464, %v3101
      %v3114 = vshrl.u32 920167782, %v3102
      %v3115 = vor.u32 %v3113, %v3114
      %v3116 = vshll.u32 920167782, %v3101
      %v3117 = vshrl.u32 1326507024, %v3102
      %v3118 = vor.u32 %v3116, %v3117
      %vm3119 = vcmp.lt.s32.totalorder %v3100, 1
      %vm3120 = vcmp.lt.s32.totalorder %v3100, 2
      %vm3121 = vcmp.lt.s32.totalorder %v3100, 3
      %vm3122 = vcmp.lt.s32.totalorder %v3100, 4
      %v3123 = vsel %vm3119, %v3103, %v3106
      %v3124 = vsel %vm3122, %v3112, 2102212464
      %v3125 = vsel %vm3121, %v3109, %v3124
      %v3126 = vsel %vm3120, %v3123, %v3125
      %v3127 = vsel %vm3119, %v3106, %v3109
      %v3128 = vsel %vm3122, %v3115, 920167782
      %v3129 = vsel %vm3121, %v3112, %v3128
      %v3130 = vsel %vm3120, %v3127, %v3129
      %v3131 = vsel %vm3119, %v3109, %v3112
      %v3132 = vsel %vm3122, %v3118, 1326507024
      %v3133 = vsel %vm3121, %v3115, %v3132
      %v3134 = vsel %vm3120, %v3131, %v3133
      %v3135 = vshll.u32 %v3095, 8
      %v3136 = vand.u32 %v3135, 65535
      %v3137 = vshrl.u32 %v3135, 16
      %v3138 = vand.u32 %v3134, 65535
      %v3139 = vshrl.u32 %v3134, 16
      %v3140 = vmul.u32 %v3136, %v3138
      %v3141 = vmul.u32 %v3136, %v3139
      %v3142 = vmul.u32 %v3137, %v3138
      %v3143 = vmul.u32 %v3137, %v3139
      %v3144 = vshll.u32 %v3141, 16
      %v3145 = vshrl.u32 %v3141, 16
      %v3146 = vshll.u32 %v3142, 16
      %v3147 = vshrl.u32 %v3142, 16
      %vm3148 = vc.u32 %v3140, %v3144
      %v3149 = vsel %vm3148, 1, 0
      %v3150 = vadd.s32 %v3140, %v3144
      %v3151 = vadd.s32 %v3143, %v3149
      %vm3152 = vc.u32 %v3150, %v3146
      %v3153 = vsel %vm3152, 1, 0
      %v3154 = vadd.s32 %v3150, %v3146
      %v3155 = vadd.s32 %v3151, %v3153
      %v3156 = vadd.s32 %v3155, %v3145
      %v3157 = vadd.s32 %v3156, %v3147
      %v3158 = vand.u32 %v3135, 65535
      %v3159 = vshrl.u32 %v3135, 16
      %v3160 = vand.u32 %v3130, 65535
      %v3161 = vshrl.u32 %v3130, 16
      %v3162 = vmul.u32 %v3158, %v3160
      %v3163 = vmul.u32 %v3158, %v3161
      %v3164 = vmul.u32 %v3159, %v3160
      %v3165 = vmul.u32 %v3159, %v3161
      %v3166 = vshll.u32 %v3163, 16
      %v3167 = vshrl.u32 %v3163, 16
      %v3168 = vshll.u32 %v3164, 16
      %v3169 = vshrl.u32 %v3164, 16
      %vm3170 = vc.u32 %v3162, %v3166
      %v3171 = vsel %vm3170, 1, 0
      %v3172 = vadd.s32 %v3162, %v3166
      %v3173 = vadd.s32 %v3165, %v3171
      %vm3174 = vc.u32 %v3172, %v3168
      %v3175 = vsel %vm3174, 1, 0
      %v3176 = vadd.s32 %v3172, %v3168
      %v3177 = vadd.s32 %v3173, %v3175
      %v3178 = vadd.s32 %v3177, %v3167
      %v3179 = vadd.s32 %v3178, %v3169
      %v3180 = vmul.u32 %v3135, %v3126
      %v3181 = vadd.s32 %v3157, %v3176
      %vm3182 = vc.u32 %v3157, %v3176
      %v3183 = vadd.s32 %v3179, 1
      %v3184 = vsel %vm3182, %v3183, %v3179
      %v3185 = vadd.s32 %v3180, %v3184
      %v3186 = vadd.s32 %v3185, 536870912
      %v3187 = vshrl.u32 %v3186, 30
      %v3188 = vshll.u32 %v3187, 30
      %v3189 = vsub.s32 %v3185, %v3188
      %vm3190 = vcmp.lt.s32.totalorder %v3189, 0
      %v3191 = vsub.s32 0, %v3189
      %v3192 = vsel %vm3190, %v3191, %v3189
      %v3193 = vclz %v3192
      %v3194 = vsub.s32 %v3193, 2
      %vm3195 = vcmp.gt.s32.totalorder 0, %v3194
      %v3196 = vsel %vm3195, 0, %v3194
      %v3197 = vsub.s32 32, %v3196
      %v3198 = vshll.u32 %v3189, %v3196
      %v3199 = vshrl.u32 %v3181, %v3197
      %v3200 = vor.u32 %v3198, %v3199
      %v3201 = vsub.s32 4294967266, %v3196
      %v3202 = vadd.s32 %v3201, 127
      %v3203 = vshll.u32 %v3202, 23
      %v3204 = vor.u32 4788187, %v3203
      %v3205 = vand.u32 2147483647, %v3204
      %v3207 = vcvt.s32.f32 %v3200
      %v3208 = vmul.f32 %v3207, %v3205
      %v3209 = vxor.u32 %v3208, 2147483648
      %v3210 = vsel %vm3089, %v3209, %v3208
      %v3211 = vsub.s32 4, %v3187
      %v3212 = vsel %vm3089, %v3211, %v3187
      %v3213 = vsel %vm3088, %v438, %v3210
      %v3214 = vsel %vm3088, 0, %v3212
      %v3215 = vmul.f32 %v3213, %v3213
      %v3216 = vmul.f32 %v3215, -0.001358992
      %v3217 = vadd.f32 %v3216, 0.041655596
      %v3218 = vmul.f32 %v3215, %v3217
      %v3219 = vadd.f32 %v3218, -0.4999988
      %v3220 = vmul.f32 %v3215, %v3219
      %v3221 = vadd.f32 1.0, %v3220
      %v3222 = vmul.f32 %v3213, %v3213
      %v3223 = vmul.f32 %v3222, -0.00019511016
      %v3224 = vadd.f32 %v3223, 0.008332121
      %v3225 = vmul.f32 %v3222, %v3224
      %v3226 = vadd.f32 %v3225, -0.16666654
      %v3227 = vmul.f32 %v3222, %v3226
      %v3228 = vadd.f32 %v3227, 1.0
      %v3229 = vmul.f32 %v3228, %v3213
      %vm3230 = vweird.f32 %v438
      %v3231 = vand.u32 %v3214, 3
      %vm3232 = vcmp.lt.s32.totalorder %v3231, 2
      %vm3233 = vcmp.eq.s32.totalorder %v3231, 0
      %v3234 = vxor.u32 %v3229, 2147483648
      %v3235 = vsel %vm3233, %v3221, %v3234
      %vm3236 = vcmp.eq.s32.totalorder %v3231, 2
      %v3237 = vxor.u32 %v3221, 2147483648
      %v3238 = vsel %vm3236, %v3237, %v3229
      %v3239 = vsel %vm3232, %v3235, %v3238
      %v3240 = vsel %vm3230, nan, %v3239
      %v3241 = vand.u32 2147483647, %v439
      %vm3242 = vcmp.le.f32.partialorder %v3241, 0.7853982
      %vm3243 = vcmp.lt.s32.totalorder %v439, 0
      %v3244 = vand.u32 %v439, 2139095040
      %v3245 = vshrl.u32 %v3244, 23
      %v3246 = vsub.s32 %v3245, 127
      %v3247 = vand.u32 2147483647, %v439
      %v3248 = vand.u32 %v3247, 8388607
      %v3249 = vor.u32 %v3248, 8388608
      %v3250 = vsub.s32 0, %v3249
      %v3251 = vadd.s32 %v3246, 1
      %vm3252 = vcmp.gt.s32.totalorder %v3251, 0
      %v3253 = vsel %vm3252, %v3251, 0
      %v3254 = vshrl.u32 %v3253, 5
      %v3255 = vand.u32 %v3253, 31
      %v3256 = vsub.s32 32, %v3255
      %v3257 = vshrl.u32 683565275, %v3256
      %v3258 = vshll.u32 683565275, %v3255
      %v3259 = vshrl.u32 2475754826, %v3256
      %v3260 = vor.u32 %v3258, %v3259
      %v3261 = vshll.u32 2475754826, %v3255
      %v3262 = vshrl.u32 2131351028, %v3256
      %v3263 = vor.u32 %v3261, %v3262
      %v3264 = vshll.u32 2131351028, %v3255
      %v3265 = vshrl.u32 2102212464, %v3256
      %v3266 = vor.u32 %v3264, %v3265
      %v3267 = vshll.u32 2102212464, %v3255
      %v3268 = vshrl.u32 920167782, %v3256
      %v3269 = vor.u32 %v3267, %v3268
      %v3270 = vshll.u32 920167782, %v3255
      %v3271 = vshrl.u32 1326507024, %v3256
      %v3272 = vor.u32 %v3270, %v3271
      %vm3273 = vcmp.lt.s32.totalorder %v3254, 1
      %vm3274 = vcmp.lt.s32.totalorder %v3254, 2
      %vm3275 = vcmp.lt.s32.totalorder %v3254, 3
      %vm3276 = vcmp.lt.s32.totalorder %v3254, 4
      %v3277 = vsel %vm3273, %v3257, %v3260
      %v3278 = vsel %vm3276, %v3266, 2102212464
      %v3279 = vsel %vm3275, %v3263, %v3278
      %v3280 = vsel %vm3274, %v3277, %v3279
      %v3281 = vsel %vm3273, %v3260, %v3263
      %v3282 = vsel %vm3276, %v3269, 920167782
      %v3283 = vsel %vm3275, %v3266, %v3282
      %v3284 = vsel %vm3274, %v3281, %v3283
      %v3285 = vsel %vm3273, %v3263, %v3266
      %v3286 = vsel %vm3276, %v3272, 1326507024
      %v3287 = vsel %vm3275, %v3269, %v3286
      %v3288 = vsel %vm3274, %v3285, %v3287
      %v3289 = vshll.u32 %v3249, 8
      %v3290 = vand.u32 %v3289, 65535
      %v3291 = vshrl.u32 %v3289, 16
      %v3292 = vand.u32 %v3288, 65535
      %v3293 = vshrl.u32 %v3288, 16
      %v3294 = vmul.u32 %v3290, %v3292
      %v3295 = vmul.u32 %v3290, %v3293
      %v3296 = vmul.u32 %v3291, %v3292
      %v3297 = vmul.u32 %v3291, %v3293
      %v3298 = vshll.u32 %v3295, 16
      %v3299 = vshrl.u32 %v3295, 16
      %v3300 = vshll.u32 %v3296, 16
      %v3301 = vshrl.u32 %v3296, 16
      %vm3302 = vc.u32 %v3294, %v3298
      %v3303 = vsel %vm3302, 1, 0
      %v3304 = vadd.s32 %v3294, %v3298
      %v3305 = vadd.s32 %v3297, %v3303
      %vm3306 = vc.u32 %v3304, %v3300
      %v3307 = vsel %vm3306, 1, 0
      %v3308 = vadd.s32 %v3304, %v3300
      %v3309 = vadd.s32 %v3305, %v3307
      %v3310 = vadd.s32 %v3309, %v3299
      %v3311 = vadd.s32 %v3310, %v3301
      %v3312 = vand.u32 %v3289, 65535
      %v3313 = vshrl.u32 %v3289, 16
      %v3314 = vand.u32 %v3284, 65535
      %v3315 = vshrl.u32 %v3284, 16
      %v3316 = vmul.u32 %v3312, %v3314
      %v3317 = vmul.u32 %v3312, %v3315
      %v3318 = vmul.u32 %v3313, %v3314
      %v3319 = vmul.u32 %v3313, %v3315
      %v3320 = vshll.u32 %v3317, 16
      %v3321 = vshrl.u32 %v3317, 16
      %v3322 = vshll.u32 %v3318, 16
      %v3323 = vshrl.u32 %v3318, 16
      %vm3324 = vc.u32 %v3316, %v3320
      %v3325 = vsel %vm3324, 1, 0
      %v3326 = vadd.s32 %v3316, %v3320
      %v3327 = vadd.s32 %v3319, %v3325
      %vm3328 = vc.u32 %v3326, %v3322
      %v3329 = vsel %vm3328, 1, 0
      %v3330 = vadd.s32 %v3326, %v3322
      %v3331 = vadd.s32 %v3327, %v3329
      %v3332 = vadd.s32 %v3331, %v3321
      %v3333 = vadd.s32 %v3332, %v3323
      %v3334 = vmul.u32 %v3289, %v3280
      %v3335 = vadd.s32 %v3311, %v3330
      %vm3336 = vc.u32 %v3311, %v3330
      %v3337 = vadd.s32 %v3333, 1
      %v3338 = vsel %vm3336, %v3337, %v3333
      %v3339 = vadd.s32 %v3334, %v3338
      %v3340 = vadd.s32 %v3339, 536870912
      %v3341 = vshrl.u32 %v3340, 30
      %v3342 = vshll.u32 %v3341, 30
      %v3343 = vsub.s32 %v3339, %v3342
      %vm3344 = vcmp.lt.s32.totalorder %v3343, 0
      %v3345 = vsub.s32 0, %v3343
      %v3346 = vsel %vm3344, %v3345, %v3343
      %v3347 = vclz %v3346
      %v3348 = vsub.s32 %v3347, 2
      %vm3349 = vcmp.gt.s32.totalorder 0, %v3348
      %v3350 = vsel %vm3349, 0, %v3348
      %v3351 = vsub.s32 32, %v3350
      %v3352 = vshll.u32 %v3343, %v3350
      %v3353 = vshrl.u32 %v3335, %v3351
      %v3354 = vor.u32 %v3352, %v3353
      %v3355 = vsub.s32 4294967266, %v3350
      %v3356 = vadd.s32 %v3355, 127
      %v3357 = vshll.u32 %v3356, 23
      %v3358 = vor.u32 4788187, %v3357
      %v3359 = vand.u32 2147483647, %v3358
      %v3361 = vcvt.s32.f32 %v3354
      %v3362 = vmul.f32 %v3361, %v3359
      %v3363 = vxor.u32 %v3362, 2147483648
      %v3364 = vsel %vm3243, %v3363, %v3362
      %v3365 = vsub.s32 4, %v3341
      %v3366 = vsel %vm3243, %v3365, %v3341
      %v3367 = vsel %vm3242, %v439, %v3364
      %v3368 = vsel %vm3242, 0, %v3366
      %v3369 = vmul.f32 %v3367, %v3367
      %v3370 = vmul.f32 %v3369, -0.001358992
      %v3371 = vadd.f32 %v3370, 0.041655596
      %v3372 = vmul.f32 %v3369, %v3371
      %v3373 = vadd.f32 %v3372, -0.4999988
      %v3374 = vmul.f32 %v3369, %v3373
      %v3375 = vadd.f32 1.0, %v3374
      %v3376 = vmul.f32 %v3367, %v3367
      %v3377 = vmul.f32 %v3376, -0.00019511016
      %v3378 = vadd.f32 %v3377, 0.008332121
      %v3379 = vmul.f32 %v3376, %v3378
      %v3380 = vadd.f32 %v3379, -0.16666654
      %v3381 = vmul.f32 %v3376, %v3380
      %v3382 = vadd.f32 %v3381, 1.0
      %v3383 = vmul.f32 %v3382, %v3367
      %vm3384 = vweird.f32 %v439
      %v3385 = vand.u32 %v3368, 3
      %vm3386 = vcmp.lt.s32.totalorder %v3385, 2
      %vm3387 = vcmp.eq.s32.totalorder %v3385, 0
      %v3388 = vxor.u32 %v3383, 2147483648
      %v3389 = vsel %vm3387, %v3375, %v3388
      %vm3390 = vcmp.eq.s32.totalorder %v3385, 2
      %v3391 = vxor.u32 %v3375, 2147483648
      %v3392 = vsel %vm3390, %v3391, %v3383
      %v3393 = vsel %vm3386, %v3389, %v3392
      %v3394 = vsel %vm3384, nan, %v3393
      %v3395 = vand.u32 2147483647, %v440
      %vm3396 = vcmp.le.f32.partialorder %v3395, 0.7853982
      %vm3397 = vcmp.lt.s32.totalorder %v440, 0
      %v3398 = vand.u32 %v440, 2139095040
      %v3399 = vshrl.u32 %v3398, 23
      %v3400 = vsub.s32 %v3399, 127
      %v3401 = vand.u32 2147483647, %v440
      %v3402 = vand.u32 %v3401, 8388607
      %v3403 = vor.u32 %v3402, 8388608
      %v3404 = vsub.s32 0, %v3403
      %v3405 = vadd.s32 %v3400, 1
      %vm3406 = vcmp.gt.s32.totalorder %v3405, 0
      %v3407 = vsel %vm3406, %v3405, 0
      %v3408 = vshrl.u32 %v3407, 5
      %v3409 = vand.u32 %v3407, 31
      %v3410 = vsub.s32 32, %v3409
      %v3411 = vshrl.u32 683565275, %v3410
      %v3412 = vshll.u32 683565275, %v3409
      %v3413 = vshrl.u32 2475754826, %v3410
      %v3414 = vor.u32 %v3412, %v3413
      %v3415 = vshll.u32 2475754826, %v3409
      %v3416 = vshrl.u32 2131351028, %v3410
      %v3417 = vor.u32 %v3415, %v3416
      %v3418 = vshll.u32 2131351028, %v3409
      %v3419 = vshrl.u32 2102212464, %v3410
      %v3420 = vor.u32 %v3418, %v3419
      %v3421 = vshll.u32 2102212464, %v3409
      %v3422 = vshrl.u32 920167782, %v3410
      %v3423 = vor.u32 %v3421, %v3422
      %v3424 = vshll.u32 920167782, %v3409
      %v3425 = vshrl.u32 1326507024, %v3410
      %v3426 = vor.u32 %v3424, %v3425
      %vm3427 = vcmp.lt.s32.totalorder %v3408, 1
      %vm3428 = vcmp.lt.s32.totalorder %v3408, 2
      %vm3429 = vcmp.lt.s32.totalorder %v3408, 3
      %vm3430 = vcmp.lt.s32.totalorder %v3408, 4
      %v3431 = vsel %vm3427, %v3411, %v3414
      %v3432 = vsel %vm3430, %v3420, 2102212464
      %v3433 = vsel %vm3429, %v3417, %v3432
      %v3434 = vsel %vm3428, %v3431, %v3433
      %v3435 = vsel %vm3427, %v3414, %v3417
      %v3436 = vsel %vm3430, %v3423, 920167782
      %v3437 = vsel %vm3429, %v3420, %v3436
      %v3438 = vsel %vm3428, %v3435, %v3437
      %v3439 = vsel %vm3427, %v3417, %v3420
      %v3440 = vsel %vm3430, %v3426, 1326507024
      %v3441 = vsel %vm3429, %v3423, %v3440
      %v3442 = vsel %vm3428, %v3439, %v3441
      %v3443 = vshll.u32 %v3403, 8
      %v3444 = vand.u32 %v3443, 65535
      %v3445 = vshrl.u32 %v3443, 16
      %v3446 = vand.u32 %v3442, 65535
      %v3447 = vshrl.u32 %v3442, 16
      %v3448 = vmul.u32 %v3444, %v3446
      %v3449 = vmul.u32 %v3444, %v3447
      %v3450 = vmul.u32 %v3445, %v3446
      %v3451 = vmul.u32 %v3445, %v3447
      %v3452 = vshll.u32 %v3449, 16
      %v3453 = vshrl.u32 %v3449, 16
      %v3454 = vshll.u32 %v3450, 16
      %v3455 = vshrl.u32 %v3450, 16
      %vm3456 = vc.u32 %v3448, %v3452
      %v3457 = vsel %vm3456, 1, 0
      %v3458 = vadd.s32 %v3448, %v3452
      %v3459 = vadd.s32 %v3451, %v3457
      %vm3460 = vc.u32 %v3458, %v3454
      %v3461 = vsel %vm3460, 1, 0
      %v3462 = vadd.s32 %v3458, %v3454
      %v3463 = vadd.s32 %v3459, %v3461
      %v3464 = vadd.s32 %v3463, %v3453
      %v3465 = vadd.s32 %v3464, %v3455
      %v3466 = vand.u32 %v3443, 65535
      %v3467 = vshrl.u32 %v3443, 16
      %v3468 = vand.u32 %v3438, 65535
      %v3469 = vshrl.u32 %v3438, 16
      %v3470 = vmul.u32 %v3466, %v3468
      %v3471 = vmul.u32 %v3466, %v3469
      %v3472 = vmul.u32 %v3467, %v3468
      %v3473 = vmul.u32 %v3467, %v3469
      %v3474 = vshll.u32 %v3471, 16
      %v3475 = vshrl.u32 %v3471, 16
      %v3476 = vshll.u32 %v3472, 16
      %v3477 = vshrl.u32 %v3472, 16
      %vm3478 = vc.u32 %v3470, %v3474
      %v3479 = vsel %vm3478, 1, 0
      %v3480 = vadd.s32 %v3470, %v3474
      %v3481 = vadd.s32 %v3473, %v3479
      %vm3482 = vc.u32 %v3480, %v3476
      %v3483 = vsel %vm3482, 1, 0
      %v3484 = vadd.s32 %v3480, %v3476
      %v3485 = vadd.s32 %v3481, %v3483
      %v3486 = vadd.s32 %v3485, %v3475
      %v3487 = vadd.s32 %v3486, %v3477
      %v3488 = vmul.u32 %v3443, %v3434
      %v3489 = vadd.s32 %v3465, %v3484
      %vm3490 = vc.u32 %v3465, %v3484
      %v3491 = vadd.s32 %v3487, 1
      %v3492 = vsel %vm3490, %v3491, %v3487
      %v3493 = vadd.s32 %v3488, %v3492
      %v3494 = vadd.s32 %v3493, 536870912
      %v3495 = vshrl.u32 %v3494, 30
      %v3496 = vshll.u32 %v3495, 30
      %v3497 = vsub.s32 %v3493, %v3496
      %vm3498 = vcmp.lt.s32.totalorder %v3497, 0
      %v3499 = vsub.s32 0, %v3497
      %v3500 = vsel %vm3498, %v3499, %v3497
      %v3501 = vclz %v3500
      %v3502 = vsub.s32 %v3501, 2
      %vm3503 = vcmp.gt.s32.totalorder 0, %v3502
      %v3504 = vsel %vm3503, 0, %v3502
      %v3505 = vsub.s32 32, %v3504
      %v3506 = vshll.u32 %v3497, %v3504
      %v3507 = vshrl.u32 %v3489, %v3505
      %v3508 = vor.u32 %v3506, %v3507
      %v3509 = vsub.s32 4294967266, %v3504
      %v3510 = vadd.s32 %v3509, 127
      %v3511 = vshll.u32 %v3510, 23
      %v3512 = vor.u32 4788187, %v3511
      %v3513 = vand.u32 2147483647, %v3512
      %v3515 = vcvt.s32.f32 %v3508
      %v3516 = vmul.f32 %v3515, %v3513
      %v3517 = vxor.u32 %v3516, 2147483648
      %v3518 = vsel %vm3397, %v3517, %v3516
      %v3519 = vsub.s32 4, %v3495
      %v3520 = vsel %vm3397, %v3519, %v3495
      %v3521 = vsel %vm3396, %v440, %v3518
      %v3522 = vsel %vm3396, 0, %v3520
      %v3523 = vmul.f32 %v3521, %v3521
      %v3524 = vmul.f32 %v3523, -0.001358992
      %v3525 = vadd.f32 %v3524, 0.041655596
      %v3526 = vmul.f32 %v3523, %v3525
      %v3527 = vadd.f32 %v3526, -0.4999988
      %v3528 = vmul.f32 %v3523, %v3527
      %v3529 = vadd.f32 1.0, %v3528
      %v3530 = vmul.f32 %v3521, %v3521
      %v3531 = vmul.f32 %v3530, -0.00019511016
      %v3532 = vadd.f32 %v3531, 0.008332121
      %v3533 = vmul.f32 %v3530, %v3532
      %v3534 = vadd.f32 %v3533, -0.16666654
      %v3535 = vmul.f32 %v3530, %v3534
      %v3536 = vadd.f32 %v3535, 1.0
      %v3537 = vmul.f32 %v3536, %v3521
      %vm3538 = vweird.f32 %v440
      %v3539 = vand.u32 %v3522, 3
      %vm3540 = vcmp.lt.s32.totalorder %v3539, 2
      %vm3541 = vcmp.eq.s32.totalorder %v3539, 0
      %v3542 = vxor.u32 %v3537, 2147483648
      %v3543 = vsel %vm3541, %v3529, %v3542
      %vm3544 = vcmp.eq.s32.totalorder %v3539, 2
      %v3545 = vxor.u32 %v3529, 2147483648
      %v3546 = vsel %vm3544, %v3545, %v3537
      %v3547 = vsel %vm3540, %v3543, %v3546
      %v3548 = vsel %vm3538, nan, %v3547
      %v3549 = vand.u32 2147483647, %v441
      %vm3550 = vcmp.le.f32.partialorder %v3549, 0.7853982
      %vm3551 = vcmp.lt.s32.totalorder %v441, 0
      %v3552 = vand.u32 %v441, 2139095040
      %v3553 = vshrl.u32 %v3552, 23
      %v3554 = vsub.s32 %v3553, 127
      %v3555 = vand.u32 2147483647, %v441
      %v3556 = vand.u32 %v3555, 8388607
      %v3557 = vor.u32 %v3556, 8388608
      %v3558 = vsub.s32 0, %v3557
      %v3559 = vadd.s32 %v3554, 1
      %vm3560 = vcmp.gt.s32.totalorder %v3559, 0
      %v3561 = vsel %vm3560, %v3559, 0
      %v3562 = vshrl.u32 %v3561, 5
      %v3563 = vand.u32 %v3561, 31
      %v3564 = vsub.s32 32, %v3563
      %v3565 = vshrl.u32 683565275, %v3564
      %v3566 = vshll.u32 683565275, %v3563
      %v3567 = vshrl.u32 2475754826, %v3564
      %v3568 = vor.u32 %v3566, %v3567
      %v3569 = vshll.u32 2475754826, %v3563
      %v3570 = vshrl.u32 2131351028, %v3564
      %v3571 = vor.u32 %v3569, %v3570
      %v3572 = vshll.u32 2131351028, %v3563
      %v3573 = vshrl.u32 2102212464, %v3564
      %v3574 = vor.u32 %v3572, %v3573
      %v3575 = vshll.u32 2102212464, %v3563
      %v3576 = vshrl.u32 920167782, %v3564
      %v3577 = vor.u32 %v3575, %v3576
      %v3578 = vshll.u32 920167782, %v3563
      %v3579 = vshrl.u32 1326507024, %v3564
      %v3580 = vor.u32 %v3578, %v3579
      %vm3581 = vcmp.lt.s32.totalorder %v3562, 1
      %vm3582 = vcmp.lt.s32.totalorder %v3562, 2
      %vm3583 = vcmp.lt.s32.totalorder %v3562, 3
      %vm3584 = vcmp.lt.s32.totalorder %v3562, 4
      %v3585 = vsel %vm3581, %v3565, %v3568
      %v3586 = vsel %vm3584, %v3574, 2102212464
      %v3587 = vsel %vm3583, %v3571, %v3586
      %v3588 = vsel %vm3582, %v3585, %v3587
      %v3589 = vsel %vm3581, %v3568, %v3571
      %v3590 = vsel %vm3584, %v3577, 920167782
      %v3591 = vsel %vm3583, %v3574, %v3590
      %v3592 = vsel %vm3582, %v3589, %v3591
      %v3593 = vsel %vm3581, %v3571, %v3574
      %v3594 = vsel %vm3584, %v3580, 1326507024
      %v3595 = vsel %vm3583, %v3577, %v3594
      %v3596 = vsel %vm3582, %v3593, %v3595
      %v3597 = vshll.u32 %v3557, 8
      %v3598 = vand.u32 %v3597, 65535
      %v3599 = vshrl.u32 %v3597, 16
      %v3600 = vand.u32 %v3596, 65535
      %v3601 = vshrl.u32 %v3596, 16
      %v3602 = vmul.u32 %v3598, %v3600
      %v3603 = vmul.u32 %v3598, %v3601
      %v3604 = vmul.u32 %v3599, %v3600
      %v3605 = vmul.u32 %v3599, %v3601
      %v3606 = vshll.u32 %v3603, 16
      %v3607 = vshrl.u32 %v3603, 16
      %v3608 = vshll.u32 %v3604, 16
      %v3609 = vshrl.u32 %v3604, 16
      %vm3610 = vc.u32 %v3602, %v3606
      %v3611 = vsel %vm3610, 1, 0
      %v3612 = vadd.s32 %v3602, %v3606
      %v3613 = vadd.s32 %v3605, %v3611
      %vm3614 = vc.u32 %v3612, %v3608
      %v3615 = vsel %vm3614, 1, 0
      %v3616 = vadd.s32 %v3612, %v3608
      %v3617 = vadd.s32 %v3613, %v3615
      %v3618 = vadd.s32 %v3617, %v3607
      %v3619 = vadd.s32 %v3618, %v3609
      %v3620 = vand.u32 %v3597, 65535
      %v3621 = vshrl.u32 %v3597, 16
      %v3622 = vand.u32 %v3592, 65535
      %v3623 = vshrl.u32 %v3592, 16
      %v3624 = vmul.u32 %v3620, %v3622
      %v3625 = vmul.u32 %v3620, %v3623
      %v3626 = vmul.u32 %v3621, %v3622
      %v3627 = vmul.u32 %v3621, %v3623
      %v3628 = vshll.u32 %v3625, 16
      %v3629 = vshrl.u32 %v3625, 16
      %v3630 = vshll.u32 %v3626, 16
      %v3631 = vshrl.u32 %v3626, 16
      %vm3632 = vc.u32 %v3624, %v3628
      %v3633 = vsel %vm3632, 1, 0
      %v3634 = vadd.s32 %v3624, %v3628
      %v3635 = vadd.s32 %v3627, %v3633
      %vm3636 = vc.u32 %v3634, %v3630
      %v3637 = vsel %vm3636, 1, 0
      %v3638 = vadd.s32 %v3634, %v3630
      %v3639 = vadd.s32 %v3635, %v3637
      %v3640 = vadd.s32 %v3639, %v3629
      %v3641 = vadd.s32 %v3640, %v3631
      %v3642 = vmul.u32 %v3597, %v3588
      %v3643 = vadd.s32 %v3619, %v3638
      %vm3644 = vc.u32 %v3619, %v3638
      %v3645 = vadd.s32 %v3641, 1
      %v3646 = vsel %vm3644, %v3645, %v3641
      %v3647 = vadd.s32 %v3642, %v3646
      %v3648 = vadd.s32 %v3647, 536870912
      %v3649 = vshrl.u32 %v3648, 30
      %v3650 = vshll.u32 %v3649, 30
      %v3651 = vsub.s32 %v3647, %v3650
      %vm3652 = vcmp.lt.s32.totalorder %v3651, 0
      %v3653 = vsub.s32 0, %v3651
      %v3654 = vsel %vm3652, %v3653, %v3651
      %v3655 = vclz %v3654
      %v3656 = vsub.s32 %v3655, 2
      %vm3657 = vcmp.gt.s32.totalorder 0, %v3656
      %v3658 = vsel %vm3657, 0, %v3656
      %v3659 = vsub.s32 32, %v3658
      %v3660 = vshll.u32 %v3651, %v3658
      %v3661 = vshrl.u32 %v3643, %v3659
      %v3662 = vor.u32 %v3660, %v3661
      %v3663 = vsub.s32 4294967266, %v3658
      %v3664 = vadd.s32 %v3663, 127
      %v3665 = vshll.u32 %v3664, 23
      %v3666 = vor.u32 4788187, %v3665
      %v3667 = vand.u32 2147483647, %v3666
      %v3669 = vcvt.s32.f32 %v3662
      %v3670 = vmul.f32 %v3669, %v3667
      %v3671 = vxor.u32 %v3670, 2147483648
      %v3672 = vsel %vm3551, %v3671, %v3670
      %v3673 = vsub.s32 4, %v3649
      %v3674 = vsel %vm3551, %v3673, %v3649
      %v3675 = vsel %vm3550, %v441, %v3672
      %v3676 = vsel %vm3550, 0, %v3674
      %v3677 = vmul.f32 %v3675, %v3675
      %v3678 = vmul.f32 %v3677, -0.001358992
      %v3679 = vadd.f32 %v3678, 0.041655596
      %v3680 = vmul.f32 %v3677, %v3679
      %v3681 = vadd.f32 %v3680, -0.4999988
      %v3682 = vmul.f32 %v3677, %v3681
      %v3683 = vadd.f32 1.0, %v3682
      %v3684 = vmul.f32 %v3675, %v3675
      %v3685 = vmul.f32 %v3684, -0.00019511016
      %v3686 = vadd.f32 %v3685, 0.008332121
      %v3687 = vmul.f32 %v3684, %v3686
      %v3688 = vadd.f32 %v3687, -0.16666654
      %v3689 = vmul.f32 %v3684, %v3688
      %v3690 = vadd.f32 %v3689, 1.0
      %v3691 = vmul.f32 %v3690, %v3675
      %vm3692 = vweird.f32 %v441
      %v3693 = vand.u32 %v3676, 3
      %vm3694 = vcmp.lt.s32.totalorder %v3693, 2
      %vm3695 = vcmp.eq.s32.totalorder %v3693, 0
      %v3696 = vxor.u32 %v3691, 2147483648
      %v3697 = vsel %vm3695, %v3683, %v3696
      %vm3698 = vcmp.eq.s32.totalorder %v3693, 2
      %v3699 = vxor.u32 %v3683, 2147483648
      %v3700 = vsel %vm3698, %v3699, %v3691
      %v3701 = vsel %vm3694, %v3697, %v3700
      %v3702 = vsel %vm3692, nan, %v3701
      %v3703 = vand.u32 2147483647, %v442
      %vm3704 = vcmp.le.f32.partialorder %v3703, 0.7853982
      %vm3705 = vcmp.lt.s32.totalorder %v442, 0
      %v3706 = vand.u32 %v442, 2139095040
      %v3707 = vshrl.u32 %v3706, 23
      %v3708 = vsub.s32 %v3707, 127
      %v3709 = vand.u32 2147483647, %v442
      %v3710 = vand.u32 %v3709, 8388607
      %v3711 = vor.u32 %v3710, 8388608
      %v3712 = vsub.s32 0, %v3711
      %v3713 = vadd.s32 %v3708, 1
      %vm3714 = vcmp.gt.s32.totalorder %v3713, 0
      %v3715 = vsel %vm3714, %v3713, 0
      %v3716 = vshrl.u32 %v3715, 5
      %v3717 = vand.u32 %v3715, 31
      %v3718 = vsub.s32 32, %v3717
      %v3719 = vshrl.u32 683565275, %v3718
      %v3720 = vshll.u32 683565275, %v3717
      %v3721 = vshrl.u32 2475754826, %v3718
      %v3722 = vor.u32 %v3720, %v3721
      %v3723 = vshll.u32 2475754826, %v3717
      %v3724 = vshrl.u32 2131351028, %v3718
      %v3725 = vor.u32 %v3723, %v3724
      %v3726 = vshll.u32 2131351028, %v3717
      %v3727 = vshrl.u32 2102212464, %v3718
      %v3728 = vor.u32 %v3726, %v3727
      %v3729 = vshll.u32 2102212464, %v3717
      %v3730 = vshrl.u32 920167782, %v3718
      %v3731 = vor.u32 %v3729, %v3730
      %v3732 = vshll.u32 920167782, %v3717
      %v3733 = vshrl.u32 1326507024, %v3718
      %v3734 = vor.u32 %v3732, %v3733
      %vm3735 = vcmp.lt.s32.totalorder %v3716, 1
      %vm3736 = vcmp.lt.s32.totalorder %v3716, 2
      %vm3737 = vcmp.lt.s32.totalorder %v3716, 3
      %vm3738 = vcmp.lt.s32.totalorder %v3716, 4
      %v3739 = vsel %vm3735, %v3719, %v3722
      %v3740 = vsel %vm3738, %v3728, 2102212464
      %v3741 = vsel %vm3737, %v3725, %v3740
      %v3742 = vsel %vm3736, %v3739, %v3741
      %v3743 = vsel %vm3735, %v3722, %v3725
      %v3744 = vsel %vm3738, %v3731, 920167782
      %v3745 = vsel %vm3737, %v3728, %v3744
      %v3746 = vsel %vm3736, %v3743, %v3745
      %v3747 = vsel %vm3735, %v3725, %v3728
      %v3748 = vsel %vm3738, %v3734, 1326507024
      %v3749 = vsel %vm3737, %v3731, %v3748
      %v3750 = vsel %vm3736, %v3747, %v3749
      %v3751 = vshll.u32 %v3711, 8
      %v3752 = vand.u32 %v3751, 65535
      %v3753 = vshrl.u32 %v3751, 16
      %v3754 = vand.u32 %v3750, 65535
      %v3755 = vshrl.u32 %v3750, 16
      %v3756 = vmul.u32 %v3752, %v3754
      %v3757 = vmul.u32 %v3752, %v3755
      %v3758 = vmul.u32 %v3753, %v3754
      %v3759 = vmul.u32 %v3753, %v3755
      %v3760 = vshll.u32 %v3757, 16
      %v3761 = vshrl.u32 %v3757, 16
      %v3762 = vshll.u32 %v3758, 16
      %v3763 = vshrl.u32 %v3758, 16
      %vm3764 = vc.u32 %v3756, %v3760
      %v3765 = vsel %vm3764, 1, 0
      %v3766 = vadd.s32 %v3756, %v3760
      %v3767 = vadd.s32 %v3759, %v3765
      %vm3768 = vc.u32 %v3766, %v3762
      %v3769 = vsel %vm3768, 1, 0
      %v3770 = vadd.s32 %v3766, %v3762
      %v3771 = vadd.s32 %v3767, %v3769
      %v3772 = vadd.s32 %v3771, %v3761
      %v3773 = vadd.s32 %v3772, %v3763
      %v3774 = vand.u32 %v3751, 65535
      %v3775 = vshrl.u32 %v3751, 16
      %v3776 = vand.u32 %v3746, 65535
      %v3777 = vshrl.u32 %v3746, 16
      %v3778 = vmul.u32 %v3774, %v3776
      %v3779 = vmul.u32 %v3774, %v3777
      %v3780 = vmul.u32 %v3775, %v3776
      %v3781 = vmul.u32 %v3775, %v3777
      %v3782 = vshll.u32 %v3779, 16
      %v3783 = vshrl.u32 %v3779, 16
      %v3784 = vshll.u32 %v3780, 16
      %v3785 = vshrl.u32 %v3780, 16
      %vm3786 = vc.u32 %v3778, %v3782
      %v3787 = vsel %vm3786, 1, 0
      %v3788 = vadd.s32 %v3778, %v3782
      %v3789 = vadd.s32 %v3781, %v3787
      %vm3790 = vc.u32 %v3788, %v3784
      %v3791 = vsel %vm3790, 1, 0
      %v3792 = vadd.s32 %v3788, %v3784
      %v3793 = vadd.s32 %v3789, %v3791
      %v3794 = vadd.s32 %v3793, %v3783
      %v3795 = vadd.s32 %v3794, %v3785
      %v3796 = vmul.u32 %v3751, %v3742
      %v3797 = vadd.s32 %v3773, %v3792
      %vm3798 = vc.u32 %v3773, %v3792
      %v3799 = vadd.s32 %v3795, 1
      %v3800 = vsel %vm3798, %v3799, %v3795
      %v3801 = vadd.s32 %v3796, %v3800
      %v3802 = vadd.s32 %v3801, 536870912
      %v3803 = vshrl.u32 %v3802, 30
      %v3804 = vshll.u32 %v3803, 30
      %v3805 = vsub.s32 %v3801, %v3804
      %vm3806 = vcmp.lt.s32.totalorder %v3805, 0
      %v3807 = vsub.s32 0, %v3805
      %v3808 = vsel %vm3806, %v3807, %v3805
      %v3809 = vclz %v3808
      %v3810 = vsub.s32 %v3809, 2
      %vm3811 = vcmp.gt.s32.totalorder 0, %v3810
      %v3812 = vsel %vm3811, 0, %v3810
      %v3813 = vsub.s32 32, %v3812
      %v3814 = vshll.u32 %v3805, %v3812
      %v3815 = vshrl.u32 %v3797, %v3813
      %v3816 = vor.u32 %v3814, %v3815
      %v3817 = vsub.s32 4294967266, %v3812
      %v3818 = vadd.s32 %v3817, 127
      %v3819 = vshll.u32 %v3818, 23
      %v3820 = vor.u32 4788187, %v3819
      %v3821 = vand.u32 2147483647, %v3820
      %v3823 = vcvt.s32.f32 %v3816
      %v3824 = vmul.f32 %v3823, %v3821
      %v3825 = vxor.u32 %v3824, 2147483648
      %v3826 = vsel %vm3705, %v3825, %v3824
      %v3827 = vsub.s32 4, %v3803
      %v3828 = vsel %vm3705, %v3827, %v3803
      %v3829 = vsel %vm3704, %v442, %v3826
      %v3830 = vsel %vm3704, 0, %v3828
      %v3831 = vmul.f32 %v3829, %v3829
      %v3832 = vmul.f32 %v3831, -0.001358992
      %v3833 = vadd.f32 %v3832, 0.041655596
      %v3834 = vmul.f32 %v3831, %v3833
      %v3835 = vadd.f32 %v3834, -0.4999988
      %v3836 = vmul.f32 %v3831, %v3835
      %v3837 = vadd.f32 1.0, %v3836
      %v3838 = vmul.f32 %v3829, %v3829
      %v3839 = vmul.f32 %v3838, -0.00019511016
      %v3840 = vadd.f32 %v3839, 0.008332121
      %v3841 = vmul.f32 %v3838, %v3840
      %v3842 = vadd.f32 %v3841, -0.16666654
      %v3843 = vmul.f32 %v3838, %v3842
      %v3844 = vadd.f32 %v3843, 1.0
      %v3845 = vmul.f32 %v3844, %v3829
      %vm3846 = vweird.f32 %v442
      %v3847 = vand.u32 %v3830, 3
      %vm3848 = vcmp.lt.s32.totalorder %v3847, 2
      %vm3849 = vcmp.eq.s32.totalorder %v3847, 0
      %v3850 = vxor.u32 %v3845, 2147483648
      %v3851 = vsel %vm3849, %v3837, %v3850
      %vm3852 = vcmp.eq.s32.totalorder %v3847, 2
      %v3853 = vxor.u32 %v3837, 2147483648
      %v3854 = vsel %vm3852, %v3853, %v3845
      %v3855 = vsel %vm3848, %v3851, %v3854
      %v3856 = vsel %vm3846, nan, %v3855
      %v3857 = vand.u32 2147483647, %v443
      %vm3858 = vcmp.le.f32.partialorder %v3857, 0.7853982
      %vm3859 = vcmp.lt.s32.totalorder %v443, 0
      %v3860 = vand.u32 %v443, 2139095040
      %v3861 = vshrl.u32 %v3860, 23
      %v3862 = vsub.s32 %v3861, 127
      %v3863 = vand.u32 2147483647, %v443
      %v3864 = vand.u32 %v3863, 8388607
      %v3865 = vor.u32 %v3864, 8388608
      %v3866 = vsub.s32 0, %v3865
      %v3867 = vadd.s32 %v3862, 1
      %vm3868 = vcmp.gt.s32.totalorder %v3867, 0
      %v3869 = vsel %vm3868, %v3867, 0
      %v3870 = vshrl.u32 %v3869, 5
      %v3871 = vand.u32 %v3869, 31
      %v3872 = vsub.s32 32, %v3871
      %v3873 = vshrl.u32 683565275, %v3872
      %v3874 = vshll.u32 683565275, %v3871
      %v3875 = vshrl.u32 2475754826, %v3872
      %v3876 = vor.u32 %v3874, %v3875
      %v3877 = vshll.u32 2475754826, %v3871
      %v3878 = vshrl.u32 2131351028, %v3872
      %v3879 = vor.u32 %v3877, %v3878
      %v3880 = vshll.u32 2131351028, %v3871
      %v3881 = vshrl.u32 2102212464, %v3872
      %v3882 = vor.u32 %v3880, %v3881
      %v3883 = vshll.u32 2102212464, %v3871
      %v3884 = vshrl.u32 920167782, %v3872
      %v3885 = vor.u32 %v3883, %v3884
      %v3886 = vshll.u32 920167782, %v3871
      %v3887 = vshrl.u32 1326507024, %v3872
      %v3888 = vor.u32 %v3886, %v3887
      %vm3889 = vcmp.lt.s32.totalorder %v3870, 1
      %vm3890 = vcmp.lt.s32.totalorder %v3870, 2
      %vm3891 = vcmp.lt.s32.totalorder %v3870, 3
      %vm3892 = vcmp.lt.s32.totalorder %v3870, 4
      %v3893 = vsel %vm3889, %v3873, %v3876
      %v3894 = vsel %vm3892, %v3882, 2102212464
      %v3895 = vsel %vm3891, %v3879, %v3894
      %v3896 = vsel %vm3890, %v3893, %v3895
      %v3897 = vsel %vm3889, %v3876, %v3879
      %v3898 = vsel %vm3892, %v3885, 920167782
      %v3899 = vsel %vm3891, %v3882, %v3898
      %v3900 = vsel %vm3890, %v3897, %v3899
      %v3901 = vsel %vm3889, %v3879, %v3882
      %v3902 = vsel %vm3892, %v3888, 1326507024
      %v3903 = vsel %vm3891, %v3885, %v3902
      %v3904 = vsel %vm3890, %v3901, %v3903
      %v3905 = vshll.u32 %v3865, 8
      %v3906 = vand.u32 %v3905, 65535
      %v3907 = vshrl.u32 %v3905, 16
      %v3908 = vand.u32 %v3904, 65535
      %v3909 = vshrl.u32 %v3904, 16
      %v3910 = vmul.u32 %v3906, %v3908
      %v3911 = vmul.u32 %v3906, %v3909
      %v3912 = vmul.u32 %v3907, %v3908
      %v3913 = vmul.u32 %v3907, %v3909
      %v3914 = vshll.u32 %v3911, 16
      %v3915 = vshrl.u32 %v3911, 16
      %v3916 = vshll.u32 %v3912, 16
      %v3917 = vshrl.u32 %v3912, 16
      %vm3918 = vc.u32 %v3910, %v3914
      %v3919 = vsel %vm3918, 1, 0
      %v3920 = vadd.s32 %v3910, %v3914
      %v3921 = vadd.s32 %v3913, %v3919
      %vm3922 = vc.u32 %v3920, %v3916
      %v3923 = vsel %vm3922, 1, 0
      %v3924 = vadd.s32 %v3920, %v3916
      %v3925 = vadd.s32 %v3921, %v3923
      %v3926 = vadd.s32 %v3925, %v3915
      %v3927 = vadd.s32 %v3926, %v3917
      %v3928 = vand.u32 %v3905, 65535
      %v3929 = vshrl.u32 %v3905, 16
      %v3930 = vand.u32 %v3900, 65535
      %v3931 = vshrl.u32 %v3900, 16
      %v3932 = vmul.u32 %v3928, %v3930
      %v3933 = vmul.u32 %v3928, %v3931
      %v3934 = vmul.u32 %v3929, %v3930
      %v3935 = vmul.u32 %v3929, %v3931
      %v3936 = vshll.u32 %v3933, 16
      %v3937 = vshrl.u32 %v3933, 16
      %v3938 = vshll.u32 %v3934, 16
      %v3939 = vshrl.u32 %v3934, 16
      %vm3940 = vc.u32 %v3932, %v3936
      %v3941 = vsel %vm3940, 1, 0
      %v3942 = vadd.s32 %v3932, %v3936
      %v3943 = vadd.s32 %v3935, %v3941
      %vm3944 = vc.u32 %v3942, %v3938
      %v3945 = vsel %vm3944, 1, 0
      %v3946 = vadd.s32 %v3942, %v3938
      %v3947 = vadd.s32 %v3943, %v3945
      %v3948 = vadd.s32 %v3947, %v3937
      %v3949 = vadd.s32 %v3948, %v3939
      %v3950 = vmul.u32 %v3905, %v3896
      %v3951 = vadd.s32 %v3927, %v3946
      %vm3952 = vc.u32 %v3927, %v3946
      %v3953 = vadd.s32 %v3949, 1
      %v3954 = vsel %vm3952, %v3953, %v3949
      %v3955 = vadd.s32 %v3950, %v3954
      %v3956 = vadd.s32 %v3955, 536870912
      %v3957 = vshrl.u32 %v3956, 30
      %v3958 = vshll.u32 %v3957, 30
      %v3959 = vsub.s32 %v3955, %v3958
      %vm3960 = vcmp.lt.s32.totalorder %v3959, 0
      %v3961 = vsub.s32 0, %v3959
      %v3962 = vsel %vm3960, %v3961, %v3959
      %v3963 = vclz %v3962
      %v3964 = vsub.s32 %v3963, 2
      %vm3965 = vcmp.gt.s32.totalorder 0, %v3964
      %v3966 = vsel %vm3965, 0, %v3964
      %v3967 = vsub.s32 32, %v3966
      %v3968 = vshll.u32 %v3959, %v3966
      %v3969 = vshrl.u32 %v3951, %v3967
      %v3970 = vor.u32 %v3968, %v3969
      %v3971 = vsub.s32 4294967266, %v3966
      %v3972 = vadd.s32 %v3971, 127
      %v3973 = vshll.u32 %v3972, 23
      %v3974 = vor.u32 4788187, %v3973
      %v3975 = vand.u32 2147483647, %v3974
      %v3977 = vcvt.s32.f32 %v3970
      %v3978 = vmul.f32 %v3977, %v3975
      %v3979 = vxor.u32 %v3978, 2147483648
      %v3980 = vsel %vm3859, %v3979, %v3978
      %v3981 = vsub.s32 4, %v3957
      %v3982 = vsel %vm3859, %v3981, %v3957
      %v3983 = vsel %vm3858, %v443, %v3980
      %v3984 = vsel %vm3858, 0, %v3982
      %v3985 = vmul.f32 %v3983, %v3983
      %v3986 = vmul.f32 %v3985, -0.001358992
      %v3987 = vadd.f32 %v3986, 0.041655596
      %v3988 = vmul.f32 %v3985, %v3987
      %v3989 = vadd.f32 %v3988, -0.4999988
      %v3990 = vmul.f32 %v3985, %v3989
      %v3991 = vadd.f32 1.0, %v3990
      %v3992 = vmul.f32 %v3983, %v3983
      %v3993 = vmul.f32 %v3992, -0.00019511016
      %v3994 = vadd.f32 %v3993, 0.008332121
      %v3995 = vmul.f32 %v3992, %v3994
      %v3996 = vadd.f32 %v3995, -0.16666654
      %v3997 = vmul.f32 %v3992, %v3996
      %v3998 = vadd.f32 %v3997, 1.0
      %v3999 = vmul.f32 %v3998, %v3983
      %vm4000 = vweird.f32 %v443
      %v4001 = vand.u32 %v3984, 3
      %vm4002 = vcmp.lt.s32.totalorder %v4001, 2
      %vm4003 = vcmp.eq.s32.totalorder %v4001, 0
      %v4004 = vxor.u32 %v3999, 2147483648
      %v4005 = vsel %vm4003, %v3991, %v4004
      %vm4006 = vcmp.eq.s32.totalorder %v4001, 2
      %v4007 = vxor.u32 %v3991, 2147483648
      %v4008 = vsel %vm4006, %v4007, %v3999
      %v4009 = vsel %vm4002, %v4005, %v4008
      %v4010 = vsel %vm4000, nan, %v4009
      %v4011 = vand.u32 2147483647, %v444
      %vm4012 = vcmp.le.f32.partialorder %v4011, 0.7853982
      %vm4013 = vcmp.lt.s32.totalorder %v444, 0
      %v4014 = vand.u32 %v444, 2139095040
      %v4015 = vshrl.u32 %v4014, 23
      %v4016 = vsub.s32 %v4015, 127
      %v4017 = vand.u32 2147483647, %v444
      %v4018 = vand.u32 %v4017, 8388607
      %v4019 = vor.u32 %v4018, 8388608
      %v4020 = vsub.s32 0, %v4019
      %v4021 = vadd.s32 %v4016, 1
      %vm4022 = vcmp.gt.s32.totalorder %v4021, 0
      %v4023 = vsel %vm4022, %v4021, 0
      %v4024 = vshrl.u32 %v4023, 5
      %v4025 = vand.u32 %v4023, 31
      %v4026 = vsub.s32 32, %v4025
      %v4027 = vshrl.u32 683565275, %v4026
      %v4028 = vshll.u32 683565275, %v4025
      %v4029 = vshrl.u32 2475754826, %v4026
      %v4030 = vor.u32 %v4028, %v4029
      %v4031 = vshll.u32 2475754826, %v4025
      %v4032 = vshrl.u32 2131351028, %v4026
      %v4033 = vor.u32 %v4031, %v4032
      %v4034 = vshll.u32 2131351028, %v4025
      %v4035 = vshrl.u32 2102212464, %v4026
      %v4036 = vor.u32 %v4034, %v4035
      %v4037 = vshll.u32 2102212464, %v4025
      %v4038 = vshrl.u32 920167782, %v4026
      %v4039 = vor.u32 %v4037, %v4038
      %v4040 = vshll.u32 920167782, %v4025
      %v4041 = vshrl.u32 1326507024, %v4026
      %v4042 = vor.u32 %v4040, %v4041
      %vm4043 = vcmp.lt.s32.totalorder %v4024, 1
      %vm4044 = vcmp.lt.s32.totalorder %v4024, 2
      %vm4045 = vcmp.lt.s32.totalorder %v4024, 3
      %vm4046 = vcmp.lt.s32.totalorder %v4024, 4
      %v4047 = vsel %vm4043, %v4027, %v4030
      %v4048 = vsel %vm4046, %v4036, 2102212464
      %v4049 = vsel %vm4045, %v4033, %v4048
      %v4050 = vsel %vm4044, %v4047, %v4049
      %v4051 = vsel %vm4043, %v4030, %v4033
      %v4052 = vsel %vm4046, %v4039, 920167782
      %v4053 = vsel %vm4045, %v4036, %v4052
      %v4054 = vsel %vm4044, %v4051, %v4053
      %v4055 = vsel %vm4043, %v4033, %v4036
      %v4056 = vsel %vm4046, %v4042, 1326507024
      %v4057 = vsel %vm4045, %v4039, %v4056
      %v4058 = vsel %vm4044, %v4055, %v4057
      %v4059 = vshll.u32 %v4019, 8
      %v4060 = vand.u32 %v4059, 65535
      %v4061 = vshrl.u32 %v4059, 16
      %v4062 = vand.u32 %v4058, 65535
      %v4063 = vshrl.u32 %v4058, 16
      %v4064 = vmul.u32 %v4060, %v4062
      %v4065 = vmul.u32 %v4060, %v4063
      %v4066 = vmul.u32 %v4061, %v4062
      %v4067 = vmul.u32 %v4061, %v4063
      %v4068 = vshll.u32 %v4065, 16
      %v4069 = vshrl.u32 %v4065, 16
      %v4070 = vshll.u32 %v4066, 16
      %v4071 = vshrl.u32 %v4066, 16
      %vm4072 = vc.u32 %v4064, %v4068
      %v4073 = vsel %vm4072, 1, 0
      %v4074 = vadd.s32 %v4064, %v4068
      %v4075 = vadd.s32 %v4067, %v4073
      %vm4076 = vc.u32 %v4074, %v4070
      %v4077 = vsel %vm4076, 1, 0
      %v4078 = vadd.s32 %v4074, %v4070
      %v4079 = vadd.s32 %v4075, %v4077
      %v4080 = vadd.s32 %v4079, %v4069
      %v4081 = vadd.s32 %v4080, %v4071
      %v4082 = vand.u32 %v4059, 65535
      %v4083 = vshrl.u32 %v4059, 16
      %v4084 = vand.u32 %v4054, 65535
      %v4085 = vshrl.u32 %v4054, 16
      %v4086 = vmul.u32 %v4082, %v4084
      %v4087 = vmul.u32 %v4082, %v4085
      %v4088 = vmul.u32 %v4083, %v4084
      %v4089 = vmul.u32 %v4083, %v4085
      %v4090 = vshll.u32 %v4087, 16
      %v4091 = vshrl.u32 %v4087, 16
      %v4092 = vshll.u32 %v4088, 16
      %v4093 = vshrl.u32 %v4088, 16
      %vm4094 = vc.u32 %v4086, %v4090
      %v4095 = vsel %vm4094, 1, 0
      %v4096 = vadd.s32 %v4086, %v4090
      %v4097 = vadd.s32 %v4089, %v4095
      %vm4098 = vc.u32 %v4096, %v4092
      %v4099 = vsel %vm4098, 1, 0
      %v4100 = vadd.s32 %v4096, %v4092
      %v4101 = vadd.s32 %v4097, %v4099
      %v4102 = vadd.s32 %v4101, %v4091
      %v4103 = vadd.s32 %v4102, %v4093
      %v4104 = vmul.u32 %v4059, %v4050
      %v4105 = vadd.s32 %v4081, %v4100
      %vm4106 = vc.u32 %v4081, %v4100
      %v4107 = vadd.s32 %v4103, 1
      %v4108 = vsel %vm4106, %v4107, %v4103
      %v4109 = vadd.s32 %v4104, %v4108
      %v4110 = vadd.s32 %v4109, 536870912
      %v4111 = vshrl.u32 %v4110, 30
      %v4112 = vshll.u32 %v4111, 30
      %v4113 = vsub.s32 %v4109, %v4112
      %vm4114 = vcmp.lt.s32.totalorder %v4113, 0
      %v4115 = vsub.s32 0, %v4113
      %v4116 = vsel %vm4114, %v4115, %v4113
      %v4117 = vclz %v4116
      %v4118 = vsub.s32 %v4117, 2
      %vm4119 = vcmp.gt.s32.totalorder 0, %v4118
      %v4120 = vsel %vm4119, 0, %v4118
      %v4121 = vsub.s32 32, %v4120
      %v4122 = vshll.u32 %v4113, %v4120
      %v4123 = vshrl.u32 %v4105, %v4121
      %v4124 = vor.u32 %v4122, %v4123
      %v4125 = vsub.s32 4294967266, %v4120
      %v4126 = vadd.s32 %v4125, 127
      %v4127 = vshll.u32 %v4126, 23
      %v4128 = vor.u32 4788187, %v4127
      %v4129 = vand.u32 2147483647, %v4128
      %v4131 = vcvt.s32.f32 %v4124
      %v4132 = vmul.f32 %v4131, %v4129
      %v4133 = vxor.u32 %v4132, 2147483648
      %v4134 = vsel %vm4013, %v4133, %v4132
      %v4135 = vsub.s32 4, %v4111
      %v4136 = vsel %vm4013, %v4135, %v4111
      %v4137 = vsel %vm4012, %v444, %v4134
      %v4138 = vsel %vm4012, 0, %v4136
      %v4139 = vmul.f32 %v4137, %v4137
      %v4140 = vmul.f32 %v4139, -0.001358992
      %v4141 = vadd.f32 %v4140, 0.041655596
      %v4142 = vmul.f32 %v4139, %v4141
      %v4143 = vadd.f32 %v4142, -0.4999988
      %v4144 = vmul.f32 %v4139, %v4143
      %v4145 = vadd.f32 1.0, %v4144
      %v4146 = vmul.f32 %v4137, %v4137
      %v4147 = vmul.f32 %v4146, -0.00019511016
      %v4148 = vadd.f32 %v4147, 0.008332121
      %v4149 = vmul.f32 %v4146, %v4148
      %v4150 = vadd.f32 %v4149, -0.16666654
      %v4151 = vmul.f32 %v4146, %v4150
      %v4152 = vadd.f32 %v4151, 1.0
      %v4153 = vmul.f32 %v4152, %v4137
      %vm4154 = vweird.f32 %v444
      %v4155 = vand.u32 %v4138, 3
      %vm4156 = vcmp.lt.s32.totalorder %v4155, 2
      %vm4157 = vcmp.eq.s32.totalorder %v4155, 0
      %v4158 = vxor.u32 %v4153, 2147483648
      %v4159 = vsel %vm4157, %v4145, %v4158
      %vm4160 = vcmp.eq.s32.totalorder %v4155, 2
      %v4161 = vxor.u32 %v4145, 2147483648
      %v4162 = vsel %vm4160, %v4161, %v4153
      %v4163 = vsel %vm4156, %v4159, %v4162
      %v4164 = vsel %vm4154, nan, %v4163
      %v4165 = vand.u32 2147483647, %v445
      %vm4166 = vcmp.le.f32.partialorder %v4165, 0.7853982
      %vm4167 = vcmp.lt.s32.totalorder %v445, 0
      %v4168 = vand.u32 %v445, 2139095040
      %v4169 = vshrl.u32 %v4168, 23
      %v4170 = vsub.s32 %v4169, 127
      %v4171 = vand.u32 2147483647, %v445
      %v4172 = vand.u32 %v4171, 8388607
      %v4173 = vor.u32 %v4172, 8388608
      %v4174 = vsub.s32 0, %v4173
      %v4175 = vadd.s32 %v4170, 1
      %vm4176 = vcmp.gt.s32.totalorder %v4175, 0
      %v4177 = vsel %vm4176, %v4175, 0
      %v4178 = vshrl.u32 %v4177, 5
      %v4179 = vand.u32 %v4177, 31
      %v4180 = vsub.s32 32, %v4179
      %v4181 = vshrl.u32 683565275, %v4180
      %v4182 = vshll.u32 683565275, %v4179
      %v4183 = vshrl.u32 2475754826, %v4180
      %v4184 = vor.u32 %v4182, %v4183
      %v4185 = vshll.u32 2475754826, %v4179
      %v4186 = vshrl.u32 2131351028, %v4180
      %v4187 = vor.u32 %v4185, %v4186
      %v4188 = vshll.u32 2131351028, %v4179
      %v4189 = vshrl.u32 2102212464, %v4180
      %v4190 = vor.u32 %v4188, %v4189
      %v4191 = vshll.u32 2102212464, %v4179
      %v4192 = vshrl.u32 920167782, %v4180
      %v4193 = vor.u32 %v4191, %v4192
      %v4194 = vshll.u32 920167782, %v4179
      %v4195 = vshrl.u32 1326507024, %v4180
      %v4196 = vor.u32 %v4194, %v4195
      %vm4197 = vcmp.lt.s32.totalorder %v4178, 1
      %vm4198 = vcmp.lt.s32.totalorder %v4178, 2
      %vm4199 = vcmp.lt.s32.totalorder %v4178, 3
      %vm4200 = vcmp.lt.s32.totalorder %v4178, 4
      %v4201 = vsel %vm4197, %v4181, %v4184
      %v4202 = vsel %vm4200, %v4190, 2102212464
      %v4203 = vsel %vm4199, %v4187, %v4202
      %v4204 = vsel %vm4198, %v4201, %v4203
      %v4205 = vsel %vm4197, %v4184, %v4187
      %v4206 = vsel %vm4200, %v4193, 920167782
      %v4207 = vsel %vm4199, %v4190, %v4206
      %v4208 = vsel %vm4198, %v4205, %v4207
      %v4209 = vsel %vm4197, %v4187, %v4190
      %v4210 = vsel %vm4200, %v4196, 1326507024
      %v4211 = vsel %vm4199, %v4193, %v4210
      %v4212 = vsel %vm4198, %v4209, %v4211
      %v4213 = vshll.u32 %v4173, 8
      %v4214 = vand.u32 %v4213, 65535
      %v4215 = vshrl.u32 %v4213, 16
      %v4216 = vand.u32 %v4212, 65535
      %v4217 = vshrl.u32 %v4212, 16
      %v4218 = vmul.u32 %v4214, %v4216
      %v4219 = vmul.u32 %v4214, %v4217
      %v4220 = vmul.u32 %v4215, %v4216
      %v4221 = vmul.u32 %v4215, %v4217
      %v4222 = vshll.u32 %v4219, 16
      %v4223 = vshrl.u32 %v4219, 16
      %v4224 = vshll.u32 %v4220, 16
      %v4225 = vshrl.u32 %v4220, 16
      %vm4226 = vc.u32 %v4218, %v4222
      %v4227 = vsel %vm4226, 1, 0
      %v4228 = vadd.s32 %v4218, %v4222
      %v4229 = vadd.s32 %v4221, %v4227
      %vm4230 = vc.u32 %v4228, %v4224
      %v4231 = vsel %vm4230, 1, 0
      %v4232 = vadd.s32 %v4228, %v4224
      %v4233 = vadd.s32 %v4229, %v4231
      %v4234 = vadd.s32 %v4233, %v4223
      %v4235 = vadd.s32 %v4234, %v4225
      %v4236 = vand.u32 %v4213, 65535
      %v4237 = vshrl.u32 %v4213, 16
      %v4238 = vand.u32 %v4208, 65535
      %v4239 = vshrl.u32 %v4208, 16
      %v4240 = vmul.u32 %v4236, %v4238
      %v4241 = vmul.u32 %v4236, %v4239
      %v4242 = vmul.u32 %v4237, %v4238
      %v4243 = vmul.u32 %v4237, %v4239
      %v4244 = vshll.u32 %v4241, 16
      %v4245 = vshrl.u32 %v4241, 16
      %v4246 = vshll.u32 %v4242, 16
      %v4247 = vshrl.u32 %v4242, 16
      %vm4248 = vc.u32 %v4240, %v4244
      %v4249 = vsel %vm4248, 1, 0
      %v4250 = vadd.s32 %v4240, %v4244
      %v4251 = vadd.s32 %v4243, %v4249
      %vm4252 = vc.u32 %v4250, %v4246
      %v4253 = vsel %vm4252, 1, 0
      %v4254 = vadd.s32 %v4250, %v4246
      %v4255 = vadd.s32 %v4251, %v4253
      %v4256 = vadd.s32 %v4255, %v4245
      %v4257 = vadd.s32 %v4256, %v4247
      %v4258 = vmul.u32 %v4213, %v4204
      %v4259 = vadd.s32 %v4235, %v4254
      %vm4260 = vc.u32 %v4235, %v4254
      %v4261 = vadd.s32 %v4257, 1
      %v4262 = vsel %vm4260, %v4261, %v4257
      %v4263 = vadd.s32 %v4258, %v4262
      %v4264 = vadd.s32 %v4263, 536870912
      %v4265 = vshrl.u32 %v4264, 30
      %v4266 = vshll.u32 %v4265, 30
      %v4267 = vsub.s32 %v4263, %v4266
      %vm4268 = vcmp.lt.s32.totalorder %v4267, 0
      %v4269 = vsub.s32 0, %v4267
      %v4270 = vsel %vm4268, %v4269, %v4267
      %v4271 = vclz %v4270
      %v4272 = vsub.s32 %v4271, 2
      %vm4273 = vcmp.gt.s32.totalorder 0, %v4272
      %v4274 = vsel %vm4273, 0, %v4272
      %v4275 = vsub.s32 32, %v4274
      %v4276 = vshll.u32 %v4267, %v4274
      %v4277 = vshrl.u32 %v4259, %v4275
      %v4278 = vor.u32 %v4276, %v4277
      %v4279 = vsub.s32 4294967266, %v4274
      %v4280 = vadd.s32 %v4279, 127
      %v4281 = vshll.u32 %v4280, 23
      %v4282 = vor.u32 4788187, %v4281
      %v4283 = vand.u32 2147483647, %v4282
      %v4285 = vcvt.s32.f32 %v4278
      %v4286 = vmul.f32 %v4285, %v4283
      %v4287 = vxor.u32 %v4286, 2147483648
      %v4288 = vsel %vm4167, %v4287, %v4286
      %v4289 = vsub.s32 4, %v4265
      %v4290 = vsel %vm4167, %v4289, %v4265
      %v4291 = vsel %vm4166, %v445, %v4288
      %v4292 = vsel %vm4166, 0, %v4290
      %v4293 = vmul.f32 %v4291, %v4291
      %v4294 = vmul.f32 %v4293, -0.001358992
      %v4295 = vadd.f32 %v4294, 0.041655596
      %v4296 = vmul.f32 %v4293, %v4295
      %v4297 = vadd.f32 %v4296, -0.4999988
      %v4298 = vmul.f32 %v4293, %v4297
      %v4299 = vadd.f32 1.0, %v4298
      %v4300 = vmul.f32 %v4291, %v4291
      %v4301 = vmul.f32 %v4300, -0.00019511016
      %v4302 = vadd.f32 %v4301, 0.008332121
      %v4303 = vmul.f32 %v4300, %v4302
      %v4304 = vadd.f32 %v4303, -0.16666654
      %v4305 = vmul.f32 %v4300, %v4304
      %v4306 = vadd.f32 %v4305, 1.0
      %v4307 = vmul.f32 %v4306, %v4291
      %vm4308 = vweird.f32 %v445
      %v4309 = vand.u32 %v4292, 3
      %vm4310 = vcmp.lt.s32.totalorder %v4309, 2
      %vm4311 = vcmp.eq.s32.totalorder %v4309, 0
      %v4312 = vxor.u32 %v4307, 2147483648
      %v4313 = vsel %vm4311, %v4299, %v4312
      %vm4314 = vcmp.eq.s32.totalorder %v4309, 2
      %v4315 = vxor.u32 %v4299, 2147483648
      %v4316 = vsel %vm4314, %v4315, %v4307
      %v4317 = vsel %vm4310, %v4313, %v4316
      %v4318 = vsel %vm4308, nan, %v4317
      %v4319 = vand.u32 2147483647, %v446
      %vm4320 = vcmp.le.f32.partialorder %v4319, 0.7853982
      %vm4321 = vcmp.lt.s32.totalorder %v446, 0
      %v4322 = vand.u32 %v446, 2139095040
      %v4323 = vshrl.u32 %v4322, 23
      %v4324 = vsub.s32 %v4323, 127
      %v4325 = vand.u32 2147483647, %v446
      %v4326 = vand.u32 %v4325, 8388607
      %v4327 = vor.u32 %v4326, 8388608
      %v4328 = vsub.s32 0, %v4327
      %v4329 = vadd.s32 %v4324, 1
      %vm4330 = vcmp.gt.s32.totalorder %v4329, 0
      %v4331 = vsel %vm4330, %v4329, 0
      %v4332 = vshrl.u32 %v4331, 5
      %v4333 = vand.u32 %v4331, 31
      %v4334 = vsub.s32 32, %v4333
      %v4335 = vshrl.u32 683565275, %v4334
      %v4336 = vshll.u32 683565275, %v4333
      %v4337 = vshrl.u32 2475754826, %v4334
      %v4338 = vor.u32 %v4336, %v4337
      %v4339 = vshll.u32 2475754826, %v4333
      %v4340 = vshrl.u32 2131351028, %v4334
      %v4341 = vor.u32 %v4339, %v4340
      %v4342 = vshll.u32 2131351028, %v4333
      %v4343 = vshrl.u32 2102212464, %v4334
      %v4344 = vor.u32 %v4342, %v4343
      %v4345 = vshll.u32 2102212464, %v4333
      %v4346 = vshrl.u32 920167782, %v4334
      %v4347 = vor.u32 %v4345, %v4346
      %v4348 = vshll.u32 920167782, %v4333
      %v4349 = vshrl.u32 1326507024, %v4334
      %v4350 = vor.u32 %v4348, %v4349
      %vm4351 = vcmp.lt.s32.totalorder %v4332, 1
      %vm4352 = vcmp.lt.s32.totalorder %v4332, 2
      %vm4353 = vcmp.lt.s32.totalorder %v4332, 3
      %vm4354 = vcmp.lt.s32.totalorder %v4332, 4
      %v4355 = vsel %vm4351, %v4335, %v4338
      %v4356 = vsel %vm4354, %v4344, 2102212464
      %v4357 = vsel %vm4353, %v4341, %v4356
      %v4358 = vsel %vm4352, %v4355, %v4357
      %v4359 = vsel %vm4351, %v4338, %v4341
      %v4360 = vsel %vm4354, %v4347, 920167782
      %v4361 = vsel %vm4353, %v4344, %v4360
      %v4362 = vsel %vm4352, %v4359, %v4361
      %v4363 = vsel %vm4351, %v4341, %v4344
      %v4364 = vsel %vm4354, %v4350, 1326507024
      %v4365 = vsel %vm4353, %v4347, %v4364
      %v4366 = vsel %vm4352, %v4363, %v4365
      %v4367 = vshll.u32 %v4327, 8
      %v4368 = vand.u32 %v4367, 65535
      %v4369 = vshrl.u32 %v4367, 16
      %v4370 = vand.u32 %v4366, 65535
      %v4371 = vshrl.u32 %v4366, 16
      %v4372 = vmul.u32 %v4368, %v4370
      %v4373 = vmul.u32 %v4368, %v4371
      %v4374 = vmul.u32 %v4369, %v4370
      %v4375 = vmul.u32 %v4369, %v4371
      %v4376 = vshll.u32 %v4373, 16
      %v4377 = vshrl.u32 %v4373, 16
      %v4378 = vshll.u32 %v4374, 16
      %v4379 = vshrl.u32 %v4374, 16
      %vm4380 = vc.u32 %v4372, %v4376
      %v4381 = vsel %vm4380, 1, 0
      %v4382 = vadd.s32 %v4372, %v4376
      %v4383 = vadd.s32 %v4375, %v4381
      %vm4384 = vc.u32 %v4382, %v4378
      %v4385 = vsel %vm4384, 1, 0
      %v4386 = vadd.s32 %v4382, %v4378
      %v4387 = vadd.s32 %v4383, %v4385
      %v4388 = vadd.s32 %v4387, %v4377
      %v4389 = vadd.s32 %v4388, %v4379
      %v4390 = vand.u32 %v4367, 65535
      %v4391 = vshrl.u32 %v4367, 16
      %v4392 = vand.u32 %v4362, 65535
      %v4393 = vshrl.u32 %v4362, 16
      %v4394 = vmul.u32 %v4390, %v4392
      %v4395 = vmul.u32 %v4390, %v4393
      %v4396 = vmul.u32 %v4391, %v4392
      %v4397 = vmul.u32 %v4391, %v4393
      %v4398 = vshll.u32 %v4395, 16
      %v4399 = vshrl.u32 %v4395, 16
      %v4400 = vshll.u32 %v4396, 16
      %v4401 = vshrl.u32 %v4396, 16
      %vm4402 = vc.u32 %v4394, %v4398
      %v4403 = vsel %vm4402, 1, 0
      %v4404 = vadd.s32 %v4394, %v4398
      %v4405 = vadd.s32 %v4397, %v4403
      %vm4406 = vc.u32 %v4404, %v4400
      %v4407 = vsel %vm4406, 1, 0
      %v4408 = vadd.s32 %v4404, %v4400
      %v4409 = vadd.s32 %v4405, %v4407
      %v4410 = vadd.s32 %v4409, %v4399
      %v4411 = vadd.s32 %v4410, %v4401
      %v4412 = vmul.u32 %v4367, %v4358
      %v4413 = vadd.s32 %v4389, %v4408
      %vm4414 = vc.u32 %v4389, %v4408
      %v4415 = vadd.s32 %v4411, 1
      %v4416 = vsel %vm4414, %v4415, %v4411
      %v4417 = vadd.s32 %v4412, %v4416
      %v4418 = vadd.s32 %v4417, 536870912
      %v4419 = vshrl.u32 %v4418, 30
      %v4420 = vshll.u32 %v4419, 30
      %v4421 = vsub.s32 %v4417, %v4420
      %vm4422 = vcmp.lt.s32.totalorder %v4421, 0
      %v4423 = vsub.s32 0, %v4421
      %v4424 = vsel %vm4422, %v4423, %v4421
      %v4425 = vclz %v4424
      %v4426 = vsub.s32 %v4425, 2
      %vm4427 = vcmp.gt.s32.totalorder 0, %v4426
      %v4428 = vsel %vm4427, 0, %v4426
      %v4429 = vsub.s32 32, %v4428
      %v4430 = vshll.u32 %v4421, %v4428
      %v4431 = vshrl.u32 %v4413, %v4429
      %v4432 = vor.u32 %v4430, %v4431
      %v4433 = vsub.s32 4294967266, %v4428
      %v4434 = vadd.s32 %v4433, 127
      %v4435 = vshll.u32 %v4434, 23
      %v4436 = vor.u32 4788187, %v4435
      %v4437 = vand.u32 2147483647, %v4436
      %v4439 = vcvt.s32.f32 %v4432
      %v4440 = vmul.f32 %v4439, %v4437
      %v4441 = vxor.u32 %v4440, 2147483648
      %v4442 = vsel %vm4321, %v4441, %v4440
      %v4443 = vsub.s32 4, %v4419
      %v4444 = vsel %vm4321, %v4443, %v4419
      %v4445 = vsel %vm4320, %v446, %v4442
      %v4446 = vsel %vm4320, 0, %v4444
      %v4447 = vmul.f32 %v4445, %v4445
      %v4448 = vmul.f32 %v4447, -0.001358992
      %v4449 = vadd.f32 %v4448, 0.041655596
      %v4450 = vmul.f32 %v4447, %v4449
      %v4451 = vadd.f32 %v4450, -0.4999988
      %v4452 = vmul.f32 %v4447, %v4451
      %v4453 = vadd.f32 1.0, %v4452
      %v4454 = vmul.f32 %v4445, %v4445
      %v4455 = vmul.f32 %v4454, -0.00019511016
      %v4456 = vadd.f32 %v4455, 0.008332121
      %v4457 = vmul.f32 %v4454, %v4456
      %v4458 = vadd.f32 %v4457, -0.16666654
      %v4459 = vmul.f32 %v4454, %v4458
      %v4460 = vadd.f32 %v4459, 1.0
      %v4461 = vmul.f32 %v4460, %v4445
      %vm4462 = vweird.f32 %v446
      %v4463 = vand.u32 %v4446, 3
      %vm4464 = vcmp.lt.s32.totalorder %v4463, 2
      %vm4465 = vcmp.eq.s32.totalorder %v4463, 0
      %v4466 = vxor.u32 %v4461, 2147483648
      %v4467 = vsel %vm4465, %v4453, %v4466
      %vm4468 = vcmp.eq.s32.totalorder %v4463, 2
      %v4469 = vxor.u32 %v4453, 2147483648
      %v4470 = vsel %vm4468, %v4469, %v4461
      %v4471 = vsel %vm4464, %v4467, %v4470
      %v4472 = vsel %vm4462, nan, %v4471
      %v4473 = vand.u32 2147483647, %v447
      %vm4474 = vcmp.le.f32.partialorder %v4473, 0.7853982
      %vm4475 = vcmp.lt.s32.totalorder %v447, 0
      %v4476 = vand.u32 %v447, 2139095040
      %v4477 = vshrl.u32 %v4476, 23
      %v4478 = vsub.s32 %v4477, 127
      %v4479 = vand.u32 2147483647, %v447
      %v4480 = vand.u32 %v4479, 8388607
      %v4481 = vor.u32 %v4480, 8388608
      %v4482 = vsub.s32 0, %v4481
      %v4483 = vadd.s32 %v4478, 1
      %vm4484 = vcmp.gt.s32.totalorder %v4483, 0
      %v4485 = vsel %vm4484, %v4483, 0
      %v4486 = vshrl.u32 %v4485, 5
      %v4487 = vand.u32 %v4485, 31
      %v4488 = vsub.s32 32, %v4487
      %v4489 = vshrl.u32 683565275, %v4488
      %v4490 = vshll.u32 683565275, %v4487
      %v4491 = vshrl.u32 2475754826, %v4488
      %v4492 = vor.u32 %v4490, %v4491
      %v4493 = vshll.u32 2475754826, %v4487
      %v4494 = vshrl.u32 2131351028, %v4488
      %v4495 = vor.u32 %v4493, %v4494
      %v4496 = vshll.u32 2131351028, %v4487
      %v4497 = vshrl.u32 2102212464, %v4488
      %v4498 = vor.u32 %v4496, %v4497
      %v4499 = vshll.u32 2102212464, %v4487
      %v4500 = vshrl.u32 920167782, %v4488
      %v4501 = vor.u32 %v4499, %v4500
      %v4502 = vshll.u32 920167782, %v4487
      %v4503 = vshrl.u32 1326507024, %v4488
      %v4504 = vor.u32 %v4502, %v4503
      %vm4505 = vcmp.lt.s32.totalorder %v4486, 1
      %vm4506 = vcmp.lt.s32.totalorder %v4486, 2
      %vm4507 = vcmp.lt.s32.totalorder %v4486, 3
      %vm4508 = vcmp.lt.s32.totalorder %v4486, 4
      %v4509 = vsel %vm4505, %v4489, %v4492
      %v4510 = vsel %vm4508, %v4498, 2102212464
      %v4511 = vsel %vm4507, %v4495, %v4510
      %v4512 = vsel %vm4506, %v4509, %v4511
      %v4513 = vsel %vm4505, %v4492, %v4495
      %v4514 = vsel %vm4508, %v4501, 920167782
      %v4515 = vsel %vm4507, %v4498, %v4514
      %v4516 = vsel %vm4506, %v4513, %v4515
      %v4517 = vsel %vm4505, %v4495, %v4498
      %v4518 = vsel %vm4508, %v4504, 1326507024
      %v4519 = vsel %vm4507, %v4501, %v4518
      %v4520 = vsel %vm4506, %v4517, %v4519
      %v4521 = vshll.u32 %v4481, 8
      %v4522 = vand.u32 %v4521, 65535
      %v4523 = vshrl.u32 %v4521, 16
      %v4524 = vand.u32 %v4520, 65535
      %v4525 = vshrl.u32 %v4520, 16
      %v4526 = vmul.u32 %v4522, %v4524
      %v4527 = vmul.u32 %v4522, %v4525
      %v4528 = vmul.u32 %v4523, %v4524
      %v4529 = vmul.u32 %v4523, %v4525
      %v4530 = vshll.u32 %v4527, 16
      %v4531 = vshrl.u32 %v4527, 16
      %v4532 = vshll.u32 %v4528, 16
      %v4533 = vshrl.u32 %v4528, 16
      %vm4534 = vc.u32 %v4526, %v4530
      %v4535 = vsel %vm4534, 1, 0
      %v4536 = vadd.s32 %v4526, %v4530
      %v4537 = vadd.s32 %v4529, %v4535
      %vm4538 = vc.u32 %v4536, %v4532
      %v4539 = vsel %vm4538, 1, 0
      %v4540 = vadd.s32 %v4536, %v4532
      %v4541 = vadd.s32 %v4537, %v4539
      %v4542 = vadd.s32 %v4541, %v4531
      %v4543 = vadd.s32 %v4542, %v4533
      %v4544 = vand.u32 %v4521, 65535
      %v4545 = vshrl.u32 %v4521, 16
      %v4546 = vand.u32 %v4516, 65535
      %v4547 = vshrl.u32 %v4516, 16
      %v4548 = vmul.u32 %v4544, %v4546
      %v4549 = vmul.u32 %v4544, %v4547
      %v4550 = vmul.u32 %v4545, %v4546
      %v4551 = vmul.u32 %v4545, %v4547
      %v4552 = vshll.u32 %v4549, 16
      %v4553 = vshrl.u32 %v4549, 16
      %v4554 = vshll.u32 %v4550, 16
      %v4555 = vshrl.u32 %v4550, 16
      %vm4556 = vc.u32 %v4548, %v4552
      %v4557 = vsel %vm4556, 1, 0
      %v4558 = vadd.s32 %v4548, %v4552
      %v4559 = vadd.s32 %v4551, %v4557
      %vm4560 = vc.u32 %v4558, %v4554
      %v4561 = vsel %vm4560, 1, 0
      %v4562 = vadd.s32 %v4558, %v4554
      %v4563 = vadd.s32 %v4559, %v4561
      %v4564 = vadd.s32 %v4563, %v4553
      %v4565 = vadd.s32 %v4564, %v4555
      %v4566 = vmul.u32 %v4521, %v4512
      %v4567 = vadd.s32 %v4543, %v4562
      %vm4568 = vc.u32 %v4543, %v4562
      %v4569 = vadd.s32 %v4565, 1
      %v4570 = vsel %vm4568, %v4569, %v4565
      %v4571 = vadd.s32 %v4566, %v4570
      %v4572 = vadd.s32 %v4571, 536870912
      %v4573 = vshrl.u32 %v4572, 30
      %v4574 = vshll.u32 %v4573, 30
      %v4575 = vsub.s32 %v4571, %v4574
      %vm4576 = vcmp.lt.s32.totalorder %v4575, 0
      %v4577 = vsub.s32 0, %v4575
      %v4578 = vsel %vm4576, %v4577, %v4575
      %v4579 = vclz %v4578
      %v4580 = vsub.s32 %v4579, 2
      %vm4581 = vcmp.gt.s32.totalorder 0, %v4580
      %v4582 = vsel %vm4581, 0, %v4580
      %v4583 = vsub.s32 32, %v4582
      %v4584 = vshll.u32 %v4575, %v4582
      %v4585 = vshrl.u32 %v4567, %v4583
      %v4586 = vor.u32 %v4584, %v4585
      %v4587 = vsub.s32 4294967266, %v4582
      %v4588 = vadd.s32 %v4587, 127
      %v4589 = vshll.u32 %v4588, 23
      %v4590 = vor.u32 4788187, %v4589
      %v4591 = vand.u32 2147483647, %v4590
      %v4593 = vcvt.s32.f32 %v4586
      %v4594 = vmul.f32 %v4593, %v4591
      %v4595 = vxor.u32 %v4594, 2147483648
      %v4596 = vsel %vm4475, %v4595, %v4594
      %v4597 = vsub.s32 4, %v4573
      %v4598 = vsel %vm4475, %v4597, %v4573
      %v4599 = vsel %vm4474, %v447, %v4596
      %v4600 = vsel %vm4474, 0, %v4598
      %v4601 = vmul.f32 %v4599, %v4599
      %v4602 = vmul.f32 %v4601, -0.001358992
      %v4603 = vadd.f32 %v4602, 0.041655596
      %v4604 = vmul.f32 %v4601, %v4603
      %v4605 = vadd.f32 %v4604, -0.4999988
      %v4606 = vmul.f32 %v4601, %v4605
      %v4607 = vadd.f32 1.0, %v4606
      %v4608 = vmul.f32 %v4599, %v4599
      %v4609 = vmul.f32 %v4608, -0.00019511016
      %v4610 = vadd.f32 %v4609, 0.008332121
      %v4611 = vmul.f32 %v4608, %v4610
      %v4612 = vadd.f32 %v4611, -0.16666654
      %v4613 = vmul.f32 %v4608, %v4612
      %v4614 = vadd.f32 %v4613, 1.0
      %v4615 = vmul.f32 %v4614, %v4599
      %vm4616 = vweird.f32 %v447
      %v4617 = vand.u32 %v4600, 3
      %vm4618 = vcmp.lt.s32.totalorder %v4617, 2
      %vm4619 = vcmp.eq.s32.totalorder %v4617, 0
      %v4620 = vxor.u32 %v4615, 2147483648
      %v4621 = vsel %vm4619, %v4607, %v4620
      %vm4622 = vcmp.eq.s32.totalorder %v4617, 2
      %v4623 = vxor.u32 %v4607, 2147483648
      %v4624 = vsel %vm4622, %v4623, %v4615
      %v4625 = vsel %vm4618, %v4621, %v4624
      %v4626 = vsel %vm4616, nan, %v4625
      %v4627 = vand.u32 2147483647, %v448
      %vm4628 = vcmp.le.f32.partialorder %v4627, 0.7853982
      %vm4629 = vcmp.lt.s32.totalorder %v448, 0
      %v4630 = vand.u32 %v448, 2139095040
      %v4631 = vshrl.u32 %v4630, 23
      %v4632 = vsub.s32 %v4631, 127
      %v4633 = vand.u32 2147483647, %v448
      %v4634 = vand.u32 %v4633, 8388607
      %v4635 = vor.u32 %v4634, 8388608
      %v4636 = vsub.s32 0, %v4635
      %v4637 = vadd.s32 %v4632, 1
      %vm4638 = vcmp.gt.s32.totalorder %v4637, 0
      %v4639 = vsel %vm4638, %v4637, 0
      %v4640 = vshrl.u32 %v4639, 5
      %v4641 = vand.u32 %v4639, 31
      %v4642 = vsub.s32 32, %v4641
      %v4643 = vshrl.u32 683565275, %v4642
      %v4644 = vshll.u32 683565275, %v4641
      %v4645 = vshrl.u32 2475754826, %v4642
      %v4646 = vor.u32 %v4644, %v4645
      %v4647 = vshll.u32 2475754826, %v4641
      %v4648 = vshrl.u32 2131351028, %v4642
      %v4649 = vor.u32 %v4647, %v4648
      %v4650 = vshll.u32 2131351028, %v4641
      %v4651 = vshrl.u32 2102212464, %v4642
      %v4652 = vor.u32 %v4650, %v4651
      %v4653 = vshll.u32 2102212464, %v4641
      %v4654 = vshrl.u32 920167782, %v4642
      %v4655 = vor.u32 %v4653, %v4654
      %v4656 = vshll.u32 920167782, %v4641
      %v4657 = vshrl.u32 1326507024, %v4642
      %v4658 = vor.u32 %v4656, %v4657
      %vm4659 = vcmp.lt.s32.totalorder %v4640, 1
      %vm4660 = vcmp.lt.s32.totalorder %v4640, 2
      %vm4661 = vcmp.lt.s32.totalorder %v4640, 3
      %vm4662 = vcmp.lt.s32.totalorder %v4640, 4
      %v4663 = vsel %vm4659, %v4643, %v4646
      %v4664 = vsel %vm4662, %v4652, 2102212464
      %v4665 = vsel %vm4661, %v4649, %v4664
      %v4666 = vsel %vm4660, %v4663, %v4665
      %v4667 = vsel %vm4659, %v4646, %v4649
      %v4668 = vsel %vm4662, %v4655, 920167782
      %v4669 = vsel %vm4661, %v4652, %v4668
      %v4670 = vsel %vm4660, %v4667, %v4669
      %v4671 = vsel %vm4659, %v4649, %v4652
      %v4672 = vsel %vm4662, %v4658, 1326507024
      %v4673 = vsel %vm4661, %v4655, %v4672
      %v4674 = vsel %vm4660, %v4671, %v4673
      %v4675 = vshll.u32 %v4635, 8
      %v4676 = vand.u32 %v4675, 65535
      %v4677 = vshrl.u32 %v4675, 16
      %v4678 = vand.u32 %v4674, 65535
      %v4679 = vshrl.u32 %v4674, 16
      %v4680 = vmul.u32 %v4676, %v4678
      %v4681 = vmul.u32 %v4676, %v4679
      %v4682 = vmul.u32 %v4677, %v4678
      %v4683 = vmul.u32 %v4677, %v4679
      %v4684 = vshll.u32 %v4681, 16
      %v4685 = vshrl.u32 %v4681, 16
      %v4686 = vshll.u32 %v4682, 16
      %v4687 = vshrl.u32 %v4682, 16
      %vm4688 = vc.u32 %v4680, %v4684
      %v4689 = vsel %vm4688, 1, 0
      %v4690 = vadd.s32 %v4680, %v4684
      %v4691 = vadd.s32 %v4683, %v4689
      %vm4692 = vc.u32 %v4690, %v4686
      %v4693 = vsel %vm4692, 1, 0
      %v4694 = vadd.s32 %v4690, %v4686
      %v4695 = vadd.s32 %v4691, %v4693
      %v4696 = vadd.s32 %v4695, %v4685
      %v4697 = vadd.s32 %v4696, %v4687
      %v4698 = vand.u32 %v4675, 65535
      %v4699 = vshrl.u32 %v4675, 16
      %v4700 = vand.u32 %v4670, 65535
      %v4701 = vshrl.u32 %v4670, 16
      %v4702 = vmul.u32 %v4698, %v4700
      %v4703 = vmul.u32 %v4698, %v4701
      %v4704 = vmul.u32 %v4699, %v4700
      %v4705 = vmul.u32 %v4699, %v4701
      %v4706 = vshll.u32 %v4703, 16
      %v4707 = vshrl.u32 %v4703, 16
      %v4708 = vshll.u32 %v4704, 16
      %v4709 = vshrl.u32 %v4704, 16
      %vm4710 = vc.u32 %v4702, %v4706
      %v4711 = vsel %vm4710, 1, 0
      %v4712 = vadd.s32 %v4702, %v4706
      %v4713 = vadd.s32 %v4705, %v4711
      %vm4714 = vc.u32 %v4712, %v4708
      %v4715 = vsel %vm4714, 1, 0
      %v4716 = vadd.s32 %v4712, %v4708
      %v4717 = vadd.s32 %v4713, %v4715
      %v4718 = vadd.s32 %v4717, %v4707
      %v4719 = vadd.s32 %v4718, %v4709
      %v4720 = vmul.u32 %v4675, %v4666
      %v4721 = vadd.s32 %v4697, %v4716
      %vm4722 = vc.u32 %v4697, %v4716
      %v4723 = vadd.s32 %v4719, 1
      %v4724 = vsel %vm4722, %v4723, %v4719
      %v4725 = vadd.s32 %v4720, %v4724
      %v4726 = vadd.s32 %v4725, 536870912
      %v4727 = vshrl.u32 %v4726, 30
      %v4728 = vshll.u32 %v4727, 30
      %v4729 = vsub.s32 %v4725, %v4728
      %vm4730 = vcmp.lt.s32.totalorder %v4729, 0
      %v4731 = vsub.s32 0, %v4729
      %v4732 = vsel %vm4730, %v4731, %v4729
      %v4733 = vclz %v4732
      %v4734 = vsub.s32 %v4733, 2
      %vm4735 = vcmp.gt.s32.totalorder 0, %v4734
      %v4736 = vsel %vm4735, 0, %v4734
      %v4737 = vsub.s32 32, %v4736
      %v4738 = vshll.u32 %v4729, %v4736
      %v4739 = vshrl.u32 %v4721, %v4737
      %v4740 = vor.u32 %v4738, %v4739
      %v4741 = vsub.s32 4294967266, %v4736
      %v4742 = vadd.s32 %v4741, 127
      %v4743 = vshll.u32 %v4742, 23
      %v4744 = vor.u32 4788187, %v4743
      %v4745 = vand.u32 2147483647, %v4744
      %v4747 = vcvt.s32.f32 %v4740
      %v4748 = vmul.f32 %v4747, %v4745
      %v4749 = vxor.u32 %v4748, 2147483648
      %v4750 = vsel %vm4629, %v4749, %v4748
      %v4751 = vsub.s32 4, %v4727
      %v4752 = vsel %vm4629, %v4751, %v4727
      %v4753 = vsel %vm4628, %v448, %v4750
      %v4754 = vsel %vm4628, 0, %v4752
      %v4755 = vmul.f32 %v4753, %v4753
      %v4756 = vmul.f32 %v4755, -0.001358992
      %v4757 = vadd.f32 %v4756, 0.041655596
      %v4758 = vmul.f32 %v4755, %v4757
      %v4759 = vadd.f32 %v4758, -0.4999988
      %v4760 = vmul.f32 %v4755, %v4759
      %v4761 = vadd.f32 1.0, %v4760
      %v4762 = vmul.f32 %v4753, %v4753
      %v4763 = vmul.f32 %v4762, -0.00019511016
      %v4764 = vadd.f32 %v4763, 0.008332121
      %v4765 = vmul.f32 %v4762, %v4764
      %v4766 = vadd.f32 %v4765, -0.16666654
      %v4767 = vmul.f32 %v4762, %v4766
      %v4768 = vadd.f32 %v4767, 1.0
      %v4769 = vmul.f32 %v4768, %v4753
      %vm4770 = vweird.f32 %v448
      %v4771 = vand.u32 %v4754, 3
      %vm4772 = vcmp.lt.s32.totalorder %v4771, 2
      %vm4773 = vcmp.eq.s32.totalorder %v4771, 0
      %v4774 = vxor.u32 %v4769, 2147483648
      %v4775 = vsel %vm4773, %v4761, %v4774
      %vm4776 = vcmp.eq.s32.totalorder %v4771, 2
      %v4777 = vxor.u32 %v4761, 2147483648
      %v4778 = vsel %vm4776, %v4777, %v4769
      %v4779 = vsel %vm4772, %v4775, %v4778
      %v4780 = vsel %vm4770, nan, %v4779
      %v4781 = vand.u32 2147483647, %v449
      %vm4782 = vcmp.le.f32.partialorder %v4781, 0.7853982
      %vm4783 = vcmp.lt.s32.totalorder %v449, 0
      %v4784 = vand.u32 %v449, 2139095040
      %v4785 = vshrl.u32 %v4784, 23
      %v4786 = vsub.s32 %v4785, 127
      %v4787 = vand.u32 2147483647, %v449
      %v4788 = vand.u32 %v4787, 8388607
      %v4789 = vor.u32 %v4788, 8388608
      %v4790 = vsub.s32 0, %v4789
      %v4791 = vadd.s32 %v4786, 1
      %vm4792 = vcmp.gt.s32.totalorder %v4791, 0
      %v4793 = vsel %vm4792, %v4791, 0
      %v4794 = vshrl.u32 %v4793, 5
      %v4795 = vand.u32 %v4793, 31
      %v4796 = vsub.s32 32, %v4795
      %v4797 = vshrl.u32 683565275, %v4796
      %v4798 = vshll.u32 683565275, %v4795
      %v4799 = vshrl.u32 2475754826, %v4796
      %v4800 = vor.u32 %v4798, %v4799
      %v4801 = vshll.u32 2475754826, %v4795
      %v4802 = vshrl.u32 2131351028, %v4796
      %v4803 = vor.u32 %v4801, %v4802
      %v4804 = vshll.u32 2131351028, %v4795
      %v4805 = vshrl.u32 2102212464, %v4796
      %v4806 = vor.u32 %v4804, %v4805
      %v4807 = vshll.u32 2102212464, %v4795
      %v4808 = vshrl.u32 920167782, %v4796
      %v4809 = vor.u32 %v4807, %v4808
      %v4810 = vshll.u32 920167782, %v4795
      %v4811 = vshrl.u32 1326507024, %v4796
      %v4812 = vor.u32 %v4810, %v4811
      %vm4813 = vcmp.lt.s32.totalorder %v4794, 1
      %vm4814 = vcmp.lt.s32.totalorder %v4794, 2
      %vm4815 = vcmp.lt.s32.totalorder %v4794, 3
      %vm4816 = vcmp.lt.s32.totalorder %v4794, 4
      %v4817 = vsel %vm4813, %v4797, %v4800
      %v4818 = vsel %vm4816, %v4806, 2102212464
      %v4819 = vsel %vm4815, %v4803, %v4818
      %v4820 = vsel %vm4814, %v4817, %v4819
      %v4821 = vsel %vm4813, %v4800, %v4803
      %v4822 = vsel %vm4816, %v4809, 920167782
      %v4823 = vsel %vm4815, %v4806, %v4822
      %v4824 = vsel %vm4814, %v4821, %v4823
      %v4825 = vsel %vm4813, %v4803, %v4806
      %v4826 = vsel %vm4816, %v4812, 1326507024
      %v4827 = vsel %vm4815, %v4809, %v4826
      %v4828 = vsel %vm4814, %v4825, %v4827
      %v4829 = vshll.u32 %v4789, 8
      %v4830 = vand.u32 %v4829, 65535
      %v4831 = vshrl.u32 %v4829, 16
      %v4832 = vand.u32 %v4828, 65535
      %v4833 = vshrl.u32 %v4828, 16
      %v4834 = vmul.u32 %v4830, %v4832
      %v4835 = vmul.u32 %v4830, %v4833
      %v4836 = vmul.u32 %v4831, %v4832
      %v4837 = vmul.u32 %v4831, %v4833
      %v4838 = vshll.u32 %v4835, 16
      %v4839 = vshrl.u32 %v4835, 16
      %v4840 = vshll.u32 %v4836, 16
      %v4841 = vshrl.u32 %v4836, 16
      %vm4842 = vc.u32 %v4834, %v4838
      %v4843 = vsel %vm4842, 1, 0
      %v4844 = vadd.s32 %v4834, %v4838
      %v4845 = vadd.s32 %v4837, %v4843
      %vm4846 = vc.u32 %v4844, %v4840
      %v4847 = vsel %vm4846, 1, 0
      %v4848 = vadd.s32 %v4844, %v4840
      %v4849 = vadd.s32 %v4845, %v4847
      %v4850 = vadd.s32 %v4849, %v4839
      %v4851 = vadd.s32 %v4850, %v4841
      %v4852 = vand.u32 %v4829, 65535
      %v4853 = vshrl.u32 %v4829, 16
      %v4854 = vand.u32 %v4824, 65535
      %v4855 = vshrl.u32 %v4824, 16
      %v4856 = vmul.u32 %v4852, %v4854
      %v4857 = vmul.u32 %v4852, %v4855
      %v4858 = vmul.u32 %v4853, %v4854
      %v4859 = vmul.u32 %v4853, %v4855
      %v4860 = vshll.u32 %v4857, 16
      %v4861 = vshrl.u32 %v4857, 16
      %v4862 = vshll.u32 %v4858, 16
      %v4863 = vshrl.u32 %v4858, 16
      %vm4864 = vc.u32 %v4856, %v4860
      %v4865 = vsel %vm4864, 1, 0
      %v4866 = vadd.s32 %v4856, %v4860
      %v4867 = vadd.s32 %v4859, %v4865
      %vm4868 = vc.u32 %v4866, %v4862
      %v4869 = vsel %vm4868, 1, 0
      %v4870 = vadd.s32 %v4866, %v4862
      %v4871 = vadd.s32 %v4867, %v4869
      %v4872 = vadd.s32 %v4871, %v4861
      %v4873 = vadd.s32 %v4872, %v4863
      %v4874 = vmul.u32 %v4829, %v4820
      %v4875 = vadd.s32 %v4851, %v4870
      %vm4876 = vc.u32 %v4851, %v4870
      %v4877 = vadd.s32 %v4873, 1
      %v4878 = vsel %vm4876, %v4877, %v4873
      %v4879 = vadd.s32 %v4874, %v4878
      %v4880 = vadd.s32 %v4879, 536870912
      %v4881 = vshrl.u32 %v4880, 30
      %v4882 = vshll.u32 %v4881, 30
      %v4883 = vsub.s32 %v4879, %v4882
      %vm4884 = vcmp.lt.s32.totalorder %v4883, 0
      %v4885 = vsub.s32 0, %v4883
      %v4886 = vsel %vm4884, %v4885, %v4883
      %v4887 = vclz %v4886
      %v4888 = vsub.s32 %v4887, 2
      %vm4889 = vcmp.gt.s32.totalorder 0, %v4888
      %v4890 = vsel %vm4889, 0, %v4888
      %v4891 = vsub.s32 32, %v4890
      %v4892 = vshll.u32 %v4883, %v4890
      %v4893 = vshrl.u32 %v4875, %v4891
      %v4894 = vor.u32 %v4892, %v4893
      %v4895 = vsub.s32 4294967266, %v4890
      %v4896 = vadd.s32 %v4895, 127
      %v4897 = vshll.u32 %v4896, 23
      %v4898 = vor.u32 4788187, %v4897
      %v4899 = vand.u32 2147483647, %v4898
      %v4901 = vcvt.s32.f32 %v4894
      %v4902 = vmul.f32 %v4901, %v4899
      %v4903 = vxor.u32 %v4902, 2147483648
      %v4904 = vsel %vm4783, %v4903, %v4902
      %v4905 = vsub.s32 4, %v4881
      %v4906 = vsel %vm4783, %v4905, %v4881
      %v4907 = vsel %vm4782, %v449, %v4904
      %v4908 = vsel %vm4782, 0, %v4906
      %v4909 = vmul.f32 %v4907, %v4907
      %v4910 = vmul.f32 %v4909, -0.001358992
      %v4911 = vadd.f32 %v4910, 0.041655596
      %v4912 = vmul.f32 %v4909, %v4911
      %v4913 = vadd.f32 %v4912, -0.4999988
      %v4914 = vmul.f32 %v4909, %v4913
      %v4915 = vadd.f32 1.0, %v4914
      %v4916 = vmul.f32 %v4907, %v4907
      %v4917 = vmul.f32 %v4916, -0.00019511016
      %v4918 = vadd.f32 %v4917, 0.008332121
      %v4919 = vmul.f32 %v4916, %v4918
      %v4920 = vadd.f32 %v4919, -0.16666654
      %v4921 = vmul.f32 %v4916, %v4920
      %v4922 = vadd.f32 %v4921, 1.0
      %v4923 = vmul.f32 %v4922, %v4907
      %vm4924 = vweird.f32 %v449
      %v4925 = vand.u32 %v4908, 3
      %vm4926 = vcmp.lt.s32.totalorder %v4925, 2
      %vm4927 = vcmp.eq.s32.totalorder %v4925, 0
      %v4928 = vxor.u32 %v4923, 2147483648
      %v4929 = vsel %vm4927, %v4915, %v4928
      %vm4930 = vcmp.eq.s32.totalorder %v4925, 2
      %v4931 = vxor.u32 %v4915, 2147483648
      %v4932 = vsel %vm4930, %v4931, %v4923
      %v4933 = vsel %vm4926, %v4929, %v4932
      %v4934 = vsel %vm4924, nan, %v4933
      %v4935 = vand.u32 2147483647, %v450
      %vm4936 = vcmp.le.f32.partialorder %v4935, 0.7853982
      %vm4937 = vcmp.lt.s32.totalorder %v450, 0
      %v4938 = vand.u32 %v450, 2139095040
      %v4939 = vshrl.u32 %v4938, 23
      %v4940 = vsub.s32 %v4939, 127
      %v4941 = vand.u32 2147483647, %v450
      %v4942 = vand.u32 %v4941, 8388607
      %v4943 = vor.u32 %v4942, 8388608
      %v4944 = vsub.s32 0, %v4943
      %v4945 = vadd.s32 %v4940, 1
      %vm4946 = vcmp.gt.s32.totalorder %v4945, 0
      %v4947 = vsel %vm4946, %v4945, 0
      %v4948 = vshrl.u32 %v4947, 5
      %v4949 = vand.u32 %v4947, 31
      %v4950 = vsub.s32 32, %v4949
      %v4951 = vshrl.u32 683565275, %v4950
      %v4952 = vshll.u32 683565275, %v4949
      %v4953 = vshrl.u32 2475754826, %v4950
      %v4954 = vor.u32 %v4952, %v4953
      %v4955 = vshll.u32 2475754826, %v4949
      %v4956 = vshrl.u32 2131351028, %v4950
      %v4957 = vor.u32 %v4955, %v4956
      %v4958 = vshll.u32 2131351028, %v4949
      %v4959 = vshrl.u32 2102212464, %v4950
      %v4960 = vor.u32 %v4958, %v4959
      %v4961 = vshll.u32 2102212464, %v4949
      %v4962 = vshrl.u32 920167782, %v4950
      %v4963 = vor.u32 %v4961, %v4962
      %v4964 = vshll.u32 920167782, %v4949
      %v4965 = vshrl.u32 1326507024, %v4950
      %v4966 = vor.u32 %v4964, %v4965
      %vm4967 = vcmp.lt.s32.totalorder %v4948, 1
      %vm4968 = vcmp.lt.s32.totalorder %v4948, 2
      %vm4969 = vcmp.lt.s32.totalorder %v4948, 3
      %vm4970 = vcmp.lt.s32.totalorder %v4948, 4
      %v4971 = vsel %vm4967, %v4951, %v4954
      %v4972 = vsel %vm4970, %v4960, 2102212464
      %v4973 = vsel %vm4969, %v4957, %v4972
      %v4974 = vsel %vm4968, %v4971, %v4973
      %v4975 = vsel %vm4967, %v4954, %v4957
      %v4976 = vsel %vm4970, %v4963, 920167782
      %v4977 = vsel %vm4969, %v4960, %v4976
      %v4978 = vsel %vm4968, %v4975, %v4977
      %v4979 = vsel %vm4967, %v4957, %v4960
      %v4980 = vsel %vm4970, %v4966, 1326507024
      %v4981 = vsel %vm4969, %v4963, %v4980
      %v4982 = vsel %vm4968, %v4979, %v4981
      %v4983 = vshll.u32 %v4943, 8
      %v4984 = vand.u32 %v4983, 65535
      %v4985 = vshrl.u32 %v4983, 16
      %v4986 = vand.u32 %v4982, 65535
      %v4987 = vshrl.u32 %v4982, 16
      %v4988 = vmul.u32 %v4984, %v4986
      %v4989 = vmul.u32 %v4984, %v4987
      %v4990 = vmul.u32 %v4985, %v4986
      %v4991 = vmul.u32 %v4985, %v4987
      %v4992 = vshll.u32 %v4989, 16
      %v4993 = vshrl.u32 %v4989, 16
      %v4994 = vshll.u32 %v4990, 16
      %v4995 = vshrl.u32 %v4990, 16
      %vm4996 = vc.u32 %v4988, %v4992
      %v4997 = vsel %vm4996, 1, 0
      %v4998 = vadd.s32 %v4988, %v4992
      %v4999 = vadd.s32 %v4991, %v4997
      %vm5000 = vc.u32 %v4998, %v4994
      %v5001 = vsel %vm5000, 1, 0
      %v5002 = vadd.s32 %v4998, %v4994
      %v5003 = vadd.s32 %v4999, %v5001
      %v5004 = vadd.s32 %v5003, %v4993
      %v5005 = vadd.s32 %v5004, %v4995
      %v5006 = vand.u32 %v4983, 65535
      %v5007 = vshrl.u32 %v4983, 16
      %v5008 = vand.u32 %v4978, 65535
      %v5009 = vshrl.u32 %v4978, 16
      %v5010 = vmul.u32 %v5006, %v5008
      %v5011 = vmul.u32 %v5006, %v5009
      %v5012 = vmul.u32 %v5007, %v5008
      %v5013 = vmul.u32 %v5007, %v5009
      %v5014 = vshll.u32 %v5011, 16
      %v5015 = vshrl.u32 %v5011, 16
      %v5016 = vshll.u32 %v5012, 16
      %v5017 = vshrl.u32 %v5012, 16
      %vm5018 = vc.u32 %v5010, %v5014
      %v5019 = vsel %vm5018, 1, 0
      %v5020 = vadd.s32 %v5010, %v5014
      %v5021 = vadd.s32 %v5013, %v5019
      %vm5022 = vc.u32 %v5020, %v5016
      %v5023 = vsel %vm5022, 1, 0
      %v5024 = vadd.s32 %v5020, %v5016
      %v5025 = vadd.s32 %v5021, %v5023
      %v5026 = vadd.s32 %v5025, %v5015
      %v5027 = vadd.s32 %v5026, %v5017
      %v5028 = vmul.u32 %v4983, %v4974
      %v5029 = vadd.s32 %v5005, %v5024
      %vm5030 = vc.u32 %v5005, %v5024
      %v5031 = vadd.s32 %v5027, 1
      %v5032 = vsel %vm5030, %v5031, %v5027
      %v5033 = vadd.s32 %v5028, %v5032
      %v5034 = vadd.s32 %v5033, 536870912
      %v5035 = vshrl.u32 %v5034, 30
      %v5036 = vshll.u32 %v5035, 30
      %v5037 = vsub.s32 %v5033, %v5036
      %vm5038 = vcmp.lt.s32.totalorder %v5037, 0
      %v5039 = vsub.s32 0, %v5037
      %v5040 = vsel %vm5038, %v5039, %v5037
      %v5041 = vclz %v5040
      %v5042 = vsub.s32 %v5041, 2
      %vm5043 = vcmp.gt.s32.totalorder 0, %v5042
      %v5044 = vsel %vm5043, 0, %v5042
      %v5045 = vsub.s32 32, %v5044
      %v5046 = vshll.u32 %v5037, %v5044
      %v5047 = vshrl.u32 %v5029, %v5045
      %v5048 = vor.u32 %v5046, %v5047
      %v5049 = vsub.s32 4294967266, %v5044
      %v5050 = vadd.s32 %v5049, 127
      %v5051 = vshll.u32 %v5050, 23
      %v5052 = vor.u32 4788187, %v5051
      %v5053 = vand.u32 2147483647, %v5052
      %v5055 = vcvt.s32.f32 %v5048
      %v5056 = vmul.f32 %v5055, %v5053
      %v5057 = vxor.u32 %v5056, 2147483648
      %v5058 = vsel %vm4937, %v5057, %v5056
      %v5059 = vsub.s32 4, %v5035
      %v5060 = vsel %vm4937, %v5059, %v5035
      %v5061 = vsel %vm4936, %v450, %v5058
      %v5062 = vsel %vm4936, 0, %v5060
      %v5063 = vmul.f32 %v5061, %v5061
      %v5064 = vmul.f32 %v5063, -0.001358992
      %v5065 = vadd.f32 %v5064, 0.041655596
      %v5066 = vmul.f32 %v5063, %v5065
      %v5067 = vadd.f32 %v5066, -0.4999988
      %v5068 = vmul.f32 %v5063, %v5067
      %v5069 = vadd.f32 1.0, %v5068
      %v5070 = vmul.f32 %v5061, %v5061
      %v5071 = vmul.f32 %v5070, -0.00019511016
      %v5072 = vadd.f32 %v5071, 0.008332121
      %v5073 = vmul.f32 %v5070, %v5072
      %v5074 = vadd.f32 %v5073, -0.16666654
      %v5075 = vmul.f32 %v5070, %v5074
      %v5076 = vadd.f32 %v5075, 1.0
      %v5077 = vmul.f32 %v5076, %v5061
      %vm5078 = vweird.f32 %v450
      %v5079 = vand.u32 %v5062, 3
      %vm5080 = vcmp.lt.s32.totalorder %v5079, 2
      %vm5081 = vcmp.eq.s32.totalorder %v5079, 0
      %v5082 = vxor.u32 %v5077, 2147483648
      %v5083 = vsel %vm5081, %v5069, %v5082
      %vm5084 = vcmp.eq.s32.totalorder %v5079, 2
      %v5085 = vxor.u32 %v5069, 2147483648
      %v5086 = vsel %vm5084, %v5085, %v5077
      %v5087 = vsel %vm5080, %v5083, %v5086
      %v5088 = vsel %vm5078, nan, %v5087
      %v5089 = vand.u32 2147483647, %v451
      %vm5090 = vcmp.le.f32.partialorder %v5089, 0.7853982
      %vm5091 = vcmp.lt.s32.totalorder %v451, 0
      %v5092 = vand.u32 %v451, 2139095040
      %v5093 = vshrl.u32 %v5092, 23
      %v5094 = vsub.s32 %v5093, 127
      %v5095 = vand.u32 2147483647, %v451
      %v5096 = vand.u32 %v5095, 8388607
      %v5097 = vor.u32 %v5096, 8388608
      %v5098 = vsub.s32 0, %v5097
      %v5099 = vadd.s32 %v5094, 1
      %vm5100 = vcmp.gt.s32.totalorder %v5099, 0
      %v5101 = vsel %vm5100, %v5099, 0
      %v5102 = vshrl.u32 %v5101, 5
      %v5103 = vand.u32 %v5101, 31
      %v5104 = vsub.s32 32, %v5103
      %v5105 = vshrl.u32 683565275, %v5104
      %v5106 = vshll.u32 683565275, %v5103
      %v5107 = vshrl.u32 2475754826, %v5104
      %v5108 = vor.u32 %v5106, %v5107
      %v5109 = vshll.u32 2475754826, %v5103
      %v5110 = vshrl.u32 2131351028, %v5104
      %v5111 = vor.u32 %v5109, %v5110
      %v5112 = vshll.u32 2131351028, %v5103
      %v5113 = vshrl.u32 2102212464, %v5104
      %v5114 = vor.u32 %v5112, %v5113
      %v5115 = vshll.u32 2102212464, %v5103
      %v5116 = vshrl.u32 920167782, %v5104
      %v5117 = vor.u32 %v5115, %v5116
      %v5118 = vshll.u32 920167782, %v5103
      %v5119 = vshrl.u32 1326507024, %v5104
      %v5120 = vor.u32 %v5118, %v5119
      %vm5121 = vcmp.lt.s32.totalorder %v5102, 1
      %vm5122 = vcmp.lt.s32.totalorder %v5102, 2
      %vm5123 = vcmp.lt.s32.totalorder %v5102, 3
      %vm5124 = vcmp.lt.s32.totalorder %v5102, 4
      %v5125 = vsel %vm5121, %v5105, %v5108
      %v5126 = vsel %vm5124, %v5114, 2102212464
      %v5127 = vsel %vm5123, %v5111, %v5126
      %v5128 = vsel %vm5122, %v5125, %v5127
      %v5129 = vsel %vm5121, %v5108, %v5111
      %v5130 = vsel %vm5124, %v5117, 920167782
      %v5131 = vsel %vm5123, %v5114, %v5130
      %v5132 = vsel %vm5122, %v5129, %v5131
      %v5133 = vsel %vm5121, %v5111, %v5114
      %v5134 = vsel %vm5124, %v5120, 1326507024
      %v5135 = vsel %vm5123, %v5117, %v5134
      %v5136 = vsel %vm5122, %v5133, %v5135
      %v5137 = vshll.u32 %v5097, 8
      %v5138 = vand.u32 %v5137, 65535
      %v5139 = vshrl.u32 %v5137, 16
      %v5140 = vand.u32 %v5136, 65535
      %v5141 = vshrl.u32 %v5136, 16
      %v5142 = vmul.u32 %v5138, %v5140
      %v5143 = vmul.u32 %v5138, %v5141
      %v5144 = vmul.u32 %v5139, %v5140
      %v5145 = vmul.u32 %v5139, %v5141
      %v5146 = vshll.u32 %v5143, 16
      %v5147 = vshrl.u32 %v5143, 16
      %v5148 = vshll.u32 %v5144, 16
      %v5149 = vshrl.u32 %v5144, 16
      %vm5150 = vc.u32 %v5142, %v5146
      %v5151 = vsel %vm5150, 1, 0
      %v5152 = vadd.s32 %v5142, %v5146
      %v5153 = vadd.s32 %v5145, %v5151
      %vm5154 = vc.u32 %v5152, %v5148
      %v5155 = vsel %vm5154, 1, 0
      %v5156 = vadd.s32 %v5152, %v5148
      %v5157 = vadd.s32 %v5153, %v5155
      %v5158 = vadd.s32 %v5157, %v5147
      %v5159 = vadd.s32 %v5158, %v5149
      %v5160 = vand.u32 %v5137, 65535
      %v5161 = vshrl.u32 %v5137, 16
      %v5162 = vand.u32 %v5132, 65535
      %v5163 = vshrl.u32 %v5132, 16
      %v5164 = vmul.u32 %v5160, %v5162
      %v5165 = vmul.u32 %v5160, %v5163
      %v5166 = vmul.u32 %v5161, %v5162
      %v5167 = vmul.u32 %v5161, %v5163
      %v5168 = vshll.u32 %v5165, 16
      %v5169 = vshrl.u32 %v5165, 16
      %v5170 = vshll.u32 %v5166, 16
      %v5171 = vshrl.u32 %v5166, 16
      %vm5172 = vc.u32 %v5164, %v5168
      %v5173 = vsel %vm5172, 1, 0
      %v5174 = vadd.s32 %v5164, %v5168
      %v5175 = vadd.s32 %v5167, %v5173
      %vm5176 = vc.u32 %v5174, %v5170
      %v5177 = vsel %vm5176, 1, 0
      %v5178 = vadd.s32 %v5174, %v5170
      %v5179 = vadd.s32 %v5175, %v5177
      %v5180 = vadd.s32 %v5179, %v5169
      %v5181 = vadd.s32 %v5180, %v5171
      %v5182 = vmul.u32 %v5137, %v5128
      %v5183 = vadd.s32 %v5159, %v5178
      %vm5184 = vc.u32 %v5159, %v5178
      %v5185 = vadd.s32 %v5181, 1
      %v5186 = vsel %vm5184, %v5185, %v5181
      %v5187 = vadd.s32 %v5182, %v5186
      %v5188 = vadd.s32 %v5187, 536870912
      %v5189 = vshrl.u32 %v5188, 30
      %v5190 = vshll.u32 %v5189, 30
      %v5191 = vsub.s32 %v5187, %v5190
      %vm5192 = vcmp.lt.s32.totalorder %v5191, 0
      %v5193 = vsub.s32 0, %v5191
      %v5194 = vsel %vm5192, %v5193, %v5191
      %v5195 = vclz %v5194
      %v5196 = vsub.s32 %v5195, 2
      %vm5197 = vcmp.gt.s32.totalorder 0, %v5196
      %v5198 = vsel %vm5197, 0, %v5196
      %v5199 = vsub.s32 32, %v5198
      %v5200 = vshll.u32 %v5191, %v5198
      %v5201 = vshrl.u32 %v5183, %v5199
      %v5202 = vor.u32 %v5200, %v5201
      %v5203 = vsub.s32 4294967266, %v5198
      %v5204 = vadd.s32 %v5203, 127
      %v5205 = vshll.u32 %v5204, 23
      %v5206 = vor.u32 4788187, %v5205
      %v5207 = vand.u32 2147483647, %v5206
      %v5209 = vcvt.s32.f32 %v5202
      %v5210 = vmul.f32 %v5209, %v5207
      %v5211 = vxor.u32 %v5210, 2147483648
      %v5212 = vsel %vm5091, %v5211, %v5210
      %v5213 = vsub.s32 4, %v5189
      %v5214 = vsel %vm5091, %v5213, %v5189
      %v5215 = vsel %vm5090, %v451, %v5212
      %v5216 = vsel %vm5090, 0, %v5214
      %v5217 = vmul.f32 %v5215, %v5215
      %v5218 = vmul.f32 %v5217, -0.001358992
      %v5219 = vadd.f32 %v5218, 0.041655596
      %v5220 = vmul.f32 %v5217, %v5219
      %v5221 = vadd.f32 %v5220, -0.4999988
      %v5222 = vmul.f32 %v5217, %v5221
      %v5223 = vadd.f32 1.0, %v5222
      %v5224 = vmul.f32 %v5215, %v5215
      %v5225 = vmul.f32 %v5224, -0.00019511016
      %v5226 = vadd.f32 %v5225, 0.008332121
      %v5227 = vmul.f32 %v5224, %v5226
      %v5228 = vadd.f32 %v5227, -0.16666654
      %v5229 = vmul.f32 %v5224, %v5228
      %v5230 = vadd.f32 %v5229, 1.0
      %v5231 = vmul.f32 %v5230, %v5215
      %vm5232 = vweird.f32 %v451
      %v5233 = vand.u32 %v5216, 3
      %vm5234 = vcmp.lt.s32.totalorder %v5233, 2
      %vm5235 = vcmp.eq.s32.totalorder %v5233, 0
      %v5236 = vxor.u32 %v5231, 2147483648
      %v5237 = vsel %vm5235, %v5223, %v5236
      %vm5238 = vcmp.eq.s32.totalorder %v5233, 2
      %v5239 = vxor.u32 %v5223, 2147483648
      %v5240 = vsel %vm5238, %v5239, %v5231
      %v5241 = vsel %vm5234, %v5237, %v5240
      %v5242 = vsel %vm5232, nan, %v5241
      %v5243 = vand.u32 2147483647, %v452
      %vm5244 = vcmp.le.f32.partialorder %v5243, 0.7853982
      %vm5245 = vcmp.lt.s32.totalorder %v452, 0
      %v5246 = vand.u32 %v452, 2139095040
      %v5247 = vshrl.u32 %v5246, 23
      %v5248 = vsub.s32 %v5247, 127
      %v5249 = vand.u32 2147483647, %v452
      %v5250 = vand.u32 %v5249, 8388607
      %v5251 = vor.u32 %v5250, 8388608
      %v5252 = vsub.s32 0, %v5251
      %v5253 = vadd.s32 %v5248, 1
      %vm5254 = vcmp.gt.s32.totalorder %v5253, 0
      %v5255 = vsel %vm5254, %v5253, 0
      %v5256 = vshrl.u32 %v5255, 5
      %v5257 = vand.u32 %v5255, 31
      %v5258 = vsub.s32 32, %v5257
      %v5259 = vshrl.u32 683565275, %v5258
      %v5260 = vshll.u32 683565275, %v5257
      %v5261 = vshrl.u32 2475754826, %v5258
      %v5262 = vor.u32 %v5260, %v5261
      %v5263 = vshll.u32 2475754826, %v5257
      %v5264 = vshrl.u32 2131351028, %v5258
      %v5265 = vor.u32 %v5263, %v5264
      %v5266 = vshll.u32 2131351028, %v5257
      %v5267 = vshrl.u32 2102212464, %v5258
      %v5268 = vor.u32 %v5266, %v5267
      %v5269 = vshll.u32 2102212464, %v5257
      %v5270 = vshrl.u32 920167782, %v5258
      %v5271 = vor.u32 %v5269, %v5270
      %v5272 = vshll.u32 920167782, %v5257
      %v5273 = vshrl.u32 1326507024, %v5258
      %v5274 = vor.u32 %v5272, %v5273
      %vm5275 = vcmp.lt.s32.totalorder %v5256, 1
      %vm5276 = vcmp.lt.s32.totalorder %v5256, 2
      %vm5277 = vcmp.lt.s32.totalorder %v5256, 3
      %vm5278 = vcmp.lt.s32.totalorder %v5256, 4
      %v5279 = vsel %vm5275, %v5259, %v5262
      %v5280 = vsel %vm5278, %v5268, 2102212464
      %v5281 = vsel %vm5277, %v5265, %v5280
      %v5282 = vsel %vm5276, %v5279, %v5281
      %v5283 = vsel %vm5275, %v5262, %v5265
      %v5284 = vsel %vm5278, %v5271, 920167782
      %v5285 = vsel %vm5277, %v5268, %v5284
      %v5286 = vsel %vm5276, %v5283, %v5285
      %v5287 = vsel %vm5275, %v5265, %v5268
      %v5288 = vsel %vm5278, %v5274, 1326507024
      %v5289 = vsel %vm5277, %v5271, %v5288
      %v5290 = vsel %vm5276, %v5287, %v5289
      %v5291 = vshll.u32 %v5251, 8
      %v5292 = vand.u32 %v5291, 65535
      %v5293 = vshrl.u32 %v5291, 16
      %v5294 = vand.u32 %v5290, 65535
      %v5295 = vshrl.u32 %v5290, 16
      %v5296 = vmul.u32 %v5292, %v5294
      %v5297 = vmul.u32 %v5292, %v5295
      %v5298 = vmul.u32 %v5293, %v5294
      %v5299 = vmul.u32 %v5293, %v5295
      %v5300 = vshll.u32 %v5297, 16
      %v5301 = vshrl.u32 %v5297, 16
      %v5302 = vshll.u32 %v5298, 16
      %v5303 = vshrl.u32 %v5298, 16
      %vm5304 = vc.u32 %v5296, %v5300
      %v5305 = vsel %vm5304, 1, 0
      %v5306 = vadd.s32 %v5296, %v5300
      %v5307 = vadd.s32 %v5299, %v5305
      %vm5308 = vc.u32 %v5306, %v5302
      %v5309 = vsel %vm5308, 1, 0
      %v5310 = vadd.s32 %v5306, %v5302
      %v5311 = vadd.s32 %v5307, %v5309
      %v5312 = vadd.s32 %v5311, %v5301
      %v5313 = vadd.s32 %v5312, %v5303
      %v5314 = vand.u32 %v5291, 65535
      %v5315 = vshrl.u32 %v5291, 16
      %v5316 = vand.u32 %v5286, 65535
      %v5317 = vshrl.u32 %v5286, 16
      %v5318 = vmul.u32 %v5314, %v5316
      %v5319 = vmul.u32 %v5314, %v5317
      %v5320 = vmul.u32 %v5315, %v5316
      %v5321 = vmul.u32 %v5315, %v5317
      %v5322 = vshll.u32 %v5319, 16
      %v5323 = vshrl.u32 %v5319, 16
      %v5324 = vshll.u32 %v5320, 16
      %v5325 = vshrl.u32 %v5320, 16
      %vm5326 = vc.u32 %v5318, %v5322
      %v5327 = vsel %vm5326, 1, 0
      %v5328 = vadd.s32 %v5318, %v5322
      %v5329 = vadd.s32 %v5321, %v5327
      %vm5330 = vc.u32 %v5328, %v5324
      %v5331 = vsel %vm5330, 1, 0
      %v5332 = vadd.s32 %v5328, %v5324
      %v5333 = vadd.s32 %v5329, %v5331
      %v5334 = vadd.s32 %v5333, %v5323
      %v5335 = vadd.s32 %v5334, %v5325
      %v5336 = vmul.u32 %v5291, %v5282
      %v5337 = vadd.s32 %v5313, %v5332
      %vm5338 = vc.u32 %v5313, %v5332
      %v5339 = vadd.s32 %v5335, 1
      %v5340 = vsel %vm5338, %v5339, %v5335
      %v5341 = vadd.s32 %v5336, %v5340
      %v5342 = vadd.s32 %v5341, 536870912
      %v5343 = vshrl.u32 %v5342, 30
      %v5344 = vshll.u32 %v5343, 30
      %v5345 = vsub.s32 %v5341, %v5344
      %vm5346 = vcmp.lt.s32.totalorder %v5345, 0
      %v5347 = vsub.s32 0, %v5345
      %v5348 = vsel %vm5346, %v5347, %v5345
      %v5349 = vclz %v5348
      %v5350 = vsub.s32 %v5349, 2
      %vm5351 = vcmp.gt.s32.totalorder 0, %v5350
      %v5352 = vsel %vm5351, 0, %v5350
      %v5353 = vsub.s32 32, %v5352
      %v5354 = vshll.u32 %v5345, %v5352
      %v5355 = vshrl.u32 %v5337, %v5353
      %v5356 = vor.u32 %v5354, %v5355
      %v5357 = vsub.s32 4294967266, %v5352
      %v5358 = vadd.s32 %v5357, 127
      %v5359 = vshll.u32 %v5358, 23
      %v5360 = vor.u32 4788187, %v5359
      %v5361 = vand.u32 2147483647, %v5360
      %v5363 = vcvt.s32.f32 %v5356
      %v5364 = vmul.f32 %v5363, %v5361
      %v5365 = vxor.u32 %v5364, 2147483648
      %v5366 = vsel %vm5245, %v5365, %v5364
      %v5367 = vsub.s32 4, %v5343
      %v5368 = vsel %vm5245, %v5367, %v5343
      %v5369 = vsel %vm5244, %v452, %v5366
      %v5370 = vsel %vm5244, 0, %v5368
      %v5371 = vmul.f32 %v5369, %v5369
      %v5372 = vmul.f32 %v5371, -0.001358992
      %v5373 = vadd.f32 %v5372, 0.041655596
      %v5374 = vmul.f32 %v5371, %v5373
      %v5375 = vadd.f32 %v5374, -0.4999988
      %v5376 = vmul.f32 %v5371, %v5375
      %v5377 = vadd.f32 1.0, %v5376
      %v5378 = vmul.f32 %v5369, %v5369
      %v5379 = vmul.f32 %v5378, -0.00019511016
      %v5380 = vadd.f32 %v5379, 0.008332121
      %v5381 = vmul.f32 %v5378, %v5380
      %v5382 = vadd.f32 %v5381, -0.16666654
      %v5383 = vmul.f32 %v5378, %v5382
      %v5384 = vadd.f32 %v5383, 1.0
      %v5385 = vmul.f32 %v5384, %v5369
      %vm5386 = vweird.f32 %v452
      %v5387 = vand.u32 %v5370, 3
      %vm5388 = vcmp.lt.s32.totalorder %v5387, 2
      %vm5389 = vcmp.eq.s32.totalorder %v5387, 0
      %v5390 = vxor.u32 %v5385, 2147483648
      %v5391 = vsel %vm5389, %v5377, %v5390
      %vm5392 = vcmp.eq.s32.totalorder %v5387, 2
      %v5393 = vxor.u32 %v5377, 2147483648
      %v5394 = vsel %vm5392, %v5393, %v5385
      %v5395 = vsel %vm5388, %v5391, %v5394
      %v5396 = vsel %vm5386, nan, %v5395
      %v5397 = vsel %vm334, %v607, %v3086
      %v5398 = vsel %vm334, %v762, %v3240
      %v5399 = vsel %vm334, %v917, %v3394
      %v5400 = vsel %vm334, %v1072, %v3548
      %v5401 = vsel %vm334, %v1227, %v3702
      %v5402 = vsel %vm334, %v1382, %v3856
      %v5403 = vsel %vm334, %v1537, %v4010
      %v5404 = vsel %vm334, %v1692, %v4164
      %v5405 = vsel %vm334, %v1847, %v4318
      %v5406 = vsel %vm334, %v2002, %v4472
      %v5407 = vsel %vm334, %v2157, %v4626
      %v5408 = vsel %vm334, %v2312, %v4780
      %v5409 = vsel %vm334, %v2467, %v4934
      %v5410 = vsel %vm334, %v2622, %v5088
      %v5411 = vsel %vm334, %v2777, %v5242
      %v5412 = vsel %vm334, %v2932, %v5396
      %v5413 = vpack.c.bf16 %v5398, %v5397
      %v5414 = vpack.c.bf16 %v5400, %v5399
      %v5415 = vpack.c.bf16 %v5402, %v5401
      %v5416 = vpack.c.bf16 %v5404, %v5403
      %v5417 = vpack.c.bf16 %v5406, %v5405
      %v5418 = vpack.c.bf16 %v5408, %v5407
      %v5419 = vpack.c.bf16 %v5410, %v5409
      %v5420 = vpack.c.bf16 %v5412, %v5411
      %v5421 = vld [vmem:[%s2] sm:$0xf]
      %v5422 = vld [vmem:[%s2 + $0x4] sm:$0xf]
      %v5423 = vld [vmem:[%s2 + $0x8] sm:$0xf]
      %v5424 = vld [vmem:[%s2 + $0xc] sm:$0xf]
      %v5425 = vld [vmem:[%s2 + $0x10] sm:$0xf]
      %v5426 = vld [vmem:[%s2 + $0x14] sm:$0xf]
      %v5427 = vld [vmem:[%s2 + $0x18] sm:$0xf]
      %v5428 = vld [vmem:[%s2 + $0x1c] sm:$0xf]
      %v5429 = vld [vmem:[%s2 + $0x20] sm:$0xf]
      %v5430 = vld [vmem:[%s2 + $0x24] sm:$0xf]
      %v5431 = vld [vmem:[%s2 + $0x28] sm:$0xf]
      %v5432 = vld [vmem:[%s2 + $0x2c] sm:$0xf]
      %v5433 = vld [vmem:[%s2 + $0x30] sm:$0xf]
      %v5434 = vld [vmem:[%s2 + $0x34] sm:$0xf]
      %v5435 = vld [vmem:[%s2 + $0x38] sm:$0xf]
      %v5436 = vld [vmem:[%s2 + $0x3c] sm:$0xf]
      %v5437 = vld [vmem:[%s7] sm:$0x1]
      %v5438 = vperm.slane %v5437, 0
      %v5455 = vunpack.c.l.b16 %v5421
      %v5456 = vunpack.c.l.b16 %v5422
      %v5457 = vunpack.c.l.b16 %v5423
      %v5458 = vunpack.c.l.b16 %v5424
      %v5459 = vunpack.c.l.b16 %v5425
      %v5460 = vunpack.c.l.b16 %v5426
      %v5461 = vunpack.c.l.b16 %v5427
      %v5462 = vunpack.c.l.b16 %v5428
      %v5463 = vunpack.c.l.b16 %v5429
      %v5464 = vunpack.c.l.b16 %v5430
      %v5465 = vunpack.c.l.b16 %v5431
      %v5466 = vunpack.c.l.b16 %v5432
      %v5467 = vunpack.c.l.b16 %v5433
      %v5468 = vunpack.c.l.b16 %v5434
      %v5469 = vunpack.c.l.b16 %v5435
      %v5470 = vunpack.c.l.b16 %v5436
      %v5471 = vpack.c.b16 %v5456, %v5455
      %v5472 = vpack.c.b16 %v5458, %v5457
      %v5473 = vpack.c.b16 %v5460, %v5459
      %v5474 = vpack.c.b16 %v5462, %v5461
      %v5475 = vpack.c.b16 %v5464, %v5463
      %v5476 = vpack.c.b16 %v5466, %v5465
      %v5477 = vpack.c.b16 %v5468, %v5467
      %v5478 = vpack.c.b16 %v5470, %v5469
      %5487 = vmatpush.bf16.msra.mxu0 %v5478
      %5488 = vmatpush.bf16.msra.mxu0 %v5477
      %5489 = vmatpush.bf16.msra.mxu0 %v5476
      %5490 = vmatpush.bf16.msra.mxu0 %v5475
      %5491 = vmatpush.bf16.msra.mxu0 %v5474
      %5492 = vmatpush.bf16.msra.mxu0 %v5473
      %5493 = vmatpush.bf16.msra.mxu0 %v5472
      %5494 = vmatpush.bf16.msra.mxu0 %v5471
      %5495 = vmatmul.bf16.gmra.mxu0 %v5413
      %v5496 = vpop.f32.mrf.mxu0
      %v5497 = vadd.f32 %v5438, %v5496
      %v5498 = vpop.f32.mrf.mxu0
      %v5499 = vadd.f32 %v5438, %v5498
      %5500 = vmatmul.bf16.gmra.mxu0 %v5414
      %v5501 = vpop.f32.mrf.mxu0
      %v5502 = vadd.f32 %v5438, %v5501
      %v5503 = vpop.f32.mrf.mxu0
      %v5504 = vadd.f32 %v5438, %v5503
      %5505 = vmatmul.bf16.gmra.mxu0 %v5415
      %v5506 = vpop.f32.mrf.mxu0
      %v5507 = vadd.f32 %v5438, %v5506
      %v5508 = vpop.f32.mrf.mxu0
      %v5509 = vadd.f32 %v5438, %v5508
      %5510 = vmatmul.bf16.gmra.mxu0 %v5416
      %v5511 = vpop.f32.mrf.mxu0
      %v5512 = vadd.f32 %v5438, %v5511
      %v5513 = vpop.f32.mrf.mxu0
      %v5514 = vadd.f32 %v5438, %v5513
      %5515 = vmatmul.bf16.gmra.mxu0 %v5417
      %v5516 = vpop.f32.mrf.mxu0
      %v5517 = vadd.f32 %v5438, %v5516
      %v5518 = vpop.f32.mrf.mxu0
      %v5519 = vadd.f32 %v5438, %v5518
      %5520 = vmatmul.bf16.gmra.mxu0 %v5418
      %v5521 = vpop.f32.mrf.mxu0
      %v5522 = vadd.f32 %v5438, %v5521
      %v5523 = vpop.f32.mrf.mxu0
      %v5524 = vadd.f32 %v5438, %v5523
      %5525 = vmatmul.bf16.gmra.mxu0 %v5419
      %v5526 = vpop.f32.mrf.mxu0
      %v5527 = vadd.f32 %v5438, %v5526
      %v5528 = vpop.f32.mrf.mxu0
      %v5529 = vadd.f32 %v5438, %v5528
      %5530 = vmatmul.bf16.gmra.mxu0 %v5420
      %v5531 = vpop.f32.mrf.mxu0
      %v5532 = vadd.f32 %v5438, %v5531
      %v5533 = vpop.f32.mrf.mxu0
      %v5534 = vadd.f32 %v5438, %v5533
      %5535 = vdwg.mxu0
      %v5536 = vxor.u32 %v5497, 2147483648
      %v5537 = vxor.u32 %v5499, 2147483648
      %v5538 = vxor.u32 %v5502, 2147483648
      %v5539 = vxor.u32 %v5504, 2147483648
      %v5540 = vxor.u32 %v5507, 2147483648
      %v5541 = vxor.u32 %v5509, 2147483648
      %v5542 = vxor.u32 %v5512, 2147483648
      %v5543 = vxor.u32 %v5514, 2147483648
      %v5544 = vxor.u32 %v5517, 2147483648
      %v5545 = vxor.u32 %v5519, 2147483648
      %v5546 = vxor.u32 %v5522, 2147483648
      %v5547 = vxor.u32 %v5524, 2147483648
      %v5548 = vxor.u32 %v5527, 2147483648
      %v5549 = vxor.u32 %v5529, 2147483648
      %v5550 = vxor.u32 %v5532, 2147483648
      %v5551 = vxor.u32 %v5534, 2147483648
      %v5552 = vmul.f32 %v5536, 1.442695
      %v5553 = vpow.pop %v5552
      %v5554 = vmul.f32 %v5537, 1.442695
      %v5555 = vpow.pop %v5554
      %v5556 = vmul.f32 %v5538, 1.442695
      %v5557 = vpow.pop %v5556
      %v5558 = vmul.f32 %v5539, 1.442695
      %v5559 = vpow.pop %v5558
      %v5560 = vmul.f32 %v5540, 1.442695
      %v5561 = vpow.pop %v5560
      %v5562 = vmul.f32 %v5541, 1.442695
      %v5563 = vpow.pop %v5562
      %v5564 = vmul.f32 %v5542, 1.442695
      %v5565 = vpow.pop %v5564
      %v5566 = vmul.f32 %v5543, 1.442695
      %v5567 = vpow.pop %v5566
      %v5568 = vmul.f32 %v5544, 1.442695
      %v5569 = vpow.pop %v5568
      %v5570 = vmul.f32 %v5545, 1.442695
      %v5571 = vpow.pop %v5570
      %v5572 = vmul.f32 %v5546, 1.442695
      %v5573 = vpow.pop %v5572
      %v5574 = vmul.f32 %v5547, 1.442695
      %v5575 = vpow.pop %v5574
      %v5576 = vmul.f32 %v5548, 1.442695
      %v5577 = vpow.pop %v5576
      %v5578 = vmul.f32 %v5549, 1.442695
      %v5579 = vpow.pop %v5578
      %v5580 = vmul.f32 %v5550, 1.442695
      %v5581 = vpow.pop %v5580
      %v5582 = vmul.f32 %v5551, 1.442695
      %v5583 = vpow.pop %v5582
      %v5584 = vadd.f32 %v5553, 1.0
      %v5585 = vadd.f32 %v5555, 1.0
      %v5586 = vadd.f32 %v5557, 1.0
      %v5587 = vadd.f32 %v5559, 1.0
      %v5588 = vadd.f32 %v5561, 1.0
      %v5589 = vadd.f32 %v5563, 1.0
      %v5590 = vadd.f32 %v5565, 1.0
      %v5591 = vadd.f32 %v5567, 1.0
      %v5592 = vadd.f32 %v5569, 1.0
      %v5593 = vadd.f32 %v5571, 1.0
      %v5594 = vadd.f32 %v5573, 1.0
      %v5595 = vadd.f32 %v5575, 1.0
      %v5596 = vadd.f32 %v5577, 1.0
      %v5597 = vadd.f32 %v5579, 1.0
      %v5598 = vadd.f32 %v5581, 1.0
      %v5599 = vadd.f32 %v5583, 1.0
      %v5600 = vrcp.pop %v5584
      %v5601 = vmul.f32 %v5584, %v5600
      %v5602 = vsub.f32 1.0, %v5601
      %v5603 = vmul.f32 %v5600, %v5602
      %v5604 = vadd.f32 %v5600, %v5603
      %vm5605 = vweird.f32 %v5584
      %vm5606 = vweird.f32 %v5600
      %vm5607 = vmor %vm5605, %vm5606
      %v5608 = vsel %vm5607, %v5600, %v5604
      %v5609 = vand.u32 2147483647, %v5584
      %vm5610 = vcmp.eq.f32.partialorder %v5609, 8.507059e+37
      %v5611 = vand.u32 %v5584, 2147483648
      %v5612 = vor.u32 1.1754944e-38, %v5611
      %v5613 = vsel %vm5610, %v5612, %v5608
      %v5614 = vmul.f32 1.0, %v5613
      %v5615 = vrcp.pop %v5585
      %v5616 = vmul.f32 %v5585, %v5615
      %v5617 = vsub.f32 1.0, %v5616
      %v5618 = vmul.f32 %v5615, %v5617
      %v5619 = vadd.f32 %v5615, %v5618
      %vm5620 = vweird.f32 %v5585
      %vm5621 = vweird.f32 %v5615
      %vm5622 = vmor %vm5620, %vm5621
      %v5623 = vsel %vm5622, %v5615, %v5619
      %v5624 = vand.u32 2147483647, %v5585
      %vm5625 = vcmp.eq.f32.partialorder %v5624, 8.507059e+37
      %v5626 = vand.u32 %v5585, 2147483648
      %v5627 = vor.u32 1.1754944e-38, %v5626
      %v5628 = vsel %vm5625, %v5627, %v5623
      %v5629 = vmul.f32 1.0, %v5628
      %v5630 = vrcp.pop %v5586
      %v5631 = vmul.f32 %v5586, %v5630
      %v5632 = vsub.f32 1.0, %v5631
      %v5633 = vmul.f32 %v5630, %v5632
      %v5634 = vadd.f32 %v5630, %v5633
      %vm5635 = vweird.f32 %v5586
      %vm5636 = vweird.f32 %v5630
      %vm5637 = vmor %vm5635, %vm5636
      %v5638 = vsel %vm5637, %v5630, %v5634
      %v5639 = vand.u32 2147483647, %v5586
      %vm5640 = vcmp.eq.f32.partialorder %v5639, 8.507059e+37
      %v5641 = vand.u32 %v5586, 2147483648
      %v5642 = vor.u32 1.1754944e-38, %v5641
      %v5643 = vsel %vm5640, %v5642, %v5638
      %v5644 = vmul.f32 1.0, %v5643
      %v5645 = vrcp.pop %v5587
      %v5646 = vmul.f32 %v5587, %v5645
      %v5647 = vsub.f32 1.0, %v5646
      %v5648 = vmul.f32 %v5645, %v5647
      %v5649 = vadd.f32 %v5645, %v5648
      %vm5650 = vweird.f32 %v5587
      %vm5651 = vweird.f32 %v5645
      %vm5652 = vmor %vm5650, %vm5651
      %v5653 = vsel %vm5652, %v5645, %v5649
      %v5654 = vand.u32 2147483647, %v5587
      %vm5655 = vcmp.eq.f32.partialorder %v5654, 8.507059e+37
      %v5656 = vand.u32 %v5587, 2147483648
      %v5657 = vor.u32 1.1754944e-38, %v5656
      %v5658 = vsel %vm5655, %v5657, %v5653
      %v5659 = vmul.f32 1.0, %v5658
      %v5660 = vrcp.pop %v5588
      %v5661 = vmul.f32 %v5588, %v5660
      %v5662 = vsub.f32 1.0, %v5661
      %v5663 = vmul.f32 %v5660, %v5662
      %v5664 = vadd.f32 %v5660, %v5663
      %vm5665 = vweird.f32 %v5588
      %vm5666 = vweird.f32 %v5660
      %vm5667 = vmor %vm5665, %vm5666
      %v5668 = vsel %vm5667, %v5660, %v5664
      %v5669 = vand.u32 2147483647, %v5588
      %vm5670 = vcmp.eq.f32.partialorder %v5669, 8.507059e+37
      %v5671 = vand.u32 %v5588, 2147483648
      %v5672 = vor.u32 1.1754944e-38, %v5671
      %v5673 = vsel %vm5670, %v5672, %v5668
      %v5674 = vmul.f32 1.0, %v5673
      %v5675 = vrcp.pop %v5589
      %v5676 = vmul.f32 %v5589, %v5675
      %v5677 = vsub.f32 1.0, %v5676
      %v5678 = vmul.f32 %v5675, %v5677
      %v5679 = vadd.f32 %v5675, %v5678
      %vm5680 = vweird.f32 %v5589
      %vm5681 = vweird.f32 %v5675
      %vm5682 = vmor %vm5680, %vm5681
      %v5683 = vsel %vm5682, %v5675, %v5679
      %v5684 = vand.u32 2147483647, %v5589
      %vm5685 = vcmp.eq.f32.partialorder %v5684, 8.507059e+37
      %v5686 = vand.u32 %v5589, 2147483648
      %v5687 = vor.u32 1.1754944e-38, %v5686
      %v5688 = vsel %vm5685, %v5687, %v5683
      %v5689 = vmul.f32 1.0, %v5688
      %v5690 = vrcp.pop %v5590
      %v5691 = vmul.f32 %v5590, %v5690
      %v5692 = vsub.f32 1.0, %v5691
      %v5693 = vmul.f32 %v5690, %v5692
      %v5694 = vadd.f32 %v5690, %v5693
      %vm5695 = vweird.f32 %v5590
      %vm5696 = vweird.f32 %v5690
      %vm5697 = vmor %vm5695, %vm5696
      %v5698 = vsel %vm5697, %v5690, %v5694
      %v5699 = vand.u32 2147483647, %v5590
      %vm5700 = vcmp.eq.f32.partialorder %v5699, 8.507059e+37
      %v5701 = vand.u32 %v5590, 2147483648
      %v5702 = vor.u32 1.1754944e-38, %v5701
      %v5703 = vsel %vm5700, %v5702, %v5698
      %v5704 = vmul.f32 1.0, %v5703
      %v5705 = vrcp.pop %v5591
      %v5706 = vmul.f32 %v5591, %v5705
      %v5707 = vsub.f32 1.0, %v5706
      %v5708 = vmul.f32 %v5705, %v5707
      %v5709 = vadd.f32 %v5705, %v5708
      %vm5710 = vweird.f32 %v5591
      %vm5711 = vweird.f32 %v5705
      %vm5712 = vmor %vm5710, %vm5711
      %v5713 = vsel %vm5712, %v5705, %v5709
      %v5714 = vand.u32 2147483647, %v5591
      %vm5715 = vcmp.eq.f32.partialorder %v5714, 8.507059e+37
      %v5716 = vand.u32 %v5591, 2147483648
      %v5717 = vor.u32 1.1754944e-38, %v5716
      %v5718 = vsel %vm5715, %v5717, %v5713
      %v5719 = vmul.f32 1.0, %v5718
      %v5720 = vrcp.pop %v5592
      %v5721 = vmul.f32 %v5592, %v5720
      %v5722 = vsub.f32 1.0, %v5721
      %v5723 = vmul.f32 %v5720, %v5722
      %v5724 = vadd.f32 %v5720, %v5723
      %vm5725 = vweird.f32 %v5592
      %vm5726 = vweird.f32 %v5720
      %vm5727 = vmor %vm5725, %vm5726
      %v5728 = vsel %vm5727, %v5720, %v5724
      %v5729 = vand.u32 2147483647, %v5592
      %vm5730 = vcmp.eq.f32.partialorder %v5729, 8.507059e+37
      %v5731 = vand.u32 %v5592, 2147483648
      %v5732 = vor.u32 1.1754944e-38, %v5731
      %v5733 = vsel %vm5730, %v5732, %v5728
      %v5734 = vmul.f32 1.0, %v5733
      %v5735 = vrcp.pop %v5593
      %v5736 = vmul.f32 %v5593, %v5735
      %v5737 = vsub.f32 1.0, %v5736
      %v5738 = vmul.f32 %v5735, %v5737
      %v5739 = vadd.f32 %v5735, %v5738
      %vm5740 = vweird.f32 %v5593
      %vm5741 = vweird.f32 %v5735
      %vm5742 = vmor %vm5740, %vm5741
      %v5743 = vsel %vm5742, %v5735, %v5739
      %v5744 = vand.u32 2147483647, %v5593
      %vm5745 = vcmp.eq.f32.partialorder %v5744, 8.507059e+37
      %v5746 = vand.u32 %v5593, 2147483648
      %v5747 = vor.u32 1.1754944e-38, %v5746
      %v5748 = vsel %vm5745, %v5747, %v5743
      %v5749 = vmul.f32 1.0, %v5748
      %v5750 = vrcp.pop %v5594
      %v5751 = vmul.f32 %v5594, %v5750
      %v5752 = vsub.f32 1.0, %v5751
      %v5753 = vmul.f32 %v5750, %v5752
      %v5754 = vadd.f32 %v5750, %v5753
      %vm5755 = vweird.f32 %v5594
      %vm5756 = vweird.f32 %v5750
      %vm5757 = vmor %vm5755, %vm5756
      %v5758 = vsel %vm5757, %v5750, %v5754
      %v5759 = vand.u32 2147483647, %v5594
      %vm5760 = vcmp.eq.f32.partialorder %v5759, 8.507059e+37
      %v5761 = vand.u32 %v5594, 2147483648
      %v5762 = vor.u32 1.1754944e-38, %v5761
      %v5763 = vsel %vm5760, %v5762, %v5758
      %v5764 = vmul.f32 1.0, %v5763
      %v5765 = vrcp.pop %v5595
      %v5766 = vmul.f32 %v5595, %v5765
      %v5767 = vsub.f32 1.0, %v5766
      %v5768 = vmul.f32 %v5765, %v5767
      %v5769 = vadd.f32 %v5765, %v5768
      %vm5770 = vweird.f32 %v5595
      %vm5771 = vweird.f32 %v5765
      %vm5772 = vmor %vm5770, %vm5771
      %v5773 = vsel %vm5772, %v5765, %v5769
      %v5774 = vand.u32 2147483647, %v5595
      %vm5775 = vcmp.eq.f32.partialorder %v5774, 8.507059e+37
      %v5776 = vand.u32 %v5595, 2147483648
      %v5777 = vor.u32 1.1754944e-38, %v5776
      %v5778 = vsel %vm5775, %v5777, %v5773
      %v5779 = vmul.f32 1.0, %v5778
      %v5780 = vrcp.pop %v5596
      %v5781 = vmul.f32 %v5596, %v5780
      %v5782 = vsub.f32 1.0, %v5781
      %v5783 = vmul.f32 %v5780, %v5782
      %v5784 = vadd.f32 %v5780, %v5783
      %vm5785 = vweird.f32 %v5596
      %vm5786 = vweird.f32 %v5780
      %vm5787 = vmor %vm5785, %vm5786
      %v5788 = vsel %vm5787, %v5780, %v5784
      %v5789 = vand.u32 2147483647, %v5596
      %vm5790 = vcmp.eq.f32.partialorder %v5789, 8.507059e+37
      %v5791 = vand.u32 %v5596, 2147483648
      %v5792 = vor.u32 1.1754944e-38, %v5791
      %v5793 = vsel %vm5790, %v5792, %v5788
      %v5794 = vmul.f32 1.0, %v5793
      %v5795 = vrcp.pop %v5597
      %v5796 = vmul.f32 %v5597, %v5795
      %v5797 = vsub.f32 1.0, %v5796
      %v5798 = vmul.f32 %v5795, %v5797
      %v5799 = vadd.f32 %v5795, %v5798
      %vm5800 = vweird.f32 %v5597
      %vm5801 = vweird.f32 %v5795
      %vm5802 = vmor %vm5800, %vm5801
      %v5803 = vsel %vm5802, %v5795, %v5799
      %v5804 = vand.u32 2147483647, %v5597
      %vm5805 = vcmp.eq.f32.partialorder %v5804, 8.507059e+37
      %v5806 = vand.u32 %v5597, 2147483648
      %v5807 = vor.u32 1.1754944e-38, %v5806
      %v5808 = vsel %vm5805, %v5807, %v5803
      %v5809 = vmul.f32 1.0, %v5808
      %v5810 = vrcp.pop %v5598
      %v5811 = vmul.f32 %v5598, %v5810
      %v5812 = vsub.f32 1.0, %v5811
      %v5813 = vmul.f32 %v5810, %v5812
      %v5814 = vadd.f32 %v5810, %v5813
      %vm5815 = vweird.f32 %v5598
      %vm5816 = vweird.f32 %v5810
      %vm5817 = vmor %vm5815, %vm5816
      %v5818 = vsel %vm5817, %v5810, %v5814
      %v5819 = vand.u32 2147483647, %v5598
      %vm5820 = vcmp.eq.f32.partialorder %v5819, 8.507059e+37
      %v5821 = vand.u32 %v5598, 2147483648
      %v5822 = vor.u32 1.1754944e-38, %v5821
      %v5823 = vsel %vm5820, %v5822, %v5818
      %v5824 = vmul.f32 1.0, %v5823
      %v5825 = vrcp.pop %v5599
      %v5826 = vmul.f32 %v5599, %v5825
      %v5827 = vsub.f32 1.0, %v5826
      %v5828 = vmul.f32 %v5825, %v5827
      %v5829 = vadd.f32 %v5825, %v5828
      %vm5830 = vweird.f32 %v5599
      %vm5831 = vweird.f32 %v5825
      %vm5832 = vmor %vm5830, %vm5831
      %v5833 = vsel %vm5832, %v5825, %v5829
      %v5834 = vand.u32 2147483647, %v5599
      %vm5835 = vcmp.eq.f32.partialorder %v5834, 8.507059e+37
      %v5836 = vand.u32 %v5599, 2147483648
      %v5837 = vor.u32 1.1754944e-38, %v5836
      %v5838 = vsel %vm5835, %v5837, %v5833
      %v5839 = vmul.f32 1.0, %v5838
      %v5840 = vmul.f32 %v5497, %v5614
      %v5841 = vmul.f32 %v5499, %v5629
      %v5842 = vmul.f32 %v5502, %v5644
      %v5843 = vmul.f32 %v5504, %v5659
      %v5844 = vmul.f32 %v5507, %v5674
      %v5845 = vmul.f32 %v5509, %v5689
      %v5846 = vmul.f32 %v5512, %v5704
      %v5847 = vmul.f32 %v5514, %v5719
      %v5848 = vmul.f32 %v5517, %v5734
      %v5849 = vmul.f32 %v5519, %v5749
      %v5850 = vmul.f32 %v5522, %v5764
      %v5851 = vmul.f32 %v5524, %v5779
      %v5852 = vmul.f32 %v5527, %v5794
      %v5853 = vmul.f32 %v5529, %v5809
      %v5854 = vmul.f32 %v5532, %v5824
      %v5855 = vmul.f32 %v5534, %v5839
      %v5856 = vpack.c.bf16 %v5841, %v5840
      %v5857 = vpack.c.bf16 %v5843, %v5842
      %v5858 = vpack.c.bf16 %v5845, %v5844
      %v5859 = vpack.c.bf16 %v5847, %v5846
      %v5860 = vpack.c.bf16 %v5849, %v5848
      %v5861 = vpack.c.bf16 %v5851, %v5850
      %v5862 = vpack.c.bf16 %v5853, %v5852
      %v5863 = vpack.c.bf16 %v5855, %v5854
      %v5864 = vld [vmem:[%s5] sm:$0xff]
      %v5865 = vld [vmem:[%s5 + $0x8] sm:$0xf]
      %v5866 = vld [vmem:[%s5 + $0xc] sm:$0xff]
      %v5867 = vld [vmem:[%s5 + $0x14] sm:$0xf]
      %v5868 = vld [vmem:[%s5 + $0x18] sm:$0xff]
      %v5869 = vld [vmem:[%s5 + $0x20] sm:$0xf]
      %v5870 = vld [vmem:[%s5 + $0x24] sm:$0xff]
      %v5871 = vld [vmem:[%s5 + $0x2c] sm:$0xf]
      %v5872 = vld [vmem:[%s5 + $0x30] sm:$0xff]
      %v5873 = vld [vmem:[%s5 + $0x38] sm:$0xf]
      %v5874 = vld [vmem:[%s5 + $0x3c] sm:$0xff]
      %v5875 = vld [vmem:[%s5 + $0x44] sm:$0xf]
      %v5876 = vld [vmem:[%s5 + $0x48] sm:$0xff]
      %v5877 = vld [vmem:[%s5 + $0x50] sm:$0xf]
      %v5878 = vld [vmem:[%s5 + $0x54] sm:$0xff]
      %v5879 = vld [vmem:[%s5 + $0x5c] sm:$0xf]
      %v5880 = vld [vmem:[%s5 + $0x60] sm:$0xff]
      %v5881 = vld [vmem:[%s5 + $0x68] sm:$0xf]
      %v5882 = vld [vmem:[%s5 + $0x6c] sm:$0xff]
      %v5883 = vld [vmem:[%s5 + $0x74] sm:$0xf]
      %v5884 = vld [vmem:[%s5 + $0x78] sm:$0xff]
      %v5885 = vld [vmem:[%s5 + $0x80] sm:$0xf]
      %v5886 = vld [vmem:[%s5 + $0x84] sm:$0xff]
      %v5887 = vld [vmem:[%s5 + $0x8c] sm:$0xf]
      %v5888 = vld [vmem:[%s5 + $0x90] sm:$0xff]
      %v5889 = vld [vmem:[%s5 + $0x98] sm:$0xf]
      %v5890 = vld [vmem:[%s5 + $0x9c] sm:$0xff]
      %v5891 = vld [vmem:[%s5 + $0xa4] sm:$0xf]
      %v5892 = vld [vmem:[%s5 + $0xa8] sm:$0xff]
      %v5893 = vld [vmem:[%s5 + $0xb0] sm:$0xf]
      %v5894 = vld [vmem:[%s5 + $0xb4] sm:$0xff]
      %v5895 = vld [vmem:[%s5 + $0xbc] sm:$0xf]
      %v5928 = vunpack.c.l.b16 %v5864
      %v5929 = vunpack.c.h.b16 %v5864
      %v5930 = vunpack.c.l.b16 %v5865
      %v5931 = vunpack.c.l.b16 %v5866
      %v5932 = vunpack.c.h.b16 %v5866
      %v5933 = vunpack.c.l.b16 %v5867
      %v5934 = vunpack.c.l.b16 %v5868
      %v5935 = vunpack.c.h.b16 %v5868
      %v5936 = vunpack.c.l.b16 %v5869
      %v5937 = vunpack.c.l.b16 %v5870
      %v5938 = vunpack.c.h.b16 %v5870
      %v5939 = vunpack.c.l.b16 %v5871
      %v5940 = vunpack.c.l.b16 %v5872
      %v5941 = vunpack.c.h.b16 %v5872
      %v5942 = vunpack.c.l.b16 %v5873
      %v5943 = vunpack.c.l.b16 %v5874
      %v5944 = vunpack.c.h.b16 %v5874
      %v5945 = vunpack.c.l.b16 %v5875
      %v5946 = vunpack.c.l.b16 %v5876
      %v5947 = vunpack.c.h.b16 %v5876
      %v5948 = vunpack.c.l.b16 %v5877
      %v5949 = vunpack.c.l.b16 %v5878
      %v5950 = vunpack.c.h.b16 %v5878
      %v5951 = vunpack.c.l.b16 %v5879
      %v5952 = vunpack.c.l.b16 %v5880
      %v5953 = vunpack.c.h.b16 %v5880
      %v5954 = vunpack.c.l.b16 %v5881
      %v5955 = vunpack.c.l.b16 %v5882
      %v5956 = vunpack.c.h.b16 %v5882
      %v5957 = vunpack.c.l.b16 %v5883
      %v5958 = vunpack.c.l.b16 %v5884
      %v5959 = vunpack.c.h.b16 %v5884
      %v5960 = vunpack.c.l.b16 %v5885
      %v5961 = vunpack.c.l.b16 %v5886
      %v5962 = vunpack.c.h.b16 %v5886
      %v5963 = vunpack.c.l.b16 %v5887
      %v5964 = vunpack.c.l.b16 %v5888
      %v5965 = vunpack.c.h.b16 %v5888
      %v5966 = vunpack.c.l.b16 %v5889
      %v5967 = vunpack.c.l.b16 %v5890
      %v5968 = vunpack.c.h.b16 %v5890
      %v5969 = vunpack.c.l.b16 %v5891
      %v5970 = vunpack.c.l.b16 %v5892
      %v5971 = vunpack.c.h.b16 %v5892
      %v5972 = vunpack.c.l.b16 %v5893
      %v5973 = vunpack.c.l.b16 %v5894
      %v5974 = vunpack.c.h.b16 %v5894
      %v5975 = vunpack.c.l.b16 %v5895
      %v5976 = vpack.c.b16 %v5931, %v5928
      %v5977 = vpack.c.b16 %v5932, %v5929
      %v5978 = vpack.c.b16 %v5933, %v5930
      %v5979 = vpack.c.b16 %v5937, %v5934
      %v5980 = vpack.c.b16 %v5938, %v5935
      %v5981 = vpack.c.b16 %v5939, %v5936
      %v5982 = vpack.c.b16 %v5943, %v5940
      %v5983 = vpack.c.b16 %v5944, %v5941
      %v5984 = vpack.c.b16 %v5945, %v5942
      %v5985 = vpack.c.b16 %v5949, %v5946
      %v5986 = vpack.c.b16 %v5950, %v5947
      %v5987 = vpack.c.b16 %v5951, %v5948
      %v5988 = vpack.c.b16 %v5955, %v5952
      %v5989 = vpack.c.b16 %v5956, %v5953
      %v5990 = vpack.c.b16 %v5957, %v5954
      %v5991 = vpack.c.b16 %v5961, %v5958
      %v5992 = vpack.c.b16 %v5962, %v5959
      %v5993 = vpack.c.b16 %v5963, %v5960
      %v5994 = vpack.c.b16 %v5967, %v5964
      %v5995 = vpack.c.b16 %v5968, %v5965
      %v5996 = vpack.c.b16 %v5969, %v5966
      %v5997 = vpack.c.b16 %v5973, %v5970
      %v5998 = vpack.c.b16 %v5974, %v5971
      %v5999 = vpack.c.b16 %v5975, %v5972
      %6024 = vmatpush.bf16.msra.mxu0 %v5997
      %6025 = vmatpush.bf16.msra.mxu0 %v5994
      %6026 = vmatpush.bf16.msra.mxu0 %v5991
      %6027 = vmatpush.bf16.msra.mxu0 %v5988
      %6028 = vmatpush.bf16.msra.mxu0 %v5985
      %6029 = vmatpush.bf16.msra.mxu0 %v5982
      %6030 = vmatpush.bf16.msra.mxu0 %v5979
      %6031 = vmatpush.bf16.msra.mxu0 %v5976
      %6032 = vmatmul.bf16.gmra.mxu0 %v5856
      %v6033 = vpop.f32.mrf.mxu0
      %v6034 = vadd.f32 0.0, %v6033
      %v6035 = vpop.f32.mrf.mxu0
      %v6036 = vadd.f32 0.0, %v6035
      %6037 = vmatmul.bf16.gmra.mxu0 %v5857
      %v6038 = vpop.f32.mrf.mxu0
      %v6039 = vadd.f32 0.0, %v6038
      %v6040 = vpop.f32.mrf.mxu0
      %v6041 = vadd.f32 0.0, %v6040
      %6042 = vmatmul.bf16.gmra.mxu0 %v5858
      %v6043 = vpop.f32.mrf.mxu0
      %v6044 = vadd.f32 0.0, %v6043
      %v6045 = vpop.f32.mrf.mxu0
      %v6046 = vadd.f32 0.0, %v6045
      %6047 = vmatmul.bf16.gmra.mxu0 %v5859
      %v6048 = vpop.f32.mrf.mxu0
      %v6049 = vadd.f32 0.0, %v6048
      %v6050 = vpop.f32.mrf.mxu0
      %v6051 = vadd.f32 0.0, %v6050
      %6052 = vmatmul.bf16.gmra.mxu0 %v5860
      %v6053 = vpop.f32.mrf.mxu0
      %v6054 = vadd.f32 0.0, %v6053
      %v6055 = vpop.f32.mrf.mxu0
      %v6056 = vadd.f32 0.0, %v6055
      %6057 = vmatmul.bf16.gmra.mxu0 %v5861
      %v6058 = vpop.f32.mrf.mxu0
      %v6059 = vadd.f32 0.0, %v6058
      %v6060 = vpop.f32.mrf.mxu0
      %v6061 = vadd.f32 0.0, %v6060
      %6062 = vmatmul.bf16.gmra.mxu0 %v5862
      %v6063 = vpop.f32.mrf.mxu0
      %v6064 = vadd.f32 0.0, %v6063
      %v6065 = vpop.f32.mrf.mxu0
      %v6066 = vadd.f32 0.0, %v6065
      %6067 = vmatmul.bf16.gmra.mxu0 %v5863
      %v6068 = vpop.f32.mrf.mxu0
      %v6069 = vadd.f32 0.0, %v6068
      %v6070 = vpop.f32.mrf.mxu0
      %v6071 = vadd.f32 0.0, %v6070
      %6072 = vdwg.mxu0
      %6073 = vmatpush.bf16.msra.mxu0 %v5998
      %6074 = vmatpush.bf16.msra.mxu0 %v5995
      %6075 = vmatpush.bf16.msra.mxu0 %v5992
      %6076 = vmatpush.bf16.msra.mxu0 %v5989
      %6077 = vmatpush.bf16.msra.mxu0 %v5986
      %6078 = vmatpush.bf16.msra.mxu0 %v5983
      %6079 = vmatpush.bf16.msra.mxu0 %v5980
      %6080 = vmatpush.bf16.msra.mxu0 %v5977
      %6081 = vmatmul.bf16.gmra.mxu0 %v5856
      %v6082 = vpop.f32.mrf.mxu0
      %v6083 = vadd.f32 0.0, %v6082
      %v6084 = vpop.f32.mrf.mxu0
      %v6085 = vadd.f32 0.0, %v6084
      %6086 = vmatmul.bf16.gmra.mxu0 %v5857
      %v6087 = vpop.f32.mrf.mxu0
      %v6088 = vadd.f32 0.0, %v6087
      %v6089 = vpop.f32.mrf.mxu0
      %v6090 = vadd.f32 0.0, %v6089
      %6091 = vmatmul.bf16.gmra.mxu0 %v5858
      %v6092 = vpop.f32.mrf.mxu0
      %v6093 = vadd.f32 0.0, %v6092
      %v6094 = vpop.f32.mrf.mxu0
      %v6095 = vadd.f32 0.0, %v6094
      %6096 = vmatmul.bf16.gmra.mxu0 %v5859
      %v6097 = vpop.f32.mrf.mxu0
      %v6098 = vadd.f32 0.0, %v6097
      %v6099 = vpop.f32.mrf.mxu0
      %v6100 = vadd.f32 0.0, %v6099
      %6101 = vmatmul.bf16.gmra.mxu0 %v5860
      %v6102 = vpop.f32.mrf.mxu0
      %v6103 = vadd.f32 0.0, %v6102
      %v6104 = vpop.f32.mrf.mxu0
      %v6105 = vadd.f32 0.0, %v6104
      %6106 = vmatmul.bf16.gmra.mxu0 %v5861
      %v6107 = vpop.f32.mrf.mxu0
      %v6108 = vadd.f32 0.0, %v6107
      %v6109 = vpop.f32.mrf.mxu0
      %v6110 = vadd.f32 0.0, %v6109
      %6111 = vmatmul.bf16.gmra.mxu0 %v5862
      %v6112 = vpop.f32.mrf.mxu0
      %v6113 = vadd.f32 0.0, %v6112
      %v6114 = vpop.f32.mrf.mxu0
      %v6115 = vadd.f32 0.0, %v6114
      %6116 = vmatmul.bf16.gmra.mxu0 %v5863
      %v6117 = vpop.f32.mrf.mxu0
      %v6118 = vadd.f32 0.0, %v6117
      %v6119 = vpop.f32.mrf.mxu0
      %v6120 = vadd.f32 0.0, %v6119
      %6121 = vdwg.mxu0
      %6122 = vmatpush.bf16.msra.mxu0 %v5999
      %6123 = vmatpush.bf16.msra.mxu0 %v5996
      %6124 = vmatpush.bf16.msra.mxu0 %v5993
      %6125 = vmatpush.bf16.msra.mxu0 %v5990
      %6126 = vmatpush.bf16.msra.mxu0 %v5987
      %6127 = vmatpush.bf16.msra.mxu0 %v5984
      %6128 = vmatpush.bf16.msra.mxu0 %v5981
      %6129 = vmatpush.bf16.msra.mxu0 %v5978
      %6130 = vmatmul.bf16.gmra.mxu0 %v5856
      %v6131 = vpop.f32.mrf.mxu0
      %v6132 = vadd.f32 0.0, %v6131
      %v6133 = vpop.f32.mrf.mxu0
      %v6134 = vadd.f32 0.0, %v6133
      %6135 = vmatmul.bf16.gmra.mxu0 %v5857
      %v6136 = vpop.f32.mrf.mxu0
      %v6137 = vadd.f32 0.0, %v6136
      %v6138 = vpop.f32.mrf.mxu0
      %v6139 = vadd.f32 0.0, %v6138
      %6140 = vmatmul.bf16.gmra.mxu0 %v5858
      %v6141 = vpop.f32.mrf.mxu0
      %v6142 = vadd.f32 0.0, %v6141
      %v6143 = vpop.f32.mrf.mxu0
      %v6144 = vadd.f32 0.0, %v6143
      %6145 = vmatmul.bf16.gmra.mxu0 %v5859
      %v6146 = vpop.f32.mrf.mxu0
      %v6147 = vadd.f32 0.0, %v6146
      %v6148 = vpop.f32.mrf.mxu0
      %v6149 = vadd.f32 0.0, %v6148
      %6150 = vmatmul.bf16.gmra.mxu0 %v5860
      %v6151 = vpop.f32.mrf.mxu0
      %v6152 = vadd.f32 0.0, %v6151
      %v6153 = vpop.f32.mrf.mxu0
      %v6154 = vadd.f32 0.0, %v6153
      %6155 = vmatmul.bf16.gmra.mxu0 %v5861
      %v6156 = vpop.f32.mrf.mxu0
      %v6157 = vadd.f32 0.0, %v6156
      %v6158 = vpop.f32.mrf.mxu0
      %v6159 = vadd.f32 0.0, %v6158
      %6160 = vmatmul.bf16.gmra.mxu0 %v5862
      %v6161 = vpop.f32.mrf.mxu0
      %v6162 = vadd.f32 0.0, %v6161
      %v6163 = vpop.f32.mrf.mxu0
      %v6164 = vadd.f32 0.0, %v6163
      %6165 = vmatmul.bf16.gmra.mxu0 %v5863
      %v6166 = vpop.f32.mrf.mxu0
      %v6167 = vadd.f32 0.0, %v6166
      %v6168 = vpop.f32.mrf.mxu0
      %v6169 = vadd.f32 0.0, %v6168
      %6170 = vdwg.mxu0
      %v6171 = vld [vmem:[%s323] sm:$0xff]
      %v6172 = vld [vmem:[%s323 + $0x8] sm:$0xff]
      %v6173 = vld [vmem:[%s323 + $0x10] sm:$0xff]
      %v6174 = vld [vmem:[%s323 + $0x18] sm:$0xff]
      %v6175 = vld [vmem:[%s323 + $0x20] sm:$0xff]
      %v6176 = vld [vmem:[%s323 + $0x28] sm:$0xff]
      %v6177 = vld [vmem:[%s323 + $0x30] sm:$0xff]
      %v6178 = vld [vmem:[%s323 + $0x38] sm:$0xff]
      %v6179 = vld [vmem:[%s323 + $0x40] sm:$0xff]
      %v6180 = vld [vmem:[%s323 + $0x48] sm:$0xff]
      %v6181 = vld [vmem:[%s323 + $0x50] sm:$0xff]
      %v6182 = vld [vmem:[%s323 + $0x58] sm:$0xff]
      %v6183 = vld [vmem:[%s323 + $0x60] sm:$0xff]
      %v6184 = vld [vmem:[%s323 + $0x68] sm:$0xff]
      %v6185 = vld [vmem:[%s323 + $0x70] sm:$0xff]
      %v6186 = vld [vmem:[%s323 + $0x78] sm:$0xff]
      %v6187 = vpack.c.bf16 %v6172, %v6171
      %v6188 = vpack.c.bf16 %v6174, %v6173
      %v6189 = vpack.c.bf16 %v6176, %v6175
      %v6190 = vpack.c.bf16 %v6178, %v6177
      %v6191 = vpack.c.bf16 %v6180, %v6179
      %v6192 = vpack.c.bf16 %v6182, %v6181
      %v6193 = vpack.c.bf16 %v6184, %v6183
      %v6194 = vpack.c.bf16 %v6186, %v6185
      %v6195 = vld [vmem:[%s3] sm:$0xf]
      %v6196 = vld [vmem:[%s3 + $0x4] sm:$0xf]
      %v6197 = vld [vmem:[%s3 + $0x8] sm:$0xf]
      %v6198 = vld [vmem:[%s3 + $0xc] sm:$0xf]
      %v6199 = vld [vmem:[%s3 + $0x10] sm:$0xf]
      %v6200 = vld [vmem:[%s3 + $0x14] sm:$0xf]
      %v6201 = vld [vmem:[%s3 + $0x18] sm:$0xf]
      %v6202 = vld [vmem:[%s3 + $0x1c] sm:$0xf]
      %v6211 = vunpack.c.l.b16 %v6195
      %v6212 = vunpack.c.l.b16 %v6196
      %v6213 = vunpack.c.l.b16 %v6197
      %v6214 = vunpack.c.l.b16 %v6198
      %v6215 = vunpack.c.l.b16 %v6199
      %v6216 = vunpack.c.l.b16 %v6200
      %v6217 = vunpack.c.l.b16 %v6201
      %v6218 = vunpack.c.l.b16 %v6202
      %v6219 = vpack.c.b16 %v6212, %v6211
      %v6220 = vpack.c.b16 %v6214, %v6213
      %v6221 = vpack.c.b16 %v6216, %v6215
      %v6222 = vpack.c.b16 %v6218, %v6217
      %vm6227 = vcmask 523264
      %v6229 = vsel %vm6227, %v6187, 0
      %v6232 = vsel %vm6227, %v6188, 0
      %v6235 = vsel %vm6227, %v6189, 0
      %v6238 = vsel %vm6227, %v6190, 0
      %v6241 = vsel %vm6227, %v6191, 0
      %v6244 = vsel %vm6227, %v6192, 0
      %v6247 = vsel %vm6227, %v6193, 0
      %v6250 = vsel %vm6227, %v6194, 0
      %6252 = vmatpush.bf16.msra.mxu0 0
      %6253 = vmatpush.bf16.msra.mxu0 0
      %6254 = vmatpush.bf16.msra.mxu0 0
      %6255 = vmatpush.bf16.msra.mxu0 0
      %6256 = vmatpush.bf16.msra.mxu0 %v6222
      %6257 = vmatpush.bf16.msra.mxu0 %v6221
      %6258 = vmatpush.bf16.msra.mxu0 %v6220
      %6259 = vmatpush.bf16.msra.mxu0 %v6219
      %6260 = vmatmul.bf16.gmra.mxu0 %v6229
      %v6261 = vpop.f32.mrf.mxu0
      %v6262 = vadd.f32 %v6034, %v6261
      %v6263 = vpop.f32.mrf.mxu0
      %v6264 = vadd.f32 %v6036, %v6263
      %6265 = vmatmul.bf16.gmra.mxu0 %v6232
      %v6266 = vpop.f32.mrf.mxu0
      %v6267 = vadd.f32 %v6039, %v6266
      %v6268 = vpop.f32.mrf.mxu0
      %v6269 = vadd.f32 %v6041, %v6268
      %6270 = vmatmul.bf16.gmra.mxu0 %v6235
      %v6271 = vpop.f32.mrf.mxu0
      %v6272 = vadd.f32 %v6044, %v6271
      %v6273 = vpop.f32.mrf.mxu0
      %v6274 = vadd.f32 %v6046, %v6273
      %6275 = vmatmul.bf16.gmra.mxu0 %v6238
      %v6276 = vpop.f32.mrf.mxu0
      %v6277 = vadd.f32 %v6049, %v6276
      %v6278 = vpop.f32.mrf.mxu0
      %v6279 = vadd.f32 %v6051, %v6278
      %6280 = vmatmul.bf16.gmra.mxu0 %v6241
      %v6281 = vpop.f32.mrf.mxu0
      %v6282 = vadd.f32 %v6054, %v6281
      %v6283 = vpop.f32.mrf.mxu0
      %v6284 = vadd.f32 %v6056, %v6283
      %6285 = vmatmul.bf16.gmra.mxu0 %v6244
      %v6286 = vpop.f32.mrf.mxu0
      %v6287 = vadd.f32 %v6059, %v6286
      %v6288 = vpop.f32.mrf.mxu0
      %v6289 = vadd.f32 %v6061, %v6288
      %6290 = vmatmul.bf16.gmra.mxu0 %v6247
      %v6291 = vpop.f32.mrf.mxu0
      %v6292 = vadd.f32 %v6064, %v6291
      %v6293 = vpop.f32.mrf.mxu0
      %v6294 = vadd.f32 %v6066, %v6293
      %6295 = vmatmul.bf16.gmra.mxu0 %v6250
      %v6296 = vpop.f32.mrf.mxu0
      %v6297 = vadd.f32 %v6069, %v6296
      %v6298 = vpop.f32.mrf.mxu0
      %v6299 = vadd.f32 %v6071, %v6298
      %6300 = vdwg.mxu0
      %v6301 = vld [vmem:[%s7 + $0x1] sm:$0x1]
      %v6302 = vperm.slane %v6301, 0
      %v6303 = vadd.f32 %v6262, %v6302
      %v6304 = vadd.f32 %v6264, %v6302
      %v6305 = vadd.f32 %v6267, %v6302
      %v6306 = vadd.f32 %v6269, %v6302
      %v6307 = vadd.f32 %v6272, %v6302
      %v6308 = vadd.f32 %v6274, %v6302
      %v6309 = vadd.f32 %v6277, %v6302
      %v6310 = vadd.f32 %v6279, %v6302
      %v6311 = vadd.f32 %v6282, %v6302
      %v6312 = vadd.f32 %v6284, %v6302
      %v6313 = vadd.f32 %v6287, %v6302
      %v6314 = vadd.f32 %v6289, %v6302
      %v6315 = vadd.f32 %v6292, %v6302
      %v6316 = vadd.f32 %v6294, %v6302
      %v6317 = vadd.f32 %v6297, %v6302
      %v6318 = vadd.f32 %v6299, %v6302
      %v6319 = vxor.u32 %v6303, 2147483648
      %v6320 = vxor.u32 %v6304, 2147483648
      %v6321 = vxor.u32 %v6305, 2147483648
      %v6322 = vxor.u32 %v6306, 2147483648
      %v6323 = vxor.u32 %v6307, 2147483648
      %v6324 = vxor.u32 %v6308, 2147483648
      %v6325 = vxor.u32 %v6309, 2147483648
      %v6326 = vxor.u32 %v6310, 2147483648
      %v6327 = vxor.u32 %v6311, 2147483648
      %v6328 = vxor.u32 %v6312, 2147483648
      %v6329 = vxor.u32 %v6313, 2147483648
      %v6330 = vxor.u32 %v6314, 2147483648
      %v6331 = vxor.u32 %v6315, 2147483648
      %v6332 = vxor.u32 %v6316, 2147483648
      %v6333 = vxor.u32 %v6317, 2147483648
      %v6334 = vxor.u32 %v6318, 2147483648
      %v6335 = vmul.f32 %v6319, 1.442695
      %v6336 = vpow.pop %v6335
      %v6337 = vmul.f32 %v6320, 1.442695
      %v6338 = vpow.pop %v6337
      %v6339 = vmul.f32 %v6321, 1.442695
      %v6340 = vpow.pop %v6339
      %v6341 = vmul.f32 %v6322, 1.442695
      %v6342 = vpow.pop %v6341
      %v6343 = vmul.f32 %v6323, 1.442695
      %v6344 = vpow.pop %v6343
      %v6345 = vmul.f32 %v6324, 1.442695
      %v6346 = vpow.pop %v6345
      %v6347 = vmul.f32 %v6325, 1.442695
      %v6348 = vpow.pop %v6347
      %v6349 = vmul.f32 %v6326, 1.442695
      %v6350 = vpow.pop %v6349
      %v6351 = vmul.f32 %v6327, 1.442695
      %v6352 = vpow.pop %v6351
      %v6353 = vmul.f32 %v6328, 1.442695
      %v6354 = vpow.pop %v6353
      %v6355 = vmul.f32 %v6329, 1.442695
      %v6356 = vpow.pop %v6355
      %v6357 = vmul.f32 %v6330, 1.442695
      %v6358 = vpow.pop %v6357
      %v6359 = vmul.f32 %v6331, 1.442695
      %v6360 = vpow.pop %v6359
      %v6361 = vmul.f32 %v6332, 1.442695
      %v6362 = vpow.pop %v6361
      %v6363 = vmul.f32 %v6333, 1.442695
      %v6364 = vpow.pop %v6363
      %v6365 = vmul.f32 %v6334, 1.442695
      %v6366 = vpow.pop %v6365
      %v6367 = vadd.f32 %v6336, 1.0
      %v6368 = vadd.f32 %v6338, 1.0
      %v6369 = vadd.f32 %v6340, 1.0
      %v6370 = vadd.f32 %v6342, 1.0
      %v6371 = vadd.f32 %v6344, 1.0
      %v6372 = vadd.f32 %v6346, 1.0
      %v6373 = vadd.f32 %v6348, 1.0
      %v6374 = vadd.f32 %v6350, 1.0
      %v6375 = vadd.f32 %v6352, 1.0
      %v6376 = vadd.f32 %v6354, 1.0
      %v6377 = vadd.f32 %v6356, 1.0
      %v6378 = vadd.f32 %v6358, 1.0
      %v6379 = vadd.f32 %v6360, 1.0
      %v6380 = vadd.f32 %v6362, 1.0
      %v6381 = vadd.f32 %v6364, 1.0
      %v6382 = vadd.f32 %v6366, 1.0
      %v6383 = vrcp.pop %v6367
      %v6384 = vmul.f32 %v6367, %v6383
      %v6385 = vsub.f32 1.0, %v6384
      %v6386 = vmul.f32 %v6383, %v6385
      %v6387 = vadd.f32 %v6383, %v6386
      %vm6388 = vweird.f32 %v6367
      %vm6389 = vweird.f32 %v6383
      %vm6390 = vmor %vm6388, %vm6389
      %v6391 = vsel %vm6390, %v6383, %v6387
      %v6392 = vand.u32 2147483647, %v6367
      %vm6393 = vcmp.eq.f32.partialorder %v6392, 8.507059e+37
      %v6394 = vand.u32 %v6367, 2147483648
      %v6395 = vor.u32 1.1754944e-38, %v6394
      %v6396 = vsel %vm6393, %v6395, %v6391
      %v6397 = vmul.f32 1.0, %v6396
      %v6398 = vrcp.pop %v6368
      %v6399 = vmul.f32 %v6368, %v6398
      %v6400 = vsub.f32 1.0, %v6399
      %v6401 = vmul.f32 %v6398, %v6400
      %v6402 = vadd.f32 %v6398, %v6401
      %vm6403 = vweird.f32 %v6368
      %vm6404 = vweird.f32 %v6398
      %vm6405 = vmor %vm6403, %vm6404
      %v6406 = vsel %vm6405, %v6398, %v6402
      %v6407 = vand.u32 2147483647, %v6368
      %vm6408 = vcmp.eq.f32.partialorder %v6407, 8.507059e+37
      %v6409 = vand.u32 %v6368, 2147483648
      %v6410 = vor.u32 1.1754944e-38, %v6409
      %v6411 = vsel %vm6408, %v6410, %v6406
      %v6412 = vmul.f32 1.0, %v6411
      %v6413 = vrcp.pop %v6369
      %v6414 = vmul.f32 %v6369, %v6413
      %v6415 = vsub.f32 1.0, %v6414
      %v6416 = vmul.f32 %v6413, %v6415
      %v6417 = vadd.f32 %v6413, %v6416
      %vm6418 = vweird.f32 %v6369
      %vm6419 = vweird.f32 %v6413
      %vm6420 = vmor %vm6418, %vm6419
      %v6421 = vsel %vm6420, %v6413, %v6417
      %v6422 = vand.u32 2147483647, %v6369
      %vm6423 = vcmp.eq.f32.partialorder %v6422, 8.507059e+37
      %v6424 = vand.u32 %v6369, 2147483648
      %v6425 = vor.u32 1.1754944e-38, %v6424
      %v6426 = vsel %vm6423, %v6425, %v6421
      %v6427 = vmul.f32 1.0, %v6426
      %v6428 = vrcp.pop %v6370
      %v6429 = vmul.f32 %v6370, %v6428
      %v6430 = vsub.f32 1.0, %v6429
      %v6431 = vmul.f32 %v6428, %v6430
      %v6432 = vadd.f32 %v6428, %v6431
      %vm6433 = vweird.f32 %v6370
      %vm6434 = vweird.f32 %v6428
      %vm6435 = vmor %vm6433, %vm6434
      %v6436 = vsel %vm6435, %v6428, %v6432
      %v6437 = vand.u32 2147483647, %v6370
      %vm6438 = vcmp.eq.f32.partialorder %v6437, 8.507059e+37
      %v6439 = vand.u32 %v6370, 2147483648
      %v6440 = vor.u32 1.1754944e-38, %v6439
      %v6441 = vsel %vm6438, %v6440, %v6436
      %v6442 = vmul.f32 1.0, %v6441
      %v6443 = vrcp.pop %v6371
      %v6444 = vmul.f32 %v6371, %v6443
      %v6445 = vsub.f32 1.0, %v6444
      %v6446 = vmul.f32 %v6443, %v6445
      %v6447 = vadd.f32 %v6443, %v6446
      %vm6448 = vweird.f32 %v6371
      %vm6449 = vweird.f32 %v6443
      %vm6450 = vmor %vm6448, %vm6449
      %v6451 = vsel %vm6450, %v6443, %v6447
      %v6452 = vand.u32 2147483647, %v6371
      %vm6453 = vcmp.eq.f32.partialorder %v6452, 8.507059e+37
      %v6454 = vand.u32 %v6371, 2147483648
      %v6455 = vor.u32 1.1754944e-38, %v6454
      %v6456 = vsel %vm6453, %v6455, %v6451
      %v6457 = vmul.f32 1.0, %v6456
      %v6458 = vrcp.pop %v6372
      %v6459 = vmul.f32 %v6372, %v6458
      %v6460 = vsub.f32 1.0, %v6459
      %v6461 = vmul.f32 %v6458, %v6460
      %v6462 = vadd.f32 %v6458, %v6461
      %vm6463 = vweird.f32 %v6372
      %vm6464 = vweird.f32 %v6458
      %vm6465 = vmor %vm6463, %vm6464
      %v6466 = vsel %vm6465, %v6458, %v6462
      %v6467 = vand.u32 2147483647, %v6372
      %vm6468 = vcmp.eq.f32.partialorder %v6467, 8.507059e+37
      %v6469 = vand.u32 %v6372, 2147483648
      %v6470 = vor.u32 1.1754944e-38, %v6469
      %v6471 = vsel %vm6468, %v6470, %v6466
      %v6472 = vmul.f32 1.0, %v6471
      %v6473 = vrcp.pop %v6373
      %v6474 = vmul.f32 %v6373, %v6473
      %v6475 = vsub.f32 1.0, %v6474
      %v6476 = vmul.f32 %v6473, %v6475
      %v6477 = vadd.f32 %v6473, %v6476
      %vm6478 = vweird.f32 %v6373
      %vm6479 = vweird.f32 %v6473
      %vm6480 = vmor %vm6478, %vm6479
      %v6481 = vsel %vm6480, %v6473, %v6477
      %v6482 = vand.u32 2147483647, %v6373
      %vm6483 = vcmp.eq.f32.partialorder %v6482, 8.507059e+37
      %v6484 = vand.u32 %v6373, 2147483648
      %v6485 = vor.u32 1.1754944e-38, %v6484
      %v6486 = vsel %vm6483, %v6485, %v6481
      %v6487 = vmul.f32 1.0, %v6486
      %v6488 = vrcp.pop %v6374
      %v6489 = vmul.f32 %v6374, %v6488
      %v6490 = vsub.f32 1.0, %v6489
      %v6491 = vmul.f32 %v6488, %v6490
      %v6492 = vadd.f32 %v6488, %v6491
      %vm6493 = vweird.f32 %v6374
      %vm6494 = vweird.f32 %v6488
      %vm6495 = vmor %vm6493, %vm6494
      %v6496 = vsel %vm6495, %v6488, %v6492
      %v6497 = vand.u32 2147483647, %v6374
      %vm6498 = vcmp.eq.f32.partialorder %v6497, 8.507059e+37
      %v6499 = vand.u32 %v6374, 2147483648
      %v6500 = vor.u32 1.1754944e-38, %v6499
      %v6501 = vsel %vm6498, %v6500, %v6496
      %v6502 = vmul.f32 1.0, %v6501
      %v6503 = vrcp.pop %v6375
      %v6504 = vmul.f32 %v6375, %v6503
      %v6505 = vsub.f32 1.0, %v6504
      %v6506 = vmul.f32 %v6503, %v6505
      %v6507 = vadd.f32 %v6503, %v6506
      %vm6508 = vweird.f32 %v6375
      %vm6509 = vweird.f32 %v6503
      %vm6510 = vmor %vm6508, %vm6509
      %v6511 = vsel %vm6510, %v6503, %v6507
      %v6512 = vand.u32 2147483647, %v6375
      %vm6513 = vcmp.eq.f32.partialorder %v6512, 8.507059e+37
      %v6514 = vand.u32 %v6375, 2147483648
      %v6515 = vor.u32 1.1754944e-38, %v6514
      %v6516 = vsel %vm6513, %v6515, %v6511
      %v6517 = vmul.f32 1.0, %v6516
      %v6518 = vrcp.pop %v6376
      %v6519 = vmul.f32 %v6376, %v6518
      %v6520 = vsub.f32 1.0, %v6519
      %v6521 = vmul.f32 %v6518, %v6520
      %v6522 = vadd.f32 %v6518, %v6521
      %vm6523 = vweird.f32 %v6376
      %vm6524 = vweird.f32 %v6518
      %vm6525 = vmor %vm6523, %vm6524
      %v6526 = vsel %vm6525, %v6518, %v6522
      %v6527 = vand.u32 2147483647, %v6376
      %vm6528 = vcmp.eq.f32.partialorder %v6527, 8.507059e+37
      %v6529 = vand.u32 %v6376, 2147483648
      %v6530 = vor.u32 1.1754944e-38, %v6529
      %v6531 = vsel %vm6528, %v6530, %v6526
      %v6532 = vmul.f32 1.0, %v6531
      %v6533 = vrcp.pop %v6377
      %v6534 = vmul.f32 %v6377, %v6533
      %v6535 = vsub.f32 1.0, %v6534
      %v6536 = vmul.f32 %v6533, %v6535
      %v6537 = vadd.f32 %v6533, %v6536
      %vm6538 = vweird.f32 %v6377
      %vm6539 = vweird.f32 %v6533
      %vm6540 = vmor %vm6538, %vm6539
      %v6541 = vsel %vm6540, %v6533, %v6537
      %v6542 = vand.u32 2147483647, %v6377
      %vm6543 = vcmp.eq.f32.partialorder %v6542, 8.507059e+37
      %v6544 = vand.u32 %v6377, 2147483648
      %v6545 = vor.u32 1.1754944e-38, %v6544
      %v6546 = vsel %vm6543, %v6545, %v6541
      %v6547 = vmul.f32 1.0, %v6546
      %v6548 = vrcp.pop %v6378
      %v6549 = vmul.f32 %v6378, %v6548
      %v6550 = vsub.f32 1.0, %v6549
      %v6551 = vmul.f32 %v6548, %v6550
      %v6552 = vadd.f32 %v6548, %v6551
      %vm6553 = vweird.f32 %v6378
      %vm6554 = vweird.f32 %v6548
      %vm6555 = vmor %vm6553, %vm6554
      %v6556 = vsel %vm6555, %v6548, %v6552
      %v6557 = vand.u32 2147483647, %v6378
      %vm6558 = vcmp.eq.f32.partialorder %v6557, 8.507059e+37
      %v6559 = vand.u32 %v6378, 2147483648
      %v6560 = vor.u32 1.1754944e-38, %v6559
      %v6561 = vsel %vm6558, %v6560, %v6556
      %v6562 = vmul.f32 1.0, %v6561
      %v6563 = vrcp.pop %v6379
      %v6564 = vmul.f32 %v6379, %v6563
      %v6565 = vsub.f32 1.0, %v6564
      %v6566 = vmul.f32 %v6563, %v6565
      %v6567 = vadd.f32 %v6563, %v6566
      %vm6568 = vweird.f32 %v6379
      %vm6569 = vweird.f32 %v6563
      %vm6570 = vmor %vm6568, %vm6569
      %v6571 = vsel %vm6570, %v6563, %v6567
      %v6572 = vand.u32 2147483647, %v6379
      %vm6573 = vcmp.eq.f32.partialorder %v6572, 8.507059e+37
      %v6574 = vand.u32 %v6379, 2147483648
      %v6575 = vor.u32 1.1754944e-38, %v6574
      %v6576 = vsel %vm6573, %v6575, %v6571
      %v6577 = vmul.f32 1.0, %v6576
      %v6578 = vrcp.pop %v6380
      %v6579 = vmul.f32 %v6380, %v6578
      %v6580 = vsub.f32 1.0, %v6579
      %v6581 = vmul.f32 %v6578, %v6580
      %v6582 = vadd.f32 %v6578, %v6581
      %vm6583 = vweird.f32 %v6380
      %vm6584 = vweird.f32 %v6578
      %vm6585 = vmor %vm6583, %vm6584
      %v6586 = vsel %vm6585, %v6578, %v6582
      %v6587 = vand.u32 2147483647, %v6380
      %vm6588 = vcmp.eq.f32.partialorder %v6587, 8.507059e+37
      %v6589 = vand.u32 %v6380, 2147483648
      %v6590 = vor.u32 1.1754944e-38, %v6589
      %v6591 = vsel %vm6588, %v6590, %v6586
      %v6592 = vmul.f32 1.0, %v6591
      %v6593 = vrcp.pop %v6381
      %v6594 = vmul.f32 %v6381, %v6593
      %v6595 = vsub.f32 1.0, %v6594
      %v6596 = vmul.f32 %v6593, %v6595
      %v6597 = vadd.f32 %v6593, %v6596
      %vm6598 = vweird.f32 %v6381
      %vm6599 = vweird.f32 %v6593
      %vm6600 = vmor %vm6598, %vm6599
      %v6601 = vsel %vm6600, %v6593, %v6597
      %v6602 = vand.u32 2147483647, %v6381
      %vm6603 = vcmp.eq.f32.partialorder %v6602, 8.507059e+37
      %v6604 = vand.u32 %v6381, 2147483648
      %v6605 = vor.u32 1.1754944e-38, %v6604
      %v6606 = vsel %vm6603, %v6605, %v6601
      %v6607 = vmul.f32 1.0, %v6606
      %v6608 = vrcp.pop %v6382
      %v6609 = vmul.f32 %v6382, %v6608
      %v6610 = vsub.f32 1.0, %v6609
      %v6611 = vmul.f32 %v6608, %v6610
      %v6612 = vadd.f32 %v6608, %v6611
      %vm6613 = vweird.f32 %v6382
      %vm6614 = vweird.f32 %v6608
      %vm6615 = vmor %vm6613, %vm6614
      %v6616 = vsel %vm6615, %v6608, %v6612
      %v6617 = vand.u32 2147483647, %v6382
      %vm6618 = vcmp.eq.f32.partialorder %v6617, 8.507059e+37
      %v6619 = vand.u32 %v6382, 2147483648
      %v6620 = vor.u32 1.1754944e-38, %v6619
      %v6621 = vsel %vm6618, %v6620, %v6616
      %v6622 = vmul.f32 1.0, %v6621
      %v6623 = vmul.f32 %v6303, %v6397
      %v6624 = vmul.f32 %v6304, %v6412
      %v6625 = vmul.f32 %v6305, %v6427
      %v6626 = vmul.f32 %v6306, %v6442
      %v6627 = vmul.f32 %v6307, %v6457
      %v6628 = vmul.f32 %v6308, %v6472
      %v6629 = vmul.f32 %v6309, %v6487
      %v6630 = vmul.f32 %v6310, %v6502
      %v6631 = vmul.f32 %v6311, %v6517
      %v6632 = vmul.f32 %v6312, %v6532
      %v6633 = vmul.f32 %v6313, %v6547
      %v6634 = vmul.f32 %v6314, %v6562
      %v6635 = vmul.f32 %v6315, %v6577
      %v6636 = vmul.f32 %v6316, %v6592
      %v6637 = vmul.f32 %v6317, %v6607
      %v6638 = vmul.f32 %v6318, %v6622
      %v6639 = vpack.c.bf16 %v6624, %v6623
      %v6640 = vpack.c.bf16 %v6626, %v6625
      %v6641 = vpack.c.bf16 %v6628, %v6627
      %v6642 = vpack.c.bf16 %v6630, %v6629
      %v6643 = vpack.c.bf16 %v6632, %v6631
      %v6644 = vpack.c.bf16 %v6634, %v6633
      %v6645 = vpack.c.bf16 %v6636, %v6635
      %v6646 = vpack.c.bf16 %v6638, %v6637
      %v6647 = vld [vmem:[%s4] sm:$0xf]
      %v6648 = vld [vmem:[%s4 + $0x4] sm:$0xf]
      %v6649 = vld [vmem:[%s4 + $0x8] sm:$0xf]
      %v6650 = vld [vmem:[%s4 + $0xc] sm:$0xf]
      %v6651 = vld [vmem:[%s4 + $0x10] sm:$0xf]
      %v6652 = vld [vmem:[%s4 + $0x14] sm:$0xf]
      %v6653 = vld [vmem:[%s4 + $0x18] sm:$0xf]
      %v6654 = vld [vmem:[%s4 + $0x1c] sm:$0xf]
      %v6655 = vld [vmem:[%s4 + $0x20] sm:$0xf]
      %v6656 = vld [vmem:[%s4 + $0x24] sm:$0xf]
      %v6657 = vld [vmem:[%s4 + $0x28] sm:$0xf]
      %v6658 = vld [vmem:[%s4 + $0x2c] sm:$0xf]
      %v6659 = vld [vmem:[%s4 + $0x30] sm:$0xf]
      %v6660 = vld [vmem:[%s4 + $0x34] sm:$0xf]
      %v6661 = vld [vmem:[%s4 + $0x38] sm:$0xf]
      %v6662 = vld [vmem:[%s4 + $0x3c] sm:$0xf]
      %v6679 = vunpack.c.l.b16 %v6647
      %v6680 = vunpack.c.l.b16 %v6648
      %v6681 = vunpack.c.l.b16 %v6649
      %v6682 = vunpack.c.l.b16 %v6650
      %v6683 = vunpack.c.l.b16 %v6651
      %v6684 = vunpack.c.l.b16 %v6652
      %v6685 = vunpack.c.l.b16 %v6653
      %v6686 = vunpack.c.l.b16 %v6654
      %v6687 = vunpack.c.l.b16 %v6655
      %v6688 = vunpack.c.l.b16 %v6656
      %v6689 = vunpack.c.l.b16 %v6657
      %v6690 = vunpack.c.l.b16 %v6658
      %v6691 = vunpack.c.l.b16 %v6659
      %v6692 = vunpack.c.l.b16 %v6660
      %v6693 = vunpack.c.l.b16 %v6661
      %v6694 = vunpack.c.l.b16 %v6662
      %v6695 = vpack.c.b16 %v6680, %v6679
      %v6696 = vpack.c.b16 %v6682, %v6681
      %v6697 = vpack.c.b16 %v6684, %v6683
      %v6698 = vpack.c.b16 %v6686, %v6685
      %v6699 = vpack.c.b16 %v6688, %v6687
      %v6700 = vpack.c.b16 %v6690, %v6689
      %v6701 = vpack.c.b16 %v6692, %v6691
      %v6702 = vpack.c.b16 %v6694, %v6693
      %6711 = vmatpush.bf16.msra.mxu0 %v6702
      %6712 = vmatpush.bf16.msra.mxu0 %v6701
      %6713 = vmatpush.bf16.msra.mxu0 %v6700
      %6714 = vmatpush.bf16.msra.mxu0 %v6699
      %6715 = vmatpush.bf16.msra.mxu0 %v6698
      %6716 = vmatpush.bf16.msra.mxu0 %v6697
      %6717 = vmatpush.bf16.msra.mxu0 %v6696
      %6718 = vmatpush.bf16.msra.mxu0 %v6695
      %6719 = vmatmul.bf16.gmra.mxu0 %v6639
      %v6720 = vpop.f32.mrf.mxu0
      %v6721 = vadd.f32 %v6083, %v6720
      %v6722 = vpop.f32.mrf.mxu0
      %v6723 = vadd.f32 %v6085, %v6722
      %6724 = vmatmul.bf16.gmra.mxu0 %v6640
      %v6725 = vpop.f32.mrf.mxu0
      %v6726 = vadd.f32 %v6088, %v6725
      %v6727 = vpop.f32.mrf.mxu0
      %v6728 = vadd.f32 %v6090, %v6727
      %6729 = vmatmul.bf16.gmra.mxu0 %v6641
      %v6730 = vpop.f32.mrf.mxu0
      %v6731 = vadd.f32 %v6093, %v6730
      %v6732 = vpop.f32.mrf.mxu0
      %v6733 = vadd.f32 %v6095, %v6732
      %6734 = vmatmul.bf16.gmra.mxu0 %v6642
      %v6735 = vpop.f32.mrf.mxu0
      %v6736 = vadd.f32 %v6098, %v6735
      %v6737 = vpop.f32.mrf.mxu0
      %v6738 = vadd.f32 %v6100, %v6737
      %6739 = vmatmul.bf16.gmra.mxu0 %v6643
      %v6740 = vpop.f32.mrf.mxu0
      %v6741 = vadd.f32 %v6103, %v6740
      %v6742 = vpop.f32.mrf.mxu0
      %v6743 = vadd.f32 %v6105, %v6742
      %6744 = vmatmul.bf16.gmra.mxu0 %v6644
      %v6745 = vpop.f32.mrf.mxu0
      %v6746 = vadd.f32 %v6108, %v6745
      %v6747 = vpop.f32.mrf.mxu0
      %v6748 = vadd.f32 %v6110, %v6747
      %6749 = vmatmul.bf16.gmra.mxu0 %v6645
      %v6750 = vpop.f32.mrf.mxu0
      %v6751 = vadd.f32 %v6113, %v6750
      %v6752 = vpop.f32.mrf.mxu0
      %v6753 = vadd.f32 %v6115, %v6752
      %6754 = vmatmul.bf16.gmra.mxu0 %v6646
      %v6755 = vpop.f32.mrf.mxu0
      %v6756 = vadd.f32 %v6118, %v6755
      %v6757 = vpop.f32.mrf.mxu0
      %v6758 = vadd.f32 %v6120, %v6757
      %6759 = vdwg.mxu0
      %v6760 = vld [vmem:[%s7 + $0x2] sm:$0x1]
      %v6761 = vperm.slane %v6760, 0
      %v6762 = vadd.f32 %v6721, %v6761
      %v6763 = vadd.f32 %v6723, %v6761
      %v6764 = vadd.f32 %v6726, %v6761
      %v6765 = vadd.f32 %v6728, %v6761
      %v6766 = vadd.f32 %v6731, %v6761
      %v6767 = vadd.f32 %v6733, %v6761
      %v6768 = vadd.f32 %v6736, %v6761
      %v6769 = vadd.f32 %v6738, %v6761
      %v6770 = vadd.f32 %v6741, %v6761
      %v6771 = vadd.f32 %v6743, %v6761
      %v6772 = vadd.f32 %v6746, %v6761
      %v6773 = vadd.f32 %v6748, %v6761
      %v6774 = vadd.f32 %v6751, %v6761
      %v6775 = vadd.f32 %v6753, %v6761
      %v6776 = vadd.f32 %v6756, %v6761
      %v6777 = vadd.f32 %v6758, %v6761
      %v6778 = vxor.u32 %v6762, 2147483648
      %v6779 = vxor.u32 %v6763, 2147483648
      %v6780 = vxor.u32 %v6764, 2147483648
      %v6781 = vxor.u32 %v6765, 2147483648
      %v6782 = vxor.u32 %v6766, 2147483648
      %v6783 = vxor.u32 %v6767, 2147483648
      %v6784 = vxor.u32 %v6768, 2147483648
      %v6785 = vxor.u32 %v6769, 2147483648
      %v6786 = vxor.u32 %v6770, 2147483648
      %v6787 = vxor.u32 %v6771, 2147483648
      %v6788 = vxor.u32 %v6772, 2147483648
      %v6789 = vxor.u32 %v6773, 2147483648
      %v6790 = vxor.u32 %v6774, 2147483648
      %v6791 = vxor.u32 %v6775, 2147483648
      %v6792 = vxor.u32 %v6776, 2147483648
      %v6793 = vxor.u32 %v6777, 2147483648
      %v6794 = vmul.f32 %v6778, 1.442695
      %v6795 = vpow.pop %v6794
      %v6796 = vmul.f32 %v6779, 1.442695
      %v6797 = vpow.pop %v6796
      %v6798 = vmul.f32 %v6780, 1.442695
      %v6799 = vpow.pop %v6798
      %v6800 = vmul.f32 %v6781, 1.442695
      %v6801 = vpow.pop %v6800
      %v6802 = vmul.f32 %v6782, 1.442695
      %v6803 = vpow.pop %v6802
      %v6804 = vmul.f32 %v6783, 1.442695
      %v6805 = vpow.pop %v6804
      %v6806 = vmul.f32 %v6784, 1.442695
      %v6807 = vpow.pop %v6806
      %v6808 = vmul.f32 %v6785, 1.442695
      %v6809 = vpow.pop %v6808
      %v6810 = vmul.f32 %v6786, 1.442695
      %v6811 = vpow.pop %v6810
      %v6812 = vmul.f32 %v6787, 1.442695
      %v6813 = vpow.pop %v6812
      %v6814 = vmul.f32 %v6788, 1.442695
      %v6815 = vpow.pop %v6814
      %v6816 = vmul.f32 %v6789, 1.442695
      %v6817 = vpow.pop %v6816
      %v6818 = vmul.f32 %v6790, 1.442695
      %v6819 = vpow.pop %v6818
      %v6820 = vmul.f32 %v6791, 1.442695
      %v6821 = vpow.pop %v6820
      %v6822 = vmul.f32 %v6792, 1.442695
      %v6823 = vpow.pop %v6822
      %v6824 = vmul.f32 %v6793, 1.442695
      %v6825 = vpow.pop %v6824
      %v6826 = vadd.f32 %v6795, 1.0
      %v6827 = vadd.f32 %v6797, 1.0
      %v6828 = vadd.f32 %v6799, 1.0
      %v6829 = vadd.f32 %v6801, 1.0
      %v6830 = vadd.f32 %v6803, 1.0
      %v6831 = vadd.f32 %v6805, 1.0
      %v6832 = vadd.f32 %v6807, 1.0
      %v6833 = vadd.f32 %v6809, 1.0
      %v6834 = vadd.f32 %v6811, 1.0
      %v6835 = vadd.f32 %v6813, 1.0
      %v6836 = vadd.f32 %v6815, 1.0
      %v6837 = vadd.f32 %v6817, 1.0
      %v6838 = vadd.f32 %v6819, 1.0
      %v6839 = vadd.f32 %v6821, 1.0
      %v6840 = vadd.f32 %v6823, 1.0
      %v6841 = vadd.f32 %v6825, 1.0
      %v6842 = vrcp.pop %v6826
      %v6843 = vmul.f32 %v6826, %v6842
      %v6844 = vsub.f32 1.0, %v6843
      %v6845 = vmul.f32 %v6842, %v6844
      %v6846 = vadd.f32 %v6842, %v6845
      %vm6847 = vweird.f32 %v6826
      %vm6848 = vweird.f32 %v6842
      %vm6849 = vmor %vm6847, %vm6848
      %v6850 = vsel %vm6849, %v6842, %v6846
      %v6851 = vand.u32 2147483647, %v6826
      %vm6852 = vcmp.eq.f32.partialorder %v6851, 8.507059e+37
      %v6853 = vand.u32 %v6826, 2147483648
      %v6854 = vor.u32 1.1754944e-38, %v6853
      %v6855 = vsel %vm6852, %v6854, %v6850
      %v6856 = vmul.f32 1.0, %v6855
      %v6857 = vrcp.pop %v6827
      %v6858 = vmul.f32 %v6827, %v6857
      %v6859 = vsub.f32 1.0, %v6858
      %v6860 = vmul.f32 %v6857, %v6859
      %v6861 = vadd.f32 %v6857, %v6860
      %vm6862 = vweird.f32 %v6827
      %vm6863 = vweird.f32 %v6857
      %vm6864 = vmor %vm6862, %vm6863
      %v6865 = vsel %vm6864, %v6857, %v6861
      %v6866 = vand.u32 2147483647, %v6827
      %vm6867 = vcmp.eq.f32.partialorder %v6866, 8.507059e+37
      %v6868 = vand.u32 %v6827, 2147483648
      %v6869 = vor.u32 1.1754944e-38, %v6868
      %v6870 = vsel %vm6867, %v6869, %v6865
      %v6871 = vmul.f32 1.0, %v6870
      %v6872 = vrcp.pop %v6828
      %v6873 = vmul.f32 %v6828, %v6872
      %v6874 = vsub.f32 1.0, %v6873
      %v6875 = vmul.f32 %v6872, %v6874
      %v6876 = vadd.f32 %v6872, %v6875
      %vm6877 = vweird.f32 %v6828
      %vm6878 = vweird.f32 %v6872
      %vm6879 = vmor %vm6877, %vm6878
      %v6880 = vsel %vm6879, %v6872, %v6876
      %v6881 = vand.u32 2147483647, %v6828
      %vm6882 = vcmp.eq.f32.partialorder %v6881, 8.507059e+37
      %v6883 = vand.u32 %v6828, 2147483648
      %v6884 = vor.u32 1.1754944e-38, %v6883
      %v6885 = vsel %vm6882, %v6884, %v6880
      %v6886 = vmul.f32 1.0, %v6885
      %v6887 = vrcp.pop %v6829
      %v6888 = vmul.f32 %v6829, %v6887
      %v6889 = vsub.f32 1.0, %v6888
      %v6890 = vmul.f32 %v6887, %v6889
      %v6891 = vadd.f32 %v6887, %v6890
      %vm6892 = vweird.f32 %v6829
      %vm6893 = vweird.f32 %v6887
      %vm6894 = vmor %vm6892, %vm6893
      %v6895 = vsel %vm6894, %v6887, %v6891
      %v6896 = vand.u32 2147483647, %v6829
      %vm6897 = vcmp.eq.f32.partialorder %v6896, 8.507059e+37
      %v6898 = vand.u32 %v6829, 2147483648
      %v6899 = vor.u32 1.1754944e-38, %v6898
      %v6900 = vsel %vm6897, %v6899, %v6895
      %v6901 = vmul.f32 1.0, %v6900
      %v6902 = vrcp.pop %v6830
      %v6903 = vmul.f32 %v6830, %v6902
      %v6904 = vsub.f32 1.0, %v6903
      %v6905 = vmul.f32 %v6902, %v6904
      %v6906 = vadd.f32 %v6902, %v6905
      %vm6907 = vweird.f32 %v6830
      %vm6908 = vweird.f32 %v6902
      %vm6909 = vmor %vm6907, %vm6908
      %v6910 = vsel %vm6909, %v6902, %v6906
      %v6911 = vand.u32 2147483647, %v6830
      %vm6912 = vcmp.eq.f32.partialorder %v6911, 8.507059e+37
      %v6913 = vand.u32 %v6830, 2147483648
      %v6914 = vor.u32 1.1754944e-38, %v6913
      %v6915 = vsel %vm6912, %v6914, %v6910
      %v6916 = vmul.f32 1.0, %v6915
      %v6917 = vrcp.pop %v6831
      %v6918 = vmul.f32 %v6831, %v6917
      %v6919 = vsub.f32 1.0, %v6918
      %v6920 = vmul.f32 %v6917, %v6919
      %v6921 = vadd.f32 %v6917, %v6920
      %vm6922 = vweird.f32 %v6831
      %vm6923 = vweird.f32 %v6917
      %vm6924 = vmor %vm6922, %vm6923
      %v6925 = vsel %vm6924, %v6917, %v6921
      %v6926 = vand.u32 2147483647, %v6831
      %vm6927 = vcmp.eq.f32.partialorder %v6926, 8.507059e+37
      %v6928 = vand.u32 %v6831, 2147483648
      %v6929 = vor.u32 1.1754944e-38, %v6928
      %v6930 = vsel %vm6927, %v6929, %v6925
      %v6931 = vmul.f32 1.0, %v6930
      %v6932 = vrcp.pop %v6832
      %v6933 = vmul.f32 %v6832, %v6932
      %v6934 = vsub.f32 1.0, %v6933
      %v6935 = vmul.f32 %v6932, %v6934
      %v6936 = vadd.f32 %v6932, %v6935
      %vm6937 = vweird.f32 %v6832
      %vm6938 = vweird.f32 %v6932
      %vm6939 = vmor %vm6937, %vm6938
      %v6940 = vsel %vm6939, %v6932, %v6936
      %v6941 = vand.u32 2147483647, %v6832
      %vm6942 = vcmp.eq.f32.partialorder %v6941, 8.507059e+37
      %v6943 = vand.u32 %v6832, 2147483648
      %v6944 = vor.u32 1.1754944e-38, %v6943
      %v6945 = vsel %vm6942, %v6944, %v6940
      %v6946 = vmul.f32 1.0, %v6945
      %v6947 = vrcp.pop %v6833
      %v6948 = vmul.f32 %v6833, %v6947
      %v6949 = vsub.f32 1.0, %v6948
      %v6950 = vmul.f32 %v6947, %v6949
      %v6951 = vadd.f32 %v6947, %v6950
      %vm6952 = vweird.f32 %v6833
      %vm6953 = vweird.f32 %v6947
      %vm6954 = vmor %vm6952, %vm6953
      %v6955 = vsel %vm6954, %v6947, %v6951
      %v6956 = vand.u32 2147483647, %v6833
      %vm6957 = vcmp.eq.f32.partialorder %v6956, 8.507059e+37
      %v6958 = vand.u32 %v6833, 2147483648
      %v6959 = vor.u32 1.1754944e-38, %v6958
      %v6960 = vsel %vm6957, %v6959, %v6955
      %v6961 = vmul.f32 1.0, %v6960
      %v6962 = vrcp.pop %v6834
      %v6963 = vmul.f32 %v6834, %v6962
      %v6964 = vsub.f32 1.0, %v6963
      %v6965 = vmul.f32 %v6962, %v6964
      %v6966 = vadd.f32 %v6962, %v6965
      %vm6967 = vweird.f32 %v6834
      %vm6968 = vweird.f32 %v6962
      %vm6969 = vmor %vm6967, %vm6968
      %v6970 = vsel %vm6969, %v6962, %v6966
      %v6971 = vand.u32 2147483647, %v6834
      %vm6972 = vcmp.eq.f32.partialorder %v6971, 8.507059e+37
      %v6973 = vand.u32 %v6834, 2147483648
      %v6974 = vor.u32 1.1754944e-38, %v6973
      %v6975 = vsel %vm6972, %v6974, %v6970
      %v6976 = vmul.f32 1.0, %v6975
      %v6977 = vrcp.pop %v6835
      %v6978 = vmul.f32 %v6835, %v6977
      %v6979 = vsub.f32 1.0, %v6978
      %v6980 = vmul.f32 %v6977, %v6979
      %v6981 = vadd.f32 %v6977, %v6980
      %vm6982 = vweird.f32 %v6835
      %vm6983 = vweird.f32 %v6977
      %vm6984 = vmor %vm6982, %vm6983
      %v6985 = vsel %vm6984, %v6977, %v6981
      %v6986 = vand.u32 2147483647, %v6835
      %vm6987 = vcmp.eq.f32.partialorder %v6986, 8.507059e+37
      %v6988 = vand.u32 %v6835, 2147483648
      %v6989 = vor.u32 1.1754944e-38, %v6988
      %v6990 = vsel %vm6987, %v6989, %v6985
      %v6991 = vmul.f32 1.0, %v6990
      %v6992 = vrcp.pop %v6836
      %v6993 = vmul.f32 %v6836, %v6992
      %v6994 = vsub.f32 1.0, %v6993
      %v6995 = vmul.f32 %v6992, %v6994
      %v6996 = vadd.f32 %v6992, %v6995
      %vm6997 = vweird.f32 %v6836
      %vm6998 = vweird.f32 %v6992
      %vm6999 = vmor %vm6997, %vm6998
      %v7000 = vsel %vm6999, %v6992, %v6996
      %v7001 = vand.u32 2147483647, %v6836
      %vm7002 = vcmp.eq.f32.partialorder %v7001, 8.507059e+37
      %v7003 = vand.u32 %v6836, 2147483648
      %v7004 = vor.u32 1.1754944e-38, %v7003
      %v7005 = vsel %vm7002, %v7004, %v7000
      %v7006 = vmul.f32 1.0, %v7005
      %v7007 = vrcp.pop %v6837
      %v7008 = vmul.f32 %v6837, %v7007
      %v7009 = vsub.f32 1.0, %v7008
      %v7010 = vmul.f32 %v7007, %v7009
      %v7011 = vadd.f32 %v7007, %v7010
      %vm7012 = vweird.f32 %v6837
      %vm7013 = vweird.f32 %v7007
      %vm7014 = vmor %vm7012, %vm7013
      %v7015 = vsel %vm7014, %v7007, %v7011
      %v7016 = vand.u32 2147483647, %v6837
      %vm7017 = vcmp.eq.f32.partialorder %v7016, 8.507059e+37
      %v7018 = vand.u32 %v6837, 2147483648
      %v7019 = vor.u32 1.1754944e-38, %v7018
      %v7020 = vsel %vm7017, %v7019, %v7015
      %v7021 = vmul.f32 1.0, %v7020
      %v7022 = vrcp.pop %v6838
      %v7023 = vmul.f32 %v6838, %v7022
      %v7024 = vsub.f32 1.0, %v7023
      %v7025 = vmul.f32 %v7022, %v7024
      %v7026 = vadd.f32 %v7022, %v7025
      %vm7027 = vweird.f32 %v6838
      %vm7028 = vweird.f32 %v7022
      %vm7029 = vmor %vm7027, %vm7028
      %v7030 = vsel %vm7029, %v7022, %v7026
      %v7031 = vand.u32 2147483647, %v6838
      %vm7032 = vcmp.eq.f32.partialorder %v7031, 8.507059e+37
      %v7033 = vand.u32 %v6838, 2147483648
      %v7034 = vor.u32 1.1754944e-38, %v7033
      %v7035 = vsel %vm7032, %v7034, %v7030
      %v7036 = vmul.f32 1.0, %v7035
      %v7037 = vrcp.pop %v6839
      %v7038 = vmul.f32 %v6839, %v7037
      %v7039 = vsub.f32 1.0, %v7038
      %v7040 = vmul.f32 %v7037, %v7039
      %v7041 = vadd.f32 %v7037, %v7040
      %vm7042 = vweird.f32 %v6839
      %vm7043 = vweird.f32 %v7037
      %vm7044 = vmor %vm7042, %vm7043
      %v7045 = vsel %vm7044, %v7037, %v7041
      %v7046 = vand.u32 2147483647, %v6839
      %vm7047 = vcmp.eq.f32.partialorder %v7046, 8.507059e+37
      %v7048 = vand.u32 %v6839, 2147483648
      %v7049 = vor.u32 1.1754944e-38, %v7048
      %v7050 = vsel %vm7047, %v7049, %v7045
      %v7051 = vmul.f32 1.0, %v7050
      %v7052 = vrcp.pop %v6840
      %v7053 = vmul.f32 %v6840, %v7052
      %v7054 = vsub.f32 1.0, %v7053
      %v7055 = vmul.f32 %v7052, %v7054
      %v7056 = vadd.f32 %v7052, %v7055
      %vm7057 = vweird.f32 %v6840
      %vm7058 = vweird.f32 %v7052
      %vm7059 = vmor %vm7057, %vm7058
      %v7060 = vsel %vm7059, %v7052, %v7056
      %v7061 = vand.u32 2147483647, %v6840
      %vm7062 = vcmp.eq.f32.partialorder %v7061, 8.507059e+37
      %v7063 = vand.u32 %v6840, 2147483648
      %v7064 = vor.u32 1.1754944e-38, %v7063
      %v7065 = vsel %vm7062, %v7064, %v7060
      %v7066 = vmul.f32 1.0, %v7065
      %v7067 = vrcp.pop %v6841
      %v7068 = vmul.f32 %v6841, %v7067
      %v7069 = vsub.f32 1.0, %v7068
      %v7070 = vmul.f32 %v7067, %v7069
      %v7071 = vadd.f32 %v7067, %v7070
      %vm7072 = vweird.f32 %v6841
      %vm7073 = vweird.f32 %v7067
      %vm7074 = vmor %vm7072, %vm7073
      %v7075 = vsel %vm7074, %v7067, %v7071
      %v7076 = vand.u32 2147483647, %v6841
      %vm7077 = vcmp.eq.f32.partialorder %v7076, 8.507059e+37
      %v7078 = vand.u32 %v6841, 2147483648
      %v7079 = vor.u32 1.1754944e-38, %v7078
      %v7080 = vsel %vm7077, %v7079, %v7075
      %v7081 = vmul.f32 1.0, %v7080
      %v7082 = vmul.f32 %v6762, %v6856
      %v7083 = vmul.f32 %v6763, %v6871
      %v7084 = vmul.f32 %v6764, %v6886
      %v7085 = vmul.f32 %v6765, %v6901
      %v7086 = vmul.f32 %v6766, %v6916
      %v7087 = vmul.f32 %v6767, %v6931
      %v7088 = vmul.f32 %v6768, %v6946
      %v7089 = vmul.f32 %v6769, %v6961
      %v7090 = vmul.f32 %v6770, %v6976
      %v7091 = vmul.f32 %v6771, %v6991
      %v7092 = vmul.f32 %v6772, %v7006
      %v7093 = vmul.f32 %v6773, %v7021
      %v7094 = vmul.f32 %v6774, %v7036
      %v7095 = vmul.f32 %v6775, %v7051
      %v7096 = vmul.f32 %v6776, %v7066
      %v7097 = vmul.f32 %v6777, %v7081
      %v7098 = vpack.c.bf16 %v7083, %v7082
      %v7099 = vpack.c.bf16 %v7085, %v7084
      %v7100 = vpack.c.bf16 %v7087, %v7086
      %v7101 = vpack.c.bf16 %v7089, %v7088
      %v7102 = vpack.c.bf16 %v7091, %v7090
      %v7103 = vpack.c.bf16 %v7093, %v7092
      %v7104 = vpack.c.bf16 %v7095, %v7094
      %v7105 = vpack.c.bf16 %v7097, %v7096
      %s7106 = scalar_lea.vmem %s4, 64
      %v7107 = vld [vmem:[%s7106] sm:$0xf]
      %v7108 = vld [vmem:[%s7106 + $0x4] sm:$0xf]
      %v7109 = vld [vmem:[%s7106 + $0x8] sm:$0xf]
      %v7110 = vld [vmem:[%s7106 + $0xc] sm:$0xf]
      %v7111 = vld [vmem:[%s7106 + $0x10] sm:$0xf]
      %v7112 = vld [vmem:[%s7106 + $0x14] sm:$0xf]
      %v7113 = vld [vmem:[%s7106 + $0x18] sm:$0xf]
      %v7114 = vld [vmem:[%s7106 + $0x1c] sm:$0xf]
      %v7115 = vld [vmem:[%s7106 + $0x20] sm:$0xf]
      %v7116 = vld [vmem:[%s7106 + $0x24] sm:$0xf]
      %v7117 = vld [vmem:[%s7106 + $0x28] sm:$0xf]
      %v7118 = vld [vmem:[%s7106 + $0x2c] sm:$0xf]
      %v7119 = vld [vmem:[%s7106 + $0x30] sm:$0xf]
      %v7120 = vld [vmem:[%s7106 + $0x34] sm:$0xf]
      %v7121 = vld [vmem:[%s7106 + $0x38] sm:$0xf]
      %v7122 = vld [vmem:[%s7106 + $0x3c] sm:$0xf]
      %v7139 = vunpack.c.l.b16 %v7107
      %v7140 = vunpack.c.l.b16 %v7108
      %v7141 = vunpack.c.l.b16 %v7109
      %v7142 = vunpack.c.l.b16 %v7110
      %v7143 = vunpack.c.l.b16 %v7111
      %v7144 = vunpack.c.l.b16 %v7112
      %v7145 = vunpack.c.l.b16 %v7113
      %v7146 = vunpack.c.l.b16 %v7114
      %v7147 = vunpack.c.l.b16 %v7115
      %v7148 = vunpack.c.l.b16 %v7116
      %v7149 = vunpack.c.l.b16 %v7117
      %v7150 = vunpack.c.l.b16 %v7118
      %v7151 = vunpack.c.l.b16 %v7119
      %v7152 = vunpack.c.l.b16 %v7120
      %v7153 = vunpack.c.l.b16 %v7121
      %v7154 = vunpack.c.l.b16 %v7122
      %v7155 = vpack.c.b16 %v7140, %v7139
      %v7156 = vpack.c.b16 %v7142, %v7141
      %v7157 = vpack.c.b16 %v7144, %v7143
      %v7158 = vpack.c.b16 %v7146, %v7145
      %v7159 = vpack.c.b16 %v7148, %v7147
      %v7160 = vpack.c.b16 %v7150, %v7149
      %v7161 = vpack.c.b16 %v7152, %v7151
      %v7162 = vpack.c.b16 %v7154, %v7153
      %7171 = vmatpush.bf16.msra.mxu0 %v7162
      %7172 = vmatpush.bf16.msra.mxu0 %v7161
      %7173 = vmatpush.bf16.msra.mxu0 %v7160
      %7174 = vmatpush.bf16.msra.mxu0 %v7159
      %7175 = vmatpush.bf16.msra.mxu0 %v7158
      %7176 = vmatpush.bf16.msra.mxu0 %v7157
      %7177 = vmatpush.bf16.msra.mxu0 %v7156
      %7178 = vmatpush.bf16.msra.mxu0 %v7155
      %7179 = vmatmul.bf16.gmra.mxu0 %v7098
      %v7180 = vpop.f32.mrf.mxu0
      %v7181 = vadd.f32 %v6132, %v7180
      %v7182 = vpop.f32.mrf.mxu0
      %v7183 = vadd.f32 %v6134, %v7182
      %7184 = vmatmul.bf16.gmra.mxu0 %v7099
      %v7185 = vpop.f32.mrf.mxu0
      %v7186 = vadd.f32 %v6137, %v7185
      %v7187 = vpop.f32.mrf.mxu0
      %v7188 = vadd.f32 %v6139, %v7187
      %7189 = vmatmul.bf16.gmra.mxu0 %v7100
      %v7190 = vpop.f32.mrf.mxu0
      %v7191 = vadd.f32 %v6142, %v7190
      %v7192 = vpop.f32.mrf.mxu0
      %v7193 = vadd.f32 %v6144, %v7192
      %7194 = vmatmul.bf16.gmra.mxu0 %v7101
      %v7195 = vpop.f32.mrf.mxu0
      %v7196 = vadd.f32 %v6147, %v7195
      %v7197 = vpop.f32.mrf.mxu0
      %v7198 = vadd.f32 %v6149, %v7197
      %7199 = vmatmul.bf16.gmra.mxu0 %v7102
      %v7200 = vpop.f32.mrf.mxu0
      %v7201 = vadd.f32 %v6152, %v7200
      %v7202 = vpop.f32.mrf.mxu0
      %v7203 = vadd.f32 %v6154, %v7202
      %7204 = vmatmul.bf16.gmra.mxu0 %v7103
      %v7205 = vpop.f32.mrf.mxu0
      %v7206 = vadd.f32 %v6157, %v7205
      %v7207 = vpop.f32.mrf.mxu0
      %v7208 = vadd.f32 %v6159, %v7207
      %7209 = vmatmul.bf16.gmra.mxu0 %v7104
      %v7210 = vpop.f32.mrf.mxu0
      %v7211 = vadd.f32 %v6162, %v7210
      %v7212 = vpop.f32.mrf.mxu0
      %v7213 = vadd.f32 %v6164, %v7212
      %7214 = vmatmul.bf16.gmra.mxu0 %v7105
      %v7215 = vpop.f32.mrf.mxu0
      %v7216 = vadd.f32 %v6167, %v7215
      %v7217 = vpop.f32.mrf.mxu0
      %v7218 = vadd.f32 %v6169, %v7217
      %7219 = vdwg.mxu0
      %v7220 = vld [vmem:[%s7 + $0x3] sm:$0x1]
      %v7221 = vperm.slane %v7220, 0
      %v7222 = vadd.f32 %v7181, %v7221
      %v7223 = vadd.f32 %v7183, %v7221
      %v7224 = vadd.f32 %v7186, %v7221
      %v7225 = vadd.f32 %v7188, %v7221
      %v7226 = vadd.f32 %v7191, %v7221
      %v7227 = vadd.f32 %v7193, %v7221
      %v7228 = vadd.f32 %v7196, %v7221
      %v7229 = vadd.f32 %v7198, %v7221
      %v7230 = vadd.f32 %v7201, %v7221
      %v7231 = vadd.f32 %v7203, %v7221
      %v7232 = vadd.f32 %v7206, %v7221
      %v7233 = vadd.f32 %v7208, %v7221
      %v7234 = vadd.f32 %v7211, %v7221
      %v7235 = vadd.f32 %v7213, %v7221
      %v7236 = vadd.f32 %v7216, %v7221
      %v7237 = vadd.f32 %v7218, %v7221
      %v7238 = vxor.u32 %v7222, 2147483648
      %v7239 = vxor.u32 %v7223, 2147483648
      %v7240 = vxor.u32 %v7224, 2147483648
      %v7241 = vxor.u32 %v7225, 2147483648
      %v7242 = vxor.u32 %v7226, 2147483648
      %v7243 = vxor.u32 %v7227, 2147483648
      %v7244 = vxor.u32 %v7228, 2147483648
      %v7245 = vxor.u32 %v7229, 2147483648
      %v7246 = vxor.u32 %v7230, 2147483648
      %v7247 = vxor.u32 %v7231, 2147483648
      %v7248 = vxor.u32 %v7232, 2147483648
      %v7249 = vxor.u32 %v7233, 2147483648
      %v7250 = vxor.u32 %v7234, 2147483648
      %v7251 = vxor.u32 %v7235, 2147483648
      %v7252 = vxor.u32 %v7236, 2147483648
      %v7253 = vxor.u32 %v7237, 2147483648
      %v7254 = vmul.f32 %v7238, 1.442695
      %v7255 = vpow.pop %v7254
      %v7256 = vmul.f32 %v7239, 1.442695
      %v7257 = vpow.pop %v7256
      %v7258 = vmul.f32 %v7240, 1.442695
      %v7259 = vpow.pop %v7258
      %v7260 = vmul.f32 %v7241, 1.442695
      %v7261 = vpow.pop %v7260
      %v7262 = vmul.f32 %v7242, 1.442695
      %v7263 = vpow.pop %v7262
      %v7264 = vmul.f32 %v7243, 1.442695
      %v7265 = vpow.pop %v7264
      %v7266 = vmul.f32 %v7244, 1.442695
      %v7267 = vpow.pop %v7266
      %v7268 = vmul.f32 %v7245, 1.442695
      %v7269 = vpow.pop %v7268
      %v7270 = vmul.f32 %v7246, 1.442695
      %v7271 = vpow.pop %v7270
      %v7272 = vmul.f32 %v7247, 1.442695
      %v7273 = vpow.pop %v7272
      %v7274 = vmul.f32 %v7248, 1.442695
      %v7275 = vpow.pop %v7274
      %v7276 = vmul.f32 %v7249, 1.442695
      %v7277 = vpow.pop %v7276
      %v7278 = vmul.f32 %v7250, 1.442695
      %v7279 = vpow.pop %v7278
      %v7280 = vmul.f32 %v7251, 1.442695
      %v7281 = vpow.pop %v7280
      %v7282 = vmul.f32 %v7252, 1.442695
      %v7283 = vpow.pop %v7282
      %v7284 = vmul.f32 %v7253, 1.442695
      %v7285 = vpow.pop %v7284
      %v7286 = vadd.f32 %v7255, 1.0
      %v7287 = vadd.f32 %v7257, 1.0
      %v7288 = vadd.f32 %v7259, 1.0
      %v7289 = vadd.f32 %v7261, 1.0
      %v7290 = vadd.f32 %v7263, 1.0
      %v7291 = vadd.f32 %v7265, 1.0
      %v7292 = vadd.f32 %v7267, 1.0
      %v7293 = vadd.f32 %v7269, 1.0
      %v7294 = vadd.f32 %v7271, 1.0
      %v7295 = vadd.f32 %v7273, 1.0
      %v7296 = vadd.f32 %v7275, 1.0
      %v7297 = vadd.f32 %v7277, 1.0
      %v7298 = vadd.f32 %v7279, 1.0
      %v7299 = vadd.f32 %v7281, 1.0
      %v7300 = vadd.f32 %v7283, 1.0
      %v7301 = vadd.f32 %v7285, 1.0
      %v7302 = vrcp.pop %v7286
      %v7303 = vmul.f32 %v7286, %v7302
      %v7304 = vsub.f32 1.0, %v7303
      %v7305 = vmul.f32 %v7302, %v7304
      %v7306 = vadd.f32 %v7302, %v7305
      %vm7307 = vweird.f32 %v7286
      %vm7308 = vweird.f32 %v7302
      %vm7309 = vmor %vm7307, %vm7308
      %v7310 = vsel %vm7309, %v7302, %v7306
      %v7311 = vand.u32 2147483647, %v7286
      %vm7312 = vcmp.eq.f32.partialorder %v7311, 8.507059e+37
      %v7313 = vand.u32 %v7286, 2147483648
      %v7314 = vor.u32 1.1754944e-38, %v7313
      %v7315 = vsel %vm7312, %v7314, %v7310
      %v7316 = vmul.f32 1.0, %v7315
      %v7317 = vrcp.pop %v7287
      %v7318 = vmul.f32 %v7287, %v7317
      %v7319 = vsub.f32 1.0, %v7318
      %v7320 = vmul.f32 %v7317, %v7319
      %v7321 = vadd.f32 %v7317, %v7320
      %vm7322 = vweird.f32 %v7287
      %vm7323 = vweird.f32 %v7317
      %vm7324 = vmor %vm7322, %vm7323
      %v7325 = vsel %vm7324, %v7317, %v7321
      %v7326 = vand.u32 2147483647, %v7287
      %vm7327 = vcmp.eq.f32.partialorder %v7326, 8.507059e+37
      %v7328 = vand.u32 %v7287, 2147483648
      %v7329 = vor.u32 1.1754944e-38, %v7328
      %v7330 = vsel %vm7327, %v7329, %v7325
      %v7331 = vmul.f32 1.0, %v7330
      %v7332 = vrcp.pop %v7288
      %v7333 = vmul.f32 %v7288, %v7332
      %v7334 = vsub.f32 1.0, %v7333
      %v7335 = vmul.f32 %v7332, %v7334
      %v7336 = vadd.f32 %v7332, %v7335
      %vm7337 = vweird.f32 %v7288
      %vm7338 = vweird.f32 %v7332
      %vm7339 = vmor %vm7337, %vm7338
      %v7340 = vsel %vm7339, %v7332, %v7336
      %v7341 = vand.u32 2147483647, %v7288
      %vm7342 = vcmp.eq.f32.partialorder %v7341, 8.507059e+37
      %v7343 = vand.u32 %v7288, 2147483648
      %v7344 = vor.u32 1.1754944e-38, %v7343
      %v7345 = vsel %vm7342, %v7344, %v7340
      %v7346 = vmul.f32 1.0, %v7345
      %v7347 = vrcp.pop %v7289
      %v7348 = vmul.f32 %v7289, %v7347
      %v7349 = vsub.f32 1.0, %v7348
      %v7350 = vmul.f32 %v7347, %v7349
      %v7351 = vadd.f32 %v7347, %v7350
      %vm7352 = vweird.f32 %v7289
      %vm7353 = vweird.f32 %v7347
      %vm7354 = vmor %vm7352, %vm7353
      %v7355 = vsel %vm7354, %v7347, %v7351
      %v7356 = vand.u32 2147483647, %v7289
      %vm7357 = vcmp.eq.f32.partialorder %v7356, 8.507059e+37
      %v7358 = vand.u32 %v7289, 2147483648
      %v7359 = vor.u32 1.1754944e-38, %v7358
      %v7360 = vsel %vm7357, %v7359, %v7355
      %v7361 = vmul.f32 1.0, %v7360
      %v7362 = vrcp.pop %v7290
      %v7363 = vmul.f32 %v7290, %v7362
      %v7364 = vsub.f32 1.0, %v7363
      %v7365 = vmul.f32 %v7362, %v7364
      %v7366 = vadd.f32 %v7362, %v7365
      %vm7367 = vweird.f32 %v7290
      %vm7368 = vweird.f32 %v7362
      %vm7369 = vmor %vm7367, %vm7368
      %v7370 = vsel %vm7369, %v7362, %v7366
      %v7371 = vand.u32 2147483647, %v7290
      %vm7372 = vcmp.eq.f32.partialorder %v7371, 8.507059e+37
      %v7373 = vand.u32 %v7290, 2147483648
      %v7374 = vor.u32 1.1754944e-38, %v7373
      %v7375 = vsel %vm7372, %v7374, %v7370
      %v7376 = vmul.f32 1.0, %v7375
      %v7377 = vrcp.pop %v7291
      %v7378 = vmul.f32 %v7291, %v7377
      %v7379 = vsub.f32 1.0, %v7378
      %v7380 = vmul.f32 %v7377, %v7379
      %v7381 = vadd.f32 %v7377, %v7380
      %vm7382 = vweird.f32 %v7291
      %vm7383 = vweird.f32 %v7377
      %vm7384 = vmor %vm7382, %vm7383
      %v7385 = vsel %vm7384, %v7377, %v7381
      %v7386 = vand.u32 2147483647, %v7291
      %vm7387 = vcmp.eq.f32.partialorder %v7386, 8.507059e+37
      %v7388 = vand.u32 %v7291, 2147483648
      %v7389 = vor.u32 1.1754944e-38, %v7388
      %v7390 = vsel %vm7387, %v7389, %v7385
      %v7391 = vmul.f32 1.0, %v7390
      %v7392 = vrcp.pop %v7292
      %v7393 = vmul.f32 %v7292, %v7392
      %v7394 = vsub.f32 1.0, %v7393
      %v7395 = vmul.f32 %v7392, %v7394
      %v7396 = vadd.f32 %v7392, %v7395
      %vm7397 = vweird.f32 %v7292
      %vm7398 = vweird.f32 %v7392
      %vm7399 = vmor %vm7397, %vm7398
      %v7400 = vsel %vm7399, %v7392, %v7396
      %v7401 = vand.u32 2147483647, %v7292
      %vm7402 = vcmp.eq.f32.partialorder %v7401, 8.507059e+37
      %v7403 = vand.u32 %v7292, 2147483648
      %v7404 = vor.u32 1.1754944e-38, %v7403
      %v7405 = vsel %vm7402, %v7404, %v7400
      %v7406 = vmul.f32 1.0, %v7405
      %v7407 = vrcp.pop %v7293
      %v7408 = vmul.f32 %v7293, %v7407
      %v7409 = vsub.f32 1.0, %v7408
      %v7410 = vmul.f32 %v7407, %v7409
      %v7411 = vadd.f32 %v7407, %v7410
      %vm7412 = vweird.f32 %v7293
      %vm7413 = vweird.f32 %v7407
      %vm7414 = vmor %vm7412, %vm7413
      %v7415 = vsel %vm7414, %v7407, %v7411
      %v7416 = vand.u32 2147483647, %v7293
      %vm7417 = vcmp.eq.f32.partialorder %v7416, 8.507059e+37
      %v7418 = vand.u32 %v7293, 2147483648
      %v7419 = vor.u32 1.1754944e-38, %v7418
      %v7420 = vsel %vm7417, %v7419, %v7415
      %v7421 = vmul.f32 1.0, %v7420
      %v7422 = vrcp.pop %v7294
      %v7423 = vmul.f32 %v7294, %v7422
      %v7424 = vsub.f32 1.0, %v7423
      %v7425 = vmul.f32 %v7422, %v7424
      %v7426 = vadd.f32 %v7422, %v7425
      %vm7427 = vweird.f32 %v7294
      %vm7428 = vweird.f32 %v7422
      %vm7429 = vmor %vm7427, %vm7428
      %v7430 = vsel %vm7429, %v7422, %v7426
      %v7431 = vand.u32 2147483647, %v7294
      %vm7432 = vcmp.eq.f32.partialorder %v7431, 8.507059e+37
      %v7433 = vand.u32 %v7294, 2147483648
      %v7434 = vor.u32 1.1754944e-38, %v7433
      %v7435 = vsel %vm7432, %v7434, %v7430
      %v7436 = vmul.f32 1.0, %v7435
      %v7437 = vrcp.pop %v7295
      %v7438 = vmul.f32 %v7295, %v7437
      %v7439 = vsub.f32 1.0, %v7438
      %v7440 = vmul.f32 %v7437, %v7439
      %v7441 = vadd.f32 %v7437, %v7440
      %vm7442 = vweird.f32 %v7295
      %vm7443 = vweird.f32 %v7437
      %vm7444 = vmor %vm7442, %vm7443
      %v7445 = vsel %vm7444, %v7437, %v7441
      %v7446 = vand.u32 2147483647, %v7295
      %vm7447 = vcmp.eq.f32.partialorder %v7446, 8.507059e+37
      %v7448 = vand.u32 %v7295, 2147483648
      %v7449 = vor.u32 1.1754944e-38, %v7448
      %v7450 = vsel %vm7447, %v7449, %v7445
      %v7451 = vmul.f32 1.0, %v7450
      %v7452 = vrcp.pop %v7296
      %v7453 = vmul.f32 %v7296, %v7452
      %v7454 = vsub.f32 1.0, %v7453
      %v7455 = vmul.f32 %v7452, %v7454
      %v7456 = vadd.f32 %v7452, %v7455
      %vm7457 = vweird.f32 %v7296
      %vm7458 = vweird.f32 %v7452
      %vm7459 = vmor %vm7457, %vm7458
      %v7460 = vsel %vm7459, %v7452, %v7456
      %v7461 = vand.u32 2147483647, %v7296
      %vm7462 = vcmp.eq.f32.partialorder %v7461, 8.507059e+37
      %v7463 = vand.u32 %v7296, 2147483648
      %v7464 = vor.u32 1.1754944e-38, %v7463
      %v7465 = vsel %vm7462, %v7464, %v7460
      %v7466 = vmul.f32 1.0, %v7465
      %v7467 = vrcp.pop %v7297
      %v7468 = vmul.f32 %v7297, %v7467
      %v7469 = vsub.f32 1.0, %v7468
      %v7470 = vmul.f32 %v7467, %v7469
      %v7471 = vadd.f32 %v7467, %v7470
      %vm7472 = vweird.f32 %v7297
      %vm7473 = vweird.f32 %v7467
      %vm7474 = vmor %vm7472, %vm7473
      %v7475 = vsel %vm7474, %v7467, %v7471
      %v7476 = vand.u32 2147483647, %v7297
      %vm7477 = vcmp.eq.f32.partialorder %v7476, 8.507059e+37
      %v7478 = vand.u32 %v7297, 2147483648
      %v7479 = vor.u32 1.1754944e-38, %v7478
      %v7480 = vsel %vm7477, %v7479, %v7475
      %v7481 = vmul.f32 1.0, %v7480
      %v7482 = vrcp.pop %v7298
      %v7483 = vmul.f32 %v7298, %v7482
      %v7484 = vsub.f32 1.0, %v7483
      %v7485 = vmul.f32 %v7482, %v7484
      %v7486 = vadd.f32 %v7482, %v7485
      %vm7487 = vweird.f32 %v7298
      %vm7488 = vweird.f32 %v7482
      %vm7489 = vmor %vm7487, %vm7488
      %v7490 = vsel %vm7489, %v7482, %v7486
      %v7491 = vand.u32 2147483647, %v7298
      %vm7492 = vcmp.eq.f32.partialorder %v7491, 8.507059e+37
      %v7493 = vand.u32 %v7298, 2147483648
      %v7494 = vor.u32 1.1754944e-38, %v7493
      %v7495 = vsel %vm7492, %v7494, %v7490
      %v7496 = vmul.f32 1.0, %v7495
      %v7497 = vrcp.pop %v7299
      %v7498 = vmul.f32 %v7299, %v7497
      %v7499 = vsub.f32 1.0, %v7498
      %v7500 = vmul.f32 %v7497, %v7499
      %v7501 = vadd.f32 %v7497, %v7500
      %vm7502 = vweird.f32 %v7299
      %vm7503 = vweird.f32 %v7497
      %vm7504 = vmor %vm7502, %vm7503
      %v7505 = vsel %vm7504, %v7497, %v7501
      %v7506 = vand.u32 2147483647, %v7299
      %vm7507 = vcmp.eq.f32.partialorder %v7506, 8.507059e+37
      %v7508 = vand.u32 %v7299, 2147483648
      %v7509 = vor.u32 1.1754944e-38, %v7508
      %v7510 = vsel %vm7507, %v7509, %v7505
      %v7511 = vmul.f32 1.0, %v7510
      %v7512 = vrcp.pop %v7300
      %v7513 = vmul.f32 %v7300, %v7512
      %v7514 = vsub.f32 1.0, %v7513
      %v7515 = vmul.f32 %v7512, %v7514
      %v7516 = vadd.f32 %v7512, %v7515
      %vm7517 = vweird.f32 %v7300
      %vm7518 = vweird.f32 %v7512
      %vm7519 = vmor %vm7517, %vm7518
      %v7520 = vsel %vm7519, %v7512, %v7516
      %v7521 = vand.u32 2147483647, %v7300
      %vm7522 = vcmp.eq.f32.partialorder %v7521, 8.507059e+37
      %v7523 = vand.u32 %v7300, 2147483648
      %v7524 = vor.u32 1.1754944e-38, %v7523
      %v7525 = vsel %vm7522, %v7524, %v7520
      %v7526 = vmul.f32 1.0, %v7525
      %v7527 = vrcp.pop %v7301
      %v7528 = vmul.f32 %v7301, %v7527
      %v7529 = vsub.f32 1.0, %v7528
      %v7530 = vmul.f32 %v7527, %v7529
      %v7531 = vadd.f32 %v7527, %v7530
      %vm7532 = vweird.f32 %v7301
      %vm7533 = vweird.f32 %v7527
      %vm7534 = vmor %vm7532, %vm7533
      %v7535 = vsel %vm7534, %v7527, %v7531
      %v7536 = vand.u32 2147483647, %v7301
      %vm7537 = vcmp.eq.f32.partialorder %v7536, 8.507059e+37
      %v7538 = vand.u32 %v7301, 2147483648
      %v7539 = vor.u32 1.1754944e-38, %v7538
      %v7540 = vsel %vm7537, %v7539, %v7535
      %v7541 = vmul.f32 1.0, %v7540
      %v7542 = vmul.f32 %v7222, %v7316
      %v7543 = vmul.f32 %v7223, %v7331
      %v7544 = vmul.f32 %v7224, %v7346
      %v7545 = vmul.f32 %v7225, %v7361
      %v7546 = vmul.f32 %v7226, %v7376
      %v7547 = vmul.f32 %v7227, %v7391
      %v7548 = vmul.f32 %v7228, %v7406
      %v7549 = vmul.f32 %v7229, %v7421
      %v7550 = vmul.f32 %v7230, %v7436
      %v7551 = vmul.f32 %v7231, %v7451
      %v7552 = vmul.f32 %v7232, %v7466
      %v7553 = vmul.f32 %v7233, %v7481
      %v7554 = vmul.f32 %v7234, %v7496
      %v7555 = vmul.f32 %v7235, %v7511
      %v7556 = vmul.f32 %v7236, %v7526
      %v7557 = vmul.f32 %v7237, %v7541
      %v7558 = vld [vmem:[%s6] sm:$0xff]
      %v7559 = vld [vmem:[%s6 + $0x8] sm:$0xff]
      %v7560 = vld [vmem:[%s6 + $0x10] sm:$0xff]
      %v7561 = vld [vmem:[%s6 + $0x18] sm:$0xff]
      %v7562 = vld [vmem:[%s6 + $0x20] sm:$0xff]
      %v7563 = vld [vmem:[%s6 + $0x28] sm:$0xff]
      %v7564 = vld [vmem:[%s6 + $0x30] sm:$0xff]
      %v7565 = vld [vmem:[%s6 + $0x38] sm:$0xff]
      %v7566 = vld [vmem:[%s6 + $0x40] sm:$0xff]
      %v7567 = vld [vmem:[%s6 + $0x48] sm:$0xff]
      %v7568 = vld [vmem:[%s6 + $0x50] sm:$0xff]
      %v7569 = vld [vmem:[%s6 + $0x58] sm:$0xff]
      %v7570 = vld [vmem:[%s6 + $0x60] sm:$0xff]
      %v7571 = vld [vmem:[%s6 + $0x68] sm:$0xff]
      %v7572 = vld [vmem:[%s6 + $0x70] sm:$0xff]
      %v7573 = vld [vmem:[%s6 + $0x78] sm:$0xff]
      %v7574 = vld [vmem:[%s7 + $0x4] sm:$0x1]
      %v7575 = vperm.slane %v7574, 0
      %7576 = vmatpush.msra.mxu0 %v7573
      %7577 = vmatpush.msra.mxu0 %v7572
      %7578 = vmatpush.msra.mxu0 %v7571
      %7579 = vmatpush.msra.mxu0 %v7570
      %7580 = vmatpush.msra.mxu0 %v7569
      %7581 = vmatpush.msra.mxu0 %v7568
      %7582 = vmatpush.msra.mxu0 %v7567
      %7583 = vmatpush.msra.mxu0 %v7566
      %7584 = vmatpush.msra.mxu0 %v7565
      %7585 = vmatpush.msra.mxu0 %v7564
      %7586 = vmatpush.msra.mxu0 %v7563
      %7587 = vmatpush.msra.mxu0 %v7562
      %7588 = vmatpush.msra.mxu0 %v7561
      %7589 = vmatpush.msra.mxu0 %v7560
      %7590 = vmatpush.msra.mxu0 %v7559
      %7591 = vmatpush.msra.mxu0 %v7558
      %7592 = vmatmul.f32.gmra.mxu0 %v7542
      %v7593 = vpop.f32.mrf.mxu0
      %v7594 = vadd.f32 %v7575, %v7593
      %7595 = vmatmul.f32.gmra.mxu0 %v7543
      %v7596 = vpop.f32.mrf.mxu0
      %v7597 = vadd.f32 %v7575, %v7596
      %7598 = vmatmul.f32.gmra.mxu0 %v7544
      %v7599 = vpop.f32.mrf.mxu0
      %v7600 = vadd.f32 %v7575, %v7599
      %7601 = vmatmul.f32.gmra.mxu0 %v7545
      %v7602 = vpop.f32.mrf.mxu0
      %v7603 = vadd.f32 %v7575, %v7602
      %7604 = vmatmul.f32.gmra.mxu0 %v7546
      %v7605 = vpop.f32.mrf.mxu0
      %v7606 = vadd.f32 %v7575, %v7605
      %7607 = vmatmul.f32.gmra.mxu0 %v7547
      %v7608 = vpop.f32.mrf.mxu0
      %v7609 = vadd.f32 %v7575, %v7608
      %7610 = vmatmul.f32.gmra.mxu0 %v7548
      %v7611 = vpop.f32.mrf.mxu0
      %v7612 = vadd.f32 %v7575, %v7611
      %7613 = vmatmul.f32.gmra.mxu0 %v7549
      %v7614 = vpop.f32.mrf.mxu0
      %v7615 = vadd.f32 %v7575, %v7614
      %7616 = vmatmul.f32.gmra.mxu0 %v7550
      %v7617 = vpop.f32.mrf.mxu0
      %v7618 = vadd.f32 %v7575, %v7617
      %7619 = vmatmul.f32.gmra.mxu0 %v7551
      %v7620 = vpop.f32.mrf.mxu0
      %v7621 = vadd.f32 %v7575, %v7620
      %7622 = vmatmul.f32.gmra.mxu0 %v7552
      %v7623 = vpop.f32.mrf.mxu0
      %v7624 = vadd.f32 %v7575, %v7623
      %7625 = vmatmul.f32.gmra.mxu0 %v7553
      %v7626 = vpop.f32.mrf.mxu0
      %v7627 = vadd.f32 %v7575, %v7626
      %7628 = vmatmul.f32.gmra.mxu0 %v7554
      %v7629 = vpop.f32.mrf.mxu0
      %v7630 = vadd.f32 %v7575, %v7629
      %7631 = vmatmul.f32.gmra.mxu0 %v7555
      %v7632 = vpop.f32.mrf.mxu0
      %v7633 = vadd.f32 %v7575, %v7632
      %7634 = vmatmul.f32.gmra.mxu0 %v7556
      %v7635 = vpop.f32.mrf.mxu0
      %v7636 = vadd.f32 %v7575, %v7635
      %7637 = vmatmul.f32.gmra.mxu0 %v7557
      %v7638 = vpop.f32.mrf.mxu0
      %v7639 = vadd.f32 %v7575, %v7638
      %7640 = vdwg.mxu0
      %vm7641 = vcmask 64512
      %7642 = vst.msk [vmem:[%s329] sm:$0xff] %vm7641, %v7594
      %7643 = vst.msk [vmem:[%s329 + $0x8] sm:$0xff] %vm7641, %v7597
      %7644 = vst.msk [vmem:[%s329 + $0x10] sm:$0xff] %vm7641, %v7600
      %7645 = vst.msk [vmem:[%s329 + $0x18] sm:$0xff] %vm7641, %v7603
      %7646 = vst.msk [vmem:[%s329 + $0x20] sm:$0xff] %vm7641, %v7606
      %7647 = vst.msk [vmem:[%s329 + $0x28] sm:$0xff] %vm7641, %v7609
      %7648 = vst.msk [vmem:[%s329 + $0x30] sm:$0xff] %vm7641, %v7612
      %7649 = vst.msk [vmem:[%s329 + $0x38] sm:$0xff] %vm7641, %v7615
      %7650 = vst.msk [vmem:[%s329 + $0x40] sm:$0xff] %vm7641, %v7618
      %7651 = vst.msk [vmem:[%s329 + $0x48] sm:$0xff] %vm7641, %v7621
      %7652 = vst.msk [vmem:[%s329 + $0x50] sm:$0xff] %vm7641, %v7624
      %7653 = vst.msk [vmem:[%s329 + $0x58] sm:$0xff] %vm7641, %v7627
      %7654 = vst.msk [vmem:[%s329 + $0x60] sm:$0xff] %vm7641, %v7630
      %7655 = vst.msk [vmem:[%s329 + $0x68] sm:$0xff] %vm7641, %v7633
      %7656 = vst.msk [vmem:[%s329 + $0x70] sm:$0xff] %vm7641, %v7636
      %7657 = vst.msk [vmem:[%s329 + $0x78] sm:$0xff] %vm7641, %v7639
      %s7658 = smul.u32 16, %s19
      %p7659 = scmp.lt.s32.totalorder %s7658, 31
      %s7660 = scalar_select %p7659, %s7658, 31
      %s7661 = smul.addr %s7660, 8
      %s7662 = scalar_lea.vmem %s8, %s7661
      // Predicated region
      $region53: #{ncsn_mlpv2_forward.1} parent=51 // pred_check
        %p7663 = pneg %p215
      $region54: #{ncsn_mlpv2_forward.1} parent=51 // pred_check_branch
        %7665 = sbr.rel (%p7663) target = $region56
      $region55: #{ncsn_mlpv2_forward.1} parent=51 // pred_region
        %s7666 = smul.u32 16, %s19
      $region56: #{ncsn_mlpv2_forward.1} parent=51 // pred_fallthru
        _
    $region52: #{ncsn_mlpv2_forward.1} parent=5 // pred_fallthru
      _
    %p7667 = scmp.le.s32.totalorder 2, %s14
    // Predicated region
    $region57: #{ncsn_mlpv2_forward.1} parent=5 // pred_check
      %p7668 = pneg %p7667
    $region58: #{ncsn_mlpv2_forward.1} parent=5 // pred_check_branch
      %7670 = sbr.rel (%p7668) target = $region60
    $region59: #{ncsn_mlpv2_forward.1} parent=5 // pred_region
      %s7671 = ssub.s32 %s14, 2
      // Predicated region
      $region61: #{ncsn_mlpv2_forward.1} parent=59 // pred_check
        %p7672 = pneg %p221
      $region62: #{ncsn_mlpv2_forward.1} parent=59 // pred_check_branch
        %7674 = sbr.rel (%p7672) target = $region64
      $region63: #{ncsn_mlpv2_forward.1} parent=59 // pred_region
        %s7675 = smul.u32 16, %s20
        %p7676 = scmp.lt.s32.totalorder %s7675, 31
        %s7677 = scalar_select %p7676, %s7675, 31
        %s7678 = smul.addr %s7677, 8
        %s7679 = scalar_lea.vmem %s8, %s7678
      $region64: #{ncsn_mlpv2_forward.1} parent=59 // pred_fallthru
        _
    $region60: #{ncsn_mlpv2_forward.1} parent=5 // pred_fallthru
      _
  $region6: #{ncsn_mlpv2_forward.1} parent=0 // loop_footer
    %s18 = sadd.s32 1, %s14
  $region7: #{ncsn_mlpv2_forward.1} parent=0 // loop_footer_branch
    %13 = sbr.rel target = $region3
  $region8: #{ncsn_mlpv2_forward.1} parent=0 // loop_exit
    _

</llo_original>
